<compile_context>
chip_gen: v6e
topology: v6e:2x2x1
jax: 0.10.0
libtpu: 0.0.40
codegen_flags: <defaults>
</compile_context>

<pallas_src>
import functools
import math

import jax
import jax.numpy as jnp
from jax.experimental import pallas as pl
from jax.experimental.pallas import tpu as pltpu

BN_EPS = 1e-5
STAT_ROWS = 8   # sublane-aligned packing: row 0 = sum, row 1 = sumsq
LANE = 128


# ---------------------------------------------------------------------------
# helpers
# ---------------------------------------------------------------------------
@functools.lru_cache(maxsize=None)
def _vmem_limit_bytes():
    """Generation-aware scoped-VMEM cap (v7x has only 64 MiB physical/TC)."""
    cap = 64 * 1024 * 1024  # conservative fallback (safe on every generation)
    try:
        cap = int(getattr(pltpu.get_tpu_info(), "vmem_capacity_bytes", cap))
    except Exception:
        pass
    return min(96 * 1024 * 1024, (cap * 3) // 4)


def _cparams(n_axes=1):
    return pltpu.CompilerParams(
        dimension_semantics=("parallel",) * n_axes,
        vmem_limit_bytes=_vmem_limit_bytes(),
    )


def _round_up(x, m):
    return ((x + m - 1) // m) * m


def _choose_tile_m(m, row_bytes):
    """Largest row tile that divides M and fits a conservative VMEM budget."""
    budget = _vmem_limit_bytes() // 4   # headroom for weights + double buffering
    cands = (1024, 512, 256, 128, 64, 32, 16, 8)
    for c in cands:
        if m % c == 0 and c * row_bytes <= budget:
            return c
    for c in cands:                     # fit guard failed: smallest divisor wins
        if m % c == 0:
            return c
    return m


def _pack_stats(y):
    """(rows, C) f32 -> (STAT_ROWS, C) slab: row0=colsum, row1=colsumsq."""
    c = y.shape[-1]
    s = jnp.sum(y, axis=0, keepdims=True)
    ss = jnp.sum(y * y, axis=0, keepdims=True)
    return jnp.concatenate(
        [s, ss, jnp.zeros((STAT_ROWS - 2, c), jnp.float32)], axis=0)


def _bn_scale_shift(s, ss, count, gamma, beta):
    """Fold batch stats + (gamma, beta) into per-channel scale/shift (f32)."""
    mean = s / count
    var = jnp.maximum(ss / count - mean * mean, 0.0)   # biased (torch train)
    scale = gamma.reshape(-1) * jax.lax.rsqrt(var + BN_EPS)
    shift = beta.reshape(-1) - mean * scale
    return scale.reshape(1, -1), shift.reshape(1, -1)


# ---------------------------------------------------------------------------
# Pallas kernels
# ---------------------------------------------------------------------------
def _stats_kernel(x_ref, stats_ref):
    x = x_ref[...].astype(jnp.float32)
    stats_ref[0] = _pack_stats(x)


def _bn_relu_matmul_kernel(x_ref, scale_ref, shift_ref, w_ref, b_ref,
                           o_ref, stats_ref):
    # relu(bn(x)) @ W + b, with per-tile channel stats of the f32 output as a
    # side output (feeds the next BatchNorm without re-reading the activation).
    x = x_ref[...].astype(jnp.float32)
    a = jnp.maximum(x * scale_ref[...] + shift_ref[...], 0.0)
    y = jnp.dot(a.astype(jnp.bfloat16), w_ref[...],
                preferred_element_type=jnp.float32) + b_ref[...]
    o_ref[...] = y.astype(o_ref.dtype)
    stats_ref[0] = _pack_stats(y)


def _bn_relu_conv3x3_kernel(x_ref, scale_ref, shift_ref, w_ref, b_ref,
                            o_ref, stats_ref, pad_ref):
    # One image per grid step.  BN+ReLU prologue is written into the interior
    # of a zero-bordered bf16 VMEM scratch (conv zero padding applied AFTER
    # BN+ReLU, matching torch), then the 3x3 conv is 9 accumulated MXU matmuls
    # over shifted views — no 9x im2col materialization.
    _, h, w, cin = x_ref.shape
    ng, _, cgi, cgo = w_ref.shape
    cout = o_ref.shape[-1]

    # Re-zero only the 1-pixel border each step (interior is fully rewritten).
    pad_ref[0:1, :, :] = jnp.zeros((1, w + 2, cin), jnp.bfloat16)
    pad_ref[h + 1:h + 2, :, :] = jnp.zeros((1, w + 2, cin), jnp.bfloat16)
    pad_ref[:, 0:1, :] = jnp.zeros((h + 2, 1, cin), jnp.bfloat16)
    pad_ref[:, w + 1:w + 2, :] = jnp.zeros((h + 2, 1, cin), jnp.bfloat16)

    x = x_ref[0].astype(jnp.float32)
    a = jnp.maximum(x * scale_ref[...].reshape(1, 1, cin)
                    + shift_ref[...].reshape(1, 1, cin), 0.0)
    pad_ref[1:h + 1, 1:w + 1, :] = a.astype(jnp.bfloat16)

    group_out = []
    for gi in range(ng):
        acc = jnp.zeros((h * w, cgo), jnp.float32)
        for t in range(9):
            dy, dx = divmod(t, 3)
            patch = pad_ref[dy:dy + h, dx:dx + w, gi * cgi:(gi + 1) * cgi]
            acc += jnp.dot(patch.reshape(h * w, cgi), w_ref[gi, t, :, :],
                           preferred_element_type=jnp.float32)
        group_out.append(acc)
    y = group_out[0] if ng == 1 else jnp.concatenate(group_out, axis=-1)
    y = y + b_ref[...]
    o_ref[0] = y.astype(o_ref.dtype).reshape(h, w, cout)
    stats_ref[0] = _pack_stats(y)


def _final_resize_kernel(xr_ref, scale_ref, shift_ref, w3_ref, b3_ref,
                         x_ref, wres_ref, bres_ref, o_ref):
    # relu(bn3(xr)) @ W3 + b3  +  (x @ Wres + bres)   -- fully fused
    a = jnp.maximum(xr_ref[...].astype(jnp.float32) * scale_ref[...]
                    + shift_ref[...], 0.0)
    y = jnp.dot(a.astype(jnp.bfloat16), w3_ref[...],
                preferred_element_type=jnp.float32) + b3_ref[...]
    r = jnp.dot(x_ref[...].astype(jnp.bfloat16), wres_ref[...],
                preferred_element_type=jnp.float32) + bres_ref[...]
    o_ref[...] = y + r


def _final_identity_kernel(xr_ref, scale_ref, shift_ref, w3_ref, b3_ref,
                           x_ref, o_ref):
    a = jnp.maximum(xr_ref[...].astype(jnp.float32) * scale_ref[...]
                    + shift_ref[...], 0.0)
    y = jnp.dot(a.astype(jnp.bfloat16), w3_ref[...],
                preferred_element_type=jnp.float32) + b3_ref[...]
    o_ref[...] = y + x_ref[...].astype(jnp.float32)


# ---------------------------------------------------------------------------
# pallas_call wrappers
# ---------------------------------------------------------------------------
def channel_stats(x2d):
    """Per-channel (sum, sumsq) of a (M, C) tensor, tiled + parallel."""
    m, c = x2d.shape
    tm = _choose_tile_m(m, row_bytes=2 * 4 * c)
    nt = m // tm
    stats = pl.pallas_call(
        _stats_kernel,
        grid=(nt,),
        in_specs=[pl.BlockSpec((tm, c), lambda i: (i, 0))],
        out_specs=pl.BlockSpec((1, STAT_ROWS, c), lambda i: (i, 0, 0)),
        out_shape=jax.ShapeDtypeStruct((nt, STAT_ROWS, c), jnp.float32),
        compiler_params=_cparams(1),
    )(x2d)
    tot = jnp.sum(stats, axis=0)          # single fused reduction
    return tot[0], tot[1]


def bn_relu_conv1x1(x2d, scale, shift, w, b, out_dtype=jnp.bfloat16):
    """y = relu(bn(x)) @ W + b  (plus stats of y for the next BN)."""
    m, cin = x2d.shape
    cout = w.shape[1]
    in_b = jnp.dtype(x2d.dtype).itemsize
    out_b = jnp.dtype(out_dtype).itemsize
    tm = _choose_tile_m(m, row_bytes=2 * (cin * in_b + cout * (out_b + 4)))
    nt = m // tm
    y, stats = pl.pallas_call(
        _bn_relu_matmul_kernel,
        grid=(nt,),
        in_specs=[
            pl.BlockSpec((tm, cin), lambda i: (i, 0)),
            pl.BlockSpec((1, cin), lambda i: (0, 0)),
            pl.BlockSpec((1, cin), lambda i: (0, 0)),
            pl.BlockSpec((cin, cout), lambda i: (0, 0)),
            pl.BlockSpec((1, cout), lambda i: (0, 0)),
        ],
        out_specs=(
            pl.BlockSpec((tm, cout), lambda i: (i, 0)),
            pl.BlockSpec((1, STAT_ROWS, cout), lambda i: (i, 0, 0)),
        ),
        out_shape=(
            jax.ShapeDtypeStruct((m, cout), out_dtype),
            jax.ShapeDtypeStruct((nt, STAT_ROWS, cout), jnp.float32),
        ),
        compiler_params=_cparams(1),
    )(x2d, scale, shift, w, b)
    tot = jnp.sum(stats, axis=0)
    return y, tot[0], tot[1]


def bn_relu_conv3x3(x, scale, shift, w_g, b, out_dtype=jnp.bfloat16):
    """y = conv3x3(relu(bn(x)), padding=1) with 9 accumulated in-VMEM matmuls."""
    n, h, w, cin = x.shape
    ng, _, cgi, cgo = w_g.shape
    cout = ng * cgo
    y, stats = pl.pallas_call(
        _bn_relu_conv3x3_kernel,
        grid=(n,),
        in_specs=[
            pl.BlockSpec((1, h, w, cin), lambda i: (i, 0, 0, 0)),
            pl.BlockSpec((1, cin), lambda i: (0, 0)),
            pl.BlockSpec((1, cin), lambda i: (0, 0)),
            pl.BlockSpec((ng, 9, cgi, cgo), lambda i: (0, 0, 0, 0)),
            pl.BlockSpec((1, cout), lambda i: (0, 0)),
        ],
        out_specs=(
            pl.BlockSpec((1, h, w, cout), lambda i: (i, 0, 0, 0)),
            pl.BlockSpec((1, STAT_ROWS, cout), lambda i: (i, 0, 0)),
        ),
        out_shape=(
            jax.ShapeDtypeStruct((n, h, w, cout), out_dtype),
            jax.ShapeDtypeStruct((n, STAT_ROWS, cout), jnp.float32),
        ),
        scratch_shapes=[pltpu.VMEM((h + 2, w + 2, cin), jnp.bfloat16)],
        compiler_params=_cparams(1),
    )(x, scale, shift, w_g, b)
    tot = jnp.sum(stats, axis=0)
    return y, tot[0], tot[1]


def bn_relu_conv1x1_residual(xr2d, scale, shift, w3, b3, x2d, wres, bres):
    """out = relu(bn3(xr)) @ W3 + b3 + (res_conv(x) or x)."""
    m, cmid = xr2d.shape
    cout = w3.shape[1]
    cin = x2d.shape[1]
    tm = _choose_tile_m(m, row_bytes=2 * (cmid * 2 + cin * 4 + cout * 4))
    nt = m // tm
    common_specs = [
        pl.BlockSpec((tm, cmid), lambda i: (i, 0)),
        pl.BlockSpec((1, cmid), lambda i: (0, 0)),
        pl.BlockSpec((1, cmid), lambda i: (0, 0)),
        pl.BlockSpec((cmid, cout), lambda i: (0, 0)),
        pl.BlockSpec((1, cout), lambda i: (0, 0)),
        pl.BlockSpec((tm, cin), lambda i: (i, 0)),
    ]
    out_spec = pl.BlockSpec((tm, cout), lambda i: (i, 0))
    out_shape = jax.ShapeDtypeStruct((m, cout), jnp.float32)
    if wres is not None:
        return pl.pallas_call(
            _final_resize_kernel,
            grid=(nt,),
            in_specs=common_specs + [
                pl.BlockSpec((cin, cout), lambda i: (0, 0)),
                pl.BlockSpec((1, cout), lambda i: (0, 0)),
            ],
            out_specs=out_spec,
            out_shape=out_shape,
            compiler_params=_cparams(1),
        )(xr2d, scale, shift, w3, b3, x2d, wres, bres)
    return pl.pallas_call(
        _final_identity_kernel,
        grid=(nt,),
        in_specs=common_specs,
        out_specs=out_spec,
        out_shape=out_shape,
        compiler_params=_cparams(1),
    )(xr2d, scale, shift, w3, b3, x2d)


# ---------------------------------------------------------------------------
# GroupedConvBlock forward
# ---------------------------------------------------------------------------
def grouped_conv_block_forward(params, x, out_channels):
    """x: (N, H, W, Cin) NHWC (== torch NCHW (N, Cin, H, W)); f32 output."""
    n, h, w, cin = x.shape
    cin_p = params['c1_w'].shape[0]
    if cin_p != cin:
        x = jnp.pad(x, ((0, 0), (0, 0), (0, 0), (0, cin_p - cin)))
    m = n * h * w
    x2d = x.reshape(m, cin_p)

    # bn1 (train-mode batch statistics of x)
    s1, ss1 = channel_stats(x2d)
    scale1, shift1 = _bn_scale_shift(s1, ss1, m, params['bn1_g'], params['bn1_b'])

    # c1( relu(bn1(x)) )  -- 1x1 conv; emits stats for bn2; y1 stored bf16
    y1_2d, s2, ss2 = bn_relu_conv1x1(x2d, scale1, shift1,
                                     params['c1_w'], params['c1_b'])
    cmid_p = y1_2d.shape[1]
    scale2, shift2 = _bn_scale_shift(s2, ss2, m, params['bn2_g'], params['bn2_b'])

    # c2( relu(bn2(y1)) ) -- 3x3 grouped conv, padding=1; emits stats for bn3
    y1 = y1_2d.reshape(n, h, w, cmid_p)
    y2, s3, ss3 = bn_relu_conv3x3(y1, scale2, shift2,
                                  params['c2_w'], params['c2_b'])
    scale3, shift3 = _bn_scale_shift(s3, ss3, m, params['bn3_g'], params['bn3_b'])

    # c3( relu(bn3(y2)) ) + (res_conv(x) if resize else x)
    out2d = bn_relu_conv1x1_residual(
        y2.reshape(m, cmid_p), scale3, shift3, params['c3_w'], params['c3_b'],
        x2d, params.get('res_w'), params.get('res_b'))
    out = out2d.reshape(n, h, w, out2d.shape[1])
    return out[..., :out_channels]


# ---------------------------------------------------------------------------
# Deterministic parameter init (matches the torch module's shapes; channel
# dims zero-padded to multiples of 128 so every kernel output is lane-dense).
# ---------------------------------------------------------------------------
def _conv3x3_grouped_init(key, cmid, groups, cmid_p):
    """Grouped 3x3 weight, tap-major (g, 9, ci, co).

    Per-group layout when Cg is lane-dense (>=128) so the kernel runs one
    matmul per group (no wasted MXU FLOPs); otherwise a block-diagonal dense
    (1, 9, cmid_p, cmid_p) weight (small Cg under-fills the MXU anyway)."""
    kw, kb = jax.random.split(key)
    cg = cmid // groups
    bound = 1.0 / math.sqrt(cg * 9)
    wg = jax.random.uniform(kw, (groups, 3, 3, cg, cg), jnp.float32,
                            -bound, bound)
    b = jax.random.uniform(kb, (cmid,), jnp.float32, -bound, bound)
    b_p = jnp.zeros((1, cmid_p), jnp.float32).at[0, :cmid].set(b)

    if cg % LANE == 0:
        w = wg.reshape(groups, 9, cg, cg)
    else:
        w = jnp.zeros((1, 9, cmid_p, cmid_p), jnp.float32)
        for g in range(groups):
            w = w.at[0, :, g * cg:(g + 1) * cg, g * cg:(g + 1) * cg].set(
                wg[g].reshape(9, cg, cg))
    return w.astype(jnp.bfloat16), b_p


def init_params(key, in_channels, out_channels, groups):
    cmid = min(in_channels, out_channels)
    assert cmid % groups == 0
    resize = in_channels != out_channels
    cin_p = _round_up(in_channels, LANE)
    cmid_p = _round_up(cmid, LANE)
    cout_p = _round_up(out_channels, LANE)
    keys = jax.random.split(key, 7)

    def bn(k, c, c_p):
        kg, kb = jax.random.split(k)
        g = jax.random.uniform(kg, (c,), jnp.float32, 0.5, 1.5)
        b = jax.random.uniform(kb, (c,), jnp.float32, -0.5, 0.5)
        g = jnp.ones((c_p,), jnp.float32).at[:c].set(g).reshape(1, c_p)
        b = jnp.zeros((c_p,), jnp.float32).at[:c].set(b).reshape(1, c_p)
        return g, b

    def conv1x1(k, ci, co, ci_p, co_p):
        kw, kb = jax.random.split(k)
        bound = 1.0 / math.sqrt(ci)
        w = jax.random.uniform(kw, (ci, co), jnp.float32, -bound, bound)
        b = jax.random.uniform(kb, (co,), jnp.float32, -bound, bound)
        w_p = jnp.zeros((ci_p, co_p), jnp.float32).at[:ci, :co].set(w)
        b_p = jnp.zeros((1, co_p), jnp.float32).at[0, :co].set(b)
        return w_p.astype(jnp.bfloat16), b_p   # bf16 once, at init

    p = {}
    p['bn1_g'], p['bn1_b'] = bn(keys[0], in_channels, cin_p)
    p['c1_w'], p['c1_b'] = conv1x1(keys[1], in_channels, cmid, cin_p, cmid_p)
    p['bn2_g'], p['bn2_b'] = bn(keys[2], cmid, cmid_p)
    p['c2_w'], p['c2_b'] = _conv3x3_grouped_init(keys[3], cmid, groups, cmid_p)
    p['bn3_g'], p['bn3_b'] = bn(keys[4], cmid, cmid_p)
    p['c3_w'], p['c3_b'] = conv1x1(keys[5], cmid, out_channels, cmid_p, cout_p)
    if resize:
        p['res_w'], p['res_b'] = conv1x1(keys[6], in_channels, out_channels,
                                         cin_p, cout_p)
    return p


# ---------------------------------------------------------------------------
if __name__ == "__main__":
    key = jax.random.PRNGKey(0)
    kx, kp = jax.random.split(key)

    B, H, W = 2, 16, 16
    IN_CH, OUT_CH, GROUPS = 16, 32, 4

    params = init_params(kp, IN_CH, OUT_CH, GROUPS)
    # NHWC input == torch NCHW input of shape (B, IN_CH, H, W)
    x = jax.random.normal(kx, (B, H, W, IN_CH), jnp.float32)

    fwd = jax.jit(functools.partial(grouped_conv_block_forward,
                                    out_channels=OUT_CH))
    out = jax.block_until_ready(fwd(params, x))

    assert out.shape == (B, H, W, OUT_CH), out.shape
    assert bool(jnp.all(jnp.isfinite(out)))
    print("KERNEL_OK")
</pallas_src>

<mosaic_0001>
module attributes {stable_mosaic.version = 11 : i64} {
  func.func @_stats_kernel(%arg0: i32, %arg1: memref<512x128xf32, #tpu.memory_space<vmem>>, %arg2: memref<1x8x128xf32, #tpu.memory_space<vmem>>) attributes {dimension_semantics = [#tpu.dimension_semantics<parallel>], iteration_bounds = array<i64: 1>, scalar_prefetch = 0 : i64, scratch_operands = 0 : i64, tpu.core_type = #tpu.core_type<tc>, window_params = [{transform_indices = @transform_0, window_bounds = array<i64: 512, 128>}, {transform_indices = @transform_1, window_bounds = array<i64: 1, 8, 128>}]} {
    %c0 = arith.constant 0 : index
    %c0_0 = arith.constant 0 : index
    %0 = vector.load %arg1[%c0, %c0_0] : memref<512x128xf32, #tpu.memory_space<vmem>>, vector<512x128xf32>
    %cst = arith.constant dense<0.000000e+00> : vector<128xf32>
    %1 = vector.multi_reduction <add>, %0, %cst [0] : vector<512x128xf32> to vector<128xf32>
    %2 = vector.shape_cast %1 : vector<128xf32> to vector<1x128xf32>
    %3 = arith.mulf %0, %0 : vector<512x128xf32>
    %cst_1 = arith.constant dense<0.000000e+00> : vector<128xf32>
    %4 = vector.multi_reduction <add>, %3, %cst_1 [0] : vector<512x128xf32> to vector<128xf32>
    %5 = vector.shape_cast %4 : vector<128xf32> to vector<1x128xf32>
    %cst_2 = arith.constant 0.000000e+00 : f32
    %6 = vector.broadcast %cst_2 : f32 to vector<6x128xf32>
    %7 = tpu.concatenate %2, %5, %6 in 0 : vector<1x128xf32>, vector<1x128xf32>, vector<6x128xf32> -> vector<8x128xf32>
    %c0_3 = arith.constant 0 : index
    %c0_4 = arith.constant 0 : index
    %c0_5 = arith.constant 0 : index
    %8 = vector.load %arg2[%c0_3, %c0_4, %c0_5] : memref<1x8x128xf32, #tpu.memory_space<vmem>>, vector<1x8x128xf32>
    %9 = vector.shape_cast %8 : vector<1x8x128xf32> to vector<8x128xf32>
    %10 = vector.shape_cast %7 : vector<8x128xf32> to vector<1x8x128xf32>
    tpu.vector_store %arg2[%c0_3, %c0_4, %c0_5], %10 {strides = array<i32>} : memref<1x8x128xf32, #tpu.memory_space<vmem>>, vector<1x8x128xf32>,
    return
  }
  func.func @transform_0(%arg0: i32) -> (i32, i32) {
    %c0_i32 = arith.constant 0 : i32
    %c0_i32_0 = arith.constant 0 : i32
    return %arg0, %c0_i32 : i32, i32
  }
  func.func @transform_1(%arg0: i32) -> (i32, i32, i32) {
    %c0_i32 = arith.constant 0 : i32
    %c0_i32_0 = arith.constant 0 : i32
    %c0_i32_1 = arith.constant 0 : i32
    return %arg0, %c0_i32, %c0_i32_0 : i32, i32, i32
  }
}

module attributes {stable_mosaic.version = 11 : i64} {
  func.func @_bn_relu_matmul_kernel(%arg0: i32, %arg1: memref<512x128xf32, #tpu.memory_space<vmem>>, %arg2: memref<1x128xf32, #tpu.memory_space<vmem>>, %arg3: memref<1x128xf32, #tpu.memory_space<vmem>>, %arg4: memref<128x128xbf16, #tpu.memory_space<vmem>>, %arg5: memref<1x128xf32, #tpu.memory_space<vmem>>, %arg6: memref<512x128xbf16, #tpu.memory_space<vmem>>, %arg7: memref<1x8x128xf32, #tpu.memory_space<vmem>>) attributes {dimension_semantics = [#tpu.dimension_semantics<parallel>], iteration_bounds = array<i64: 1>, scalar_prefetch = 0 : i64, scratch_operands = 0 : i64, tpu.core_type = #tpu.core_type<tc>, window_params = [{transform_indices = @transform_0, window_bounds = array<i64: 512, 128>}, {pipeline_mode = #tpu.pipeline_mode<synchronous>, transform_indices = @transform_1, window_bounds = array<i64: 1, 128>}, {pipeline_mode = #tpu.pipeline_mode<synchronous>, transform_indices = @transform_2, window_bounds = array<i64: 1, 128>}, {pipeline_mode = #tpu.pipeline_mode<synchronous>, transform_indices = @transform_3, window_bounds = array<i64: 128, 128>}, {pipeline_mode = #tpu.pipeline_mode<synchronous>, transform_indices = @transform_4, window_bounds = array<i64: 1, 128>}, {transform_indices = @transform_5, window_bounds = array<i64: 512, 128>}, {transform_indices = @transform_6, window_bounds = array<i64: 1, 8, 128>}]} {
    %c0 = arith.constant 0 : index
    %c0_0 = arith.constant 0 : index
    %0 = vector.load %arg1[%c0, %c0_0] : memref<512x128xf32, #tpu.memory_space<vmem>>, vector<512x128xf32>
    %c0_1 = arith.constant 0 : index
    %c0_2 = arith.constant 0 : index
    %1 = vector.load %arg2[%c0_1, %c0_2] : memref<1x128xf32, #tpu.memory_space<vmem>>, vector<1x128xf32>
    %2 = vector.broadcast %1 : vector<1x128xf32> to vector<512x128xf32>
    %3 = arith.mulf %0, %2 : vector<512x128xf32>
    %c0_3 = arith.constant 0 : index
    %c0_4 = arith.constant 0 : index
    %4 = vector.load %arg3[%c0_3, %c0_4] : memref<1x128xf32, #tpu.memory_space<vmem>>, vector<1x128xf32>
    %5 = vector.broadcast %4 : vector<1x128xf32> to vector<512x128xf32>
    %6 = arith.addf %3, %5 : vector<512x128xf32>
    %cst = arith.constant 0.000000e+00 : f32
    %7 = vector.broadcast %cst : f32 to vector<512x128xf32>
    %8 = arith.maximumf %6, %7 : vector<512x128xf32>
    %9 = arith.truncf %8 : vector<512x128xf32> to vector<512x128xbf16>
    %c0_5 = arith.constant 0 : index
    %c0_6 = arith.constant 0 : index
    %10 = vector.load %arg4[%c0_5, %c0_6] : memref<128x128xbf16, #tpu.memory_space<vmem>>, vector<128x128xbf16>
    %cst_7 = arith.constant dense<0.000000e+00> : vector<512x128xf32>
    %11 = tpu.matmul %9, %10, %cst_7 {dimension_numbers = #tpu.dot_dimension_numbers<[1], [0], [0], [1], [0, 0, 1, 1], [], []>} : vector<512x128xbf16>, vector<128x128xbf16>, vector<512x128xf32> -> vector<512x128xf32>
    %c0_8 = arith.constant 0 : index
    %c0_9 = arith.constant 0 : index
    %12 = vector.load %arg5[%c0_8, %c0_9] : memref<1x128xf32, #tpu.memory_space<vmem>>, vector<1x128xf32>
    %13 = vector.broadcast %12 : vector<1x128xf32> to vector<512x128xf32>
    %14 = arith.addf %11, %13 : vector<512x128xf32>
    %15 = arith.truncf %14 : vector<512x128xf32> to vector<512x128xbf16>
    %c0_10 = arith.constant 0 : index
    %c0_11 = arith.constant 0 : index
    %16 = vector.load %arg6[%c0_10, %c0_11] : memref<512x128xbf16, #tpu.memory_space<vmem>>, vector<512x128xbf16>
    tpu.vector_store %arg6[%c0_10, %c0_11], %15 {strides = array<i32>} : memref<512x128xbf16, #tpu.memory_space<vmem>>, vector<512x128xbf16>,
    %cst_12 = arith.constant dense<0.000000e+00> : vector<128xf32>
    %17 = vector.multi_reduction <add>, %14, %cst_12 [0] : vector<512x128xf32> to vector<128xf32>
    %18 = vector.shape_cast %17 : vector<128xf32> to vector<1x128xf32>
    %19 = arith.mulf %14, %14 : vector<512x128xf32>
    %cst_13 = arith.constant dense<0.000000e+00> : vector<128xf32>
    %20 = vector.multi_reduction <add>, %19, %cst_13 [0] : vector<512x128xf32> to vector<128xf32>
    %21 = vector.shape_cast %20 : vector<128xf32> to vector<1x128xf32>
    %cst_14 = arith.constant 0.000000e+00 : f32
    %22 = vector.broadcast %cst_14 : f32 to vector<6x128xf32>
    %23 = tpu.concatenate %18, %21, %22 in 0 : vector<1x128xf32>, vector<1x128xf32>, vector<6x128xf32> -> vector<8x128xf32>
    %c0_15 = arith.constant 0 : index
    %c0_16 = arith.constant 0 : index
    %c0_17 = arith.constant 0 : index
    %24 = vector.load %arg7[%c0_15, %c0_16, %c0_17] : memref<1x8x128xf32, #tpu.memory_space<vmem>>, vector<1x8x128xf32>
    %25 = vector.shape_cast %24 : vector<1x8x128xf32> to vector<8x128xf32>
    %26 = vector.shape_cast %23 : vector<8x128xf32> to vector<1x8x128xf32>
    tpu.vector_store %arg7[%c0_15, %c0_16, %c0_17], %26 {strides = array<i32>} : memref<1x8x128xf32, #tpu.memory_space<vmem>>, vector<1x8x128xf32>,
    return
  }
  func.func @transform_0(%arg0: i32) -> (i32, i32) {
    %c0_i32 = arith.constant 0 : i32
    %c0_i32_0 = arith.constant 0 : i32
    return %arg0, %c0_i32 : i32, i32
  }
  func.func @transform_1(%arg0: i32) -> (i32, i32) {
    %c0_i32 = arith.constant 0 : i32
    %c0_i32_0 = arith.constant 0 : i32
    %c0_i32_1 = arith.constant 0 : i32
    return %c0_i32, %c0_i32_0 : i32, i32
  }
  func.func @transform_2(%arg0: i32) -> (i32, i32) {
    %c0_i32 = arith.constant 0 : i32
    %c0_i32_0 = arith.constant 0 : i32
    %c0_i32_1 = arith.constant 0 : i32
    return %c0_i32, %c0_i32_0 : i32, i32
  }
  func.func @transform_3(%arg0: i32) -> (i32, i32) {
    %c0_i32 = arith.constant 0 : i32
    %c0_i32_0 = arith.constant 0 : i32
    %c0_i32_1 = arith.constant 0 : i32
    return %c0_i32, %c0_i32_0 : i32, i32
  }
  func.func @transform_4(%arg0: i32) -> (i32, i32) {
    %c0_i32 = arith.constant 0 : i32
    %c0_i32_0 = arith.constant 0 : i32
    %c0_i32_1 = arith.constant 0 : i32
    return %c0_i32, %c0_i32_0 : i32, i32
  }
  func.func @transform_5(%arg0: i32) -> (i32, i32) {
    %c0_i32 = arith.constant 0 : i32
    %c0_i32_0 = arith.constant 0 : i32
    return %arg0, %c0_i32 : i32, i32
  }
  func.func @transform_6(%arg0: i32) -> (i32, i32, i32) {
    %c0_i32 = arith.constant 0 : i32
    %c0_i32_0 = arith.constant 0 : i32
    %c0_i32_1 = arith.constant 0 : i32
    return %arg0, %c0_i32, %c0_i32_0 : i32, i32, i32
  }
}

module attributes {stable_mosaic.version = 11 : i64} {
  func.func @_bn_relu_conv3x3_kernel(%arg0: i32, %arg1: memref<1x16x16x128xbf16, #tpu.memory_space<vmem>>, %arg2: memref<1x128xf32, #tpu.memory_space<vmem>>, %arg3: memref<1x128xf32, #tpu.memory_space<vmem>>, %arg4: memref<1x9x128x128xbf16, #tpu.memory_space<vmem>>, %arg5: memref<1x128xf32, #tpu.memory_space<vmem>>, %arg6: memref<1x16x16x128xbf16, #tpu.memory_space<vmem>>, %arg7: memref<1x8x128xf32, #tpu.memory_space<vmem>>, %arg8: memref<18x18x128xbf16, #tpu.memory_space<vmem>>) attributes {dimension_semantics = [#tpu.dimension_semantics<parallel>], iteration_bounds = array<i64: 2>, scalar_prefetch = 0 : i64, scratch_operands = 1 : i64, tpu.core_type = #tpu.core_type<tc>, window_params = [{transform_indices = @transform_0, window_bounds = array<i64: 1, 16, 16, 128>}, {pipeline_mode = #tpu.pipeline_mode<synchronous>, transform_indices = @transform_1, window_bounds = array<i64: 1, 128>}, {pipeline_mode = #tpu.pipeline_mode<synchronous>, transform_indices = @transform_2, window_bounds = array<i64: 1, 128>}, {pipeline_mode = #tpu.pipeline_mode<synchronous>, transform_indices = @transform_3, window_bounds = array<i64: 1, 9, 128, 128>}, {pipeline_mode = #tpu.pipeline_mode<synchronous>, transform_indices = @transform_4, window_bounds = array<i64: 1, 128>}, {transform_indices = @transform_5, window_bounds = array<i64: 1, 16, 16, 128>}, {transform_indices = @transform_6, window_bounds = array<i64: 1, 8, 128>}]} {
    %cst = arith.constant 0.000000e+00 : bf16
    %0 = vector.broadcast %cst : bf16 to vector<1x18x128xbf16>
    %c0 = arith.constant 0 : index
    %c0_0 = arith.constant 0 : index
    %c0_1 = arith.constant 0 : index
    %1 = vector.load %arg8[%c0, %c0_0, %c0_1] : memref<18x18x128xbf16, #tpu.memory_space<vmem>>, vector<1x18x128xbf16>
    tpu.vector_store %arg8[%c0, %c0_0, %c0_1], %0 {strides = array<i32>} : memref<18x18x128xbf16, #tpu.memory_space<vmem>>, vector<1x18x128xbf16>,
    %cst_2 = arith.constant 0.000000e+00 : bf16
    %2 = vector.broadcast %cst_2 : bf16 to vector<1x18x128xbf16>
    %c17 = arith.constant 17 : index
    %c0_3 = arith.constant 0 : index
    %c0_4 = arith.constant 0 : index
    %3 = vector.load %arg8[%c17, %c0_3, %c0_4] : memref<18x18x128xbf16, #tpu.memory_space<vmem>>, vector<1x18x128xbf16>
    tpu.vector_store %arg8[%c17, %c0_3, %c0_4], %2 {strides = array<i32>} : memref<18x18x128xbf16, #tpu.memory_space<vmem>>, vector<1x18x128xbf16>,
    %cst_5 = arith.constant 0.000000e+00 : bf16
    %4 = vector.broadcast %cst_5 : bf16 to vector<18x1x128xbf16>
    %c0_6 = arith.constant 0 : index
    %c0_7 = arith.constant 0 : index
    %c0_8 = arith.constant 0 : index
    %5 = vector.load %arg8[%c0_6, %c0_7, %c0_8] : memref<18x18x128xbf16, #tpu.memory_space<vmem>>, vector<18x1x128xbf16>
    tpu.vector_store %arg8[%c0_6, %c0_7, %c0_8], %4 {strides = array<i32>} : memref<18x18x128xbf16, #tpu.memory_space<vmem>>, vector<18x1x128xbf16>,
    %cst_9 = arith.constant 0.000000e+00 : bf16
    %6 = vector.broadcast %cst_9 : bf16 to vector<18x1x128xbf16>
    %c0_10 = arith.constant 0 : index
    %c17_11 = arith.constant 17 : index
    %c0_12 = arith.constant 0 : index
    %7 = vector.load %arg8[%c0_10, %c17_11, %c0_12] : memref<18x18x128xbf16, #tpu.memory_space<vmem>>, vector<18x1x128xbf16>
    tpu.vector_store %arg8[%c0_10, %c17_11, %c0_12], %6 {strides = array<i32>} : memref<18x18x128xbf16, #tpu.memory_space<vmem>>, vector<18x1x128xbf16>,
    %c0_13 = arith.constant 0 : index
    %c0_14 = arith.constant 0 : index
    %c0_15 = arith.constant 0 : index
    %c0_16 = arith.constant 0 : index
    %8 = vector.load %arg1[%c0_13, %c0_14, %c0_15, %c0_16] : memref<1x16x16x128xbf16, #tpu.memory_space<vmem>>, vector<1x16x16x128xbf16>
    %9 = vector.shape_cast %8 : vector<1x16x16x128xbf16> to vector<16x16x128xbf16>
    %10 = arith.extf %9 : vector<16x16x128xbf16> to vector<16x16x128xf32>
    %c0_17 = arith.constant 0 : index
    %c0_18 = arith.constant 0 : index
    %11 = vector.load %arg2[%c0_17, %c0_18] : memref<1x128xf32, #tpu.memory_space<vmem>>, vector<1x128xf32>
    %12 = vector.shape_cast %11 : vector<1x128xf32> to vector<1x1x128xf32>
    %13 = vector.broadcast %12 : vector<1x1x128xf32> to vector<16x16x128xf32>
    %14 = arith.mulf %10, %13 : vector<16x16x128xf32>
    %c0_19 = arith.constant 0 : index
    %c0_20 = arith.constant 0 : index
    %15 = vector.load %arg3[%c0_19, %c0_20] : memref<1x128xf32, #tpu.memory_space<vmem>>, vector<1x128xf32>
    %16 = vector.shape_cast %15 : vector<1x128xf32> to vector<1x1x128xf32>
    %17 = vector.broadcast %16 : vector<1x1x128xf32> to vector<16x16x128xf32>
    %18 = arith.addf %14, %17 : vector<16x16x128xf32>
    %cst_21 = arith.constant 0.000000e+00 : f32
    %19 = vector.broadcast %cst_21 : f32 to vector<16x16x128xf32>
    %20 = arith.maximumf %18, %19 : vector<16x16x128xf32>
    %21 = arith.truncf %20 : vector<16x16x128xf32> to vector<16x16x128xbf16>
    %c1 = arith.constant 1 : index
    %c1_22 = arith.constant 1 : index
    %c0_23 = arith.constant 0 : index
    %22 = vector.load %arg8[%c1, %c1_22, %c0_23] : memref<18x18x128xbf16, #tpu.memory_space<vmem>>, vector<16x16x128xbf16>
    tpu.vector_store %arg8[%c1, %c1_22, %c0_23], %21 {strides = array<i32>} : memref<18x18x128xbf16, #tpu.memory_space<vmem>>, vector<16x16x128xbf16>,
    %cst_24 = arith.constant 0.000000e+00 : f32
    %23 = vector.broadcast %cst_24 : f32 to vector<256x128xf32>
    %c0_25 = arith.constant 0 : index
    %c0_26 = arith.constant 0 : index
    %c0_27 = arith.constant 0 : index
    %24 = vector.load %arg8[%c0_25, %c0_26, %c0_27] : memref<18x18x128xbf16, #tpu.memory_space<vmem>>, vector<16x16x128xbf16>
    %25 = vector.shape_cast %24 : vector<16x16x128xbf16> to vector<256x128xbf16>
    %c0_28 = arith.constant 0 : index
    %c0_29 = arith.constant 0 : index
    %c0_30 = arith.constant 0 : index
    %c0_31 = arith.constant 0 : index
    %26 = vector.load %arg4[%c0_28, %c0_29, %c0_30, %c0_31] : memref<1x9x128x128xbf16, #tpu.memory_space<vmem>>, vector<1x1x128x128xbf16>
    %27 = vector.shape_cast %26 : vector<1x1x128x128xbf16> to vector<128x128xbf16>
    %cst_32 = arith.constant dense<0.000000e+00> : vector<256x128xf32>
    %28 = tpu.matmul %25, %27, %cst_32 {dimension_numbers = #tpu.dot_dimension_numbers<[1], [0], [0], [1], [0, 0, 1, 1], [], []>} : vector<256x128xbf16>, vector<128x128xbf16>, vector<256x128xf32> -> vector<256x128xf32>
    %29 = arith.addf %23, %28 : vector<256x128xf32>
    %c0_33 = arith.constant 0 : index
    %c1_34 = arith.constant 1 : index
    %c0_35 = arith.constant 0 : index
    %30 = vector.load %arg8[%c0_33, %c1_34, %c0_35] : memref<18x18x128xbf16, #tpu.memory_space<vmem>>, vector<16x16x128xbf16>
    %31 = vector.shape_cast %30 : vector<16x16x128xbf16> to vector<256x128xbf16>
    %c0_36 = arith.constant 0 : index
    %c1_37 = arith.constant 1 : index
    %c0_38 = arith.constant 0 : index
    %c0_39 = arith.constant 0 : index
    %32 = vector.load %arg4[%c0_36, %c1_37, %c0_38, %c0_39] : memref<1x9x128x128xbf16, #tpu.memory_space<vmem>>, vector<1x1x128x128xbf16>
    %33 = vector.shape_cast %32 : vector<1x1x128x128xbf16> to vector<128x128xbf16>
    %cst_40 = arith.constant dense<0.000000e+00> : vector<256x128xf32>
    %34 = tpu.matmul %31, %33, %cst_40 {dimension_numbers = #tpu.dot_dimension_numbers<[1], [0], [0], [1], [0, 0, 1, 1], [], []>} : vector<256x128xbf16>, vector<128x128xbf16>, vector<256x128xf32> -> vector<256x128xf32>
    %35 = arith.addf %29, %34 : vector<256x128xf32>
    %c0_41 = arith.constant 0 : index
    %c2 = arith.constant 2 : index
    %c0_42 = arith.constant 0 : index
    %36 = vector.load %arg8[%c0_41, %c2, %c0_42] : memref<18x18x128xbf16, #tpu.memory_space<vmem>>, vector<16x16x128xbf16>
    %37 = vector.shape_cast %36 : vector<16x16x128xbf16> to vector<256x128xbf16>
    %c0_43 = arith.constant 0 : index
    %c2_44 = arith.constant 2 : index
    %c0_45 = arith.constant 0 : index
    %c0_46 = arith.constant 0 : index
    %38 = vector.load %arg4[%c0_43, %c2_44, %c0_45, %c0_46] : memref<1x9x128x128xbf16, #tpu.memory_space<vmem>>, vector<1x1x128x128xbf16>
    %39 = vector.shape_cast %38 : vector<1x1x128x128xbf16> to vector<128x128xbf16>
    %cst_47 = arith.constant dense<0.000000e+00> : vector<256x128xf32>
    %40 = tpu.matmul %37, %39, %cst_47 {dimension_numbers = #tpu.dot_dimension_numbers<[1], [0], [0], [1], [0, 0, 1, 1], [], []>} : vector<256x128xbf16>, vector<128x128xbf16>, vector<256x128xf32> -> vector<256x128xf32>
    %41 = arith.addf %35, %40 : vector<256x128xf32>
    %c1_48 = arith.constant 1 : index
    %c0_49 = arith.constant 0 : index
    %c0_50 = arith.constant 0 : index
    %42 = vector.load %arg8[%c1_48, %c0_49, %c0_50] : memref<18x18x128xbf16, #tpu.memory_space<vmem>>, vector<16x16x128xbf16>
    %43 = vector.shape_cast %42 : vector<16x16x128xbf16> to vector<256x128xbf16>
    %c0_51 = arith.constant 0 : index
    %c3 = arith.constant 3 : index
    %c0_52 = arith.constant 0 : index
    %c0_53 = arith.constant 0 : index
    %44 = vector.load %arg4[%c0_51, %c3, %c0_52, %c0_53] : memref<1x9x128x128xbf16, #tpu.memory_space<vmem>>, vector<1x1x128x128xbf16>
    %45 = vector.shape_cast %44 : vector<1x1x128x128xbf16> to vector<128x128xbf16>
    %cst_54 = arith.constant dense<0.000000e+00> : vector<256x128xf32>
    %46 = tpu.matmul %43, %45, %cst_54 {dimension_numbers = #tpu.dot_dimension_numbers<[1], [0], [0], [1], [0, 0, 1, 1], [], []>} : vector<256x128xbf16>, vector<128x128xbf16>, vector<256x128xf32> -> vector<256x128xf32>
    %47 = arith.addf %41, %46 : vector<256x128xf32>
    %c1_55 = arith.constant 1 : index
    %c1_56 = arith.constant 1 : index
    %c0_57 = arith.constant 0 : index
    %48 = vector.load %arg8[%c1_55, %c1_56, %c0_57] : memref<18x18x128xbf16, #tpu.memory_space<vmem>>, vector<16x16x128xbf16>
    %49 = vector.shape_cast %48 : vector<16x16x128xbf16> to vector<256x128xbf16>
    %c0_58 = arith.constant 0 : index
    %c4 = arith.constant 4 : index
    %c0_59 = arith.constant 0 : index
    %c0_60 = arith.constant 0 : index
    %50 = vector.load %arg4[%c0_58, %c4, %c0_59, %c0_60] : memref<1x9x128x128xbf16, #tpu.memory_space<vmem>>, vector<1x1x128x128xbf16>
    %51 = vector.shape_cast %50 : vector<1x1x128x128xbf16> to vector<128x128xbf16>
    %cst_61 = arith.constant dense<0.000000e+00> : vector<256x128xf32>
    %52 = tpu.matmul %49, %51, %cst_61 {dimension_numbers = #tpu.dot_dimension_numbers<[1], [0], [0], [1], [0, 0, 1, 1], [], []>} : vector<256x128xbf16>, vector<128x128xbf16>, vector<256x128xf32> -> vector<256x128xf32>
    %53 = arith.addf %47, %52 : vector<256x128xf32>
    %c1_62 = arith.constant 1 : index
    %c2_63 = arith.constant 2 : index
    %c0_64 = arith.constant 0 : index
    %54 = vector.load %arg8[%c1_62, %c2_63, %c0_64] : memref<18x18x128xbf16, #tpu.memory_space<vmem>>, vector<16x16x128xbf16>
    %55 = vector.shape_cast %54 : vector<16x16x128xbf16> to vector<256x128xbf16>
    %c0_65 = arith.constant 0 : index
    %c5 = arith.constant 5 : index
    %c0_66 = arith.constant 0 : index
    %c0_67 = arith.constant 0 : index
    %56 = vector.load %arg4[%c0_65, %c5, %c0_66, %c0_67] : memref<1x9x128x128xbf16, #tpu.memory_space<vmem>>, vector<1x1x128x128xbf16>
    %57 = vector.shape_cast %56 : vector<1x1x128x128xbf16> to vector<128x128xbf16>
    %cst_68 = arith.constant dense<0.000000e+00> : vector<256x128xf32>
    %58 = tpu.matmul %55, %57, %cst_68 {dimension_numbers = #tpu.dot_dimension_numbers<[1], [0], [0], [1], [0, 0, 1, 1], [], []>} : vector<256x128xbf16>, vector<128x128xbf16>, vector<256x128xf32> -> vector<256x128xf32>
    %59 = arith.addf %53, %58 : vector<256x128xf32>
    %c2_69 = arith.constant 2 : index
    %c0_70 = arith.constant 0 : index
    %c0_71 = arith.constant 0 : index
    %60 = vector.load %arg8[%c2_69, %c0_70, %c0_71] : memref<18x18x128xbf16, #tpu.memory_space<vmem>>, vector<16x16x128xbf16>
    %61 = vector.shape_cast %60 : vector<16x16x128xbf16> to vector<256x128xbf16>
    %c0_72 = arith.constant 0 : index
    %c6 = arith.constant 6 : index
    %c0_73 = arith.constant 0 : index
    %c0_74 = arith.constant 0 : index
    %62 = vector.load %arg4[%c0_72, %c6, %c0_73, %c0_74] : memref<1x9x128x128xbf16, #tpu.memory_space<vmem>>, vector<1x1x128x128xbf16>
    %63 = vector.shape_cast %62 : vector<1x1x128x128xbf16> to vector<128x128xbf16>
    %cst_75 = arith.constant dense<0.000000e+00> : vector<256x128xf32>
    %64 = tpu.matmul %61, %63, %cst_75 {dimension_numbers = #tpu.dot_dimension_numbers<[1], [0], [0], [1], [0, 0, 1, 1], [], []>} : vector<256x128xbf16>, vector<128x128xbf16>, vector<256x128xf32> -> vector<256x128xf32>
    %65 = arith.addf %59, %64 : vector<256x128xf32>
    %c2_76 = arith.constant 2 : index
    %c1_77 = arith.constant 1 : index
    %c0_78 = arith.constant 0 : index
    %66 = vector.load %arg8[%c2_76, %c1_77, %c0_78] : memref<18x18x128xbf16, #tpu.memory_space<vmem>>, vector<16x16x128xbf16>
    %67 = vector.shape_cast %66 : vector<16x16x128xbf16> to vector<256x128xbf16>
    %c0_79 = arith.constant 0 : index
    %c7 = arith.constant 7 : index
    %c0_80 = arith.constant 0 : index
    %c0_81 = arith.constant 0 : index
    %68 = vector.load %arg4[%c0_79, %c7, %c0_80, %c0_81] : memref<1x9x128x128xbf16, #tpu.memory_space<vmem>>, vector<1x1x128x128xbf16>
    %69 = vector.shape_cast %68 : vector<1x1x128x128xbf16> to vector<128x128xbf16>
    %cst_82 = arith.constant dense<0.000000e+00> : vector<256x128xf32>
    %70 = tpu.matmul %67, %69, %cst_82 {dimension_numbers = #tpu.dot_dimension_numbers<[1], [0], [0], [1], [0, 0, 1, 1], [], []>} : vector<256x128xbf16>, vector<128x128xbf16>, vector<256x128xf32> -> vector<256x128xf32>
    %71 = arith.addf %65, %70 : vector<256x128xf32>
    %c2_83 = arith.constant 2 : index
    %c2_84 = arith.constant 2 : index
    %c0_85 = arith.constant 0 : index
    %72 = vector.load %arg8[%c2_83, %c2_84, %c0_85] : memref<18x18x128xbf16, #tpu.memory_space<vmem>>, vector<16x16x128xbf16>
    %73 = vector.shape_cast %72 : vector<16x16x128xbf16> to vector<256x128xbf16>
    %c0_86 = arith.constant 0 : index
    %c8 = arith.constant 8 : index
    %c0_87 = arith.constant 0 : index
    %c0_88 = arith.constant 0 : index
    %74 = vector.load %arg4[%c0_86, %c8, %c0_87, %c0_88] : memref<1x9x128x128xbf16, #tpu.memory_space<vmem>>, vector<1x1x128x128xbf16>
    %75 = vector.shape_cast %74 : vector<1x1x128x128xbf16> to vector<128x128xbf16>
    %cst_89 = arith.constant dense<0.000000e+00> : vector<256x128xf32>
    %76 = tpu.matmul %73, %75, %cst_89 {dimension_numbers = #tpu.dot_dimension_numbers<[1], [0], [0], [1], [0, 0, 1, 1], [], []>} : vector<256x128xbf16>, vector<128x128xbf16>, vector<256x128xf32> -> vector<256x128xf32>
    %77 = arith.addf %71, %76 : vector<256x128xf32>
    %c0_90 = arith.constant 0 : index
    %c0_91 = arith.constant 0 : index
    %78 = vector.load %arg5[%c0_90, %c0_91] : memref<1x128xf32, #tpu.memory_space<vmem>>, vector<1x128xf32>
    %79 = vector.broadcast %78 : vector<1x128xf32> to vector<256x128xf32>
    %80 = arith.addf %77, %79 : vector<256x128xf32>
    %81 = arith.truncf %80 : vector<256x128xf32> to vector<256x128xbf16>
    %82 = vector.shape_cast %81 : vector<256x128xbf16> to vector<16x16x128xbf16>
    %c0_92 = arith.constant 0 : index
    %c0_93 = arith.constant 0 : index
    %c0_94 = arith.constant 0 : index
    %c0_95 = arith.constant 0 : index
    %83 = vector.load %arg6[%c0_92, %c0_93, %c0_94, %c0_95] : memref<1x16x16x128xbf16, #tpu.memory_space<vmem>>, vector<1x16x16x128xbf16>
    %84 = vector.shape_cast %83 : vector<1x16x16x128xbf16> to vector<16x16x128xbf16>
    %85 = vector.shape_cast %82 : vector<16x16x128xbf16> to vector<1x16x16x128xbf16>
    tpu.vector_store %arg6[%c0_92, %c0_93, %c0_94, %c0_95], %85 {strides = array<i32>} : memref<1x16x16x128xbf16, #tpu.memory_space<vmem>>, vector<1x16x16x128xbf16>,
    %cst_96 = arith.constant dense<0.000000e+00> : vector<128xf32>
    %86 = vector.multi_reduction <add>, %80, %cst_96 [0] : vector<256x128xf32> to vector<128xf32>
    %87 = vector.shape_cast %86 : vector<128xf32> to vector<1x128xf32>
    %88 = arith.mulf %80, %80 : vector<256x128xf32>
    %cst_97 = arith.constant dense<0.000000e+00> : vector<128xf32>
    %89 = vector.multi_reduction <add>, %88, %cst_97 [0] : vector<256x128xf32> to vector<128xf32>
    %90 = vector.shape_cast %89 : vector<128xf32> to vector<1x128xf32>
    %cst_98 = arith.constant 0.000000e+00 : f32
    %91 = vector.broadcast %cst_98 : f32 to vector<6x128xf32>
    %92 = tpu.concatenate %87, %90, %91 in 0 : vector<1x128xf32>, vector<1x128xf32>, vector<6x128xf32> -> vector<8x128xf32>
    %c0_99 = arith.constant 0 : index
    %c0_100 = arith.constant 0 : index
    %c0_101 = arith.constant 0 : index
    %93 = vector.load %arg7[%c0_99, %c0_100, %c0_101] : memref<1x8x128xf32, #tpu.memory_space<vmem>>, vector<1x8x128xf32>
    %94 = vector.shape_cast %93 : vector<1x8x128xf32> to vector<8x128xf32>
    %95 = vector.shape_cast %92 : vector<8x128xf32> to vector<1x8x128xf32>
    tpu.vector_store %arg7[%c0_99, %c0_100, %c0_101], %95 {strides = array<i32>} : memref<1x8x128xf32, #tpu.memory_space<vmem>>, vector<1x8x128xf32>,
    return
  }
  func.func @transform_0(%arg0: i32) -> (i32, i32, i32, i32) {
    %c0_i32 = arith.constant 0 : i32
    %c0_i32_0 = arith.constant 0 : i32
    %c0_i32_1 = arith.constant 0 : i32
    %c0_i32_2 = arith.constant 0 : i32
    return %arg0, %c0_i32, %c0_i32_0, %c0_i32_1 : i32, i32, i32, i32
  }
  func.func @transform_1(%arg0: i32) -> (i32, i32) {
    %c0_i32 = arith.constant 0 : i32
    %c0_i32_0 = arith.constant 0 : i32
    %c0_i32_1 = arith.constant 0 : i32
    return %c0_i32, %c0_i32_0 : i32, i32
  }
  func.func @transform_2(%arg0: i32) -> (i32, i32) {
    %c0_i32 = arith.constant 0 : i32
    %c0_i32_0 = arith.constant 0 : i32
    %c0_i32_1 = arith.constant 0 : i32
    return %c0_i32, %c0_i32_0 : i32, i32
  }
  func.func @transform_3(%arg0: i32) -> (i32, i32, i32, i32) {
    %c0_i32 = arith.constant 0 : i32
    %c0_i32_0 = arith.constant 0 : i32
    %c0_i32_1 = arith.constant 0 : i32
    %c0_i32_2 = arith.constant 0 : i32
    %c0_i32_3 = arith.constant 0 : i32
    return %c0_i32, %c0_i32_0, %c0_i32_1, %c0_i32_2 : i32, i32, i32, i32
  }
  func.func @transform_4(%arg0: i32) -> (i32, i32) {
    %c0_i32 = arith.constant 0 : i32
    %c0_i32_0 = arith.constant 0 : i32
    %c0_i32_1 = arith.constant 0 : i32
    return %c0_i32, %c0_i32_0 : i32, i32
  }
  func.func @transform_5(%arg0: i32) -> (i32, i32, i32, i32) {
    %c0_i32 = arith.constant 0 : i32
    %c0_i32_0 = arith.constant 0 : i32
    %c0_i32_1 = arith.constant 0 : i32
    %c0_i32_2 = arith.constant 0 : i32
    return %arg0, %c0_i32, %c0_i32_0, %c0_i32_1 : i32, i32, i32, i32
  }
  func.func @transform_6(%arg0: i32) -> (i32, i32, i32) {
    %c0_i32 = arith.constant 0 : i32
    %c0_i32_0 = arith.constant 0 : i32
    %c0_i32_1 = arith.constant 0 : i32
    return %arg0, %c0_i32, %c0_i32_0 : i32, i32, i32
  }
}

module attributes {stable_mosaic.version = 11 : i64} {
  func.func @_final_resize_kernel(%arg0: i32, %arg1: memref<512x128xbf16, #tpu.memory_space<vmem>>, %arg2: memref<1x128xf32, #tpu.memory_space<vmem>>, %arg3: memref<1x128xf32, #tpu.memory_space<vmem>>, %arg4: memref<128x128xbf16, #tpu.memory_space<vmem>>, %arg5: memref<1x128xf32, #tpu.memory_space<vmem>>, %arg6: memref<512x128xf32, #tpu.memory_space<vmem>>, %arg7: memref<128x128xbf16, #tpu.memory_space<vmem>>, %arg8: memref<1x128xf32, #tpu.memory_space<vmem>>, %arg9: memref<512x128xf32, #tpu.memory_space<vmem>>) attributes {dimension_semantics = [#tpu.dimension_semantics<parallel>], iteration_bounds = array<i64: 1>, scalar_prefetch = 0 : i64, scratch_operands = 0 : i64, tpu.core_type = #tpu.core_type<tc>, window_params = [{transform_indices = @transform_0, window_bounds = array<i64: 512, 128>}, {pipeline_mode = #tpu.pipeline_mode<synchronous>, transform_indices = @transform_1, window_bounds = array<i64: 1, 128>}, {pipeline_mode = #tpu.pipeline_mode<synchronous>, transform_indices = @transform_2, window_bounds = array<i64: 1, 128>}, {pipeline_mode = #tpu.pipeline_mode<synchronous>, transform_indices = @transform_3, window_bounds = array<i64: 128, 128>}, {pipeline_mode = #tpu.pipeline_mode<synchronous>, transform_indices = @transform_4, window_bounds = array<i64: 1, 128>}, {transform_indices = @transform_5, window_bounds = array<i64: 512, 128>}, {pipeline_mode = #tpu.pipeline_mode<synchronous>, transform_indices = @transform_6, window_bounds = array<i64: 128, 128>}, {pipeline_mode = #tpu.pipeline_mode<synchronous>, transform_indices = @transform_7, window_bounds = array<i64: 1, 128>}, {transform_indices = @transform_8, window_bounds = array<i64: 512, 128>}]} {
    %c0 = arith.constant 0 : index
    %c0_0 = arith.constant 0 : index
    %0 = vector.load %arg1[%c0, %c0_0] : memref<512x128xbf16, #tpu.memory_space<vmem>>, vector<512x128xbf16>
    %1 = arith.extf %0 : vector<512x128xbf16> to vector<512x128xf32>
    %c0_1 = arith.constant 0 : index
    %c0_2 = arith.constant 0 : index
    %2 = vector.load %arg2[%c0_1, %c0_2] : memref<1x128xf32, #tpu.memory_space<vmem>>, vector<1x128xf32>
    %3 = vector.broadcast %2 : vector<1x128xf32> to vector<512x128xf32>
    %4 = arith.mulf %1, %3 : vector<512x128xf32>
    %c0_3 = arith.constant 0 : index
    %c0_4 = arith.constant 0 : index
    %5 = vector.load %arg3[%c0_3, %c0_4] : memref<1x128xf32, #tpu.memory_space<vmem>>, vector<1x128xf32>
    %6 = vector.broadcast %5 : vector<1x128xf32> to vector<512x128xf32>
    %7 = arith.addf %4, %6 : vector<512x128xf32>
    %cst = arith.constant 0.000000e+00 : f32
    %8 = vector.broadcast %cst : f32 to vector<512x128xf32>
    %9 = arith.maximumf %7, %8 : vector<512x128xf32>
    %10 = arith.truncf %9 : vector<512x128xf32> to vector<512x128xbf16>
    %c0_5 = arith.constant 0 : index
    %c0_6 = arith.constant 0 : index
    %11 = vector.load %arg4[%c0_5, %c0_6] : memref<128x128xbf16, #tpu.memory_space<vmem>>, vector<128x128xbf16>
    %cst_7 = arith.constant dense<0.000000e+00> : vector<512x128xf32>
    %12 = tpu.matmul %10, %11, %cst_7 {dimension_numbers = #tpu.dot_dimension_numbers<[1], [0], [0], [1], [0, 0, 1, 1], [], []>} : vector<512x128xbf16>, vector<128x128xbf16>, vector<512x128xf32> -> vector<512x128xf32>
    %c0_8 = arith.constant 0 : index
    %c0_9 = arith.constant 0 : index
    %13 = vector.load %arg5[%c0_8, %c0_9] : memref<1x128xf32, #tpu.memory_space<vmem>>, vector<1x128xf32>
    %14 = vector.broadcast %13 : vector<1x128xf32> to vector<512x128xf32>
    %15 = arith.addf %12, %14 : vector<512x128xf32>
    %c0_10 = arith.constant 0 : index
    %c0_11 = arith.constant 0 : index
    %16 = vector.load %arg6[%c0_10, %c0_11] : memref<512x128xf32, #tpu.memory_space<vmem>>, vector<512x128xf32>
    %17 = arith.truncf %16 : vector<512x128xf32> to vector<512x128xbf16>
    %c0_12 = arith.constant 0 : index
    %c0_13 = arith.constant 0 : index
    %18 = vector.load %arg7[%c0_12, %c0_13] : memref<128x128xbf16, #tpu.memory_space<vmem>>, vector<128x128xbf16>
    %cst_14 = arith.constant dense<0.000000e+00> : vector<512x128xf32>
    %19 = tpu.matmul %17, %18, %cst_14 {dimension_numbers = #tpu.dot_dimension_numbers<[1], [0], [0], [1], [0, 0, 1, 1], [], []>} : vector<512x128xbf16>, vector<128x128xbf16>, vector<512x128xf32> -> vector<512x128xf32>
    %c0_15 = arith.constant 0 : index
    %c0_16 = arith.constant 0 : index
    %20 = vector.load %arg8[%c0_15, %c0_16] : memref<1x128xf32, #tpu.memory_space<vmem>>, vector<1x128xf32>
    %21 = vector.broadcast %20 : vector<1x128xf32> to vector<512x128xf32>
    %22 = arith.addf %19, %21 : vector<512x128xf32>
    %23 = arith.addf %15, %22 : vector<512x128xf32>
    %c0_17 = arith.constant 0 : index
    %c0_18 = arith.constant 0 : index
    %24 = vector.load %arg9[%c0_17, %c0_18] : memref<512x128xf32, #tpu.memory_space<vmem>>, vector<512x128xf32>
    tpu.vector_store %arg9[%c0_17, %c0_18], %23 {strides = array<i32>} : memref<512x128xf32, #tpu.memory_space<vmem>>, vector<512x128xf32>,
    return
  }
  func.func @transform_0(%arg0: i32) -> (i32, i32) {
    %c0_i32 = arith.constant 0 : i32
    %c0_i32_0 = arith.constant 0 : i32
    return %arg0, %c0_i32 : i32, i32
  }
  func.func @transform_1(%arg0: i32) -> (i32, i32) {
    %c0_i32 = arith.constant 0 : i32
    %c0_i32_0 = arith.constant 0 : i32
    %c0_i32_1 = arith.constant 0 : i32
    return %c0_i32, %c0_i32_0 : i32, i32
  }
  func.func @transform_2(%arg0: i32) -> (i32, i32) {
    %c0_i32 = arith.constant 0 : i32
    %c0_i32_0 = arith.constant 0 : i32
    %c0_i32_1 = arith.constant 0 : i32
    return %c0_i32, %c0_i32_0 : i32, i32
  }
  func.func @transform_3(%arg0: i32) -> (i32, i32) {
    %c0_i32 = arith.constant 0 : i32
    %c0_i32_0 = arith.constant 0 : i32
    %c0_i32_1 = arith.constant 0 : i32
    return %c0_i32, %c0_i32_0 : i32, i32
  }
  func.func @transform_4(%arg0: i32) -> (i32, i32) {
    %c0_i32 = arith.constant 0 : i32
    %c0_i32_0 = arith.constant 0 : i32
    %c0_i32_1 = arith.constant 0 : i32
    return %c0_i32, %c0_i32_0 : i32, i32
  }
  func.func @transform_5(%arg0: i32) -> (i32, i32) {
    %c0_i32 = arith.constant 0 : i32
    %c0_i32_0 = arith.constant 0 : i32
    return %arg0, %c0_i32 : i32, i32
  }
  func.func @transform_6(%arg0: i32) -> (i32, i32) {
    %c0_i32 = arith.constant 0 : i32
    %c0_i32_0 = arith.constant 0 : i32
    %c0_i32_1 = arith.constant 0 : i32
    return %c0_i32, %c0_i32_0 : i32, i32
  }
  func.func @transform_7(%arg0: i32) -> (i32, i32) {
    %c0_i32 = arith.constant 0 : i32
    %c0_i32_0 = arith.constant 0 : i32
    %c0_i32_1 = arith.constant 0 : i32
    return %c0_i32, %c0_i32_0 : i32, i32
  }
  func.func @transform_8(%arg0: i32) -> (i32, i32) {
    %c0_i32 = arith.constant 0 : i32
    %c0_i32_0 = arith.constant 0 : i32
    return %arg0, %c0_i32 : i32, i32
  }
}

</mosaic_0001>

<llo_original>
// kernel: grouped_conv_block_forward.4
$region0: #{grouped_conv_block_forward.4}
  #allocation0 [shape = 'u32[]', space=smem, size = 0x4, offset = 0x4, fixed_abs, tag = 'smem constant byte address 0x4 - core index']
  #allocation1 [shape = 'u32[144,128]{1,0:T(1,128)}', space=vmem, size = 0x12000, scoped, tag = 'internal scratch']
  %s0 = inlined_call_operand.vmem [shape: f32[512,128], index: 0, kind: input, shape index: {}]
  %s1 = inlined_call_operand.vmem [shape: f32[1,8,128], index: 1, kind: output, shape index: {}]
  %s2 = sld [smem:[#allocation0]]
  $region14: #{grouped_conv_block_forward.4} parent=0
    _
  %s4 = ssub.s32 1, %s2
  %s5 = scalar_select 0, %s4, %s2
  // Predicated region
  $region2: #{grouped_conv_block_forward.4} parent=0 // pred_check
    _
  $region3: #{grouped_conv_block_forward.4} parent=0 // pred_check_branch
    %7 = sbr.rel (0) target = $region5
  $region4: #{grouped_conv_block_forward.4} parent=0 // pred_region
    _
  $region5: #{grouped_conv_block_forward.4} parent=0 // pred_fallthru
    _
  %v8 = vld [vmem:[%s0] sm:$0xff]
  %v9 = vld [vmem:[%s0 + $0x8] sm:$0xff]
  %v10 = vld [vmem:[%s0 + $0x10] sm:$0xff]
  %v11 = vld [vmem:[%s0 + $0x18] sm:$0xff]
  %v12 = vld [vmem:[%s0 + $0x20] sm:$0xff]
  %v13 = vld [vmem:[%s0 + $0x28] sm:$0xff]
  %v14 = vld [vmem:[%s0 + $0x30] sm:$0xff]
  %v15 = vld [vmem:[%s0 + $0x38] sm:$0xff]
  %v16 = vld [vmem:[%s0 + $0x40] sm:$0xff]
  %v17 = vld [vmem:[%s0 + $0x48] sm:$0xff]
  %v18 = vld [vmem:[%s0 + $0x50] sm:$0xff]
  %v19 = vld [vmem:[%s0 + $0x58] sm:$0xff]
  %v20 = vld [vmem:[%s0 + $0x60] sm:$0xff]
  %v21 = vld [vmem:[%s0 + $0x68] sm:$0xff]
  %v22 = vld [vmem:[%s0 + $0x70] sm:$0xff]
  %v23 = vld [vmem:[%s0 + $0x78] sm:$0xff]
  %v24 = vld [vmem:[%s0 + $0x80] sm:$0xff]
  %v25 = vld [vmem:[%s0 + $0x88] sm:$0xff]
  %v26 = vld [vmem:[%s0 + $0x90] sm:$0xff]
  %v27 = vld [vmem:[%s0 + $0x98] sm:$0xff]
  %v28 = vld [vmem:[%s0 + $0xa0] sm:$0xff]
  %v29 = vld [vmem:[%s0 + $0xa8] sm:$0xff]
  %v30 = vld [vmem:[%s0 + $0xb0] sm:$0xff]
  %v31 = vld [vmem:[%s0 + $0xb8] sm:$0xff]
  %v32 = vld [vmem:[%s0 + $0xc0] sm:$0xff]
  %v33 = vld [vmem:[%s0 + $0xc8] sm:$0xff]
  %v34 = vld [vmem:[%s0 + $0xd0] sm:$0xff]
  %v35 = vld [vmem:[%s0 + $0xd8] sm:$0xff]
  %v36 = vld [vmem:[%s0 + $0xe0] sm:$0xff]
  %v37 = vld [vmem:[%s0 + $0xe8] sm:$0xff]
  %v38 = vld [vmem:[%s0 + $0xf0] sm:$0xff]
  %v39 = vld [vmem:[%s0 + $0xf8] sm:$0xff]
  %v40 = vld [vmem:[%s0 + $0x100] sm:$0xff]
  %v41 = vld [vmem:[%s0 + $0x108] sm:$0xff]
  %v42 = vld [vmem:[%s0 + $0x110] sm:$0xff]
  %v43 = vld [vmem:[%s0 + $0x118] sm:$0xff]
  %v44 = vld [vmem:[%s0 + $0x120] sm:$0xff]
  %v45 = vld [vmem:[%s0 + $0x128] sm:$0xff]
  %v46 = vld [vmem:[%s0 + $0x130] sm:$0xff]
  %v47 = vld [vmem:[%s0 + $0x138] sm:$0xff]
  %v48 = vld [vmem:[%s0 + $0x140] sm:$0xff]
  %v49 = vld [vmem:[%s0 + $0x148] sm:$0xff]
  %v50 = vld [vmem:[%s0 + $0x150] sm:$0xff]
  %v51 = vld [vmem:[%s0 + $0x158] sm:$0xff]
  %v52 = vld [vmem:[%s0 + $0x160] sm:$0xff]
  %v53 = vld [vmem:[%s0 + $0x168] sm:$0xff]
  %v54 = vld [vmem:[%s0 + $0x170] sm:$0xff]
  %v55 = vld [vmem:[%s0 + $0x178] sm:$0xff]
  %v56 = vld [vmem:[%s0 + $0x180] sm:$0xff]
  %v57 = vld [vmem:[%s0 + $0x188] sm:$0xff]
  %v58 = vld [vmem:[%s0 + $0x190] sm:$0xff]
  %v59 = vld [vmem:[%s0 + $0x198] sm:$0xff]
  %v60 = vld [vmem:[%s0 + $0x1a0] sm:$0xff]
  %v61 = vld [vmem:[%s0 + $0x1a8] sm:$0xff]
  %v62 = vld [vmem:[%s0 + $0x1b0] sm:$0xff]
  %v63 = vld [vmem:[%s0 + $0x1b8] sm:$0xff]
  %v64 = vld [vmem:[%s0 + $0x1c0] sm:$0xff]
  %v65 = vld [vmem:[%s0 + $0x1c8] sm:$0xff]
  %v66 = vld [vmem:[%s0 + $0x1d0] sm:$0xff]
  %v67 = vld [vmem:[%s0 + $0x1d8] sm:$0xff]
  %v68 = vld [vmem:[%s0 + $0x1e0] sm:$0xff]
  %v69 = vld [vmem:[%s0 + $0x1e8] sm:$0xff]
  %v70 = vld [vmem:[%s0 + $0x1f0] sm:$0xff]
  %v71 = vld [vmem:[%s0 + $0x1f8] sm:$0xff]
  %v72 = vadd.f32 %v8, %v9
  %v73 = vadd.f32 %v72, %v10
  %v74 = vadd.f32 %v73, %v11
  %v75 = vadd.f32 %v74, %v12
  %v76 = vadd.f32 %v75, %v13
  %v77 = vadd.f32 %v76, %v14
  %v78 = vadd.f32 %v77, %v15
  %v79 = vadd.f32 %v78, %v16
  %v80 = vadd.f32 %v79, %v17
  %v81 = vadd.f32 %v80, %v18
  %v82 = vadd.f32 %v81, %v19
  %v83 = vadd.f32 %v82, %v20
  %v84 = vadd.f32 %v83, %v21
  %v85 = vadd.f32 %v84, %v22
  %v86 = vadd.f32 %v85, %v23
  %v87 = vadd.f32 %v86, %v24
  %v88 = vadd.f32 %v87, %v25
  %v89 = vadd.f32 %v88, %v26
  %v90 = vadd.f32 %v89, %v27
  %v91 = vadd.f32 %v90, %v28
  %v92 = vadd.f32 %v91, %v29
  %v93 = vadd.f32 %v92, %v30
  %v94 = vadd.f32 %v93, %v31
  %v95 = vadd.f32 %v94, %v32
  %v96 = vadd.f32 %v95, %v33
  %v97 = vadd.f32 %v96, %v34
  %v98 = vadd.f32 %v97, %v35
  %v99 = vadd.f32 %v98, %v36
  %v100 = vadd.f32 %v99, %v37
  %v101 = vadd.f32 %v100, %v38
  %v102 = vadd.f32 %v101, %v39
  %v103 = vadd.f32 %v102, %v40
  %v104 = vadd.f32 %v103, %v41
  %v105 = vadd.f32 %v104, %v42
  %v106 = vadd.f32 %v105, %v43
  %v107 = vadd.f32 %v106, %v44
  %v108 = vadd.f32 %v107, %v45
  %v109 = vadd.f32 %v108, %v46
  %v110 = vadd.f32 %v109, %v47
  %v111 = vadd.f32 %v110, %v48
  %v112 = vadd.f32 %v111, %v49
  %v113 = vadd.f32 %v112, %v50
  %v114 = vadd.f32 %v113, %v51
  %v115 = vadd.f32 %v114, %v52
  %v116 = vadd.f32 %v115, %v53
  %v117 = vadd.f32 %v116, %v54
  %v118 = vadd.f32 %v117, %v55
  %v119 = vadd.f32 %v118, %v56
  %v120 = vadd.f32 %v119, %v57
  %v121 = vadd.f32 %v120, %v58
  %v122 = vadd.f32 %v121, %v59
  %v123 = vadd.f32 %v122, %v60
  %v124 = vadd.f32 %v123, %v61
  %v125 = vadd.f32 %v124, %v62
  %v126 = vadd.f32 %v125, %v63
  %v127 = vadd.f32 %v126, %v64
  %v128 = vadd.f32 %v127, %v65
  %v129 = vadd.f32 %v128, %v66
  %v130 = vadd.f32 %v129, %v67
  %v131 = vadd.f32 %v130, %v68
  %v132 = vadd.f32 %v131, %v69
  %v133 = vadd.f32 %v132, %v70
  %v134 = vadd.f32 %v133, %v71
  %v135 = vrot.slane %v134, 4
  %v136 = vadd.f32 %v134, %v135
  %v137 = vrot.slane %v136, 2
  %v138 = vadd.f32 %v136, %v137
  %v139 = vrot.slane %v138, 1
  %v140 = vadd.f32 %v138, %v139
  %v141 = vmul.f32 %v8, %v8
  %v142 = vmul.f32 %v9, %v9
  %v143 = vmul.f32 %v10, %v10
  %v144 = vmul.f32 %v11, %v11
  %v145 = vmul.f32 %v12, %v12
  %v146 = vmul.f32 %v13, %v13
  %v147 = vmul.f32 %v14, %v14
  %v148 = vmul.f32 %v15, %v15
  %v149 = vmul.f32 %v16, %v16
  %v150 = vmul.f32 %v17, %v17
  %v151 = vmul.f32 %v18, %v18
  %v152 = vmul.f32 %v19, %v19
  %v153 = vmul.f32 %v20, %v20
  %v154 = vmul.f32 %v21, %v21
  %v155 = vmul.f32 %v22, %v22
  %v156 = vmul.f32 %v23, %v23
  %v157 = vmul.f32 %v24, %v24
  %v158 = vmul.f32 %v25, %v25
  %v159 = vmul.f32 %v26, %v26
  %v160 = vmul.f32 %v27, %v27
  %v161 = vmul.f32 %v28, %v28
  %v162 = vmul.f32 %v29, %v29
  %v163 = vmul.f32 %v30, %v30
  %v164 = vmul.f32 %v31, %v31
  %v165 = vmul.f32 %v32, %v32
  %v166 = vmul.f32 %v33, %v33
  %v167 = vmul.f32 %v34, %v34
  %v168 = vmul.f32 %v35, %v35
  %v169 = vmul.f32 %v36, %v36
  %v170 = vmul.f32 %v37, %v37
  %v171 = vmul.f32 %v38, %v38
  %v172 = vmul.f32 %v39, %v39
  %v173 = vmul.f32 %v40, %v40
  %v174 = vmul.f32 %v41, %v41
  %v175 = vmul.f32 %v42, %v42
  %v176 = vmul.f32 %v43, %v43
  %v177 = vmul.f32 %v44, %v44
  %v178 = vmul.f32 %v45, %v45
  %v179 = vmul.f32 %v46, %v46
  %v180 = vmul.f32 %v47, %v47
  %v181 = vmul.f32 %v48, %v48
  %v182 = vmul.f32 %v49, %v49
  %v183 = vmul.f32 %v50, %v50
  %v184 = vmul.f32 %v51, %v51
  %v185 = vmul.f32 %v52, %v52
  %v186 = vmul.f32 %v53, %v53
  %v187 = vmul.f32 %v54, %v54
  %v188 = vmul.f32 %v55, %v55
  %v189 = vmul.f32 %v56, %v56
  %v190 = vmul.f32 %v57, %v57
  %v191 = vmul.f32 %v58, %v58
  %v192 = vmul.f32 %v59, %v59
  %v193 = vmul.f32 %v60, %v60
  %v194 = vmul.f32 %v61, %v61
  %v195 = vmul.f32 %v62, %v62
  %v196 = vmul.f32 %v63, %v63
  %v197 = vmul.f32 %v64, %v64
  %v198 = vmul.f32 %v65, %v65
  %v199 = vmul.f32 %v66, %v66
  %v200 = vmul.f32 %v67, %v67
  %v201 = vmul.f32 %v68, %v68
  %v202 = vmul.f32 %v69, %v69
  %v203 = vmul.f32 %v70, %v70
  %v204 = vmul.f32 %v71, %v71
  %v205 = vadd.f32 %v141, %v142
  %v206 = vadd.f32 %v205, %v143
  %v207 = vadd.f32 %v206, %v144
  %v208 = vadd.f32 %v207, %v145
  %v209 = vadd.f32 %v208, %v146
  %v210 = vadd.f32 %v209, %v147
  %v211 = vadd.f32 %v210, %v148
  %v212 = vadd.f32 %v211, %v149
  %v213 = vadd.f32 %v212, %v150
  %v214 = vadd.f32 %v213, %v151
  %v215 = vadd.f32 %v214, %v152
  %v216 = vadd.f32 %v215, %v153
  %v217 = vadd.f32 %v216, %v154
  %v218 = vadd.f32 %v217, %v155
  %v219 = vadd.f32 %v218, %v156
  %v220 = vadd.f32 %v219, %v157
  %v221 = vadd.f32 %v220, %v158
  %v222 = vadd.f32 %v221, %v159
  %v223 = vadd.f32 %v222, %v160
  %v224 = vadd.f32 %v223, %v161
  %v225 = vadd.f32 %v224, %v162
  %v226 = vadd.f32 %v225, %v163
  %v227 = vadd.f32 %v226, %v164
  %v228 = vadd.f32 %v227, %v165
  %v229 = vadd.f32 %v228, %v166
  %v230 = vadd.f32 %v229, %v167
  %v231 = vadd.f32 %v230, %v168
  %v232 = vadd.f32 %v231, %v169
  %v233 = vadd.f32 %v232, %v170
  %v234 = vadd.f32 %v233, %v171
  %v235 = vadd.f32 %v234, %v172
  %v236 = vadd.f32 %v235, %v173
  %v237 = vadd.f32 %v236, %v174
  %v238 = vadd.f32 %v237, %v175
  %v239 = vadd.f32 %v238, %v176
  %v240 = vadd.f32 %v239, %v177
  %v241 = vadd.f32 %v240, %v178
  %v242 = vadd.f32 %v241, %v179
  %v243 = vadd.f32 %v242, %v180
  %v244 = vadd.f32 %v243, %v181
  %v245 = vadd.f32 %v244, %v182
  %v246 = vadd.f32 %v245, %v183
  %v247 = vadd.f32 %v246, %v184
  %v248 = vadd.f32 %v247, %v185
  %v249 = vadd.f32 %v248, %v186
  %v250 = vadd.f32 %v249, %v187
  %v251 = vadd.f32 %v250, %v188
  %v252 = vadd.f32 %v251, %v189
  %v253 = vadd.f32 %v252, %v190
  %v254 = vadd.f32 %v253, %v191
  %v255 = vadd.f32 %v254, %v192
  %v256 = vadd.f32 %v255, %v193
  %v257 = vadd.f32 %v256, %v194
  %v258 = vadd.f32 %v257, %v195
  %v259 = vadd.f32 %v258, %v196
  %v260 = vadd.f32 %v259, %v197
  %v261 = vadd.f32 %v260, %v198
  %v262 = vadd.f32 %v261, %v199
  %v263 = vadd.f32 %v262, %v200
  %v264 = vadd.f32 %v263, %v201
  %v265 = vadd.f32 %v264, %v202
  %v266 = vadd.f32 %v265, %v203
  %v267 = vadd.f32 %v266, %v204
  %v268 = vrot.slane %v267, 4
  %v269 = vadd.f32 %v267, %v268
  %v270 = vrot.slane %v269, 2
  %v271 = vadd.f32 %v269, %v270
  %v272 = vrot.slane %v271, 1
  %v273 = vadd.f32 %v271, %v272
  %vm274 = vcmask 1040384
  %v275 = vsel %vm274, %v140, %v273
  %vm276 = vcmask 1041408
  %v277 = vsel %vm276, %v275, 0.0
  %278 = vst [vmem:[%s1] sm:$0xff] %v277
  // Predicated region
  $region6: #{grouped_conv_block_forward.4} parent=0 // pred_check
    _
  $region7: #{grouped_conv_block_forward.4} parent=0 // pred_check_branch
    %280 = sbr.rel (0) target = $region9
  $region8: #{grouped_conv_block_forward.4} parent=0 // pred_region
    _
  $region9: #{grouped_conv_block_forward.4} parent=0 // pred_fallthru
    _
  // Predicated region
  $region10: #{grouped_conv_block_forward.4} parent=0 // pred_check
    _
  $region11: #{grouped_conv_block_forward.4} parent=0 // pred_check_branch
    %282 = sbr.rel (0) target = $region13
  $region12: #{grouped_conv_block_forward.4} parent=0 // pred_region
    _
  $region13: #{grouped_conv_block_forward.4} parent=0 // pred_fallthru
    _

// kernel: grouped_conv_block_forward.5
$region0: #{grouped_conv_block_forward.5}
  #allocation0 [shape = 'u32[]', space=smem, size = 0x4, offset = 0x4, fixed_abs, tag = 'smem constant byte address 0x4 - core index']
  #allocation1 [shape = 'u32[144,128]{1,0:T(1,128)}', space=vmem, size = 0x12000, scoped, tag = 'internal scratch']
  %s0 = inlined_call_operand.vmem [shape: f32[512,128], index: 0, kind: input, shape index: {}]
  %s1 = inlined_call_operand.vmem [shape: f32[1,128], index: 1, kind: input, shape index: {}]
  %s2 = inlined_call_operand.vmem [shape: f32[1,128], index: 2, kind: input, shape index: {}]
  %s3 = inlined_call_operand.vmem [shape: bf16[128,128], index: 3, kind: input, shape index: {}]
  %s4 = inlined_call_operand.vmem [shape: f32[1,128], index: 4, kind: input, shape index: {}]
  %s5 = inlined_call_operand.vmem [shape: bf16[512,128], index: 5, kind: output, shape index: {0}]
  %s6 = inlined_call_operand.vmem [shape: f32[1,8,128], index: 6, kind: output, shape index: {1}]
  %7 = xla_tuple %s5, %s6
  %s8 = sld [smem:[#allocation0]]
  $region38: #{grouped_conv_block_forward.5} parent=0
    _
  %s10 = ssub.s32 1, %s8
  %s11 = scalar_select 0, %s10, %s8
  // Predicated region
  $region2: #{grouped_conv_block_forward.5} parent=0 // pred_check
    _
  $region3: #{grouped_conv_block_forward.5} parent=0 // pred_check_branch
    %13 = sbr.rel (0) target = $region5
  $region4: #{grouped_conv_block_forward.5} parent=0 // pred_region
    _
  $region5: #{grouped_conv_block_forward.5} parent=0 // pred_fallthru
    _
  // Predicated region
  $region6: #{grouped_conv_block_forward.5} parent=0 // pred_check
    _
  $region7: #{grouped_conv_block_forward.5} parent=0 // pred_check_branch
    %15 = sbr.rel (0) target = $region9
  $region8: #{grouped_conv_block_forward.5} parent=0 // pred_region
    _
  $region9: #{grouped_conv_block_forward.5} parent=0 // pred_fallthru
    _
  // Predicated region
  $region10: #{grouped_conv_block_forward.5} parent=0 // pred_check
    _
  $region11: #{grouped_conv_block_forward.5} parent=0 // pred_check_branch
    %17 = sbr.rel (0) target = $region13
  $region12: #{grouped_conv_block_forward.5} parent=0 // pred_region
    _
  $region13: #{grouped_conv_block_forward.5} parent=0 // pred_fallthru
    _
  // Predicated region
  $region14: #{grouped_conv_block_forward.5} parent=0 // pred_check
    _
  $region15: #{grouped_conv_block_forward.5} parent=0 // pred_check_branch
    %19 = sbr.rel (0) target = $region17
  $region16: #{grouped_conv_block_forward.5} parent=0 // pred_region
    _
  $region17: #{grouped_conv_block_forward.5} parent=0 // pred_fallthru
    _
  // Predicated region
  $region18: #{grouped_conv_block_forward.5} parent=0 // pred_check
    _
  $region19: #{grouped_conv_block_forward.5} parent=0 // pred_check_branch
    %21 = sbr.rel (0) target = $region21
  $region20: #{grouped_conv_block_forward.5} parent=0 // pred_region
    _
  $region21: #{grouped_conv_block_forward.5} parent=0 // pred_fallthru
    _
  %v23 = vld [vmem:[%s0] sm:$0xff]
  %v24 = vld [vmem:[%s0 + $0x8] sm:$0xff]
  %v25 = vld [vmem:[%s0 + $0x10] sm:$0xff]
  %v26 = vld [vmem:[%s0 + $0x18] sm:$0xff]
  %v27 = vld [vmem:[%s0 + $0x20] sm:$0xff]
  %v28 = vld [vmem:[%s0 + $0x28] sm:$0xff]
  %v29 = vld [vmem:[%s0 + $0x30] sm:$0xff]
  %v30 = vld [vmem:[%s0 + $0x38] sm:$0xff]
  %v31 = vld [vmem:[%s0 + $0x40] sm:$0xff]
  %v32 = vld [vmem:[%s0 + $0x48] sm:$0xff]
  %v33 = vld [vmem:[%s0 + $0x50] sm:$0xff]
  %v34 = vld [vmem:[%s0 + $0x58] sm:$0xff]
  %v35 = vld [vmem:[%s0 + $0x60] sm:$0xff]
  %v36 = vld [vmem:[%s0 + $0x68] sm:$0xff]
  %v37 = vld [vmem:[%s0 + $0x70] sm:$0xff]
  %v38 = vld [vmem:[%s0 + $0x78] sm:$0xff]
  %v39 = vld [vmem:[%s0 + $0x80] sm:$0xff]
  %v40 = vld [vmem:[%s0 + $0x88] sm:$0xff]
  %v41 = vld [vmem:[%s0 + $0x90] sm:$0xff]
  %v42 = vld [vmem:[%s0 + $0x98] sm:$0xff]
  %v43 = vld [vmem:[%s0 + $0xa0] sm:$0xff]
  %v44 = vld [vmem:[%s0 + $0xa8] sm:$0xff]
  %v45 = vld [vmem:[%s0 + $0xb0] sm:$0xff]
  %v46 = vld [vmem:[%s0 + $0xb8] sm:$0xff]
  %v47 = vld [vmem:[%s0 + $0xc0] sm:$0xff]
  %v48 = vld [vmem:[%s0 + $0xc8] sm:$0xff]
  %v49 = vld [vmem:[%s0 + $0xd0] sm:$0xff]
  %v50 = vld [vmem:[%s0 + $0xd8] sm:$0xff]
  %v51 = vld [vmem:[%s0 + $0xe0] sm:$0xff]
  %v52 = vld [vmem:[%s0 + $0xe8] sm:$0xff]
  %v53 = vld [vmem:[%s0 + $0xf0] sm:$0xff]
  %v54 = vld [vmem:[%s0 + $0xf8] sm:$0xff]
  %v55 = vld [vmem:[%s0 + $0x100] sm:$0xff]
  %v56 = vld [vmem:[%s0 + $0x108] sm:$0xff]
  %v57 = vld [vmem:[%s0 + $0x110] sm:$0xff]
  %v58 = vld [vmem:[%s0 + $0x118] sm:$0xff]
  %v59 = vld [vmem:[%s0 + $0x120] sm:$0xff]
  %v60 = vld [vmem:[%s0 + $0x128] sm:$0xff]
  %v61 = vld [vmem:[%s0 + $0x130] sm:$0xff]
  %v62 = vld [vmem:[%s0 + $0x138] sm:$0xff]
  %v63 = vld [vmem:[%s0 + $0x140] sm:$0xff]
  %v64 = vld [vmem:[%s0 + $0x148] sm:$0xff]
  %v65 = vld [vmem:[%s0 + $0x150] sm:$0xff]
  %v66 = vld [vmem:[%s0 + $0x158] sm:$0xff]
  %v67 = vld [vmem:[%s0 + $0x160] sm:$0xff]
  %v68 = vld [vmem:[%s0 + $0x168] sm:$0xff]
  %v69 = vld [vmem:[%s0 + $0x170] sm:$0xff]
  %v70 = vld [vmem:[%s0 + $0x178] sm:$0xff]
  %v71 = vld [vmem:[%s0 + $0x180] sm:$0xff]
  %v72 = vld [vmem:[%s0 + $0x188] sm:$0xff]
  %v73 = vld [vmem:[%s0 + $0x190] sm:$0xff]
  %v74 = vld [vmem:[%s0 + $0x198] sm:$0xff]
  %v75 = vld [vmem:[%s0 + $0x1a0] sm:$0xff]
  %v76 = vld [vmem:[%s0 + $0x1a8] sm:$0xff]
  %v77 = vld [vmem:[%s0 + $0x1b0] sm:$0xff]
  %v78 = vld [vmem:[%s0 + $0x1b8] sm:$0xff]
  %v79 = vld [vmem:[%s0 + $0x1c0] sm:$0xff]
  %v80 = vld [vmem:[%s0 + $0x1c8] sm:$0xff]
  %v81 = vld [vmem:[%s0 + $0x1d0] sm:$0xff]
  %v82 = vld [vmem:[%s0 + $0x1d8] sm:$0xff]
  %v83 = vld [vmem:[%s0 + $0x1e0] sm:$0xff]
  %v84 = vld [vmem:[%s0 + $0x1e8] sm:$0xff]
  %v85 = vld [vmem:[%s0 + $0x1f0] sm:$0xff]
  %v86 = vld [vmem:[%s0 + $0x1f8] sm:$0xff]
  %v87 = vld [vmem:[%s1] sm:$0x1]
  %v89 = vlaneseq
  %v90 = vshrl.u32 %v89, 7
  %v91 = vsub.s32 0, %v90
  %v92 = vrot.slane %v87, %v91
  %v94 = vmul.f32 %v23, %v92
  %v95 = vmul.f32 %v24, %v92
  %v96 = vmul.f32 %v25, %v92
  %v97 = vmul.f32 %v26, %v92
  %v98 = vmul.f32 %v27, %v92
  %v99 = vmul.f32 %v28, %v92
  %v100 = vmul.f32 %v29, %v92
  %v101 = vmul.f32 %v30, %v92
  %v102 = vmul.f32 %v31, %v92
  %v103 = vmul.f32 %v32, %v92
  %v104 = vmul.f32 %v33, %v92
  %v105 = vmul.f32 %v34, %v92
  %v106 = vmul.f32 %v35, %v92
  %v107 = vmul.f32 %v36, %v92
  %v108 = vmul.f32 %v37, %v92
  %v109 = vmul.f32 %v38, %v92
  %v110 = vmul.f32 %v39, %v92
  %v111 = vmul.f32 %v40, %v92
  %v112 = vmul.f32 %v41, %v92
  %v113 = vmul.f32 %v42, %v92
  %v114 = vmul.f32 %v43, %v92
  %v115 = vmul.f32 %v44, %v92
  %v116 = vmul.f32 %v45, %v92
  %v117 = vmul.f32 %v46, %v92
  %v118 = vmul.f32 %v47, %v92
  %v119 = vmul.f32 %v48, %v92
  %v120 = vmul.f32 %v49, %v92
  %v121 = vmul.f32 %v50, %v92
  %v122 = vmul.f32 %v51, %v92
  %v123 = vmul.f32 %v52, %v92
  %v124 = vmul.f32 %v53, %v92
  %v125 = vmul.f32 %v54, %v92
  %v126 = vmul.f32 %v55, %v92
  %v127 = vmul.f32 %v56, %v92
  %v128 = vmul.f32 %v57, %v92
  %v129 = vmul.f32 %v58, %v92
  %v130 = vmul.f32 %v59, %v92
  %v131 = vmul.f32 %v60, %v92
  %v132 = vmul.f32 %v61, %v92
  %v133 = vmul.f32 %v62, %v92
  %v134 = vmul.f32 %v63, %v92
  %v135 = vmul.f32 %v64, %v92
  %v136 = vmul.f32 %v65, %v92
  %v137 = vmul.f32 %v66, %v92
  %v138 = vmul.f32 %v67, %v92
  %v139 = vmul.f32 %v68, %v92
  %v140 = vmul.f32 %v69, %v92
  %v141 = vmul.f32 %v70, %v92
  %v142 = vmul.f32 %v71, %v92
  %v143 = vmul.f32 %v72, %v92
  %v144 = vmul.f32 %v73, %v92
  %v145 = vmul.f32 %v74, %v92
  %v146 = vmul.f32 %v75, %v92
  %v147 = vmul.f32 %v76, %v92
  %v148 = vmul.f32 %v77, %v92
  %v149 = vmul.f32 %v78, %v92
  %v150 = vmul.f32 %v79, %v92
  %v151 = vmul.f32 %v80, %v92
  %v152 = vmul.f32 %v81, %v92
  %v153 = vmul.f32 %v82, %v92
  %v154 = vmul.f32 %v83, %v92
  %v155 = vmul.f32 %v84, %v92
  %v156 = vmul.f32 %v85, %v92
  %v157 = vmul.f32 %v86, %v92
  %v158 = vld [vmem:[%s2] sm:$0x1]
  %v160 = vlaneseq
  %v161 = vshrl.u32 %v160, 7
  %v162 = vsub.s32 0, %v161
  %v163 = vrot.slane %v158, %v162
  %v165 = vadd.f32 %v94, %v163
  %v166 = vadd.f32 %v95, %v163
  %v167 = vadd.f32 %v96, %v163
  %v168 = vadd.f32 %v97, %v163
  %v169 = vadd.f32 %v98, %v163
  %v170 = vadd.f32 %v99, %v163
  %v171 = vadd.f32 %v100, %v163
  %v172 = vadd.f32 %v101, %v163
  %v173 = vadd.f32 %v102, %v163
  %v174 = vadd.f32 %v103, %v163
  %v175 = vadd.f32 %v104, %v163
  %v176 = vadd.f32 %v105, %v163
  %v177 = vadd.f32 %v106, %v163
  %v178 = vadd.f32 %v107, %v163
  %v179 = vadd.f32 %v108, %v163
  %v180 = vadd.f32 %v109, %v163
  %v181 = vadd.f32 %v110, %v163
  %v182 = vadd.f32 %v111, %v163
  %v183 = vadd.f32 %v112, %v163
  %v184 = vadd.f32 %v113, %v163
  %v185 = vadd.f32 %v114, %v163
  %v186 = vadd.f32 %v115, %v163
  %v187 = vadd.f32 %v116, %v163
  %v188 = vadd.f32 %v117, %v163
  %v189 = vadd.f32 %v118, %v163
  %v190 = vadd.f32 %v119, %v163
  %v191 = vadd.f32 %v120, %v163
  %v192 = vadd.f32 %v121, %v163
  %v193 = vadd.f32 %v122, %v163
  %v194 = vadd.f32 %v123, %v163
  %v195 = vadd.f32 %v124, %v163
  %v196 = vadd.f32 %v125, %v163
  %v197 = vadd.f32 %v126, %v163
  %v198 = vadd.f32 %v127, %v163
  %v199 = vadd.f32 %v128, %v163
  %v200 = vadd.f32 %v129, %v163
  %v201 = vadd.f32 %v130, %v163
  %v202 = vadd.f32 %v131, %v163
  %v203 = vadd.f32 %v132, %v163
  %v204 = vadd.f32 %v133, %v163
  %v205 = vadd.f32 %v134, %v163
  %v206 = vadd.f32 %v135, %v163
  %v207 = vadd.f32 %v136, %v163
  %v208 = vadd.f32 %v137, %v163
  %v209 = vadd.f32 %v138, %v163
  %v210 = vadd.f32 %v139, %v163
  %v211 = vadd.f32 %v140, %v163
  %v212 = vadd.f32 %v141, %v163
  %v213 = vadd.f32 %v142, %v163
  %v214 = vadd.f32 %v143, %v163
  %v215 = vadd.f32 %v144, %v163
  %v216 = vadd.f32 %v145, %v163
  %v217 = vadd.f32 %v146, %v163
  %v218 = vadd.f32 %v147, %v163
  %v219 = vadd.f32 %v148, %v163
  %v220 = vadd.f32 %v149, %v163
  %v221 = vadd.f32 %v150, %v163
  %v222 = vadd.f32 %v151, %v163
  %v223 = vadd.f32 %v152, %v163
  %v224 = vadd.f32 %v153, %v163
  %v225 = vadd.f32 %v154, %v163
  %v226 = vadd.f32 %v155, %v163
  %v227 = vadd.f32 %v156, %v163
  %v228 = vadd.f32 %v157, %v163
  %v229 = vmax.f32 %v165, 0.0
  %v230 = vmax.f32 %v166, 0.0
  %v231 = vmax.f32 %v167, 0.0
  %v232 = vmax.f32 %v168, 0.0
  %v233 = vmax.f32 %v169, 0.0
  %v234 = vmax.f32 %v170, 0.0
  %v235 = vmax.f32 %v171, 0.0
  %v236 = vmax.f32 %v172, 0.0
  %v237 = vmax.f32 %v173, 0.0
  %v238 = vmax.f32 %v174, 0.0
  %v239 = vmax.f32 %v175, 0.0
  %v240 = vmax.f32 %v176, 0.0
  %v241 = vmax.f32 %v177, 0.0
  %v242 = vmax.f32 %v178, 0.0
  %v243 = vmax.f32 %v179, 0.0
  %v244 = vmax.f32 %v180, 0.0
  %v245 = vmax.f32 %v181, 0.0
  %v246 = vmax.f32 %v182, 0.0
  %v247 = vmax.f32 %v183, 0.0
  %v248 = vmax.f32 %v184, 0.0
  %v249 = vmax.f32 %v185, 0.0
  %v250 = vmax.f32 %v186, 0.0
  %v251 = vmax.f32 %v187, 0.0
  %v252 = vmax.f32 %v188, 0.0
  %v253 = vmax.f32 %v189, 0.0
  %v254 = vmax.f32 %v190, 0.0
  %v255 = vmax.f32 %v191, 0.0
  %v256 = vmax.f32 %v192, 0.0
  %v257 = vmax.f32 %v193, 0.0
  %v258 = vmax.f32 %v194, 0.0
  %v259 = vmax.f32 %v195, 0.0
  %v260 = vmax.f32 %v196, 0.0
  %v261 = vmax.f32 %v197, 0.0
  %v262 = vmax.f32 %v198, 0.0
  %v263 = vmax.f32 %v199, 0.0
  %v264 = vmax.f32 %v200, 0.0
  %v265 = vmax.f32 %v201, 0.0
  %v266 = vmax.f32 %v202, 0.0
  %v267 = vmax.f32 %v203, 0.0
  %v268 = vmax.f32 %v204, 0.0
  %v269 = vmax.f32 %v205, 0.0
  %v270 = vmax.f32 %v206, 0.0
  %v271 = vmax.f32 %v207, 0.0
  %v272 = vmax.f32 %v208, 0.0
  %v273 = vmax.f32 %v209, 0.0
  %v274 = vmax.f32 %v210, 0.0
  %v275 = vmax.f32 %v211, 0.0
  %v276 = vmax.f32 %v212, 0.0
  %v277 = vmax.f32 %v213, 0.0
  %v278 = vmax.f32 %v214, 0.0
  %v279 = vmax.f32 %v215, 0.0
  %v280 = vmax.f32 %v216, 0.0
  %v281 = vmax.f32 %v217, 0.0
  %v282 = vmax.f32 %v218, 0.0
  %v283 = vmax.f32 %v219, 0.0
  %v284 = vmax.f32 %v220, 0.0
  %v285 = vmax.f32 %v221, 0.0
  %v286 = vmax.f32 %v222, 0.0
  %v287 = vmax.f32 %v223, 0.0
  %v288 = vmax.f32 %v224, 0.0
  %v289 = vmax.f32 %v225, 0.0
  %v290 = vmax.f32 %v226, 0.0
  %v291 = vmax.f32 %v227, 0.0
  %v292 = vmax.f32 %v228, 0.0
  %v293 = vpack.c.bf16 %v230, %v229
  %v294 = vpack.c.bf16 %v232, %v231
  %v295 = vpack.c.bf16 %v234, %v233
  %v296 = vpack.c.bf16 %v236, %v235
  %v297 = vpack.c.bf16 %v238, %v237
  %v298 = vpack.c.bf16 %v240, %v239
  %v299 = vpack.c.bf16 %v242, %v241
  %v300 = vpack.c.bf16 %v244, %v243
  %v301 = vpack.c.bf16 %v246, %v245
  %v302 = vpack.c.bf16 %v248, %v247
  %v303 = vpack.c.bf16 %v250, %v249
  %v304 = vpack.c.bf16 %v252, %v251
  %v305 = vpack.c.bf16 %v254, %v253
  %v306 = vpack.c.bf16 %v256, %v255
  %v307 = vpack.c.bf16 %v258, %v257
  %v308 = vpack.c.bf16 %v260, %v259
  %v309 = vpack.c.bf16 %v262, %v261
  %v310 = vpack.c.bf16 %v264, %v263
  %v311 = vpack.c.bf16 %v266, %v265
  %v312 = vpack.c.bf16 %v268, %v267
  %v313 = vpack.c.bf16 %v270, %v269
  %v314 = vpack.c.bf16 %v272, %v271
  %v315 = vpack.c.bf16 %v274, %v273
  %v316 = vpack.c.bf16 %v276, %v275
  %v317 = vpack.c.bf16 %v278, %v277
  %v318 = vpack.c.bf16 %v280, %v279
  %v319 = vpack.c.bf16 %v282, %v281
  %v320 = vpack.c.bf16 %v284, %v283
  %v321 = vpack.c.bf16 %v286, %v285
  %v322 = vpack.c.bf16 %v288, %v287
  %v323 = vpack.c.bf16 %v290, %v289
  %v324 = vpack.c.bf16 %v292, %v291
  %v325 = vld [vmem:[%s3] sm:$0xf]
  %v326 = vld [vmem:[%s3 + $0x4] sm:$0xf]
  %v327 = vld [vmem:[%s3 + $0x8] sm:$0xf]
  %v328 = vld [vmem:[%s3 + $0xc] sm:$0xf]
  %v329 = vld [vmem:[%s3 + $0x10] sm:$0xf]
  %v330 = vld [vmem:[%s3 + $0x14] sm:$0xf]
  %v331 = vld [vmem:[%s3 + $0x18] sm:$0xf]
  %v332 = vld [vmem:[%s3 + $0x1c] sm:$0xf]
  %v333 = vld [vmem:[%s3 + $0x20] sm:$0xf]
  %v334 = vld [vmem:[%s3 + $0x24] sm:$0xf]
  %v335 = vld [vmem:[%s3 + $0x28] sm:$0xf]
  %v336 = vld [vmem:[%s3 + $0x2c] sm:$0xf]
  %v337 = vld [vmem:[%s3 + $0x30] sm:$0xf]
  %v338 = vld [vmem:[%s3 + $0x34] sm:$0xf]
  %v339 = vld [vmem:[%s3 + $0x38] sm:$0xf]
  %v340 = vld [vmem:[%s3 + $0x3c] sm:$0xf]
  %v341 = vld [vmem:[%s4] sm:$0x1]
  %v343 = vlaneseq
  %v344 = vshrl.u32 %v343, 7
  %v345 = vsub.s32 0, %v344
  %v346 = vrot.slane %v341, %v345
  %v364 = vunpack.c.l.b16 %v325
  %v365 = vunpack.c.l.b16 %v326
  %v366 = vunpack.c.l.b16 %v327
  %v367 = vunpack.c.l.b16 %v328
  %v368 = vunpack.c.l.b16 %v329
  %v369 = vunpack.c.l.b16 %v330
  %v370 = vunpack.c.l.b16 %v331
  %v371 = vunpack.c.l.b16 %v332
  %v372 = vunpack.c.l.b16 %v333
  %v373 = vunpack.c.l.b16 %v334
  %v374 = vunpack.c.l.b16 %v335
  %v375 = vunpack.c.l.b16 %v336
  %v376 = vunpack.c.l.b16 %v337
  %v377 = vunpack.c.l.b16 %v338
  %v378 = vunpack.c.l.b16 %v339
  %v379 = vunpack.c.l.b16 %v340
  %v380 = vpack.c.b16 %v365, %v364
  %v381 = vpack.c.b16 %v367, %v366
  %v382 = vpack.c.b16 %v369, %v368
  %v383 = vpack.c.b16 %v371, %v370
  %v384 = vpack.c.b16 %v373, %v372
  %v385 = vpack.c.b16 %v375, %v374
  %v386 = vpack.c.b16 %v377, %v376
  %v387 = vpack.c.b16 %v379, %v378
  %396 = vmatprep.subr.bf16.mxu0 0
  %397 = vmatpush1.bf16.msra.mxu0 %v387
  %398 = vmatprep.subr.bf16.mxu0 0
  %399 = vmatpush1.bf16.msra.mxu0 %v386
  %400 = vmatprep.subr.bf16.mxu0 0
  %401 = vmatpush1.bf16.msra.mxu0 %v385
  %402 = vmatprep.subr.bf16.mxu0 0
  %403 = vmatpush1.bf16.msra.mxu0 %v384
  %404 = vmatprep.subr.bf16.mxu0 0
  %405 = vmatpush1.bf16.msra.mxu0 %v383
  %406 = vmatprep.subr.bf16.mxu0 0
  %407 = vmatpush1.bf16.msra.mxu0 %v382
  %408 = vmatprep.subr.bf16.mxu0 0
  %409 = vmatpush1.bf16.msra.mxu0 %v381
  %410 = vmatprep.subr.bf16.mxu0 0
  %411 = vmatpush1.bf16.msra.mxu0 %v380
  %412 = vmatprep.subr.bf16.mxu0 0
  %413 = vmatpush2.bf16.msra.mxu0 0
  %414 = vmatprep.subr.bf16.mxu0 0
  %415 = vmatpush2.bf16.msra.mxu0 0
  %416 = vmatprep.subr.bf16.mxu0 0
  %417 = vmatpush2.bf16.msra.mxu0 0
  %418 = vmatprep.subr.bf16.mxu0 0
  %419 = vmatpush2.bf16.msra.mxu0 0
  %420 = vmatprep.subr.bf16.mxu0 0
  %421 = vmatpush2.bf16.msra.mxu0 0
  %422 = vmatprep.subr.bf16.mxu0 0
  %423 = vmatpush2.bf16.msra.mxu0 0
  %424 = vmatprep.subr.bf16.mxu0 0
  %425 = vmatpush2.bf16.msra.mxu0 0
  %426 = vmatprep.subr.bf16.mxu0 0
  %427 = vmatpush2.bf16.msra.mxu0 0
  %428 = vmatprep.mubr.bf16.mxu0 0
  %429 = vmatmul.mubr.bf16.gmra.mxu0 %v293
  %v430 = vpop.f32.mrf.mxu0
  %v431 = vadd.f32 %v346, %v430
  %v432 = vpop.f32.mrf.mxu0
  %v433 = vpop.f32.mrf.mxu0
  %v434 = vadd.f32 %v346, %v433
  %v435 = vpop.f32.mrf.mxu0
  %436 = vmatprep.mubr.bf16.mxu0 0
  %437 = vmatmul.mubr.bf16.gmra.mxu0 %v294
  %v438 = vpop.f32.mrf.mxu0
  %v439 = vadd.f32 %v346, %v438
  %v440 = vpop.f32.mrf.mxu0
  %v441 = vpop.f32.mrf.mxu0
  %v442 = vadd.f32 %v346, %v441
  %v443 = vpop.f32.mrf.mxu0
  %444 = vmatprep.mubr.bf16.mxu0 0
  %445 = vmatmul.mubr.bf16.gmra.mxu0 %v295
  %v446 = vpop.f32.mrf.mxu0
  %v447 = vadd.f32 %v346, %v446
  %v448 = vpop.f32.mrf.mxu0
  %v449 = vpop.f32.mrf.mxu0
  %v450 = vadd.f32 %v346, %v449
  %v451 = vpop.f32.mrf.mxu0
  %452 = vmatprep.mubr.bf16.mxu0 0
  %453 = vmatmul.mubr.bf16.gmra.mxu0 %v296
  %v454 = vpop.f32.mrf.mxu0
  %v455 = vadd.f32 %v346, %v454
  %v456 = vpop.f32.mrf.mxu0
  %v457 = vpop.f32.mrf.mxu0
  %v458 = vadd.f32 %v346, %v457
  %v459 = vpop.f32.mrf.mxu0
  %460 = vmatprep.mubr.bf16.mxu0 0
  %461 = vmatmul.mubr.bf16.gmra.mxu0 %v297
  %v462 = vpop.f32.mrf.mxu0
  %v463 = vadd.f32 %v346, %v462
  %v464 = vpop.f32.mrf.mxu0
  %v465 = vpop.f32.mrf.mxu0
  %v466 = vadd.f32 %v346, %v465
  %v467 = vpop.f32.mrf.mxu0
  %468 = vmatprep.mubr.bf16.mxu0 0
  %469 = vmatmul.mubr.bf16.gmra.mxu0 %v298
  %v470 = vpop.f32.mrf.mxu0
  %v471 = vadd.f32 %v346, %v470
  %v472 = vpop.f32.mrf.mxu0
  %v473 = vpop.f32.mrf.mxu0
  %v474 = vadd.f32 %v346, %v473
  %v475 = vpop.f32.mrf.mxu0
  %476 = vmatprep.mubr.bf16.mxu0 0
  %477 = vmatmul.mubr.bf16.gmra.mxu0 %v299
  %v478 = vpop.f32.mrf.mxu0
  %v479 = vadd.f32 %v346, %v478
  %v480 = vpop.f32.mrf.mxu0
  %v481 = vpop.f32.mrf.mxu0
  %v482 = vadd.f32 %v346, %v481
  %v483 = vpop.f32.mrf.mxu0
  %484 = vmatprep.mubr.bf16.mxu0 0
  %485 = vmatmul.mubr.bf16.gmra.mxu0 %v300
  %v486 = vpop.f32.mrf.mxu0
  %v487 = vadd.f32 %v346, %v486
  %v488 = vpop.f32.mrf.mxu0
  %v489 = vpop.f32.mrf.mxu0
  %v490 = vadd.f32 %v346, %v489
  %v491 = vpop.f32.mrf.mxu0
  %492 = vmatprep.mubr.bf16.mxu0 0
  %493 = vmatmul.mubr.bf16.gmra.mxu0 %v301
  %v494 = vpop.f32.mrf.mxu0
  %v495 = vadd.f32 %v346, %v494
  %v496 = vpop.f32.mrf.mxu0
  %v497 = vpop.f32.mrf.mxu0
  %v498 = vadd.f32 %v346, %v497
  %v499 = vpop.f32.mrf.mxu0
  %500 = vmatprep.mubr.bf16.mxu0 0
  %501 = vmatmul.mubr.bf16.gmra.mxu0 %v302
  %v502 = vpop.f32.mrf.mxu0
  %v503 = vadd.f32 %v346, %v502
  %v504 = vpop.f32.mrf.mxu0
  %v505 = vpop.f32.mrf.mxu0
  %v506 = vadd.f32 %v346, %v505
  %v507 = vpop.f32.mrf.mxu0
  %508 = vmatprep.mubr.bf16.mxu0 0
  %509 = vmatmul.mubr.bf16.gmra.mxu0 %v303
  %v510 = vpop.f32.mrf.mxu0
  %v511 = vadd.f32 %v346, %v510
  %v512 = vpop.f32.mrf.mxu0
  %v513 = vpop.f32.mrf.mxu0
  %v514 = vadd.f32 %v346, %v513
  %v515 = vpop.f32.mrf.mxu0
  %516 = vmatprep.mubr.bf16.mxu0 0
  %517 = vmatmul.mubr.bf16.gmra.mxu0 %v304
  %v518 = vpop.f32.mrf.mxu0
  %v519 = vadd.f32 %v346, %v518
  %v520 = vpop.f32.mrf.mxu0
  %v521 = vpop.f32.mrf.mxu0
  %v522 = vadd.f32 %v346, %v521
  %v523 = vpop.f32.mrf.mxu0
  %524 = vmatprep.mubr.bf16.mxu0 0
  %525 = vmatmul.mubr.bf16.gmra.mxu0 %v305
  %v526 = vpop.f32.mrf.mxu0
  %v527 = vadd.f32 %v346, %v526
  %v528 = vpop.f32.mrf.mxu0
  %v529 = vpop.f32.mrf.mxu0
  %v530 = vadd.f32 %v346, %v529
  %v531 = vpop.f32.mrf.mxu0
  %532 = vmatprep.mubr.bf16.mxu0 0
  %533 = vmatmul.mubr.bf16.gmra.mxu0 %v306
  %v534 = vpop.f32.mrf.mxu0
  %v535 = vadd.f32 %v346, %v534
  %v536 = vpop.f32.mrf.mxu0
  %v537 = vpop.f32.mrf.mxu0
  %v538 = vadd.f32 %v346, %v537
  %v539 = vpop.f32.mrf.mxu0
  %540 = vmatprep.mubr.bf16.mxu0 0
  %541 = vmatmul.mubr.bf16.gmra.mxu0 %v307
  %v542 = vpop.f32.mrf.mxu0
  %v543 = vadd.f32 %v346, %v542
  %v544 = vpop.f32.mrf.mxu0
  %v545 = vpop.f32.mrf.mxu0
  %v546 = vadd.f32 %v346, %v545
  %v547 = vpop.f32.mrf.mxu0
  %548 = vmatprep.mubr.bf16.mxu0 0
  %549 = vmatmul.mubr.bf16.gmra.mxu0 %v308
  %v550 = vpop.f32.mrf.mxu0
  %v551 = vadd.f32 %v346, %v550
  %v552 = vpop.f32.mrf.mxu0
  %v553 = vpop.f32.mrf.mxu0
  %v554 = vadd.f32 %v346, %v553
  %v555 = vpop.f32.mrf.mxu0
  %556 = vmatprep.mubr.bf16.mxu0 0
  %557 = vmatmul.mubr.bf16.gmra.mxu0 %v309
  %v558 = vpop.f32.mrf.mxu0
  %v559 = vadd.f32 %v346, %v558
  %v560 = vpop.f32.mrf.mxu0
  %v561 = vpop.f32.mrf.mxu0
  %v562 = vadd.f32 %v346, %v561
  %v563 = vpop.f32.mrf.mxu0
  %564 = vmatprep.mubr.bf16.mxu0 0
  %565 = vmatmul.mubr.bf16.gmra.mxu0 %v310
  %v566 = vpop.f32.mrf.mxu0
  %v567 = vadd.f32 %v346, %v566
  %v568 = vpop.f32.mrf.mxu0
  %v569 = vpop.f32.mrf.mxu0
  %v570 = vadd.f32 %v346, %v569
  %v571 = vpop.f32.mrf.mxu0
  %572 = vmatprep.mubr.bf16.mxu0 0
  %573 = vmatmul.mubr.bf16.gmra.mxu0 %v311
  %v574 = vpop.f32.mrf.mxu0
  %v575 = vadd.f32 %v346, %v574
  %v576 = vpop.f32.mrf.mxu0
  %v577 = vpop.f32.mrf.mxu0
  %v578 = vadd.f32 %v346, %v577
  %v579 = vpop.f32.mrf.mxu0
  %580 = vmatprep.mubr.bf16.mxu0 0
  %581 = vmatmul.mubr.bf16.gmra.mxu0 %v312
  %v582 = vpop.f32.mrf.mxu0
  %v583 = vadd.f32 %v346, %v582
  %v584 = vpop.f32.mrf.mxu0
  %v585 = vpop.f32.mrf.mxu0
  %v586 = vadd.f32 %v346, %v585
  %v587 = vpop.f32.mrf.mxu0
  %588 = vmatprep.mubr.bf16.mxu0 0
  %589 = vmatmul.mubr.bf16.gmra.mxu0 %v313
  %v590 = vpop.f32.mrf.mxu0
  %v591 = vadd.f32 %v346, %v590
  %v592 = vpop.f32.mrf.mxu0
  %v593 = vpop.f32.mrf.mxu0
  %v594 = vadd.f32 %v346, %v593
  %v595 = vpop.f32.mrf.mxu0
  %596 = vmatprep.mubr.bf16.mxu0 0
  %597 = vmatmul.mubr.bf16.gmra.mxu0 %v314
  %v598 = vpop.f32.mrf.mxu0
  %v599 = vadd.f32 %v346, %v598
  %v600 = vpop.f32.mrf.mxu0
  %v601 = vpop.f32.mrf.mxu0
  %v602 = vadd.f32 %v346, %v601
  %v603 = vpop.f32.mrf.mxu0
  %604 = vmatprep.mubr.bf16.mxu0 0
  %605 = vmatmul.mubr.bf16.gmra.mxu0 %v315
  %v606 = vpop.f32.mrf.mxu0
  %v607 = vadd.f32 %v346, %v606
  %v608 = vpop.f32.mrf.mxu0
  %v609 = vpop.f32.mrf.mxu0
  %v610 = vadd.f32 %v346, %v609
  %v611 = vpop.f32.mrf.mxu0
  %612 = vmatprep.mubr.bf16.mxu0 0
  %613 = vmatmul.mubr.bf16.gmra.mxu0 %v316
  %v614 = vpop.f32.mrf.mxu0
  %v615 = vadd.f32 %v346, %v614
  %v616 = vpop.f32.mrf.mxu0
  %v617 = vpop.f32.mrf.mxu0
  %v618 = vadd.f32 %v346, %v617
  %v619 = vpop.f32.mrf.mxu0
  %620 = vmatprep.mubr.bf16.mxu0 0
  %621 = vmatmul.mubr.bf16.gmra.mxu0 %v317
  %v622 = vpop.f32.mrf.mxu0
  %v623 = vadd.f32 %v346, %v622
  %v624 = vpop.f32.mrf.mxu0
  %v625 = vpop.f32.mrf.mxu0
  %v626 = vadd.f32 %v346, %v625
  %v627 = vpop.f32.mrf.mxu0
  %628 = vmatprep.mubr.bf16.mxu0 0
  %629 = vmatmul.mubr.bf16.gmra.mxu0 %v318
  %v630 = vpop.f32.mrf.mxu0
  %v631 = vadd.f32 %v346, %v630
  %v632 = vpop.f32.mrf.mxu0
  %v633 = vpop.f32.mrf.mxu0
  %v634 = vadd.f32 %v346, %v633
  %v635 = vpop.f32.mrf.mxu0
  %636 = vmatprep.mubr.bf16.mxu0 0
  %637 = vmatmul.mubr.bf16.gmra.mxu0 %v319
  %v638 = vpop.f32.mrf.mxu0
  %v639 = vadd.f32 %v346, %v638
  %v640 = vpop.f32.mrf.mxu0
  %v641 = vpop.f32.mrf.mxu0
  %v642 = vadd.f32 %v346, %v641
  %v643 = vpop.f32.mrf.mxu0
  %644 = vmatprep.mubr.bf16.mxu0 0
  %645 = vmatmul.mubr.bf16.gmra.mxu0 %v320
  %v646 = vpop.f32.mrf.mxu0
  %v647 = vadd.f32 %v346, %v646
  %v648 = vpop.f32.mrf.mxu0
  %v649 = vpop.f32.mrf.mxu0
  %v650 = vadd.f32 %v346, %v649
  %v651 = vpop.f32.mrf.mxu0
  %652 = vmatprep.mubr.bf16.mxu0 0
  %653 = vmatmul.mubr.bf16.gmra.mxu0 %v321
  %v654 = vpop.f32.mrf.mxu0
  %v655 = vadd.f32 %v346, %v654
  %v656 = vpop.f32.mrf.mxu0
  %v657 = vpop.f32.mrf.mxu0
  %v658 = vadd.f32 %v346, %v657
  %v659 = vpop.f32.mrf.mxu0
  %660 = vmatprep.mubr.bf16.mxu0 0
  %661 = vmatmul.mubr.bf16.gmra.mxu0 %v322
  %v662 = vpop.f32.mrf.mxu0
  %v663 = vadd.f32 %v346, %v662
  %v664 = vpop.f32.mrf.mxu0
  %v665 = vpop.f32.mrf.mxu0
  %v666 = vadd.f32 %v346, %v665
  %v667 = vpop.f32.mrf.mxu0
  %668 = vmatprep.mubr.bf16.mxu0 0
  %669 = vmatmul.mubr.bf16.gmra.mxu0 %v323
  %v670 = vpop.f32.mrf.mxu0
  %v671 = vadd.f32 %v346, %v670
  %v672 = vpop.f32.mrf.mxu0
  %v673 = vpop.f32.mrf.mxu0
  %v674 = vadd.f32 %v346, %v673
  %v675 = vpop.f32.mrf.mxu0
  %676 = vmatprep.mubr.bf16.mxu0 0
  %677 = vmatmul.mubr.bf16.gmra.mxu0 %v324
  %v678 = vpop.f32.mrf.mxu0
  %v679 = vadd.f32 %v346, %v678
  %v680 = vpop.f32.mrf.mxu0
  %v681 = vpop.f32.mrf.mxu0
  %v682 = vadd.f32 %v346, %v681
  %v683 = vpop.f32.mrf.mxu0
  %684 = vdwg.mxu0
  %v685 = vpack.c.bf16 %v434, %v431
  %v686 = vpack.c.bf16 %v442, %v439
  %v687 = vpack.c.bf16 %v450, %v447
  %v688 = vpack.c.bf16 %v458, %v455
  %v689 = vpack.c.bf16 %v466, %v463
  %v690 = vpack.c.bf16 %v474, %v471
  %v691 = vpack.c.bf16 %v482, %v479
  %v692 = vpack.c.bf16 %v490, %v487
  %v693 = vpack.c.bf16 %v498, %v495
  %v694 = vpack.c.bf16 %v506, %v503
  %v695 = vpack.c.bf16 %v514, %v511
  %v696 = vpack.c.bf16 %v522, %v519
  %v697 = vpack.c.bf16 %v530, %v527
  %v698 = vpack.c.bf16 %v538, %v535
  %v699 = vpack.c.bf16 %v546, %v543
  %v700 = vpack.c.bf16 %v554, %v551
  %v701 = vpack.c.bf16 %v562, %v559
  %v702 = vpack.c.bf16 %v570, %v567
  %v703 = vpack.c.bf16 %v578, %v575
  %v704 = vpack.c.bf16 %v586, %v583
  %v705 = vpack.c.bf16 %v594, %v591
  %v706 = vpack.c.bf16 %v602, %v599
  %v707 = vpack.c.bf16 %v610, %v607
  %v708 = vpack.c.bf16 %v618, %v615
  %v709 = vpack.c.bf16 %v626, %v623
  %v710 = vpack.c.bf16 %v634, %v631
  %v711 = vpack.c.bf16 %v642, %v639
  %v712 = vpack.c.bf16 %v650, %v647
  %v713 = vpack.c.bf16 %v658, %v655
  %v714 = vpack.c.bf16 %v666, %v663
  %v715 = vpack.c.bf16 %v674, %v671
  %v716 = vpack.c.bf16 %v682, %v679
  %v749 = vunpack.c.l.b16 %v685
  %v750 = vunpack.c.h.b16 %v685
  %v751 = vunpack.c.l.b16 %v686
  %v752 = vunpack.c.h.b16 %v686
  %v753 = vunpack.c.l.b16 %v687
  %v754 = vunpack.c.h.b16 %v687
  %v755 = vunpack.c.l.b16 %v688
  %v756 = vunpack.c.h.b16 %v688
  %v757 = vunpack.c.l.b16 %v689
  %v758 = vunpack.c.h.b16 %v689
  %v759 = vunpack.c.l.b16 %v690
  %v760 = vunpack.c.h.b16 %v690
  %v761 = vunpack.c.l.b16 %v691
  %v762 = vunpack.c.h.b16 %v691
  %v763 = vunpack.c.l.b16 %v692
  %v764 = vunpack.c.h.b16 %v692
  %v765 = vunpack.c.l.b16 %v693
  %v766 = vunpack.c.h.b16 %v693
  %v767 = vunpack.c.l.b16 %v694
  %v768 = vunpack.c.h.b16 %v694
  %v769 = vunpack.c.l.b16 %v695
  %v770 = vunpack.c.h.b16 %v695
  %v771 = vunpack.c.l.b16 %v696
  %v772 = vunpack.c.h.b16 %v696
  %v773 = vunpack.c.l.b16 %v697
  %v774 = vunpack.c.h.b16 %v697
  %v775 = vunpack.c.l.b16 %v698
  %v776 = vunpack.c.h.b16 %v698
  %v777 = vunpack.c.l.b16 %v699
  %v778 = vunpack.c.h.b16 %v699
  %v779 = vunpack.c.l.b16 %v700
  %v780 = vunpack.c.h.b16 %v700
  %v781 = vunpack.c.l.b16 %v701
  %v782 = vunpack.c.h.b16 %v701
  %v783 = vunpack.c.l.b16 %v702
  %v784 = vunpack.c.h.b16 %v702
  %v785 = vunpack.c.l.b16 %v703
  %v786 = vunpack.c.h.b16 %v703
  %v787 = vunpack.c.l.b16 %v704
  %v788 = vunpack.c.h.b16 %v704
  %v789 = vunpack.c.l.b16 %v705
  %v790 = vunpack.c.h.b16 %v705
  %v791 = vunpack.c.l.b16 %v706
  %v792 = vunpack.c.h.b16 %v706
  %v793 = vunpack.c.l.b16 %v707
  %v794 = vunpack.c.h.b16 %v707
  %v795 = vunpack.c.l.b16 %v708
  %v796 = vunpack.c.h.b16 %v708
  %v797 = vunpack.c.l.b16 %v709
  %v798 = vunpack.c.h.b16 %v709
  %v799 = vunpack.c.l.b16 %v710
  %v800 = vunpack.c.h.b16 %v710
  %v801 = vunpack.c.l.b16 %v711
  %v802 = vunpack.c.h.b16 %v711
  %v803 = vunpack.c.l.b16 %v712
  %v804 = vunpack.c.h.b16 %v712
  %v805 = vunpack.c.l.b16 %v713
  %v806 = vunpack.c.h.b16 %v713
  %v807 = vunpack.c.l.b16 %v714
  %v808 = vunpack.c.h.b16 %v714
  %v809 = vunpack.c.l.b16 %v715
  %v810 = vunpack.c.h.b16 %v715
  %v811 = vunpack.c.l.b16 %v716
  %v812 = vunpack.c.h.b16 %v716
  %v813 = vpack.c.b16 %v749, %v749
  %v814 = vpack.c.b16 %v750, %v750
  %v815 = vpack.c.b16 %v751, %v751
  %v816 = vpack.c.b16 %v752, %v752
  %v817 = vpack.c.b16 %v753, %v753
  %v818 = vpack.c.b16 %v754, %v754
  %v819 = vpack.c.b16 %v755, %v755
  %v820 = vpack.c.b16 %v756, %v756
  %v821 = vpack.c.b16 %v757, %v757
  %v822 = vpack.c.b16 %v758, %v758
  %v823 = vpack.c.b16 %v759, %v759
  %v824 = vpack.c.b16 %v760, %v760
  %v825 = vpack.c.b16 %v761, %v761
  %v826 = vpack.c.b16 %v762, %v762
  %v827 = vpack.c.b16 %v763, %v763
  %v828 = vpack.c.b16 %v764, %v764
  %v829 = vpack.c.b16 %v765, %v765
  %v830 = vpack.c.b16 %v766, %v766
  %v831 = vpack.c.b16 %v767, %v767
  %v832 = vpack.c.b16 %v768, %v768
  %v833 = vpack.c.b16 %v769, %v769
  %v834 = vpack.c.b16 %v770, %v770
  %v835 = vpack.c.b16 %v771, %v771
  %v836 = vpack.c.b16 %v772, %v772
  %v837 = vpack.c.b16 %v773, %v773
  %v838 = vpack.c.b16 %v774, %v774
  %v839 = vpack.c.b16 %v775, %v775
  %v840 = vpack.c.b16 %v776, %v776
  %v841 = vpack.c.b16 %v777, %v777
  %v842 = vpack.c.b16 %v778, %v778
  %v843 = vpack.c.b16 %v779, %v779
  %v844 = vpack.c.b16 %v780, %v780
  %v845 = vpack.c.b16 %v781, %v781
  %v846 = vpack.c.b16 %v782, %v782
  %v847 = vpack.c.b16 %v783, %v783
  %v848 = vpack.c.b16 %v784, %v784
  %v849 = vpack.c.b16 %v785, %v785
  %v850 = vpack.c.b16 %v786, %v786
  %v851 = vpack.c.b16 %v787, %v787
  %v852 = vpack.c.b16 %v788, %v788
  %v853 = vpack.c.b16 %v789, %v789
  %v854 = vpack.c.b16 %v790, %v790
  %v855 = vpack.c.b16 %v791, %v791
  %v856 = vpack.c.b16 %v792, %v792
  %v857 = vpack.c.b16 %v793, %v793
  %v858 = vpack.c.b16 %v794, %v794
  %v859 = vpack.c.b16 %v795, %v795
  %v860 = vpack.c.b16 %v796, %v796
  %v861 = vpack.c.b16 %v797, %v797
  %v862 = vpack.c.b16 %v798, %v798
  %v863 = vpack.c.b16 %v799, %v799
  %v864 = vpack.c.b16 %v800, %v800
  %v865 = vpack.c.b16 %v801, %v801
  %v866 = vpack.c.b16 %v802, %v802
  %v867 = vpack.c.b16 %v803, %v803
  %v868 = vpack.c.b16 %v804, %v804
  %v869 = vpack.c.b16 %v805, %v805
  %v870 = vpack.c.b16 %v806, %v806
  %v871 = vpack.c.b16 %v807, %v807
  %v872 = vpack.c.b16 %v808, %v808
  %v873 = vpack.c.b16 %v809, %v809
  %v874 = vpack.c.b16 %v810, %v810
  %v875 = vpack.c.b16 %v811, %v811
  %v876 = vpack.c.b16 %v812, %v812
  %941 = vst [vmem:[%s5] sm:$0xf] %v813
  %942 = vst [vmem:[%s5 + $0x4] sm:$0xf] %v814
  %943 = vst [vmem:[%s5 + $0x8] sm:$0xf] %v815
  %944 = vst [vmem:[%s5 + $0xc] sm:$0xf] %v816
  %945 = vst [vmem:[%s5 + $0x10] sm:$0xf] %v817
  %946 = vst [vmem:[%s5 + $0x14] sm:$0xf] %v818
  %947 = vst [vmem:[%s5 + $0x18] sm:$0xf] %v819
  %948 = vst [vmem:[%s5 + $0x1c] sm:$0xf] %v820
  %949 = vst [vmem:[%s5 + $0x20] sm:$0xf] %v821
  %950 = vst [vmem:[%s5 + $0x24] sm:$0xf] %v822
  %951 = vst [vmem:[%s5 + $0x28] sm:$0xf] %v823
  %952 = vst [vmem:[%s5 + $0x2c] sm:$0xf] %v824
  %953 = vst [vmem:[%s5 + $0x30] sm:$0xf] %v825
  %954 = vst [vmem:[%s5 + $0x34] sm:$0xf] %v826
  %955 = vst [vmem:[%s5 + $0x38] sm:$0xf] %v827
  %956 = vst [vmem:[%s5 + $0x3c] sm:$0xf] %v828
  %957 = vst [vmem:[%s5 + $0x40] sm:$0xf] %v829
  %958 = vst [vmem:[%s5 + $0x44] sm:$0xf] %v830
  %959 = vst [vmem:[%s5 + $0x48] sm:$0xf] %v831
  %960 = vst [vmem:[%s5 + $0x4c] sm:$0xf] %v832
  %961 = vst [vmem:[%s5 + $0x50] sm:$0xf] %v833
  %962 = vst [vmem:[%s5 + $0x54] sm:$0xf] %v834
  %963 = vst [vmem:[%s5 + $0x58] sm:$0xf] %v835
  %964 = vst [vmem:[%s5 + $0x5c] sm:$0xf] %v836
  %965 = vst [vmem:[%s5 + $0x60] sm:$0xf] %v837
  %966 = vst [vmem:[%s5 + $0x64] sm:$0xf] %v838
  %967 = vst [vmem:[%s5 + $0x68] sm:$0xf] %v839
  %968 = vst [vmem:[%s5 + $0x6c] sm:$0xf] %v840
  %969 = vst [vmem:[%s5 + $0x70] sm:$0xf] %v841
  %970 = vst [vmem:[%s5 + $0x74] sm:$0xf] %v842
  %971 = vst [vmem:[%s5 + $0x78] sm:$0xf] %v843
  %972 = vst [vmem:[%s5 + $0x7c] sm:$0xf] %v844
  %973 = vst [vmem:[%s5 + $0x80] sm:$0xf] %v845
  %974 = vst [vmem:[%s5 + $0x84] sm:$0xf] %v846
  %975 = vst [vmem:[%s5 + $0x88] sm:$0xf] %v847
  %976 = vst [vmem:[%s5 + $0x8c] sm:$0xf] %v848
  %977 = vst [vmem:[%s5 + $0x90] sm:$0xf] %v849
  %978 = vst [vmem:[%s5 + $0x94] sm:$0xf] %v850
  %979 = vst [vmem:[%s5 + $0x98] sm:$0xf] %v851
  %980 = vst [vmem:[%s5 + $0x9c] sm:$0xf] %v852
  %981 = vst [vmem:[%s5 + $0xa0] sm:$0xf] %v853
  %982 = vst [vmem:[%s5 + $0xa4] sm:$0xf] %v854
  %983 = vst [vmem:[%s5 + $0xa8] sm:$0xf] %v855
  %984 = vst [vmem:[%s5 + $0xac] sm:$0xf] %v856
  %985 = vst [vmem:[%s5 + $0xb0] sm:$0xf] %v857
  %986 = vst [vmem:[%s5 + $0xb4] sm:$0xf] %v858
  %987 = vst [vmem:[%s5 + $0xb8] sm:$0xf] %v859
  %988 = vst [vmem:[%s5 + $0xbc] sm:$0xf] %v860
  %989 = vst [vmem:[%s5 + $0xc0] sm:$0xf] %v861
  %990 = vst [vmem:[%s5 + $0xc4] sm:$0xf] %v862
  %991 = vst [vmem:[%s5 + $0xc8] sm:$0xf] %v863
  %992 = vst [vmem:[%s5 + $0xcc] sm:$0xf] %v864
  %993 = vst [vmem:[%s5 + $0xd0] sm:$0xf] %v865
  %994 = vst [vmem:[%s5 + $0xd4] sm:$0xf] %v866
  %995 = vst [vmem:[%s5 + $0xd8] sm:$0xf] %v867
  %996 = vst [vmem:[%s5 + $0xdc] sm:$0xf] %v868
  %997 = vst [vmem:[%s5 + $0xe0] sm:$0xf] %v869
  %998 = vst [vmem:[%s5 + $0xe4] sm:$0xf] %v870
  %999 = vst [vmem:[%s5 + $0xe8] sm:$0xf] %v871
  %1000 = vst [vmem:[%s5 + $0xec] sm:$0xf] %v872
  %1001 = vst [vmem:[%s5 + $0xf0] sm:$0xf] %v873
  %1002 = vst [vmem:[%s5 + $0xf4] sm:$0xf] %v874
  %1003 = vst [vmem:[%s5 + $0xf8] sm:$0xf] %v875
  %1004 = vst [vmem:[%s5 + $0xfc] sm:$0xf] %v876
  %v1005 = vadd.f32 %v431, %v434
  %v1006 = vadd.f32 %v1005, %v439
  %v1007 = vadd.f32 %v1006, %v442
  %v1008 = vadd.f32 %v1007, %v447
  %v1009 = vadd.f32 %v1008, %v450
  %v1010 = vadd.f32 %v1009, %v455
  %v1011 = vadd.f32 %v1010, %v458
  %v1012 = vadd.f32 %v1011, %v463
  %v1013 = vadd.f32 %v1012, %v466
  %v1014 = vadd.f32 %v1013, %v471
  %v1015 = vadd.f32 %v1014, %v474
  %v1016 = vadd.f32 %v1015, %v479
  %v1017 = vadd.f32 %v1016, %v482
  %v1018 = vadd.f32 %v1017, %v487
  %v1019 = vadd.f32 %v1018, %v490
  %v1020 = vadd.f32 %v1019, %v495
  %v1021 = vadd.f32 %v1020, %v498
  %v1022 = vadd.f32 %v1021, %v503
  %v1023 = vadd.f32 %v1022, %v506
  %v1024 = vadd.f32 %v1023, %v511
  %v1025 = vadd.f32 %v1024, %v514
  %v1026 = vadd.f32 %v1025, %v519
  %v1027 = vadd.f32 %v1026, %v522
  %v1028 = vadd.f32 %v1027, %v527
  %v1029 = vadd.f32 %v1028, %v530
  %v1030 = vadd.f32 %v1029, %v535
  %v1031 = vadd.f32 %v1030, %v538
  %v1032 = vadd.f32 %v1031, %v543
  %v1033 = vadd.f32 %v1032, %v546
  %v1034 = vadd.f32 %v1033, %v551
  %v1035 = vadd.f32 %v1034, %v554
  %v1036 = vadd.f32 %v1035, %v559
  %v1037 = vadd.f32 %v1036, %v562
  %v1038 = vadd.f32 %v1037, %v567
  %v1039 = vadd.f32 %v1038, %v570
  %v1040 = vadd.f32 %v1039, %v575
  %v1041 = vadd.f32 %v1040, %v578
  %v1042 = vadd.f32 %v1041, %v583
  %v1043 = vadd.f32 %v1042, %v586
  %v1044 = vadd.f32 %v1043, %v591
  %v1045 = vadd.f32 %v1044, %v594
  %v1046 = vadd.f32 %v1045, %v599
  %v1047 = vadd.f32 %v1046, %v602
  %v1048 = vadd.f32 %v1047, %v607
  %v1049 = vadd.f32 %v1048, %v610
  %v1050 = vadd.f32 %v1049, %v615
  %v1051 = vadd.f32 %v1050, %v618
  %v1052 = vadd.f32 %v1051, %v623
  %v1053 = vadd.f32 %v1052, %v626
  %v1054 = vadd.f32 %v1053, %v631
  %v1055 = vadd.f32 %v1054, %v634
  %v1056 = vadd.f32 %v1055, %v639
  %v1057 = vadd.f32 %v1056, %v642
  %v1058 = vadd.f32 %v1057, %v647
  %v1059 = vadd.f32 %v1058, %v650
  %v1060 = vadd.f32 %v1059, %v655
  %v1061 = vadd.f32 %v1060, %v658
  %v1062 = vadd.f32 %v1061, %v663
  %v1063 = vadd.f32 %v1062, %v666
  %v1064 = vadd.f32 %v1063, %v671
  %v1065 = vadd.f32 %v1064, %v674
  %v1066 = vadd.f32 %v1065, %v679
  %v1067 = vadd.f32 %v1066, %v682
  %v1068 = vrot.slane %v1067, 4
  %v1069 = vadd.f32 %v1067, %v1068
  %v1070 = vrot.slane %v1069, 2
  %v1071 = vadd.f32 %v1069, %v1070
  %v1072 = vrot.slane %v1071, 1
  %v1073 = vadd.f32 %v1071, %v1072
  %v1074 = vmul.f32 %v431, %v431
  %v1075 = vmul.f32 %v434, %v434
  %v1076 = vmul.f32 %v439, %v439
  %v1077 = vmul.f32 %v442, %v442
  %v1078 = vmul.f32 %v447, %v447
  %v1079 = vmul.f32 %v450, %v450
  %v1080 = vmul.f32 %v455, %v455
  %v1081 = vmul.f32 %v458, %v458
  %v1082 = vmul.f32 %v463, %v463
  %v1083 = vmul.f32 %v466, %v466
  %v1084 = vmul.f32 %v471, %v471
  %v1085 = vmul.f32 %v474, %v474
  %v1086 = vmul.f32 %v479, %v479
  %v1087 = vmul.f32 %v482, %v482
  %v1088 = vmul.f32 %v487, %v487
  %v1089 = vmul.f32 %v490, %v490
  %v1090 = vmul.f32 %v495, %v495
  %v1091 = vmul.f32 %v498, %v498
  %v1092 = vmul.f32 %v503, %v503
  %v1093 = vmul.f32 %v506, %v506
  %v1094 = vmul.f32 %v511, %v511
  %v1095 = vmul.f32 %v514, %v514
  %v1096 = vmul.f32 %v519, %v519
  %v1097 = vmul.f32 %v522, %v522
  %v1098 = vmul.f32 %v527, %v527
  %v1099 = vmul.f32 %v530, %v530
  %v1100 = vmul.f32 %v535, %v535
  %v1101 = vmul.f32 %v538, %v538
  %v1102 = vmul.f32 %v543, %v543
  %v1103 = vmul.f32 %v546, %v546
  %v1104 = vmul.f32 %v551, %v551
  %v1105 = vmul.f32 %v554, %v554
  %v1106 = vmul.f32 %v559, %v559
  %v1107 = vmul.f32 %v562, %v562
  %v1108 = vmul.f32 %v567, %v567
  %v1109 = vmul.f32 %v570, %v570
  %v1110 = vmul.f32 %v575, %v575
  %v1111 = vmul.f32 %v578, %v578
  %v1112 = vmul.f32 %v583, %v583
  %v1113 = vmul.f32 %v586, %v586
  %v1114 = vmul.f32 %v591, %v591
  %v1115 = vmul.f32 %v594, %v594
  %v1116 = vmul.f32 %v599, %v599
  %v1117 = vmul.f32 %v602, %v602
  %v1118 = vmul.f32 %v607, %v607
  %v1119 = vmul.f32 %v610, %v610
  %v1120 = vmul.f32 %v615, %v615
  %v1121 = vmul.f32 %v618, %v618
  %v1122 = vmul.f32 %v623, %v623
  %v1123 = vmul.f32 %v626, %v626
  %v1124 = vmul.f32 %v631, %v631
  %v1125 = vmul.f32 %v634, %v634
  %v1126 = vmul.f32 %v639, %v639
  %v1127 = vmul.f32 %v642, %v642
  %v1128 = vmul.f32 %v647, %v647
  %v1129 = vmul.f32 %v650, %v650
  %v1130 = vmul.f32 %v655, %v655
  %v1131 = vmul.f32 %v658, %v658
  %v1132 = vmul.f32 %v663, %v663
  %v1133 = vmul.f32 %v666, %v666
  %v1134 = vmul.f32 %v671, %v671
  %v1135 = vmul.f32 %v674, %v674
  %v1136 = vmul.f32 %v679, %v679
  %v1137 = vmul.f32 %v682, %v682
  %v1138 = vadd.f32 %v1074, %v1075
  %v1139 = vadd.f32 %v1138, %v1076
  %v1140 = vadd.f32 %v1139, %v1077
  %v1141 = vadd.f32 %v1140, %v1078
  %v1142 = vadd.f32 %v1141, %v1079
  %v1143 = vadd.f32 %v1142, %v1080
  %v1144 = vadd.f32 %v1143, %v1081
  %v1145 = vadd.f32 %v1144, %v1082
  %v1146 = vadd.f32 %v1145, %v1083
  %v1147 = vadd.f32 %v1146, %v1084
  %v1148 = vadd.f32 %v1147, %v1085
  %v1149 = vadd.f32 %v1148, %v1086
  %v1150 = vadd.f32 %v1149, %v1087
  %v1151 = vadd.f32 %v1150, %v1088
  %v1152 = vadd.f32 %v1151, %v1089
  %v1153 = vadd.f32 %v1152, %v1090
  %v1154 = vadd.f32 %v1153, %v1091
  %v1155 = vadd.f32 %v1154, %v1092
  %v1156 = vadd.f32 %v1155, %v1093
  %v1157 = vadd.f32 %v1156, %v1094
  %v1158 = vadd.f32 %v1157, %v1095
  %v1159 = vadd.f32 %v1158, %v1096
  %v1160 = vadd.f32 %v1159, %v1097
  %v1161 = vadd.f32 %v1160, %v1098
  %v1162 = vadd.f32 %v1161, %v1099
  %v1163 = vadd.f32 %v1162, %v1100
  %v1164 = vadd.f32 %v1163, %v1101
  %v1165 = vadd.f32 %v1164, %v1102
  %v1166 = vadd.f32 %v1165, %v1103
  %v1167 = vadd.f32 %v1166, %v1104
  %v1168 = vadd.f32 %v1167, %v1105
  %v1169 = vadd.f32 %v1168, %v1106
  %v1170 = vadd.f32 %v1169, %v1107
  %v1171 = vadd.f32 %v1170, %v1108
  %v1172 = vadd.f32 %v1171, %v1109
  %v1173 = vadd.f32 %v1172, %v1110
  %v1174 = vadd.f32 %v1173, %v1111
  %v1175 = vadd.f32 %v1174, %v1112
  %v1176 = vadd.f32 %v1175, %v1113
  %v1177 = vadd.f32 %v1176, %v1114
  %v1178 = vadd.f32 %v1177, %v1115
  %v1179 = vadd.f32 %v1178, %v1116
  %v1180 = vadd.f32 %v1179, %v1117
  %v1181 = vadd.f32 %v1180, %v1118
  %v1182 = vadd.f32 %v1181, %v1119
  %v1183 = vadd.f32 %v1182, %v1120
  %v1184 = vadd.f32 %v1183, %v1121
  %v1185 = vadd.f32 %v1184, %v1122
  %v1186 = vadd.f32 %v1185, %v1123
  %v1187 = vadd.f32 %v1186, %v1124
  %v1188 = vadd.f32 %v1187, %v1125
  %v1189 = vadd.f32 %v1188, %v1126
  %v1190 = vadd.f32 %v1189, %v1127
  %v1191 = vadd.f32 %v1190, %v1128
  %v1192 = vadd.f32 %v1191, %v1129
  %v1193 = vadd.f32 %v1192, %v1130
  %v1194 = vadd.f32 %v1193, %v1131
  %v1195 = vadd.f32 %v1194, %v1132
  %v1196 = vadd.f32 %v1195, %v1133
  %v1197 = vadd.f32 %v1196, %v1134
  %v1198 = vadd.f32 %v1197, %v1135
  %v1199 = vadd.f32 %v1198, %v1136
  %v1200 = vadd.f32 %v1199, %v1137
  %v1201 = vrot.slane %v1200, 4
  %v1202 = vadd.f32 %v1200, %v1201
  %v1203 = vrot.slane %v1202, 2
  %v1204 = vadd.f32 %v1202, %v1203
  %v1205 = vrot.slane %v1204, 1
  %v1206 = vadd.f32 %v1204, %v1205
  %vm1207 = vcmask 1040384
  %v1208 = vsel %vm1207, %v1073, %v1206
  %vm1209 = vcmask 1041408
  %v1210 = vsel %vm1209, %v1208, 0.0
  %1211 = vst [vmem:[%s6] sm:$0xff] %v1210
  // Predicated region
  $region22: #{grouped_conv_block_forward.5} parent=0 // pred_check
    _
  $region23: #{grouped_conv_block_forward.5} parent=0 // pred_check_branch
    %1213 = sbr.rel (0) target = $region25
  $region24: #{grouped_conv_block_forward.5} parent=0 // pred_region
    _
  $region25: #{grouped_conv_block_forward.5} parent=0 // pred_fallthru
    _
  // Predicated region
  $region26: #{grouped_conv_block_forward.5} parent=0 // pred_check
    _
  $region27: #{grouped_conv_block_forward.5} parent=0 // pred_check_branch
    %1215 = sbr.rel (0) target = $region29
  $region28: #{grouped_conv_block_forward.5} parent=0 // pred_region
    _
  $region29: #{grouped_conv_block_forward.5} parent=0 // pred_fallthru
    _
  // Predicated region
  $region30: #{grouped_conv_block_forward.5} parent=0 // pred_check
    _
  $region31: #{grouped_conv_block_forward.5} parent=0 // pred_check_branch
    %1217 = sbr.rel (0) target = $region33
  $region32: #{grouped_conv_block_forward.5} parent=0 // pred_region
    _
  $region33: #{grouped_conv_block_forward.5} parent=0 // pred_fallthru
    _
  // Predicated region
  $region34: #{grouped_conv_block_forward.5} parent=0 // pred_check
    _
  $region35: #{grouped_conv_block_forward.5} parent=0 // pred_check_branch
    %1219 = sbr.rel (0) target = $region37
  $region36: #{grouped_conv_block_forward.5} parent=0 // pred_region
    _
  $region37: #{grouped_conv_block_forward.5} parent=0 // pred_fallthru
    _

// kernel: grouped_conv_block_forward.7
$region0: #{grouped_conv_block_forward.7}
  #allocation0 [shape = 'u32[]', space=smem, size = 0x4, offset = 0x4, fixed_abs, tag = 'smem constant byte address 0x4 - core index']
  #allocation1 [shape = 'u32[144,128]{1,0:T(1,128)}', space=vmem, size = 0x12000, scoped, tag = 'internal scratch']
  %s0 = inlined_call_operand.vmem [shape: bf16[512,128], index: 0, kind: input, shape index: {}]
  %s1 = inlined_call_operand.vmem [shape: f32[1,128], index: 1, kind: input, shape index: {}]
  %s2 = inlined_call_operand.vmem [shape: f32[1,128], index: 2, kind: input, shape index: {}]
  %s3 = inlined_call_operand.vmem [shape: bf16[128,128], index: 3, kind: input, shape index: {}]
  %s4 = inlined_call_operand.vmem [shape: f32[1,128], index: 4, kind: input, shape index: {}]
  %s5 = inlined_call_operand.vmem [shape: f32[512,128], index: 5, kind: input, shape index: {}]
  %s6 = inlined_call_operand.vmem [shape: bf16[128,128], index: 6, kind: input, shape index: {}]
  %s7 = inlined_call_operand.vmem [shape: f32[1,128], index: 7, kind: input, shape index: {}]
  %s8 = inlined_call_operand.hbm [shape: f32[512,128], index: 8, kind: output, shape index: {}]
  %s9 = sld [smem:[#allocation0]]
  $region42: #{grouped_conv_block_forward.7} parent=0
    _
  %s11 = ssub.s32 1, %s9
  %s12 = scalar_select 0, %s11, %s9
  $region1: #{grouped_conv_block_forward.7} parent=0
    #allocation2 [shape = 'u8[262144]{0}', space=vmem, size = 0x40000, scoped, tag = 'output window, operand 0, single buffered']
    #allocation3 [shape = 's32[1]{0}', space=sflag, size = 0x4, scoped, tag = 'scoped memory for grouped_conv_block_forward.7']
    %13 = vsyncpa [#allocation3], 0
    // Predicated region
    $region2: #{grouped_conv_block_forward.7} parent=1 // pred_check
      _
    $region3: #{grouped_conv_block_forward.7} parent=1 // pred_check_branch
      %15 = sbr.rel (0) target = $region5
    $region4: #{grouped_conv_block_forward.7} parent=1 // pred_region
      _
    $region5: #{grouped_conv_block_forward.7} parent=1 // pred_fallthru
      _
    // Predicated region
    $region6: #{grouped_conv_block_forward.7} parent=1 // pred_check
      _
    $region7: #{grouped_conv_block_forward.7} parent=1 // pred_check_branch
      %17 = sbr.rel (0) target = $region9
    $region8: #{grouped_conv_block_forward.7} parent=1 // pred_region
      _
    $region9: #{grouped_conv_block_forward.7} parent=1 // pred_fallthru
      _
    // Predicated region
    $region10: #{grouped_conv_block_forward.7} parent=1 // pred_check
      _
    $region11: #{grouped_conv_block_forward.7} parent=1 // pred_check_branch
      %19 = sbr.rel (0) target = $region13
    $region12: #{grouped_conv_block_forward.7} parent=1 // pred_region
      _
    $region13: #{grouped_conv_block_forward.7} parent=1 // pred_fallthru
      _
    // Predicated region
    $region14: #{grouped_conv_block_forward.7} parent=1 // pred_check
      _
    $region15: #{grouped_conv_block_forward.7} parent=1 // pred_check_branch
      %21 = sbr.rel (0) target = $region17
    $region16: #{grouped_conv_block_forward.7} parent=1 // pred_region
      _
    $region17: #{grouped_conv_block_forward.7} parent=1 // pred_fallthru
      _
    // Predicated region
    $region18: #{grouped_conv_block_forward.7} parent=1 // pred_check
      _
    $region19: #{grouped_conv_block_forward.7} parent=1 // pred_check_branch
      %23 = sbr.rel (0) target = $region21
    $region20: #{grouped_conv_block_forward.7} parent=1 // pred_region
      _
    $region21: #{grouped_conv_block_forward.7} parent=1 // pred_fallthru
      _
    // Predicated region
    $region22: #{grouped_conv_block_forward.7} parent=1 // pred_check
      _
    $region23: #{grouped_conv_block_forward.7} parent=1 // pred_check_branch
      %25 = sbr.rel (0) target = $region25
    $region24: #{grouped_conv_block_forward.7} parent=1 // pred_region
      _
    $region25: #{grouped_conv_block_forward.7} parent=1 // pred_fallthru
      _
    // Predicated region
    $region26: #{grouped_conv_block_forward.7} parent=1 // pred_check
      _
    $region27: #{grouped_conv_block_forward.7} parent=1 // pred_check_branch
      %27 = sbr.rel (0) target = $region29
    $region28: #{grouped_conv_block_forward.7} parent=1 // pred_region
      _
    $region29: #{grouped_conv_block_forward.7} parent=1 // pred_fallthru
      _
    // Predicated region
    $region30: #{grouped_conv_block_forward.7} parent=1 // pred_check
      _
    $region31: #{grouped_conv_block_forward.7} parent=1 // pred_check_branch
      %29 = sbr.rel (0) target = $region33
    $region32: #{grouped_conv_block_forward.7} parent=1 // pred_region
      _
    $region33: #{grouped_conv_block_forward.7} parent=1 // pred_fallthru
      _
    %v31 = vld [vmem:[%s0] sm:$0xf]
    %v32 = vld [vmem:[%s0 + $0x4] sm:$0xf]
    %v33 = vld [vmem:[%s0 + $0x8] sm:$0xf]
    %v34 = vld [vmem:[%s0 + $0xc] sm:$0xf]
    %v35 = vld [vmem:[%s0 + $0x10] sm:$0xf]
    %v36 = vld [vmem:[%s0 + $0x14] sm:$0xf]
    %v37 = vld [vmem:[%s0 + $0x18] sm:$0xf]
    %v38 = vld [vmem:[%s0 + $0x1c] sm:$0xf]
    %v39 = vld [vmem:[%s0 + $0x20] sm:$0xf]
    %v40 = vld [vmem:[%s0 + $0x24] sm:$0xf]
    %v41 = vld [vmem:[%s0 + $0x28] sm:$0xf]
    %v42 = vld [vmem:[%s0 + $0x2c] sm:$0xf]
    %v43 = vld [vmem:[%s0 + $0x30] sm:$0xf]
    %v44 = vld [vmem:[%s0 + $0x34] sm:$0xf]
    %v45 = vld [vmem:[%s0 + $0x38] sm:$0xf]
    %v46 = vld [vmem:[%s0 + $0x3c] sm:$0xf]
    %v47 = vld [vmem:[%s0 + $0x40] sm:$0xf]
    %v48 = vld [vmem:[%s0 + $0x44] sm:$0xf]
    %v49 = vld [vmem:[%s0 + $0x48] sm:$0xf]
    %v50 = vld [vmem:[%s0 + $0x4c] sm:$0xf]
    %v51 = vld [vmem:[%s0 + $0x50] sm:$0xf]
    %v52 = vld [vmem:[%s0 + $0x54] sm:$0xf]
    %v53 = vld [vmem:[%s0 + $0x58] sm:$0xf]
    %v54 = vld [vmem:[%s0 + $0x5c] sm:$0xf]
    %v55 = vld [vmem:[%s0 + $0x60] sm:$0xf]
    %v56 = vld [vmem:[%s0 + $0x64] sm:$0xf]
    %v57 = vld [vmem:[%s0 + $0x68] sm:$0xf]
    %v58 = vld [vmem:[%s0 + $0x6c] sm:$0xf]
    %v59 = vld [vmem:[%s0 + $0x70] sm:$0xf]
    %v60 = vld [vmem:[%s0 + $0x74] sm:$0xf]
    %v61 = vld [vmem:[%s0 + $0x78] sm:$0xf]
    %v62 = vld [vmem:[%s0 + $0x7c] sm:$0xf]
    %v63 = vld [vmem:[%s0 + $0x80] sm:$0xf]
    %v64 = vld [vmem:[%s0 + $0x84] sm:$0xf]
    %v65 = vld [vmem:[%s0 + $0x88] sm:$0xf]
    %v66 = vld [vmem:[%s0 + $0x8c] sm:$0xf]
    %v67 = vld [vmem:[%s0 + $0x90] sm:$0xf]
    %v68 = vld [vmem:[%s0 + $0x94] sm:$0xf]
    %v69 = vld [vmem:[%s0 + $0x98] sm:$0xf]
    %v70 = vld [vmem:[%s0 + $0x9c] sm:$0xf]
    %v71 = vld [vmem:[%s0 + $0xa0] sm:$0xf]
    %v72 = vld [vmem:[%s0 + $0xa4] sm:$0xf]
    %v73 = vld [vmem:[%s0 + $0xa8] sm:$0xf]
    %v74 = vld [vmem:[%s0 + $0xac] sm:$0xf]
    %v75 = vld [vmem:[%s0 + $0xb0] sm:$0xf]
    %v76 = vld [vmem:[%s0 + $0xb4] sm:$0xf]
    %v77 = vld [vmem:[%s0 + $0xb8] sm:$0xf]
    %v78 = vld [vmem:[%s0 + $0xbc] sm:$0xf]
    %v79 = vld [vmem:[%s0 + $0xc0] sm:$0xf]
    %v80 = vld [vmem:[%s0 + $0xc4] sm:$0xf]
    %v81 = vld [vmem:[%s0 + $0xc8] sm:$0xf]
    %v82 = vld [vmem:[%s0 + $0xcc] sm:$0xf]
    %v83 = vld [vmem:[%s0 + $0xd0] sm:$0xf]
    %v84 = vld [vmem:[%s0 + $0xd4] sm:$0xf]
    %v85 = vld [vmem:[%s0 + $0xd8] sm:$0xf]
    %v86 = vld [vmem:[%s0 + $0xdc] sm:$0xf]
    %v87 = vld [vmem:[%s0 + $0xe0] sm:$0xf]
    %v88 = vld [vmem:[%s0 + $0xe4] sm:$0xf]
    %v89 = vld [vmem:[%s0 + $0xe8] sm:$0xf]
    %v90 = vld [vmem:[%s0 + $0xec] sm:$0xf]
    %v91 = vld [vmem:[%s0 + $0xf0] sm:$0xf]
    %v92 = vld [vmem:[%s0 + $0xf4] sm:$0xf]
    %v93 = vld [vmem:[%s0 + $0xf8] sm:$0xf]
    %v94 = vld [vmem:[%s0 + $0xfc] sm:$0xf]
    %v95 = vunpack.c.l.bf16 %v31
    %v96 = vunpack.c.l.bf16 %v32
    %v97 = vunpack.c.l.bf16 %v33
    %v98 = vunpack.c.l.bf16 %v34
    %v99 = vunpack.c.l.bf16 %v35
    %v100 = vunpack.c.l.bf16 %v36
    %v101 = vunpack.c.l.bf16 %v37
    %v102 = vunpack.c.l.bf16 %v38
    %v103 = vunpack.c.l.bf16 %v39
    %v104 = vunpack.c.l.bf16 %v40
    %v105 = vunpack.c.l.bf16 %v41
    %v106 = vunpack.c.l.bf16 %v42
    %v107 = vunpack.c.l.bf16 %v43
    %v108 = vunpack.c.l.bf16 %v44
    %v109 = vunpack.c.l.bf16 %v45
    %v110 = vunpack.c.l.bf16 %v46
    %v111 = vunpack.c.l.bf16 %v47
    %v112 = vunpack.c.l.bf16 %v48
    %v113 = vunpack.c.l.bf16 %v49
    %v114 = vunpack.c.l.bf16 %v50
    %v115 = vunpack.c.l.bf16 %v51
    %v116 = vunpack.c.l.bf16 %v52
    %v117 = vunpack.c.l.bf16 %v53
    %v118 = vunpack.c.l.bf16 %v54
    %v119 = vunpack.c.l.bf16 %v55
    %v120 = vunpack.c.l.bf16 %v56
    %v121 = vunpack.c.l.bf16 %v57
    %v122 = vunpack.c.l.bf16 %v58
    %v123 = vunpack.c.l.bf16 %v59
    %v124 = vunpack.c.l.bf16 %v60
    %v125 = vunpack.c.l.bf16 %v61
    %v126 = vunpack.c.l.bf16 %v62
    %v127 = vunpack.c.l.bf16 %v63
    %v128 = vunpack.c.l.bf16 %v64
    %v129 = vunpack.c.l.bf16 %v65
    %v130 = vunpack.c.l.bf16 %v66
    %v131 = vunpack.c.l.bf16 %v67
    %v132 = vunpack.c.l.bf16 %v68
    %v133 = vunpack.c.l.bf16 %v69
    %v134 = vunpack.c.l.bf16 %v70
    %v135 = vunpack.c.l.bf16 %v71
    %v136 = vunpack.c.l.bf16 %v72
    %v137 = vunpack.c.l.bf16 %v73
    %v138 = vunpack.c.l.bf16 %v74
    %v139 = vunpack.c.l.bf16 %v75
    %v140 = vunpack.c.l.bf16 %v76
    %v141 = vunpack.c.l.bf16 %v77
    %v142 = vunpack.c.l.bf16 %v78
    %v143 = vunpack.c.l.bf16 %v79
    %v144 = vunpack.c.l.bf16 %v80
    %v145 = vunpack.c.l.bf16 %v81
    %v146 = vunpack.c.l.bf16 %v82
    %v147 = vunpack.c.l.bf16 %v83
    %v148 = vunpack.c.l.bf16 %v84
    %v149 = vunpack.c.l.bf16 %v85
    %v150 = vunpack.c.l.bf16 %v86
    %v151 = vunpack.c.l.bf16 %v87
    %v152 = vunpack.c.l.bf16 %v88
    %v153 = vunpack.c.l.bf16 %v89
    %v154 = vunpack.c.l.bf16 %v90
    %v155 = vunpack.c.l.bf16 %v91
    %v156 = vunpack.c.l.bf16 %v92
    %v157 = vunpack.c.l.bf16 %v93
    %v158 = vunpack.c.l.bf16 %v94
    %v159 = vld [vmem:[%s1] sm:$0x1]
    %v161 = vlaneseq
    %v162 = vshrl.u32 %v161, 7
    %v163 = vsub.s32 0, %v162
    %v164 = vrot.slane %v159, %v163
    %v166 = vmul.f32 %v95, %v164
    %v167 = vmul.f32 %v96, %v164
    %v168 = vmul.f32 %v97, %v164
    %v169 = vmul.f32 %v98, %v164
    %v170 = vmul.f32 %v99, %v164
    %v171 = vmul.f32 %v100, %v164
    %v172 = vmul.f32 %v101, %v164
    %v173 = vmul.f32 %v102, %v164
    %v174 = vmul.f32 %v103, %v164
    %v175 = vmul.f32 %v104, %v164
    %v176 = vmul.f32 %v105, %v164
    %v177 = vmul.f32 %v106, %v164
    %v178 = vmul.f32 %v107, %v164
    %v179 = vmul.f32 %v108, %v164
    %v180 = vmul.f32 %v109, %v164
    %v181 = vmul.f32 %v110, %v164
    %v182 = vmul.f32 %v111, %v164
    %v183 = vmul.f32 %v112, %v164
    %v184 = vmul.f32 %v113, %v164
    %v185 = vmul.f32 %v114, %v164
    %v186 = vmul.f32 %v115, %v164
    %v187 = vmul.f32 %v116, %v164
    %v188 = vmul.f32 %v117, %v164
    %v189 = vmul.f32 %v118, %v164
    %v190 = vmul.f32 %v119, %v164
    %v191 = vmul.f32 %v120, %v164
    %v192 = vmul.f32 %v121, %v164
    %v193 = vmul.f32 %v122, %v164
    %v194 = vmul.f32 %v123, %v164
    %v195 = vmul.f32 %v124, %v164
    %v196 = vmul.f32 %v125, %v164
    %v197 = vmul.f32 %v126, %v164
    %v198 = vmul.f32 %v127, %v164
    %v199 = vmul.f32 %v128, %v164
    %v200 = vmul.f32 %v129, %v164
    %v201 = vmul.f32 %v130, %v164
    %v202 = vmul.f32 %v131, %v164
    %v203 = vmul.f32 %v132, %v164
    %v204 = vmul.f32 %v133, %v164
    %v205 = vmul.f32 %v134, %v164
    %v206 = vmul.f32 %v135, %v164
    %v207 = vmul.f32 %v136, %v164
    %v208 = vmul.f32 %v137, %v164
    %v209 = vmul.f32 %v138, %v164
    %v210 = vmul.f32 %v139, %v164
    %v211 = vmul.f32 %v140, %v164
    %v212 = vmul.f32 %v141, %v164
    %v213 = vmul.f32 %v142, %v164
    %v214 = vmul.f32 %v143, %v164
    %v215 = vmul.f32 %v144, %v164
    %v216 = vmul.f32 %v145, %v164
    %v217 = vmul.f32 %v146, %v164
    %v218 = vmul.f32 %v147, %v164
    %v219 = vmul.f32 %v148, %v164
    %v220 = vmul.f32 %v149, %v164
    %v221 = vmul.f32 %v150, %v164
    %v222 = vmul.f32 %v151, %v164
    %v223 = vmul.f32 %v152, %v164
    %v224 = vmul.f32 %v153, %v164
    %v225 = vmul.f32 %v154, %v164
    %v226 = vmul.f32 %v155, %v164
    %v227 = vmul.f32 %v156, %v164
    %v228 = vmul.f32 %v157, %v164
    %v229 = vmul.f32 %v158, %v164
    %v230 = vld [vmem:[%s2] sm:$0x1]
    %v232 = vlaneseq
    %v233 = vshrl.u32 %v232, 7
    %v234 = vsub.s32 0, %v233
    %v235 = vrot.slane %v230, %v234
    %v237 = vadd.f32 %v166, %v235
    %v238 = vadd.f32 %v167, %v235
    %v239 = vadd.f32 %v168, %v235
    %v240 = vadd.f32 %v169, %v235
    %v241 = vadd.f32 %v170, %v235
    %v242 = vadd.f32 %v171, %v235
    %v243 = vadd.f32 %v172, %v235
    %v244 = vadd.f32 %v173, %v235
    %v245 = vadd.f32 %v174, %v235
    %v246 = vadd.f32 %v175, %v235
    %v247 = vadd.f32 %v176, %v235
    %v248 = vadd.f32 %v177, %v235
    %v249 = vadd.f32 %v178, %v235
    %v250 = vadd.f32 %v179, %v235
    %v251 = vadd.f32 %v180, %v235
    %v252 = vadd.f32 %v181, %v235
    %v253 = vadd.f32 %v182, %v235
    %v254 = vadd.f32 %v183, %v235
    %v255 = vadd.f32 %v184, %v235
    %v256 = vadd.f32 %v185, %v235
    %v257 = vadd.f32 %v186, %v235
    %v258 = vadd.f32 %v187, %v235
    %v259 = vadd.f32 %v188, %v235
    %v260 = vadd.f32 %v189, %v235
    %v261 = vadd.f32 %v190, %v235
    %v262 = vadd.f32 %v191, %v235
    %v263 = vadd.f32 %v192, %v235
    %v264 = vadd.f32 %v193, %v235
    %v265 = vadd.f32 %v194, %v235
    %v266 = vadd.f32 %v195, %v235
    %v267 = vadd.f32 %v196, %v235
    %v268 = vadd.f32 %v197, %v235
    %v269 = vadd.f32 %v198, %v235
    %v270 = vadd.f32 %v199, %v235
    %v271 = vadd.f32 %v200, %v235
    %v272 = vadd.f32 %v201, %v235
    %v273 = vadd.f32 %v202, %v235
    %v274 = vadd.f32 %v203, %v235
    %v275 = vadd.f32 %v204, %v235
    %v276 = vadd.f32 %v205, %v235
    %v277 = vadd.f32 %v206, %v235
    %v278 = vadd.f32 %v207, %v235
    %v279 = vadd.f32 %v208, %v235
    %v280 = vadd.f32 %v209, %v235
    %v281 = vadd.f32 %v210, %v235
    %v282 = vadd.f32 %v211, %v235
    %v283 = vadd.f32 %v212, %v235
    %v284 = vadd.f32 %v213, %v235
    %v285 = vadd.f32 %v214, %v235
    %v286 = vadd.f32 %v215, %v235
    %v287 = vadd.f32 %v216, %v235
    %v288 = vadd.f32 %v217, %v235
    %v289 = vadd.f32 %v218, %v235
    %v290 = vadd.f32 %v219, %v235
    %v291 = vadd.f32 %v220, %v235
    %v292 = vadd.f32 %v221, %v235
    %v293 = vadd.f32 %v222, %v235
    %v294 = vadd.f32 %v223, %v235
    %v295 = vadd.f32 %v224, %v235
    %v296 = vadd.f32 %v225, %v235
    %v297 = vadd.f32 %v226, %v235
    %v298 = vadd.f32 %v227, %v235
    %v299 = vadd.f32 %v228, %v235
    %v300 = vadd.f32 %v229, %v235
    %v301 = vmax.f32 %v237, 0.0
    %v302 = vmax.f32 %v238, 0.0
    %v303 = vmax.f32 %v239, 0.0
    %v304 = vmax.f32 %v240, 0.0
    %v305 = vmax.f32 %v241, 0.0
    %v306 = vmax.f32 %v242, 0.0
    %v307 = vmax.f32 %v243, 0.0
    %v308 = vmax.f32 %v244, 0.0
    %v309 = vmax.f32 %v245, 0.0
    %v310 = vmax.f32 %v246, 0.0
    %v311 = vmax.f32 %v247, 0.0
    %v312 = vmax.f32 %v248, 0.0
    %v313 = vmax.f32 %v249, 0.0
    %v314 = vmax.f32 %v250, 0.0
    %v315 = vmax.f32 %v251, 0.0
    %v316 = vmax.f32 %v252, 0.0
    %v317 = vmax.f32 %v253, 0.0
    %v318 = vmax.f32 %v254, 0.0
    %v319 = vmax.f32 %v255, 0.0
    %v320 = vmax.f32 %v256, 0.0
    %v321 = vmax.f32 %v257, 0.0
    %v322 = vmax.f32 %v258, 0.0
    %v323 = vmax.f32 %v259, 0.0
    %v324 = vmax.f32 %v260, 0.0
    %v325 = vmax.f32 %v261, 0.0
    %v326 = vmax.f32 %v262, 0.0
    %v327 = vmax.f32 %v263, 0.0
    %v328 = vmax.f32 %v264, 0.0
    %v329 = vmax.f32 %v265, 0.0
    %v330 = vmax.f32 %v266, 0.0
    %v331 = vmax.f32 %v267, 0.0
    %v332 = vmax.f32 %v268, 0.0
    %v333 = vmax.f32 %v269, 0.0
    %v334 = vmax.f32 %v270, 0.0
    %v335 = vmax.f32 %v271, 0.0
    %v336 = vmax.f32 %v272, 0.0
    %v337 = vmax.f32 %v273, 0.0
    %v338 = vmax.f32 %v274, 0.0
    %v339 = vmax.f32 %v275, 0.0
    %v340 = vmax.f32 %v276, 0.0
    %v341 = vmax.f32 %v277, 0.0
    %v342 = vmax.f32 %v278, 0.0
    %v343 = vmax.f32 %v279, 0.0
    %v344 = vmax.f32 %v280, 0.0
    %v345 = vmax.f32 %v281, 0.0
    %v346 = vmax.f32 %v282, 0.0
    %v347 = vmax.f32 %v283, 0.0
    %v348 = vmax.f32 %v284, 0.0
    %v349 = vmax.f32 %v285, 0.0
    %v350 = vmax.f32 %v286, 0.0
    %v351 = vmax.f32 %v287, 0.0
    %v352 = vmax.f32 %v288, 0.0
    %v353 = vmax.f32 %v289, 0.0
    %v354 = vmax.f32 %v290, 0.0
    %v355 = vmax.f32 %v291, 0.0
    %v356 = vmax.f32 %v292, 0.0
    %v357 = vmax.f32 %v293, 0.0
    %v358 = vmax.f32 %v294, 0.0
    %v359 = vmax.f32 %v295, 0.0
    %v360 = vmax.f32 %v296, 0.0
    %v361 = vmax.f32 %v297, 0.0
    %v362 = vmax.f32 %v298, 0.0
    %v363 = vmax.f32 %v299, 0.0
    %v364 = vmax.f32 %v300, 0.0
    %v365 = vpack.c.bf16 %v302, %v301
    %v366 = vpack.c.bf16 %v304, %v303
    %v367 = vpack.c.bf16 %v306, %v305
    %v368 = vpack.c.bf16 %v308, %v307
    %v369 = vpack.c.bf16 %v310, %v309
    %v370 = vpack.c.bf16 %v312, %v311
    %v371 = vpack.c.bf16 %v314, %v313
    %v372 = vpack.c.bf16 %v316, %v315
    %v373 = vpack.c.bf16 %v318, %v317
    %v374 = vpack.c.bf16 %v320, %v319
    %v375 = vpack.c.bf16 %v322, %v321
    %v376 = vpack.c.bf16 %v324, %v323
    %v377 = vpack.c.bf16 %v326, %v325
    %v378 = vpack.c.bf16 %v328, %v327
    %v379 = vpack.c.bf16 %v330, %v329
    %v380 = vpack.c.bf16 %v332, %v331
    %v381 = vpack.c.bf16 %v334, %v333
    %v382 = vpack.c.bf16 %v336, %v335
    %v383 = vpack.c.bf16 %v338, %v337
    %v384 = vpack.c.bf16 %v340, %v339
    %v385 = vpack.c.bf16 %v342, %v341
    %v386 = vpack.c.bf16 %v344, %v343
    %v387 = vpack.c.bf16 %v346, %v345
    %v388 = vpack.c.bf16 %v348, %v347
    %v389 = vpack.c.bf16 %v350, %v349
    %v390 = vpack.c.bf16 %v352, %v351
    %v391 = vpack.c.bf16 %v354, %v353
    %v392 = vpack.c.bf16 %v356, %v355
    %v393 = vpack.c.bf16 %v358, %v357
    %v394 = vpack.c.bf16 %v360, %v359
    %v395 = vpack.c.bf16 %v362, %v361
    %v396 = vpack.c.bf16 %v364, %v363
    %v397 = vld [vmem:[%s3] sm:$0xf]
    %v398 = vld [vmem:[%s3 + $0x4] sm:$0xf]
    %v399 = vld [vmem:[%s3 + $0x8] sm:$0xf]
    %v400 = vld [vmem:[%s3 + $0xc] sm:$0xf]
    %v401 = vld [vmem:[%s3 + $0x10] sm:$0xf]
    %v402 = vld [vmem:[%s3 + $0x14] sm:$0xf]
    %v403 = vld [vmem:[%s3 + $0x18] sm:$0xf]
    %v404 = vld [vmem:[%s3 + $0x1c] sm:$0xf]
    %v405 = vld [vmem:[%s3 + $0x20] sm:$0xf]
    %v406 = vld [vmem:[%s3 + $0x24] sm:$0xf]
    %v407 = vld [vmem:[%s3 + $0x28] sm:$0xf]
    %v408 = vld [vmem:[%s3 + $0x2c] sm:$0xf]
    %v409 = vld [vmem:[%s3 + $0x30] sm:$0xf]
    %v410 = vld [vmem:[%s3 + $0x34] sm:$0xf]
    %v411 = vld [vmem:[%s3 + $0x38] sm:$0xf]
    %v412 = vld [vmem:[%s3 + $0x3c] sm:$0xf]
    %v413 = vld [vmem:[%s4] sm:$0x1]
    %v415 = vlaneseq
    %v416 = vshrl.u32 %v415, 7
    %v417 = vsub.s32 0, %v416
    %v418 = vrot.slane %v413, %v417
    %v436 = vunpack.c.l.b16 %v397
    %v437 = vunpack.c.l.b16 %v398
    %v438 = vunpack.c.l.b16 %v399
    %v439 = vunpack.c.l.b16 %v400
    %v440 = vunpack.c.l.b16 %v401
    %v441 = vunpack.c.l.b16 %v402
    %v442 = vunpack.c.l.b16 %v403
    %v443 = vunpack.c.l.b16 %v404
    %v444 = vunpack.c.l.b16 %v405
    %v445 = vunpack.c.l.b16 %v406
    %v446 = vunpack.c.l.b16 %v407
    %v447 = vunpack.c.l.b16 %v408
    %v448 = vunpack.c.l.b16 %v409
    %v449 = vunpack.c.l.b16 %v410
    %v450 = vunpack.c.l.b16 %v411
    %v451 = vunpack.c.l.b16 %v412
    %v452 = vpack.c.b16 %v437, %v436
    %v453 = vpack.c.b16 %v439, %v438
    %v454 = vpack.c.b16 %v441, %v440
    %v455 = vpack.c.b16 %v443, %v442
    %v456 = vpack.c.b16 %v445, %v444
    %v457 = vpack.c.b16 %v447, %v446
    %v458 = vpack.c.b16 %v449, %v448
    %v459 = vpack.c.b16 %v451, %v450
    %468 = vmatprep.subr.bf16.mxu0 0
    %469 = vmatpush1.bf16.msra.mxu0 %v459
    %470 = vmatprep.subr.bf16.mxu0 0
    %471 = vmatpush1.bf16.msra.mxu0 %v458
    %472 = vmatprep.subr.bf16.mxu0 0
    %473 = vmatpush1.bf16.msra.mxu0 %v457
    %474 = vmatprep.subr.bf16.mxu0 0
    %475 = vmatpush1.bf16.msra.mxu0 %v456
    %476 = vmatprep.subr.bf16.mxu0 0
    %477 = vmatpush1.bf16.msra.mxu0 %v455
    %478 = vmatprep.subr.bf16.mxu0 0
    %479 = vmatpush1.bf16.msra.mxu0 %v454
    %480 = vmatprep.subr.bf16.mxu0 0
    %481 = vmatpush1.bf16.msra.mxu0 %v453
    %482 = vmatprep.subr.bf16.mxu0 0
    %483 = vmatpush1.bf16.msra.mxu0 %v452
    %484 = vmatprep.subr.bf16.mxu0 0
    %485 = vmatpush2.bf16.msra.mxu0 0
    %486 = vmatprep.subr.bf16.mxu0 0
    %487 = vmatpush2.bf16.msra.mxu0 0
    %488 = vmatprep.subr.bf16.mxu0 0
    %489 = vmatpush2.bf16.msra.mxu0 0
    %490 = vmatprep.subr.bf16.mxu0 0
    %491 = vmatpush2.bf16.msra.mxu0 0
    %492 = vmatprep.subr.bf16.mxu0 0
    %493 = vmatpush2.bf16.msra.mxu0 0
    %494 = vmatprep.subr.bf16.mxu0 0
    %495 = vmatpush2.bf16.msra.mxu0 0
    %496 = vmatprep.subr.bf16.mxu0 0
    %497 = vmatpush2.bf16.msra.mxu0 0
    %498 = vmatprep.subr.bf16.mxu0 0
    %499 = vmatpush2.bf16.msra.mxu0 0
    %500 = vmatprep.mubr.bf16.mxu0 0
    %501 = vmatmul.mubr.bf16.gmra.mxu0 %v365
    %v502 = vpop.f32.mrf.mxu0
    %v503 = vadd.f32 %v418, %v502
    %v504 = vpop.f32.mrf.mxu0
    %v505 = vpop.f32.mrf.mxu0
    %v506 = vadd.f32 %v418, %v505
    %v507 = vpop.f32.mrf.mxu0
    %508 = vmatprep.mubr.bf16.mxu0 0
    %509 = vmatmul.mubr.bf16.gmra.mxu0 %v366
    %v510 = vpop.f32.mrf.mxu0
    %v511 = vadd.f32 %v418, %v510
    %v512 = vpop.f32.mrf.mxu0
    %v513 = vpop.f32.mrf.mxu0
    %v514 = vadd.f32 %v418, %v513
    %v515 = vpop.f32.mrf.mxu0
    %516 = vmatprep.mubr.bf16.mxu0 0
    %517 = vmatmul.mubr.bf16.gmra.mxu0 %v367
    %v518 = vpop.f32.mrf.mxu0
    %v519 = vadd.f32 %v418, %v518
    %v520 = vpop.f32.mrf.mxu0
    %v521 = vpop.f32.mrf.mxu0
    %v522 = vadd.f32 %v418, %v521
    %v523 = vpop.f32.mrf.mxu0
    %524 = vmatprep.mubr.bf16.mxu0 0
    %525 = vmatmul.mubr.bf16.gmra.mxu0 %v368
    %v526 = vpop.f32.mrf.mxu0
    %v527 = vadd.f32 %v418, %v526
    %v528 = vpop.f32.mrf.mxu0
    %v529 = vpop.f32.mrf.mxu0
    %v530 = vadd.f32 %v418, %v529
    %v531 = vpop.f32.mrf.mxu0
    %532 = vmatprep.mubr.bf16.mxu0 0
    %533 = vmatmul.mubr.bf16.gmra.mxu0 %v369
    %v534 = vpop.f32.mrf.mxu0
    %v535 = vadd.f32 %v418, %v534
    %v536 = vpop.f32.mrf.mxu0
    %v537 = vpop.f32.mrf.mxu0
    %v538 = vadd.f32 %v418, %v537
    %v539 = vpop.f32.mrf.mxu0
    %540 = vmatprep.mubr.bf16.mxu0 0
    %541 = vmatmul.mubr.bf16.gmra.mxu0 %v370
    %v542 = vpop.f32.mrf.mxu0
    %v543 = vadd.f32 %v418, %v542
    %v544 = vpop.f32.mrf.mxu0
    %v545 = vpop.f32.mrf.mxu0
    %v546 = vadd.f32 %v418, %v545
    %v547 = vpop.f32.mrf.mxu0
    %548 = vmatprep.mubr.bf16.mxu0 0
    %549 = vmatmul.mubr.bf16.gmra.mxu0 %v371
    %v550 = vpop.f32.mrf.mxu0
    %v551 = vadd.f32 %v418, %v550
    %v552 = vpop.f32.mrf.mxu0
    %v553 = vpop.f32.mrf.mxu0
    %v554 = vadd.f32 %v418, %v553
    %v555 = vpop.f32.mrf.mxu0
    %556 = vmatprep.mubr.bf16.mxu0 0
    %557 = vmatmul.mubr.bf16.gmra.mxu0 %v372
    %v558 = vpop.f32.mrf.mxu0
    %v559 = vadd.f32 %v418, %v558
    %v560 = vpop.f32.mrf.mxu0
    %v561 = vpop.f32.mrf.mxu0
    %v562 = vadd.f32 %v418, %v561
    %v563 = vpop.f32.mrf.mxu0
    %564 = vmatprep.mubr.bf16.mxu0 0
    %565 = vmatmul.mubr.bf16.gmra.mxu0 %v373
    %v566 = vpop.f32.mrf.mxu0
    %v567 = vadd.f32 %v418, %v566
    %v568 = vpop.f32.mrf.mxu0
    %v569 = vpop.f32.mrf.mxu0
    %v570 = vadd.f32 %v418, %v569
    %v571 = vpop.f32.mrf.mxu0
    %572 = vmatprep.mubr.bf16.mxu0 0
    %573 = vmatmul.mubr.bf16.gmra.mxu0 %v374
    %v574 = vpop.f32.mrf.mxu0
    %v575 = vadd.f32 %v418, %v574
    %v576 = vpop.f32.mrf.mxu0
    %v577 = vpop.f32.mrf.mxu0
    %v578 = vadd.f32 %v418, %v577
    %v579 = vpop.f32.mrf.mxu0
    %580 = vmatprep.mubr.bf16.mxu0 0
    %581 = vmatmul.mubr.bf16.gmra.mxu0 %v375
    %v582 = vpop.f32.mrf.mxu0
    %v583 = vadd.f32 %v418, %v582
    %v584 = vpop.f32.mrf.mxu0
    %v585 = vpop.f32.mrf.mxu0
    %v586 = vadd.f32 %v418, %v585
    %v587 = vpop.f32.mrf.mxu0
    %588 = vmatprep.mubr.bf16.mxu0 0
    %589 = vmatmul.mubr.bf16.gmra.mxu0 %v376
    %v590 = vpop.f32.mrf.mxu0
    %v591 = vadd.f32 %v418, %v590
    %v592 = vpop.f32.mrf.mxu0
    %v593 = vpop.f32.mrf.mxu0
    %v594 = vadd.f32 %v418, %v593
    %v595 = vpop.f32.mrf.mxu0
    %596 = vmatprep.mubr.bf16.mxu0 0
    %597 = vmatmul.mubr.bf16.gmra.mxu0 %v377
    %v598 = vpop.f32.mrf.mxu0
    %v599 = vadd.f32 %v418, %v598
    %v600 = vpop.f32.mrf.mxu0
    %v601 = vpop.f32.mrf.mxu0
    %v602 = vadd.f32 %v418, %v601
    %v603 = vpop.f32.mrf.mxu0
    %604 = vmatprep.mubr.bf16.mxu0 0
    %605 = vmatmul.mubr.bf16.gmra.mxu0 %v378
    %v606 = vpop.f32.mrf.mxu0
    %v607 = vadd.f32 %v418, %v606
    %v608 = vpop.f32.mrf.mxu0
    %v609 = vpop.f32.mrf.mxu0
    %v610 = vadd.f32 %v418, %v609
    %v611 = vpop.f32.mrf.mxu0
    %612 = vmatprep.mubr.bf16.mxu0 0
    %613 = vmatmul.mubr.bf16.gmra.mxu0 %v379
    %v614 = vpop.f32.mrf.mxu0
    %v615 = vadd.f32 %v418, %v614
    %v616 = vpop.f32.mrf.mxu0
    %v617 = vpop.f32.mrf.mxu0
    %v618 = vadd.f32 %v418, %v617
    %v619 = vpop.f32.mrf.mxu0
    %620 = vmatprep.mubr.bf16.mxu0 0
    %621 = vmatmul.mubr.bf16.gmra.mxu0 %v380
    %v622 = vpop.f32.mrf.mxu0
    %v623 = vadd.f32 %v418, %v622
    %v624 = vpop.f32.mrf.mxu0
    %v625 = vpop.f32.mrf.mxu0
    %v626 = vadd.f32 %v418, %v625
    %v627 = vpop.f32.mrf.mxu0
    %628 = vmatprep.mubr.bf16.mxu0 0
    %629 = vmatmul.mubr.bf16.gmra.mxu0 %v381
    %v630 = vpop.f32.mrf.mxu0
    %v631 = vadd.f32 %v418, %v630
    %v632 = vpop.f32.mrf.mxu0
    %v633 = vpop.f32.mrf.mxu0
    %v634 = vadd.f32 %v418, %v633
    %v635 = vpop.f32.mrf.mxu0
    %636 = vmatprep.mubr.bf16.mxu0 0
    %637 = vmatmul.mubr.bf16.gmra.mxu0 %v382
    %v638 = vpop.f32.mrf.mxu0
    %v639 = vadd.f32 %v418, %v638
    %v640 = vpop.f32.mrf.mxu0
    %v641 = vpop.f32.mrf.mxu0
    %v642 = vadd.f32 %v418, %v641
    %v643 = vpop.f32.mrf.mxu0
    %644 = vmatprep.mubr.bf16.mxu0 0
    %645 = vmatmul.mubr.bf16.gmra.mxu0 %v383
    %v646 = vpop.f32.mrf.mxu0
    %v647 = vadd.f32 %v418, %v646
    %v648 = vpop.f32.mrf.mxu0
    %v649 = vpop.f32.mrf.mxu0
    %v650 = vadd.f32 %v418, %v649
    %v651 = vpop.f32.mrf.mxu0
    %652 = vmatprep.mubr.bf16.mxu0 0
    %653 = vmatmul.mubr.bf16.gmra.mxu0 %v384
    %v654 = vpop.f32.mrf.mxu0
    %v655 = vadd.f32 %v418, %v654
    %v656 = vpop.f32.mrf.mxu0
    %v657 = vpop.f32.mrf.mxu0
    %v658 = vadd.f32 %v418, %v657
    %v659 = vpop.f32.mrf.mxu0
    %660 = vmatprep.mubr.bf16.mxu0 0
    %661 = vmatmul.mubr.bf16.gmra.mxu0 %v385
    %v662 = vpop.f32.mrf.mxu0
    %v663 = vadd.f32 %v418, %v662
    %v664 = vpop.f32.mrf.mxu0
    %v665 = vpop.f32.mrf.mxu0
    %v666 = vadd.f32 %v418, %v665
    %v667 = vpop.f32.mrf.mxu0
    %668 = vmatprep.mubr.bf16.mxu0 0
    %669 = vmatmul.mubr.bf16.gmra.mxu0 %v386
    %v670 = vpop.f32.mrf.mxu0
    %v671 = vadd.f32 %v418, %v670
    %v672 = vpop.f32.mrf.mxu0
    %v673 = vpop.f32.mrf.mxu0
    %v674 = vadd.f32 %v418, %v673
    %v675 = vpop.f32.mrf.mxu0
    %676 = vmatprep.mubr.bf16.mxu0 0
    %677 = vmatmul.mubr.bf16.gmra.mxu0 %v387
    %v678 = vpop.f32.mrf.mxu0
    %v679 = vadd.f32 %v418, %v678
    %v680 = vpop.f32.mrf.mxu0
    %v681 = vpop.f32.mrf.mxu0
    %v682 = vadd.f32 %v418, %v681
    %v683 = vpop.f32.mrf.mxu0
    %684 = vmatprep.mubr.bf16.mxu0 0
    %685 = vmatmul.mubr.bf16.gmra.mxu0 %v388
    %v686 = vpop.f32.mrf.mxu0
    %v687 = vadd.f32 %v418, %v686
    %v688 = vpop.f32.mrf.mxu0
    %v689 = vpop.f32.mrf.mxu0
    %v690 = vadd.f32 %v418, %v689
    %v691 = vpop.f32.mrf.mxu0
    %692 = vmatprep.mubr.bf16.mxu0 0
    %693 = vmatmul.mubr.bf16.gmra.mxu0 %v389
    %v694 = vpop.f32.mrf.mxu0
    %v695 = vadd.f32 %v418, %v694
    %v696 = vpop.f32.mrf.mxu0
    %v697 = vpop.f32.mrf.mxu0
    %v698 = vadd.f32 %v418, %v697
    %v699 = vpop.f32.mrf.mxu0
    %700 = vmatprep.mubr.bf16.mxu0 0
    %701 = vmatmul.mubr.bf16.gmra.mxu0 %v390
    %v702 = vpop.f32.mrf.mxu0
    %v703 = vadd.f32 %v418, %v702
    %v704 = vpop.f32.mrf.mxu0
    %v705 = vpop.f32.mrf.mxu0
    %v706 = vadd.f32 %v418, %v705
    %v707 = vpop.f32.mrf.mxu0
    %708 = vmatprep.mubr.bf16.mxu0 0
    %709 = vmatmul.mubr.bf16.gmra.mxu0 %v391
    %v710 = vpop.f32.mrf.mxu0
    %v711 = vadd.f32 %v418, %v710
    %v712 = vpop.f32.mrf.mxu0
    %v713 = vpop.f32.mrf.mxu0
    %v714 = vadd.f32 %v418, %v713
    %v715 = vpop.f32.mrf.mxu0
    %716 = vmatprep.mubr.bf16.mxu0 0
    %717 = vmatmul.mubr.bf16.gmra.mxu0 %v392
    %v718 = vpop.f32.mrf.mxu0
    %v719 = vadd.f32 %v418, %v718
    %v720 = vpop.f32.mrf.mxu0
    %v721 = vpop.f32.mrf.mxu0
    %v722 = vadd.f32 %v418, %v721
    %v723 = vpop.f32.mrf.mxu0
    %724 = vmatprep.mubr.bf16.mxu0 0
    %725 = vmatmul.mubr.bf16.gmra.mxu0 %v393
    %v726 = vpop.f32.mrf.mxu0
    %v727 = vadd.f32 %v418, %v726
    %v728 = vpop.f32.mrf.mxu0
    %v729 = vpop.f32.mrf.mxu0
    %v730 = vadd.f32 %v418, %v729
    %v731 = vpop.f32.mrf.mxu0
    %732 = vmatprep.mubr.bf16.mxu0 0
    %733 = vmatmul.mubr.bf16.gmra.mxu0 %v394
    %v734 = vpop.f32.mrf.mxu0
    %v735 = vadd.f32 %v418, %v734
    %v736 = vpop.f32.mrf.mxu0
    %v737 = vpop.f32.mrf.mxu0
    %v738 = vadd.f32 %v418, %v737
    %v739 = vpop.f32.mrf.mxu0
    %740 = vmatprep.mubr.bf16.mxu0 0
    %741 = vmatmul.mubr.bf16.gmra.mxu0 %v395
    %v742 = vpop.f32.mrf.mxu0
    %v743 = vadd.f32 %v418, %v742
    %v744 = vpop.f32.mrf.mxu0
    %v745 = vpop.f32.mrf.mxu0
    %v746 = vadd.f32 %v418, %v745
    %v747 = vpop.f32.mrf.mxu0
    %748 = vmatprep.mubr.bf16.mxu0 0
    %749 = vmatmul.mubr.bf16.gmra.mxu0 %v396
    %v750 = vpop.f32.mrf.mxu0
    %v751 = vadd.f32 %v418, %v750
    %v752 = vpop.f32.mrf.mxu0
    %v753 = vpop.f32.mrf.mxu0
    %v754 = vadd.f32 %v418, %v753
    %v755 = vpop.f32.mrf.mxu0
    %756 = vdwg.mxu0
    %v757 = vld [vmem:[%s5] sm:$0xff]
    %v758 = vld [vmem:[%s5 + $0x8] sm:$0xff]
    %v759 = vld [vmem:[%s5 + $0x10] sm:$0xff]
    %v760 = vld [vmem:[%s5 + $0x18] sm:$0xff]
    %v761 = vld [vmem:[%s5 + $0x20] sm:$0xff]
    %v762 = vld [vmem:[%s5 + $0x28] sm:$0xff]
    %v763 = vld [vmem:[%s5 + $0x30] sm:$0xff]
    %v764 = vld [vmem:[%s5 + $0x38] sm:$0xff]
    %v765 = vld [vmem:[%s5 + $0x40] sm:$0xff]
    %v766 = vld [vmem:[%s5 + $0x48] sm:$0xff]
    %v767 = vld [vmem:[%s5 + $0x50] sm:$0xff]
    %v768 = vld [vmem:[%s5 + $0x58] sm:$0xff]
    %v769 = vld [vmem:[%s5 + $0x60] sm:$0xff]
    %v770 = vld [vmem:[%s5 + $0x68] sm:$0xff]
    %v771 = vld [vmem:[%s5 + $0x70] sm:$0xff]
    %v772 = vld [vmem:[%s5 + $0x78] sm:$0xff]
    %v773 = vld [vmem:[%s5 + $0x80] sm:$0xff]
    %v774 = vld [vmem:[%s5 + $0x88] sm:$0xff]
    %v775 = vld [vmem:[%s5 + $0x90] sm:$0xff]
    %v776 = vld [vmem:[%s5 + $0x98] sm:$0xff]
    %v777 = vld [vmem:[%s5 + $0xa0] sm:$0xff]
    %v778 = vld [vmem:[%s5 + $0xa8] sm:$0xff]
    %v779 = vld [vmem:[%s5 + $0xb0] sm:$0xff]
    %v780 = vld [vmem:[%s5 + $0xb8] sm:$0xff]
    %v781 = vld [vmem:[%s5 + $0xc0] sm:$0xff]
    %v782 = vld [vmem:[%s5 + $0xc8] sm:$0xff]
    %v783 = vld [vmem:[%s5 + $0xd0] sm:$0xff]
    %v784 = vld [vmem:[%s5 + $0xd8] sm:$0xff]
    %v785 = vld [vmem:[%s5 + $0xe0] sm:$0xff]
    %v786 = vld [vmem:[%s5 + $0xe8] sm:$0xff]
    %v787 = vld [vmem:[%s5 + $0xf0] sm:$0xff]
    %v788 = vld [vmem:[%s5 + $0xf8] sm:$0xff]
    %v789 = vld [vmem:[%s5 + $0x100] sm:$0xff]
    %v790 = vld [vmem:[%s5 + $0x108] sm:$0xff]
    %v791 = vld [vmem:[%s5 + $0x110] sm:$0xff]
    %v792 = vld [vmem:[%s5 + $0x118] sm:$0xff]
    %v793 = vld [vmem:[%s5 + $0x120] sm:$0xff]
    %v794 = vld [vmem:[%s5 + $0x128] sm:$0xff]
    %v795 = vld [vmem:[%s5 + $0x130] sm:$0xff]
    %v796 = vld [vmem:[%s5 + $0x138] sm:$0xff]
    %v797 = vld [vmem:[%s5 + $0x140] sm:$0xff]
    %v798 = vld [vmem:[%s5 + $0x148] sm:$0xff]
    %v799 = vld [vmem:[%s5 + $0x150] sm:$0xff]
    %v800 = vld [vmem:[%s5 + $0x158] sm:$0xff]
    %v801 = vld [vmem:[%s5 + $0x160] sm:$0xff]
    %v802 = vld [vmem:[%s5 + $0x168] sm:$0xff]
    %v803 = vld [vmem:[%s5 + $0x170] sm:$0xff]
    %v804 = vld [vmem:[%s5 + $0x178] sm:$0xff]
    %v805 = vld [vmem:[%s5 + $0x180] sm:$0xff]
    %v806 = vld [vmem:[%s5 + $0x188] sm:$0xff]
    %v807 = vld [vmem:[%s5 + $0x190] sm:$0xff]
    %v808 = vld [vmem:[%s5 + $0x198] sm:$0xff]
    %v809 = vld [vmem:[%s5 + $0x1a0] sm:$0xff]
    %v810 = vld [vmem:[%s5 + $0x1a8] sm:$0xff]
    %v811 = vld [vmem:[%s5 + $0x1b0] sm:$0xff]
    %v812 = vld [vmem:[%s5 + $0x1b8] sm:$0xff]
    %v813 = vld [vmem:[%s5 + $0x1c0] sm:$0xff]
    %v814 = vld [vmem:[%s5 + $0x1c8] sm:$0xff]
    %v815 = vld [vmem:[%s5 + $0x1d0] sm:$0xff]
    %v816 = vld [vmem:[%s5 + $0x1d8] sm:$0xff]
    %v817 = vld [vmem:[%s5 + $0x1e0] sm:$0xff]
    %v818 = vld [vmem:[%s5 + $0x1e8] sm:$0xff]
    %v819 = vld [vmem:[%s5 + $0x1f0] sm:$0xff]
    %v820 = vld [vmem:[%s5 + $0x1f8] sm:$0xff]
    %v821 = vpack.c.bf16 %v758, %v757
    %v822 = vpack.c.bf16 %v760, %v759
    %v823 = vpack.c.bf16 %v762, %v761
    %v824 = vpack.c.bf16 %v764, %v763
    %v825 = vpack.c.bf16 %v766, %v765
    %v826 = vpack.c.bf16 %v768, %v767
    %v827 = vpack.c.bf16 %v770, %v769
    %v828 = vpack.c.bf16 %v772, %v771
    %v829 = vpack.c.bf16 %v774, %v773
    %v830 = vpack.c.bf16 %v776, %v775
    %v831 = vpack.c.bf16 %v778, %v777
    %v832 = vpack.c.bf16 %v780, %v779
    %v833 = vpack.c.bf16 %v782, %v781
    %v834 = vpack.c.bf16 %v784, %v783
    %v835 = vpack.c.bf16 %v786, %v785
    %v836 = vpack.c.bf16 %v788, %v787
    %v837 = vpack.c.bf16 %v790, %v789
    %v838 = vpack.c.bf16 %v792, %v791
    %v839 = vpack.c.bf16 %v794, %v793
    %v840 = vpack.c.bf16 %v796, %v795
    %v841 = vpack.c.bf16 %v798, %v797
    %v842 = vpack.c.bf16 %v800, %v799
    %v843 = vpack.c.bf16 %v802, %v801
    %v844 = vpack.c.bf16 %v804, %v803
    %v845 = vpack.c.bf16 %v806, %v805
    %v846 = vpack.c.bf16 %v808, %v807
    %v847 = vpack.c.bf16 %v810, %v809
    %v848 = vpack.c.bf16 %v812, %v811
    %v849 = vpack.c.bf16 %v814, %v813
    %v850 = vpack.c.bf16 %v816, %v815
    %v851 = vpack.c.bf16 %v818, %v817
    %v852 = vpack.c.bf16 %v820, %v819
    %v853 = vld [vmem:[%s6] sm:$0xf]
    %v854 = vld [vmem:[%s6 + $0x4] sm:$0xf]
    %v855 = vld [vmem:[%s6 + $0x8] sm:$0xf]
    %v856 = vld [vmem:[%s6 + $0xc] sm:$0xf]
    %v857 = vld [vmem:[%s6 + $0x10] sm:$0xf]
    %v858 = vld [vmem:[%s6 + $0x14] sm:$0xf]
    %v859 = vld [vmem:[%s6 + $0x18] sm:$0xf]
    %v860 = vld [vmem:[%s6 + $0x1c] sm:$0xf]
    %v861 = vld [vmem:[%s6 + $0x20] sm:$0xf]
    %v862 = vld [vmem:[%s6 + $0x24] sm:$0xf]
    %v863 = vld [vmem:[%s6 + $0x28] sm:$0xf]
    %v864 = vld [vmem:[%s6 + $0x2c] sm:$0xf]
    %v865 = vld [vmem:[%s6 + $0x30] sm:$0xf]
    %v866 = vld [vmem:[%s6 + $0x34] sm:$0xf]
    %v867 = vld [vmem:[%s6 + $0x38] sm:$0xf]
    %v868 = vld [vmem:[%s6 + $0x3c] sm:$0xf]
    %v869 = vld [vmem:[%s7] sm:$0x1]
    %v871 = vlaneseq
    %v872 = vshrl.u32 %v871, 7
    %v873 = vsub.s32 0, %v872
    %v874 = vrot.slane %v869, %v873
    %v892 = vunpack.c.l.b16 %v853
    %v893 = vunpack.c.l.b16 %v854
    %v894 = vunpack.c.l.b16 %v855
    %v895 = vunpack.c.l.b16 %v856
    %v896 = vunpack.c.l.b16 %v857
    %v897 = vunpack.c.l.b16 %v858
    %v898 = vunpack.c.l.b16 %v859
    %v899 = vunpack.c.l.b16 %v860
    %v900 = vunpack.c.l.b16 %v861
    %v901 = vunpack.c.l.b16 %v862
    %v902 = vunpack.c.l.b16 %v863
    %v903 = vunpack.c.l.b16 %v864
    %v904 = vunpack.c.l.b16 %v865
    %v905 = vunpack.c.l.b16 %v866
    %v906 = vunpack.c.l.b16 %v867
    %v907 = vunpack.c.l.b16 %v868
    %v908 = vpack.c.b16 %v893, %v892
    %v909 = vpack.c.b16 %v895, %v894
    %v910 = vpack.c.b16 %v897, %v896
    %v911 = vpack.c.b16 %v899, %v898
    %v912 = vpack.c.b16 %v901, %v900
    %v913 = vpack.c.b16 %v903, %v902
    %v914 = vpack.c.b16 %v905, %v904
    %v915 = vpack.c.b16 %v907, %v906
    %924 = vmatprep.subr.bf16.mxu0 0
    %925 = vmatpush1.bf16.msra.mxu0 %v915
    %926 = vmatprep.subr.bf16.mxu0 0
    %927 = vmatpush1.bf16.msra.mxu0 %v914
    %928 = vmatprep.subr.bf16.mxu0 0
    %929 = vmatpush1.bf16.msra.mxu0 %v913
    %930 = vmatprep.subr.bf16.mxu0 0
    %931 = vmatpush1.bf16.msra.mxu0 %v912
    %932 = vmatprep.subr.bf16.mxu0 0
    %933 = vmatpush1.bf16.msra.mxu0 %v911
    %934 = vmatprep.subr.bf16.mxu0 0
    %935 = vmatpush1.bf16.msra.mxu0 %v910
    %936 = vmatprep.subr.bf16.mxu0 0
    %937 = vmatpush1.bf16.msra.mxu0 %v909
    %938 = vmatprep.subr.bf16.mxu0 0
    %939 = vmatpush1.bf16.msra.mxu0 %v908
    %940 = vmatprep.subr.bf16.mxu0 0
    %941 = vmatpush2.bf16.msra.mxu0 0
    %942 = vmatprep.subr.bf16.mxu0 0
    %943 = vmatpush2.bf16.msra.mxu0 0
    %944 = vmatprep.subr.bf16.mxu0 0
    %945 = vmatpush2.bf16.msra.mxu0 0
    %946 = vmatprep.subr.bf16.mxu0 0
    %947 = vmatpush2.bf16.msra.mxu0 0
    %948 = vmatprep.subr.bf16.mxu0 0
    %949 = vmatpush2.bf16.msra.mxu0 0
    %950 = vmatprep.subr.bf16.mxu0 0
    %951 = vmatpush2.bf16.msra.mxu0 0
    %952 = vmatprep.subr.bf16.mxu0 0
    %953 = vmatpush2.bf16.msra.mxu0 0
    %954 = vmatprep.subr.bf16.mxu0 0
    %955 = vmatpush2.bf16.msra.mxu0 0
    %956 = vmatprep.mubr.bf16.mxu0 0
    %957 = vmatmul.mubr.bf16.gmra.mxu0 %v821
    %v958 = vpop.f32.mrf.mxu0
    %v959 = vadd.f32 %v874, %v958
    %v960 = vpop.f32.mrf.mxu0
    %v961 = vpop.f32.mrf.mxu0
    %v962 = vadd.f32 %v874, %v961
    %v963 = vpop.f32.mrf.mxu0
    %964 = vmatprep.mubr.bf16.mxu0 0
    %965 = vmatmul.mubr.bf16.gmra.mxu0 %v822
    %v966 = vpop.f32.mrf.mxu0
    %v967 = vadd.f32 %v874, %v966
    %v968 = vpop.f32.mrf.mxu0
    %v969 = vpop.f32.mrf.mxu0
    %v970 = vadd.f32 %v874, %v969
    %v971 = vpop.f32.mrf.mxu0
    %972 = vmatprep.mubr.bf16.mxu0 0
    %973 = vmatmul.mubr.bf16.gmra.mxu0 %v823
    %v974 = vpop.f32.mrf.mxu0
    %v975 = vadd.f32 %v874, %v974
    %v976 = vpop.f32.mrf.mxu0
    %v977 = vpop.f32.mrf.mxu0
    %v978 = vadd.f32 %v874, %v977
    %v979 = vpop.f32.mrf.mxu0
    %980 = vmatprep.mubr.bf16.mxu0 0
    %981 = vmatmul.mubr.bf16.gmra.mxu0 %v824
    %v982 = vpop.f32.mrf.mxu0
    %v983 = vadd.f32 %v874, %v982
    %v984 = vpop.f32.mrf.mxu0
    %v985 = vpop.f32.mrf.mxu0
    %v986 = vadd.f32 %v874, %v985
    %v987 = vpop.f32.mrf.mxu0
    %988 = vmatprep.mubr.bf16.mxu0 0
    %989 = vmatmul.mubr.bf16.gmra.mxu0 %v825
    %v990 = vpop.f32.mrf.mxu0
    %v991 = vadd.f32 %v874, %v990
    %v992 = vpop.f32.mrf.mxu0
    %v993 = vpop.f32.mrf.mxu0
    %v994 = vadd.f32 %v874, %v993
    %v995 = vpop.f32.mrf.mxu0
    %996 = vmatprep.mubr.bf16.mxu0 0
    %997 = vmatmul.mubr.bf16.gmra.mxu0 %v826
    %v998 = vpop.f32.mrf.mxu0
    %v999 = vadd.f32 %v874, %v998
    %v1000 = vpop.f32.mrf.mxu0
    %v1001 = vpop.f32.mrf.mxu0
    %v1002 = vadd.f32 %v874, %v1001
    %v1003 = vpop.f32.mrf.mxu0
    %1004 = vmatprep.mubr.bf16.mxu0 0
    %1005 = vmatmul.mubr.bf16.gmra.mxu0 %v827
    %v1006 = vpop.f32.mrf.mxu0
    %v1007 = vadd.f32 %v874, %v1006
    %v1008 = vpop.f32.mrf.mxu0
    %v1009 = vpop.f32.mrf.mxu0
    %v1010 = vadd.f32 %v874, %v1009
    %v1011 = vpop.f32.mrf.mxu0
    %1012 = vmatprep.mubr.bf16.mxu0 0
    %1013 = vmatmul.mubr.bf16.gmra.mxu0 %v828
    %v1014 = vpop.f32.mrf.mxu0
    %v1015 = vadd.f32 %v874, %v1014
    %v1016 = vpop.f32.mrf.mxu0
    %v1017 = vpop.f32.mrf.mxu0
    %v1018 = vadd.f32 %v874, %v1017
    %v1019 = vpop.f32.mrf.mxu0
    %1020 = vmatprep.mubr.bf16.mxu0 0
    %1021 = vmatmul.mubr.bf16.gmra.mxu0 %v829
    %v1022 = vpop.f32.mrf.mxu0
    %v1023 = vadd.f32 %v874, %v1022
    %v1024 = vpop.f32.mrf.mxu0
    %v1025 = vpop.f32.mrf.mxu0
    %v1026 = vadd.f32 %v874, %v1025
    %v1027 = vpop.f32.mrf.mxu0
    %1028 = vmatprep.mubr.bf16.mxu0 0
    %1029 = vmatmul.mubr.bf16.gmra.mxu0 %v830
    %v1030 = vpop.f32.mrf.mxu0
    %v1031 = vadd.f32 %v874, %v1030
    %v1032 = vpop.f32.mrf.mxu0
    %v1033 = vpop.f32.mrf.mxu0
    %v1034 = vadd.f32 %v874, %v1033
    %v1035 = vpop.f32.mrf.mxu0
    %1036 = vmatprep.mubr.bf16.mxu0 0
    %1037 = vmatmul.mubr.bf16.gmra.mxu0 %v831
    %v1038 = vpop.f32.mrf.mxu0
    %v1039 = vadd.f32 %v874, %v1038
    %v1040 = vpop.f32.mrf.mxu0
    %v1041 = vpop.f32.mrf.mxu0
    %v1042 = vadd.f32 %v874, %v1041
    %v1043 = vpop.f32.mrf.mxu0
    %1044 = vmatprep.mubr.bf16.mxu0 0
    %1045 = vmatmul.mubr.bf16.gmra.mxu0 %v832
    %v1046 = vpop.f32.mrf.mxu0
    %v1047 = vadd.f32 %v874, %v1046
    %v1048 = vpop.f32.mrf.mxu0
    %v1049 = vpop.f32.mrf.mxu0
    %v1050 = vadd.f32 %v874, %v1049
    %v1051 = vpop.f32.mrf.mxu0
    %1052 = vmatprep.mubr.bf16.mxu0 0
    %1053 = vmatmul.mubr.bf16.gmra.mxu0 %v833
    %v1054 = vpop.f32.mrf.mxu0
    %v1055 = vadd.f32 %v874, %v1054
    %v1056 = vpop.f32.mrf.mxu0
    %v1057 = vpop.f32.mrf.mxu0
    %v1058 = vadd.f32 %v874, %v1057
    %v1059 = vpop.f32.mrf.mxu0
    %1060 = vmatprep.mubr.bf16.mxu0 0
    %1061 = vmatmul.mubr.bf16.gmra.mxu0 %v834
    %v1062 = vpop.f32.mrf.mxu0
    %v1063 = vadd.f32 %v874, %v1062
    %v1064 = vpop.f32.mrf.mxu0
    %v1065 = vpop.f32.mrf.mxu0
    %v1066 = vadd.f32 %v874, %v1065
    %v1067 = vpop.f32.mrf.mxu0
    %1068 = vmatprep.mubr.bf16.mxu0 0
    %1069 = vmatmul.mubr.bf16.gmra.mxu0 %v835
    %v1070 = vpop.f32.mrf.mxu0
    %v1071 = vadd.f32 %v874, %v1070
    %v1072 = vpop.f32.mrf.mxu0
    %v1073 = vpop.f32.mrf.mxu0
    %v1074 = vadd.f32 %v874, %v1073
    %v1075 = vpop.f32.mrf.mxu0
    %1076 = vmatprep.mubr.bf16.mxu0 0
    %1077 = vmatmul.mubr.bf16.gmra.mxu0 %v836
    %v1078 = vpop.f32.mrf.mxu0
    %v1079 = vadd.f32 %v874, %v1078
    %v1080 = vpop.f32.mrf.mxu0
    %v1081 = vpop.f32.mrf.mxu0
    %v1082 = vadd.f32 %v874, %v1081
    %v1083 = vpop.f32.mrf.mxu0
    %1084 = vmatprep.mubr.bf16.mxu0 0
    %1085 = vmatmul.mubr.bf16.gmra.mxu0 %v837
    %v1086 = vpop.f32.mrf.mxu0
    %v1087 = vadd.f32 %v874, %v1086
    %v1088 = vpop.f32.mrf.mxu0
    %v1089 = vpop.f32.mrf.mxu0
    %v1090 = vadd.f32 %v874, %v1089
    %v1091 = vpop.f32.mrf.mxu0
    %1092 = vmatprep.mubr.bf16.mxu0 0
    %1093 = vmatmul.mubr.bf16.gmra.mxu0 %v838
    %v1094 = vpop.f32.mrf.mxu0
    %v1095 = vadd.f32 %v874, %v1094
    %v1096 = vpop.f32.mrf.mxu0
    %v1097 = vpop.f32.mrf.mxu0
    %v1098 = vadd.f32 %v874, %v1097
    %v1099 = vpop.f32.mrf.mxu0
    %1100 = vmatprep.mubr.bf16.mxu0 0
    %1101 = vmatmul.mubr.bf16.gmra.mxu0 %v839
    %v1102 = vpop.f32.mrf.mxu0
    %v1103 = vadd.f32 %v874, %v1102
    %v1104 = vpop.f32.mrf.mxu0
    %v1105 = vpop.f32.mrf.mxu0
    %v1106 = vadd.f32 %v874, %v1105
    %v1107 = vpop.f32.mrf.mxu0
    %1108 = vmatprep.mubr.bf16.mxu0 0
    %1109 = vmatmul.mubr.bf16.gmra.mxu0 %v840
    %v1110 = vpop.f32.mrf.mxu0
    %v1111 = vadd.f32 %v874, %v1110
    %v1112 = vpop.f32.mrf.mxu0
    %v1113 = vpop.f32.mrf.mxu0
    %v1114 = vadd.f32 %v874, %v1113
    %v1115 = vpop.f32.mrf.mxu0
    %1116 = vmatprep.mubr.bf16.mxu0 0
    %1117 = vmatmul.mubr.bf16.gmra.mxu0 %v841
    %v1118 = vpop.f32.mrf.mxu0
    %v1119 = vadd.f32 %v874, %v1118
    %v1120 = vpop.f32.mrf.mxu0
    %v1121 = vpop.f32.mrf.mxu0
    %v1122 = vadd.f32 %v874, %v1121
    %v1123 = vpop.f32.mrf.mxu0
    %1124 = vmatprep.mubr.bf16.mxu0 0
    %1125 = vmatmul.mubr.bf16.gmra.mxu0 %v842
    %v1126 = vpop.f32.mrf.mxu0
    %v1127 = vadd.f32 %v874, %v1126
    %v1128 = vpop.f32.mrf.mxu0
    %v1129 = vpop.f32.mrf.mxu0
    %v1130 = vadd.f32 %v874, %v1129
    %v1131 = vpop.f32.mrf.mxu0
    %1132 = vmatprep.mubr.bf16.mxu0 0
    %1133 = vmatmul.mubr.bf16.gmra.mxu0 %v843
    %v1134 = vpop.f32.mrf.mxu0
    %v1135 = vadd.f32 %v874, %v1134
    %v1136 = vpop.f32.mrf.mxu0
    %v1137 = vpop.f32.mrf.mxu0
    %v1138 = vadd.f32 %v874, %v1137
    %v1139 = vpop.f32.mrf.mxu0
    %1140 = vmatprep.mubr.bf16.mxu0 0
    %1141 = vmatmul.mubr.bf16.gmra.mxu0 %v844
    %v1142 = vpop.f32.mrf.mxu0
    %v1143 = vadd.f32 %v874, %v1142
    %v1144 = vpop.f32.mrf.mxu0
    %v1145 = vpop.f32.mrf.mxu0
    %v1146 = vadd.f32 %v874, %v1145
    %v1147 = vpop.f32.mrf.mxu0
    %1148 = vmatprep.mubr.bf16.mxu0 0
    %1149 = vmatmul.mubr.bf16.gmra.mxu0 %v845
    %v1150 = vpop.f32.mrf.mxu0
    %v1151 = vadd.f32 %v874, %v1150
    %v1152 = vpop.f32.mrf.mxu0
    %v1153 = vpop.f32.mrf.mxu0
    %v1154 = vadd.f32 %v874, %v1153
    %v1155 = vpop.f32.mrf.mxu0
    %1156 = vmatprep.mubr.bf16.mxu0 0
    %1157 = vmatmul.mubr.bf16.gmra.mxu0 %v846
    %v1158 = vpop.f32.mrf.mxu0
    %v1159 = vadd.f32 %v874, %v1158
    %v1160 = vpop.f32.mrf.mxu0
    %v1161 = vpop.f32.mrf.mxu0
    %v1162 = vadd.f32 %v874, %v1161
    %v1163 = vpop.f32.mrf.mxu0
    %1164 = vmatprep.mubr.bf16.mxu0 0
    %1165 = vmatmul.mubr.bf16.gmra.mxu0 %v847
    %v1166 = vpop.f32.mrf.mxu0
    %v1167 = vadd.f32 %v874, %v1166
    %v1168 = vpop.f32.mrf.mxu0
    %v1169 = vpop.f32.mrf.mxu0
    %v1170 = vadd.f32 %v874, %v1169
    %v1171 = vpop.f32.mrf.mxu0
    %1172 = vmatprep.mubr.bf16.mxu0 0
    %1173 = vmatmul.mubr.bf16.gmra.mxu0 %v848
    %v1174 = vpop.f32.mrf.mxu0
    %v1175 = vadd.f32 %v874, %v1174
    %v1176 = vpop.f32.mrf.mxu0
    %v1177 = vpop.f32.mrf.mxu0
    %v1178 = vadd.f32 %v874, %v1177
    %v1179 = vpop.f32.mrf.mxu0
    %1180 = vmatprep.mubr.bf16.mxu0 0
    %1181 = vmatmul.mubr.bf16.gmra.mxu0 %v849
    %v1182 = vpop.f32.mrf.mxu0
    %v1183 = vadd.f32 %v874, %v1182
    %v1184 = vpop.f32.mrf.mxu0
    %v1185 = vpop.f32.mrf.mxu0
    %v1186 = vadd.f32 %v874, %v1185
    %v1187 = vpop.f32.mrf.mxu0
    %1188 = vmatprep.mubr.bf16.mxu0 0
    %1189 = vmatmul.mubr.bf16.gmra.mxu0 %v850
    %v1190 = vpop.f32.mrf.mxu0
    %v1191 = vadd.f32 %v874, %v1190
    %v1192 = vpop.f32.mrf.mxu0
    %v1193 = vpop.f32.mrf.mxu0
    %v1194 = vadd.f32 %v874, %v1193
    %v1195 = vpop.f32.mrf.mxu0
    %1196 = vmatprep.mubr.bf16.mxu0 0
    %1197 = vmatmul.mubr.bf16.gmra.mxu0 %v851
    %v1198 = vpop.f32.mrf.mxu0
    %v1199 = vadd.f32 %v874, %v1198
    %v1200 = vpop.f32.mrf.mxu0
    %v1201 = vpop.f32.mrf.mxu0
    %v1202 = vadd.f32 %v874, %v1201
    %v1203 = vpop.f32.mrf.mxu0
    %1204 = vmatprep.mubr.bf16.mxu0 0
    %1205 = vmatmul.mubr.bf16.gmra.mxu0 %v852
    %v1206 = vpop.f32.mrf.mxu0
    %v1207 = vadd.f32 %v874, %v1206
    %v1208 = vpop.f32.mrf.mxu0
    %v1209 = vpop.f32.mrf.mxu0
    %v1210 = vadd.f32 %v874, %v1209
    %v1211 = vpop.f32.mrf.mxu0
    %1212 = vdwg.mxu0
    %v1213 = vadd.f32 %v503, %v959
    %v1214 = vadd.f32 %v506, %v962
    %v1215 = vadd.f32 %v511, %v967
    %v1216 = vadd.f32 %v514, %v970
    %v1217 = vadd.f32 %v519, %v975
    %v1218 = vadd.f32 %v522, %v978
    %v1219 = vadd.f32 %v527, %v983
    %v1220 = vadd.f32 %v530, %v986
    %v1221 = vadd.f32 %v535, %v991
    %v1222 = vadd.f32 %v538, %v994
    %v1223 = vadd.f32 %v543, %v999
    %v1224 = vadd.f32 %v546, %v1002
    %v1225 = vadd.f32 %v551, %v1007
    %v1226 = vadd.f32 %v554, %v1010
    %v1227 = vadd.f32 %v559, %v1015
    %v1228 = vadd.f32 %v562, %v1018
    %v1229 = vadd.f32 %v567, %v1023
    %v1230 = vadd.f32 %v570, %v1026
    %v1231 = vadd.f32 %v575, %v1031
    %v1232 = vadd.f32 %v578, %v1034
    %v1233 = vadd.f32 %v583, %v1039
    %v1234 = vadd.f32 %v586, %v1042
    %v1235 = vadd.f32 %v591, %v1047
    %v1236 = vadd.f32 %v594, %v1050
    %v1237 = vadd.f32 %v599, %v1055
    %v1238 = vadd.f32 %v602, %v1058
    %v1239 = vadd.f32 %v607, %v1063
    %v1240 = vadd.f32 %v610, %v1066
    %v1241 = vadd.f32 %v615, %v1071
    %v1242 = vadd.f32 %v618, %v1074
    %v1243 = vadd.f32 %v623, %v1079
    %v1244 = vadd.f32 %v626, %v1082
    %v1245 = vadd.f32 %v631, %v1087
    %v1246 = vadd.f32 %v634, %v1090
    %v1247 = vadd.f32 %v639, %v1095
    %v1248 = vadd.f32 %v642, %v1098
    %v1249 = vadd.f32 %v647, %v1103
    %v1250 = vadd.f32 %v650, %v1106
    %v1251 = vadd.f32 %v655, %v1111
    %v1252 = vadd.f32 %v658, %v1114
    %v1253 = vadd.f32 %v663, %v1119
    %v1254 = vadd.f32 %v666, %v1122
    %v1255 = vadd.f32 %v671, %v1127
    %v1256 = vadd.f32 %v674, %v1130
    %v1257 = vadd.f32 %v679, %v1135
    %v1258 = vadd.f32 %v682, %v1138
    %v1259 = vadd.f32 %v687, %v1143
    %v1260 = vadd.f32 %v690, %v1146
    %v1261 = vadd.f32 %v695, %v1151
    %v1262 = vadd.f32 %v698, %v1154
    %v1263 = vadd.f32 %v703, %v1159
    %v1264 = vadd.f32 %v706, %v1162
    %v1265 = vadd.f32 %v711, %v1167
    %v1266 = vadd.f32 %v714, %v1170
    %v1267 = vadd.f32 %v719, %v1175
    %v1268 = vadd.f32 %v722, %v1178
    %v1269 = vadd.f32 %v727, %v1183
    %v1270 = vadd.f32 %v730, %v1186
    %v1271 = vadd.f32 %v735, %v1191
    %v1272 = vadd.f32 %v738, %v1194
    %v1273 = vadd.f32 %v743, %v1199
    %v1274 = vadd.f32 %v746, %v1202
    %v1275 = vadd.f32 %v751, %v1207
    %v1276 = vadd.f32 %v754, %v1210
    %1277 = vst [vmem:[#allocation2] sm:$0xff] %v1213
    %1278 = vst [vmem:[#allocation2 + $0x8] sm:$0xff] %v1214
    %1279 = vst [vmem:[#allocation2 + $0x10] sm:$0xff] %v1215
    %1280 = vst [vmem:[#allocation2 + $0x18] sm:$0xff] %v1216
    %1281 = vst [vmem:[#allocation2 + $0x20] sm:$0xff] %v1217
    %1282 = vst [vmem:[#allocation2 + $0x28] sm:$0xff] %v1218
    %1283 = vst [vmem:[#allocation2 + $0x30] sm:$0xff] %v1219
    %1284 = vst [vmem:[#allocation2 + $0x38] sm:$0xff] %v1220
    %1285 = vst [vmem:[#allocation2 + $0x40] sm:$0xff] %v1221
    %1286 = vst [vmem:[#allocation2 + $0x48] sm:$0xff] %v1222
    %1287 = vst [vmem:[#allocation2 + $0x50] sm:$0xff] %v1223
    %1288 = vst [vmem:[#allocation2 + $0x58] sm:$0xff] %v1224
    %1289 = vst [vmem:[#allocation2 + $0x60] sm:$0xff] %v1225
    %1290 = vst [vmem:[#allocation2 + $0x68] sm:$0xff] %v1226
    %1291 = vst [vmem:[#allocation2 + $0x70] sm:$0xff] %v1227
    %1292 = vst [vmem:[#allocation2 + $0x78] sm:$0xff] %v1228
    %1293 = vst [vmem:[#allocation2 + $0x80] sm:$0xff] %v1229
    %1294 = vst [vmem:[#allocation2 + $0x88] sm:$0xff] %v1230
    %1295 = vst [vmem:[#allocation2 + $0x90] sm:$0xff] %v1231
    %1296 = vst [vmem:[#allocation2 + $0x98] sm:$0xff] %v1232
    %1297 = vst [vmem:[#allocation2 + $0xa0] sm:$0xff] %v1233
    %1298 = vst [vmem:[#allocation2 + $0xa8] sm:$0xff] %v1234
    %1299 = vst [vmem:[#allocation2 + $0xb0] sm:$0xff] %v1235
    %1300 = vst [vmem:[#allocation2 + $0xb8] sm:$0xff] %v1236
    %1301 = vst [vmem:[#allocation2 + $0xc0] sm:$0xff] %v1237
    %1302 = vst [vmem:[#allocation2 + $0xc8] sm:$0xff] %v1238
    %1303 = vst [vmem:[#allocation2 + $0xd0] sm:$0xff] %v1239
    %1304 = vst [vmem:[#allocation2 + $0xd8] sm:$0xff] %v1240
    %1305 = vst [vmem:[#allocation2 + $0xe0] sm:$0xff] %v1241
    %1306 = vst [vmem:[#allocation2 + $0xe8] sm:$0xff] %v1242
    %1307 = vst [vmem:[#allocation2 + $0xf0] sm:$0xff] %v1243
    %1308 = vst [vmem:[#allocation2 + $0xf8] sm:$0xff] %v1244
    %1309 = vst [vmem:[#allocation2 + $0x100] sm:$0xff] %v1245
    %1310 = vst [vmem:[#allocation2 + $0x108] sm:$0xff] %v1246
    %1311 = vst [vmem:[#allocation2 + $0x110] sm:$0xff] %v1247
    %1312 = vst [vmem:[#allocation2 + $0x118] sm:$0xff] %v1248
    %1313 = vst [vmem:[#allocation2 + $0x120] sm:$0xff] %v1249
    %1314 = vst [vmem:[#allocation2 + $0x128] sm:$0xff] %v1250
    %1315 = vst [vmem:[#allocation2 + $0x130] sm:$0xff] %v1251
    %1316 = vst [vmem:[#allocation2 + $0x138] sm:$0xff] %v1252
    %1317 = vst [vmem:[#allocation2 + $0x140] sm:$0xff] %v1253
    %1318 = vst [vmem:[#allocation2 + $0x148] sm:$0xff] %v1254
    %1319 = vst [vmem:[#allocation2 + $0x150] sm:$0xff] %v1255
    %1320 = vst [vmem:[#allocation2 + $0x158] sm:$0xff] %v1256
    %1321 = vst [vmem:[#allocation2 + $0x160] sm:$0xff] %v1257
    %1322 = vst [vmem:[#allocation2 + $0x168] sm:$0xff] %v1258
    %1323 = vst [vmem:[#allocation2 + $0x170] sm:$0xff] %v1259
    %1324 = vst [vmem:[#allocation2 + $0x178] sm:$0xff] %v1260
    %1325 = vst [vmem:[#allocation2 + $0x180] sm:$0xff] %v1261
    %1326 = vst [vmem:[#allocation2 + $0x188] sm:$0xff] %v1262
    %1327 = vst [vmem:[#allocation2 + $0x190] sm:$0xff] %v1263
    %1328 = vst [vmem:[#allocation2 + $0x198] sm:$0xff] %v1264
    %1329 = vst [vmem:[#allocation2 + $0x1a0] sm:$0xff] %v1265
    %1330 = vst [vmem:[#allocation2 + $0x1a8] sm:$0xff] %v1266
    %1331 = vst [vmem:[#allocation2 + $0x1b0] sm:$0xff] %v1267
    %1332 = vst [vmem:[#allocation2 + $0x1b8] sm:$0xff] %v1268
    %1333 = vst [vmem:[#allocation2 + $0x1c0] sm:$0xff] %v1269
    %1334 = vst [vmem:[#allocation2 + $0x1c8] sm:$0xff] %v1270
    %1335 = vst [vmem:[#allocation2 + $0x1d0] sm:$0xff] %v1271
    %1336 = vst [vmem:[#allocation2 + $0x1d8] sm:$0xff] %v1272
    %1337 = vst [vmem:[#allocation2 + $0x1e0] sm:$0xff] %v1273
    %1338 = vst [vmem:[#allocation2 + $0x1e8] sm:$0xff] %v1274
    %1339 = vst [vmem:[#allocation2 + $0x1f0] sm:$0xff] %v1275
    %1340 = vst [vmem:[#allocation2 + $0x1f8] sm:$0xff] %v1276
    // Predicated region
    $region34: #{grouped_conv_block_forward.7} parent=1 // pred_check
      _
    $region35: #{grouped_conv_block_forward.7} parent=1 // pred_check_branch
      %1342 = sbr.rel (0) target = $region37
    $region36: #{grouped_conv_block_forward.7} parent=1 // pred_region
      %s1344 = ssub.s32 8192, 8192
      %1345 = vsyncadd [#allocation3], %s1344
      %s1346 = sshll.u32 [#allocation2], 4
      %s1347 = int_to_ptr.vmem [resolvable:$true] %s1346
      %1352 = dma.vmem_to_hbm [thread:$0]  %s1347, 8192, %s8, [#allocation3], 128, 128, 8
    $region37: #{grouped_conv_block_forward.7} parent=1 // pred_fallthru
      _
    // Predicated region
    $region38: #{grouped_conv_block_forward.7} parent=1 // pred_check
      _
    $region39: #{grouped_conv_block_forward.7} parent=1 // pred_check_branch
      %1354 = sbr.rel (0) target = $region41
    $region40: #{grouped_conv_block_forward.7} parent=1 // pred_region
      %1355 = dma.done [#allocation3], 8192
    $region41: #{grouped_conv_block_forward.7} parent=1 // pred_fallthru
      _
    %1356 = vsyncpa [#allocation3], 1

// kernel: grouped_conv_block_forward.6
$region0: #{grouped_conv_block_forward.6}
  #allocation0 [shape = 'u32[]', space=smem, size = 0x4, offset = 0x4, fixed_abs, tag = 'smem constant byte address 0x4 - core index']
  #allocation1 [shape = 'u32[144,128]{1,0:T(1,128)}', space=vmem, size = 0x12000, scoped, tag = 'internal scratch']
  #allocation2 [shape = 'bf16[18,18,128]{2,1,0:T(8,128)(2,1)}', space=vmem, size = 0x1b000, scoped, tag = 'scratch operand']
  %s0 = inlined_call_operand.vmem [shape: bf16[2,16,16,128], index: 0, kind: input, shape index: {}]
  %s1 = inlined_call_operand.vmem [shape: f32[1,128], index: 1, kind: input, shape index: {}]
  %s2 = inlined_call_operand.vmem [shape: f32[1,128], index: 2, kind: input, shape index: {}]
  %s3 = inlined_call_operand.vmem [shape: bf16[1,9,128,128], index: 3, kind: input, shape index: {}]
  %s4 = inlined_call_operand.vmem [shape: f32[1,128], index: 4, kind: input, shape index: {}]
  %s5 = inlined_call_operand.vmem [shape: bf16[2,16,16,128], index: 5, kind: output, shape index: {0}]
  %s6 = inlined_call_operand.vmem [shape: f32[2,8,128], index: 6, kind: output, shape index: {1}]
  %7 = xla_tuple %s5, %s6
  %s8 = sld [smem:[#allocation0]]
  $region61: #{grouped_conv_block_forward.6} parent=0
    _
  %s10 = ssub.s32 1, %s8
  %s11 = scalar_select 0, %s10, %s8
  loop: start=0, step=1, limit=4
  $region2: #{grouped_conv_block_forward.6} parent=0 // loop_pre_header
    _
  $region3: #{grouped_conv_block_forward.6} parent=0 // loop_header
    %s13 = sphi 0, %s17
    %p14 = scmp.ge.s32.totalorder %s13, 4
    %s23 = sphi 0, %s25
    %s26 = sphi 0, %s23
    %s27 = sphi 0, %s26
    %s43 = sphi 0, %s27
    %s47 = sphi 0, %s47
    %s49 = sphi 0, %s47
    %s50 = sphi 0, %s49
    %s64 = sphi 0, %s50
    %s68 = sphi 0, %s68
    %s70 = sphi 0, %s68
    %s71 = sphi 0, %s70
    %s85 = sphi 0, %s71
    %s89 = sphi 0, %s89
    %s91 = sphi 0, %s89
    %s92 = sphi 0, %s91
    %s106 = sphi 0, %s92
    %s110 = sphi 0, %s110
    %s112 = sphi 0, %s110
    %s113 = sphi 0, %s112
    %s127 = sphi 0, %s113
    %s133 = sphi 0, %s135
    %s136 = sphi 0, %s133
    %s137 = sphi 0, %s136
    %s153 = sphi 0, %s137
    %s159 = sphi 0, %s161
    %s162 = sphi 0, %s159
    %s163 = sphi 0, %s162
    %s179 = sphi 0, %s163
  $region4: #{grouped_conv_block_forward.6} parent=0 // loop_header_branch
    %16 = sbr.rel (%p14) target = $region8
  $region5: #{grouped_conv_block_forward.6} parent=0 // loop_body
    %s18 = ssub.s32 %s13, 1
    %s19 = ssub.s32 %s13, 2
    %s20 = sadd.s32 %s13, 1
    %s21 = ssub.s32 %s13, %s20
    %p22 = scmp.eq.s32.totalorder %s21, 0
    %s24 = sadd.s32 %s23, 1
    %s25 = scalar_select %p22, %s23, %s24
    %p28 = pneg %p22
    %p29 = scmp.eq.s32.totalorder %s13, 1
    %p30 = por %p28, %p29
    %p31 = scmp.ne.s32.totalorder %s23, %s26
    %p32 = scmp.eq.s32.totalorder %s13, 0
    %p33 = por %p31, %p32
    %p34 = scmp.ne.s32.totalorder %s23, %s26
    %p35 = scmp.eq.s32.totalorder %s18, 1
    %p36 = por %p34, %p35
    %p37 = scmp.ne.s32.totalorder %s26, %s27
    %p38 = scmp.eq.s32.totalorder %s18, 0
    %p39 = por %p37, %p38
    %p40 = scmp.ne.s32.totalorder %s26, %s27
    %p41 = scmp.eq.s32.totalorder %s19, 1
    %p42 = por %p40, %p41
    %p44 = scmp.ne.s32.totalorder %s27, %s43
    %p45 = scmp.eq.s32.totalorder %s19, 0
    %p46 = por %p44, %p45
    %s48 = sadd.s32 %s47, 1
    %p51 = scmp.eq.s32.totalorder %s13, 1
    %p52 = scmp.ne.s32.totalorder %s47, %s49
    %p53 = scmp.eq.s32.totalorder %s13, 0
    %p54 = por %p52, %p53
    %p55 = scmp.ne.s32.totalorder %s47, %s49
    %p56 = scmp.eq.s32.totalorder %s18, 1
    %p57 = por %p55, %p56
    %p58 = scmp.ne.s32.totalorder %s49, %s50
    %p59 = scmp.eq.s32.totalorder %s18, 0
    %p60 = por %p58, %p59
    %p61 = scmp.ne.s32.totalorder %s49, %s50
    %p62 = scmp.eq.s32.totalorder %s19, 1
    %p63 = por %p61, %p62
    %p65 = scmp.ne.s32.totalorder %s50, %s64
    %p66 = scmp.eq.s32.totalorder %s19, 0
    %p67 = por %p65, %p66
    %s69 = sadd.s32 %s68, 1
    %p72 = scmp.eq.s32.totalorder %s13, 1
    %p73 = scmp.ne.s32.totalorder %s68, %s70
    %p74 = scmp.eq.s32.totalorder %s13, 0
    %p75 = por %p73, %p74
    %p76 = scmp.ne.s32.totalorder %s68, %s70
    %p77 = scmp.eq.s32.totalorder %s18, 1
    %p78 = por %p76, %p77
    %p79 = scmp.ne.s32.totalorder %s70, %s71
    %p80 = scmp.eq.s32.totalorder %s18, 0
    %p81 = por %p79, %p80
    %p82 = scmp.ne.s32.totalorder %s70, %s71
    %p83 = scmp.eq.s32.totalorder %s19, 1
    %p84 = por %p82, %p83
    %p86 = scmp.ne.s32.totalorder %s71, %s85
    %p87 = scmp.eq.s32.totalorder %s19, 0
    %p88 = por %p86, %p87
    %s90 = sadd.s32 %s89, 1
    %p93 = scmp.eq.s32.totalorder %s13, 1
    %p94 = scmp.ne.s32.totalorder %s89, %s91
    %p95 = scmp.eq.s32.totalorder %s13, 0
    %p96 = por %p94, %p95
    %p97 = scmp.ne.s32.totalorder %s89, %s91
    %p98 = scmp.eq.s32.totalorder %s18, 1
    %p99 = por %p97, %p98
    %p100 = scmp.ne.s32.totalorder %s91, %s92
    %p101 = scmp.eq.s32.totalorder %s18, 0
    %p102 = por %p100, %p101
    %p103 = scmp.ne.s32.totalorder %s91, %s92
    %p104 = scmp.eq.s32.totalorder %s19, 1
    %p105 = por %p103, %p104
    %p107 = scmp.ne.s32.totalorder %s92, %s106
    %p108 = scmp.eq.s32.totalorder %s19, 0
    %p109 = por %p107, %p108
    %s111 = sadd.s32 %s110, 1
    %p114 = scmp.eq.s32.totalorder %s13, 1
    %p115 = scmp.ne.s32.totalorder %s110, %s112
    %p116 = scmp.eq.s32.totalorder %s13, 0
    %p117 = por %p115, %p116
    %p118 = scmp.ne.s32.totalorder %s110, %s112
    %p119 = scmp.eq.s32.totalorder %s18, 1
    %p120 = por %p118, %p119
    %p121 = scmp.ne.s32.totalorder %s112, %s113
    %p122 = scmp.eq.s32.totalorder %s18, 0
    %p123 = por %p121, %p122
    %p124 = scmp.ne.s32.totalorder %s112, %s113
    %p125 = scmp.eq.s32.totalorder %s19, 1
    %p126 = por %p124, %p125
    %p128 = scmp.ne.s32.totalorder %s113, %s127
    %p129 = scmp.eq.s32.totalorder %s19, 0
    %p130 = por %p128, %p129
    %s131 = ssub.s32 %s13, %s20
    %p132 = scmp.eq.s32.totalorder %s131, 0
    %s134 = sadd.s32 %s133, 1
    %s135 = scalar_select %p132, %s133, %s134
    %p138 = pneg %p132
    %p139 = scmp.eq.s32.totalorder %s13, 1
    %p140 = por %p138, %p139
    %p141 = scmp.ne.s32.totalorder %s133, %s136
    %p142 = scmp.eq.s32.totalorder %s13, 0
    %p143 = por %p141, %p142
    %p144 = scmp.ne.s32.totalorder %s133, %s136
    %p145 = scmp.eq.s32.totalorder %s18, 1
    %p146 = por %p144, %p145
    %p147 = scmp.ne.s32.totalorder %s136, %s137
    %p148 = scmp.eq.s32.totalorder %s18, 0
    %p149 = por %p147, %p148
    %p150 = scmp.ne.s32.totalorder %s136, %s137
    %p151 = scmp.eq.s32.totalorder %s19, 1
    %p152 = por %p150, %p151
    %p154 = scmp.ne.s32.totalorder %s137, %s153
    %p155 = scmp.eq.s32.totalorder %s19, 0
    %p156 = por %p154, %p155
    %s157 = ssub.s32 %s13, %s20
    %p158 = scmp.eq.s32.totalorder %s157, 0
    %s160 = sadd.s32 %s159, 1
    %s161 = scalar_select %p158, %s159, %s160
    %p164 = pneg %p158
    %p165 = scmp.eq.s32.totalorder %s13, 1
    %p166 = por %p164, %p165
    %p167 = scmp.ne.s32.totalorder %s159, %s162
    %p168 = scmp.eq.s32.totalorder %s13, 0
    %p169 = por %p167, %p168
    %p170 = scmp.ne.s32.totalorder %s159, %s162
    %p171 = scmp.eq.s32.totalorder %s18, 1
    %p172 = por %p170, %p171
    %p173 = scmp.ne.s32.totalorder %s162, %s163
    %p174 = scmp.eq.s32.totalorder %s18, 0
    %p175 = por %p173, %p174
    %p176 = scmp.ne.s32.totalorder %s162, %s163
    %p177 = scmp.eq.s32.totalorder %s19, 1
    %p178 = por %p176, %p177
    %p180 = scmp.ne.s32.totalorder %s163, %s179
    %p181 = scmp.eq.s32.totalorder %s19, 0
    %p182 = por %p180, %p181
    %p183 = scmp.le.s32.totalorder 1, %s13
    %p184 = scmp.lt.s32.totalorder %s13, 3
    %p185 = pnand %p183, %p184
    %p186 = pneg %p185
    // Predicated region
    $region9: #{grouped_conv_block_forward.6} parent=5 // pred_check
      _
    $region10: #{grouped_conv_block_forward.6} parent=5 // pred_check_branch
      %188 = sbr.rel (%p185) target = $region12
    $region11: #{grouped_conv_block_forward.6} parent=5 // pred_region
      %s189 = ssub.s32 %s13, 1
      // Predicated region
      $region13: #{grouped_conv_block_forward.6} parent=11 // pred_check
        %p190 = pneg %p60
      $region14: #{grouped_conv_block_forward.6} parent=11 // pred_check_branch
        %192 = sbr.rel (%p190) target = $region16
      $region15: #{grouped_conv_block_forward.6} parent=11 // pred_region
        _
      $region16: #{grouped_conv_block_forward.6} parent=11 // pred_fallthru
        _
      // Predicated region
      $region17: #{grouped_conv_block_forward.6} parent=11 // pred_check
        %p193 = pneg %p81
      $region18: #{grouped_conv_block_forward.6} parent=11 // pred_check_branch
        %195 = sbr.rel (%p193) target = $region20
      $region19: #{grouped_conv_block_forward.6} parent=11 // pred_region
        _
      $region20: #{grouped_conv_block_forward.6} parent=11 // pred_fallthru
        _
      // Predicated region
      $region21: #{grouped_conv_block_forward.6} parent=11 // pred_check
        %p196 = pneg %p102
      $region22: #{grouped_conv_block_forward.6} parent=11 // pred_check_branch
        %198 = sbr.rel (%p196) target = $region24
      $region23: #{grouped_conv_block_forward.6} parent=11 // pred_region
        _
      $region24: #{grouped_conv_block_forward.6} parent=11 // pred_fallthru
        _
      // Predicated region
      $region25: #{grouped_conv_block_forward.6} parent=11 // pred_check
        %p199 = pneg %p123
      $region26: #{grouped_conv_block_forward.6} parent=11 // pred_check_branch
        %201 = sbr.rel (%p199) target = $region28
      $region27: #{grouped_conv_block_forward.6} parent=11 // pred_region
        _
      $region28: #{grouped_conv_block_forward.6} parent=11 // pred_fallthru
        _
    $region12: #{grouped_conv_block_forward.6} parent=5 // pred_fallthru
      _
    %p202 = scmp.lt.s32.totalorder %s13, 2
    // Predicated region
    $region29: #{grouped_conv_block_forward.6} parent=5 // pred_check
      %p203 = pneg %p202
    $region30: #{grouped_conv_block_forward.6} parent=5 // pred_check_branch
      %205 = sbr.rel (%p203) target = $region32
    $region31: #{grouped_conv_block_forward.6} parent=5 // pred_region
      // Predicated region
      $region33: #{grouped_conv_block_forward.6} parent=31 // pred_check
        %p206 = pneg %p33
      $region34: #{grouped_conv_block_forward.6} parent=31 // pred_check_branch
        %208 = sbr.rel (%p206) target = $region36
      $region35: #{grouped_conv_block_forward.6} parent=31 // pred_region
        %p209 = scmp.lt.s32.totalorder %s13, 1
        %s210 = scalar_select %p209, %s13, 1
        %s211 = smul.addr %s210, 32
        %s212 = smul.addr %s211, 4
        %s213 = scalar_lea.vmem %s0, %s212
      $region36: #{grouped_conv_block_forward.6} parent=31 // pred_fallthru
        _
    $region32: #{grouped_conv_block_forward.6} parent=5 // pred_fallthru
      _
    %p214 = scmp.le.s32.totalorder 1, %s13
    %p215 = scmp.lt.s32.totalorder %s13, 3
    %p216 = pnand %p214, %p215
    %p217 = pneg %p216
    // Predicated region
    $region37: #{grouped_conv_block_forward.6} parent=5 // pred_check
      _
    $region38: #{grouped_conv_block_forward.6} parent=5 // pred_check_branch
      %219 = sbr.rel (%p216) target = $region40
    $region39: #{grouped_conv_block_forward.6} parent=5 // pred_region
      %s220 = ssub.s32 %s13, 1
      %p221 = scmp.lt.s32.totalorder %s18, 1
      %s222 = scalar_select %p221, %s18, 1
      %s223 = smul.addr %s222, 32
      %s224 = smul.addr %s223, 4
      %s225 = scalar_lea.vmem %s0, %s224
      %p226 = pneg %p39
      %p227 = pneg %p36
      %p228 = pneg %p60
      %p229 = pneg %p57
      %p230 = pneg %p81
      %p231 = pneg %p78
      %p232 = pneg %p102
      %p233 = pneg %p99
      %p234 = pneg %p123
      %p235 = pneg %p120
      %p236 = pneg %p149
      %p237 = pneg %p146
      %p238 = scmp.lt.s32.totalorder %s18, 1
      %s239 = scalar_select %p238, %s18, 1
      %s240 = smul.addr %s239, 32
      %s241 = smul.addr %s240, 4
      %s242 = scalar_lea.vmem %s5, %s241
      %p243 = pneg %p175
      %p244 = pneg %p172
      %p245 = scmp.lt.s32.totalorder %s18, 1
      %s246 = scalar_select %p245, %s18, 1
      %s247 = smul.addr %s246, 8
      %s248 = scalar_lea.vmem %s6, %s247
      %p249 = scmp.lt.s32.totalorder %s18, 1
      %s250 = scalar_select %p249, %s18, 1
      %s251 = smul.addr %s250, 32
      %s252 = smul.addr %s251, 4
      %s253 = scalar_lea.vmem %s0, %s252
      %p254 = scmp.lt.s32.totalorder %s18, 1
      %s255 = scalar_select %p254, %s18, 1
      %s256 = smul.addr %s255, 32
      %s257 = smul.addr %s256, 4
      %s258 = scalar_lea.vmem %s5, %s257
      %p259 = scmp.lt.s32.totalorder %s18, 1
      %s260 = scalar_select %p259, %s18, 1
      %s261 = smul.addr %s260, 8
      %s262 = scalar_lea.vmem %s6, %s261
      %264 = vst [vmem:[#allocation2] sm:$0xf] 0
      %265 = vst [vmem:[#allocation2 + $0x4] sm:$0xf] 0
      %266 = vst [vmem:[#allocation2 + $0x8] sm:$0x1] 0
      %s267 = scalar_lea.vmem [#allocation2], 204
      %268 = vst [vmem:[%s267] sm:$0xf] 0
      %269 = vst [vmem:[%s267 + $0x4] sm:$0xf] 0
      %270 = vst [vmem:[%s267 + $0x8] sm:$0x1] 0
      %vm271 = vcmask 1040384
      %vm272 = vsmask.f32 256
      %vm273 = vmand %vm271, %vm272
      %v274 = vld [vmem:[#allocation2] sm:$0x1]
      %v275 = vsel %vm273, 0, %v274
      %276 = vst [vmem:[#allocation2] sm:$0x1] %v275
      %v277 = vld [vmem:[#allocation2 + $0xc] sm:$0x1]
      %v278 = vsel %vm273, 0, %v277
      %279 = vst [vmem:[#allocation2 + $0xc] sm:$0x1] %v278
      %v280 = vld [vmem:[#allocation2 + $0x18] sm:$0x1]
      %v281 = vsel %vm273, 0, %v280
      %282 = vst [vmem:[#allocation2 + $0x18] sm:$0x1] %v281
      %v283 = vld [vmem:[#allocation2 + $0x24] sm:$0x1]
      %v284 = vsel %vm273, 0, %v283
      %285 = vst [vmem:[#allocation2 + $0x24] sm:$0x1] %v284
      %v286 = vld [vmem:[#allocation2 + $0x30] sm:$0x1]
      %v287 = vsel %vm273, 0, %v286
      %288 = vst [vmem:[#allocation2 + $0x30] sm:$0x1] %v287
      %v289 = vld [vmem:[#allocation2 + $0x3c] sm:$0x1]
      %v290 = vsel %vm273, 0, %v289
      %291 = vst [vmem:[#allocation2 + $0x3c] sm:$0x1] %v290
      %v292 = vld [vmem:[#allocation2 + $0x48] sm:$0x1]
      %v293 = vsel %vm273, 0, %v292
      %294 = vst [vmem:[#allocation2 + $0x48] sm:$0x1] %v293
      %v295 = vld [vmem:[#allocation2 + $0x54] sm:$0x1]
      %v296 = vsel %vm273, 0, %v295
      %297 = vst [vmem:[#allocation2 + $0x54] sm:$0x1] %v296
      %v298 = vld [vmem:[#allocation2 + $0x60] sm:$0x1]
      %v299 = vsel %vm273, 0, %v298
      %300 = vst [vmem:[#allocation2 + $0x60] sm:$0x1] %v299
      %v301 = vld [vmem:[#allocation2 + $0x6c] sm:$0x1]
      %v302 = vsel %vm273, 0, %v301
      %303 = vst [vmem:[#allocation2 + $0x6c] sm:$0x1] %v302
      %v304 = vld [vmem:[#allocation2 + $0x78] sm:$0x1]
      %v305 = vsel %vm273, 0, %v304
      %306 = vst [vmem:[#allocation2 + $0x78] sm:$0x1] %v305
      %v307 = vld [vmem:[#allocation2 + $0x84] sm:$0x1]
      %v308 = vsel %vm273, 0, %v307
      %309 = vst [vmem:[#allocation2 + $0x84] sm:$0x1] %v308
      %v310 = vld [vmem:[#allocation2 + $0x90] sm:$0x1]
      %v311 = vsel %vm273, 0, %v310
      %312 = vst [vmem:[#allocation2 + $0x90] sm:$0x1] %v311
      %v313 = vld [vmem:[#allocation2 + $0x9c] sm:$0x1]
      %v314 = vsel %vm273, 0, %v313
      %315 = vst [vmem:[#allocation2 + $0x9c] sm:$0x1] %v314
      %v316 = vld [vmem:[#allocation2 + $0xa8] sm:$0x1]
      %v317 = vsel %vm273, 0, %v316
      %318 = vst [vmem:[#allocation2 + $0xa8] sm:$0x1] %v317
      %v319 = vld [vmem:[#allocation2 + $0xb4] sm:$0x1]
      %v320 = vsel %vm273, 0, %v319
      %321 = vst [vmem:[#allocation2 + $0xb4] sm:$0x1] %v320
      %v322 = vld [vmem:[#allocation2 + $0xc0] sm:$0x1]
      %v323 = vsel %vm273, 0, %v322
      %324 = vst [vmem:[#allocation2 + $0xc0] sm:$0x1] %v323
      %v325 = vld [vmem:[#allocation2 + $0xcc] sm:$0x1]
      %v326 = vsel %vm273, 0, %v325
      %327 = vst [vmem:[#allocation2 + $0xcc] sm:$0x1] %v326
      %vm328 = vsmask.f32 7938
      %vm329 = vmand %vm271, %vm328
      %v330 = vld [vmem:[#allocation2 + $0x8] sm:$0x1]
      %v331 = vsel %vm329, 0, %v330
      %332 = vst [vmem:[#allocation2 + $0x8] sm:$0x1] %v331
      %v333 = vld [vmem:[#allocation2 + $0x14] sm:$0x1]
      %v334 = vsel %vm329, 0, %v333
      %335 = vst [vmem:[#allocation2 + $0x14] sm:$0x1] %v334
      %v336 = vld [vmem:[#allocation2 + $0x20] sm:$0x1]
      %v337 = vsel %vm329, 0, %v336
      %338 = vst [vmem:[#allocation2 + $0x20] sm:$0x1] %v337
      %v339 = vld [vmem:[#allocation2 + $0x2c] sm:$0x1]
      %v340 = vsel %vm329, 0, %v339
      %341 = vst [vmem:[#allocation2 + $0x2c] sm:$0x1] %v340
      %v342 = vld [vmem:[#allocation2 + $0x38] sm:$0x1]
      %v343 = vsel %vm329, 0, %v342
      %344 = vst [vmem:[#allocation2 + $0x38] sm:$0x1] %v343
      %v345 = vld [vmem:[#allocation2 + $0x44] sm:$0x1]
      %v346 = vsel %vm329, 0, %v345
      %347 = vst [vmem:[#allocation2 + $0x44] sm:$0x1] %v346
      %v348 = vld [vmem:[#allocation2 + $0x50] sm:$0x1]
      %v349 = vsel %vm329, 0, %v348
      %350 = vst [vmem:[#allocation2 + $0x50] sm:$0x1] %v349
      %v351 = vld [vmem:[#allocation2 + $0x5c] sm:$0x1]
      %v352 = vsel %vm329, 0, %v351
      %353 = vst [vmem:[#allocation2 + $0x5c] sm:$0x1] %v352
      %v354 = vld [vmem:[#allocation2 + $0x68] sm:$0x1]
      %v355 = vsel %vm329, 0, %v354
      %356 = vst [vmem:[#allocation2 + $0x68] sm:$0x1] %v355
      %v357 = vld [vmem:[#allocation2 + $0x74] sm:$0x1]
      %v358 = vsel %vm329, 0, %v357
      %359 = vst [vmem:[#allocation2 + $0x74] sm:$0x1] %v358
      %v360 = vld [vmem:[#allocation2 + $0x80] sm:$0x1]
      %v361 = vsel %vm329, 0, %v360
      %362 = vst [vmem:[#allocation2 + $0x80] sm:$0x1] %v361
      %v363 = vld [vmem:[#allocation2 + $0x8c] sm:$0x1]
      %v364 = vsel %vm329, 0, %v363
      %365 = vst [vmem:[#allocation2 + $0x8c] sm:$0x1] %v364
      %v366 = vld [vmem:[#allocation2 + $0x98] sm:$0x1]
      %v367 = vsel %vm329, 0, %v366
      %368 = vst [vmem:[#allocation2 + $0x98] sm:$0x1] %v367
      %v369 = vld [vmem:[#allocation2 + $0xa4] sm:$0x1]
      %v370 = vsel %vm329, 0, %v369
      %371 = vst [vmem:[#allocation2 + $0xa4] sm:$0x1] %v370
      %v372 = vld [vmem:[#allocation2 + $0xb0] sm:$0x1]
      %v373 = vsel %vm329, 0, %v372
      %374 = vst [vmem:[#allocation2 + $0xb0] sm:$0x1] %v373
      %v375 = vld [vmem:[#allocation2 + $0xbc] sm:$0x1]
      %v376 = vsel %vm329, 0, %v375
      %377 = vst [vmem:[#allocation2 + $0xbc] sm:$0x1] %v376
      %v378 = vld [vmem:[#allocation2 + $0xc8] sm:$0x1]
      %v379 = vsel %vm329, 0, %v378
      %380 = vst [vmem:[#allocation2 + $0xc8] sm:$0x1] %v379
      %v381 = vld [vmem:[#allocation2 + $0xd4] sm:$0x1]
      %v382 = vsel %vm329, 0, %v381
      %383 = vst [vmem:[#allocation2 + $0xd4] sm:$0x1] %v382
      %v384 = vld [vmem:[%s253] sm:$0xf]
      %v385 = vld [vmem:[%s253 + $0x4] sm:$0xf]
      %v386 = vld [vmem:[%s253 + $0x8] sm:$0xf]
      %v387 = vld [vmem:[%s253 + $0xc] sm:$0xf]
      %v388 = vld [vmem:[%s253 + $0x10] sm:$0xf]
      %v389 = vld [vmem:[%s253 + $0x14] sm:$0xf]
      %v390 = vld [vmem:[%s253 + $0x18] sm:$0xf]
      %v391 = vld [vmem:[%s253 + $0x1c] sm:$0xf]
      %v392 = vld [vmem:[%s253 + $0x20] sm:$0xf]
      %v393 = vld [vmem:[%s253 + $0x24] sm:$0xf]
      %v394 = vld [vmem:[%s253 + $0x28] sm:$0xf]
      %v395 = vld [vmem:[%s253 + $0x2c] sm:$0xf]
      %v396 = vld [vmem:[%s253 + $0x30] sm:$0xf]
      %v397 = vld [vmem:[%s253 + $0x34] sm:$0xf]
      %v398 = vld [vmem:[%s253 + $0x38] sm:$0xf]
      %v399 = vld [vmem:[%s253 + $0x3c] sm:$0xf]
      %v400 = vld [vmem:[%s253 + $0x40] sm:$0xf]
      %v401 = vld [vmem:[%s253 + $0x44] sm:$0xf]
      %v402 = vld [vmem:[%s253 + $0x48] sm:$0xf]
      %v403 = vld [vmem:[%s253 + $0x4c] sm:$0xf]
      %v404 = vld [vmem:[%s253 + $0x50] sm:$0xf]
      %v405 = vld [vmem:[%s253 + $0x54] sm:$0xf]
      %v406 = vld [vmem:[%s253 + $0x58] sm:$0xf]
      %v407 = vld [vmem:[%s253 + $0x5c] sm:$0xf]
      %v408 = vld [vmem:[%s253 + $0x60] sm:$0xf]
      %v409 = vld [vmem:[%s253 + $0x64] sm:$0xf]
      %v410 = vld [vmem:[%s253 + $0x68] sm:$0xf]
      %v411 = vld [vmem:[%s253 + $0x6c] sm:$0xf]
      %v412 = vld [vmem:[%s253 + $0x70] sm:$0xf]
      %v413 = vld [vmem:[%s253 + $0x74] sm:$0xf]
      %v414 = vld [vmem:[%s253 + $0x78] sm:$0xf]
      %v415 = vld [vmem:[%s253 + $0x7c] sm:$0xf]
      %v416 = vunpack.c.l.bf16 %v384
      %v417 = vunpack.c.l.bf16 %v385
      %v418 = vunpack.c.l.bf16 %v386
      %v419 = vunpack.c.l.bf16 %v387
      %v420 = vunpack.c.l.bf16 %v388
      %v421 = vunpack.c.l.bf16 %v389
      %v422 = vunpack.c.l.bf16 %v390
      %v423 = vunpack.c.l.bf16 %v391
      %v424 = vunpack.c.l.bf16 %v392
      %v425 = vunpack.c.l.bf16 %v393
      %v426 = vunpack.c.l.bf16 %v394
      %v427 = vunpack.c.l.bf16 %v395
      %v428 = vunpack.c.l.bf16 %v396
      %v429 = vunpack.c.l.bf16 %v397
      %v430 = vunpack.c.l.bf16 %v398
      %v431 = vunpack.c.l.bf16 %v399
      %v432 = vunpack.c.l.bf16 %v400
      %v433 = vunpack.c.l.bf16 %v401
      %v434 = vunpack.c.l.bf16 %v402
      %v435 = vunpack.c.l.bf16 %v403
      %v436 = vunpack.c.l.bf16 %v404
      %v437 = vunpack.c.l.bf16 %v405
      %v438 = vunpack.c.l.bf16 %v406
      %v439 = vunpack.c.l.bf16 %v407
      %v440 = vunpack.c.l.bf16 %v408
      %v441 = vunpack.c.l.bf16 %v409
      %v442 = vunpack.c.l.bf16 %v410
      %v443 = vunpack.c.l.bf16 %v411
      %v444 = vunpack.c.l.bf16 %v412
      %v445 = vunpack.c.l.bf16 %v413
      %v446 = vunpack.c.l.bf16 %v414
      %v447 = vunpack.c.l.bf16 %v415
      %v448 = vld [vmem:[%s1] sm:$0x1]
      %v450 = vlaneseq
      %v451 = vshrl.u32 %v450, 7
      %v452 = vsub.s32 0, %v451
      %v453 = vrot.slane %v448, %v452
      %v455 = vmul.f32 %v416, %v453
      %v456 = vmul.f32 %v417, %v453
      %v457 = vmul.f32 %v418, %v453
      %v458 = vmul.f32 %v419, %v453
      %v459 = vmul.f32 %v420, %v453
      %v460 = vmul.f32 %v421, %v453
      %v461 = vmul.f32 %v422, %v453
      %v462 = vmul.f32 %v423, %v453
      %v463 = vmul.f32 %v424, %v453
      %v464 = vmul.f32 %v425, %v453
      %v465 = vmul.f32 %v426, %v453
      %v466 = vmul.f32 %v427, %v453
      %v467 = vmul.f32 %v428, %v453
      %v468 = vmul.f32 %v429, %v453
      %v469 = vmul.f32 %v430, %v453
      %v470 = vmul.f32 %v431, %v453
      %v471 = vmul.f32 %v432, %v453
      %v472 = vmul.f32 %v433, %v453
      %v473 = vmul.f32 %v434, %v453
      %v474 = vmul.f32 %v435, %v453
      %v475 = vmul.f32 %v436, %v453
      %v476 = vmul.f32 %v437, %v453
      %v477 = vmul.f32 %v438, %v453
      %v478 = vmul.f32 %v439, %v453
      %v479 = vmul.f32 %v440, %v453
      %v480 = vmul.f32 %v441, %v453
      %v481 = vmul.f32 %v442, %v453
      %v482 = vmul.f32 %v443, %v453
      %v483 = vmul.f32 %v444, %v453
      %v484 = vmul.f32 %v445, %v453
      %v485 = vmul.f32 %v446, %v453
      %v486 = vmul.f32 %v447, %v453
      %v487 = vld [vmem:[%s2] sm:$0x1]
      %v489 = vlaneseq
      %v490 = vshrl.u32 %v489, 7
      %v491 = vsub.s32 0, %v490
      %v492 = vrot.slane %v487, %v491
      %v494 = vadd.f32 %v455, %v492
      %v495 = vadd.f32 %v456, %v492
      %v496 = vadd.f32 %v457, %v492
      %v497 = vadd.f32 %v458, %v492
      %v498 = vadd.f32 %v459, %v492
      %v499 = vadd.f32 %v460, %v492
      %v500 = vadd.f32 %v461, %v492
      %v501 = vadd.f32 %v462, %v492
      %v502 = vadd.f32 %v463, %v492
      %v503 = vadd.f32 %v464, %v492
      %v504 = vadd.f32 %v465, %v492
      %v505 = vadd.f32 %v466, %v492
      %v506 = vadd.f32 %v467, %v492
      %v507 = vadd.f32 %v468, %v492
      %v508 = vadd.f32 %v469, %v492
      %v509 = vadd.f32 %v470, %v492
      %v510 = vadd.f32 %v471, %v492
      %v511 = vadd.f32 %v472, %v492
      %v512 = vadd.f32 %v473, %v492
      %v513 = vadd.f32 %v474, %v492
      %v514 = vadd.f32 %v475, %v492
      %v515 = vadd.f32 %v476, %v492
      %v516 = vadd.f32 %v477, %v492
      %v517 = vadd.f32 %v478, %v492
      %v518 = vadd.f32 %v479, %v492
      %v519 = vadd.f32 %v480, %v492
      %v520 = vadd.f32 %v481, %v492
      %v521 = vadd.f32 %v482, %v492
      %v522 = vadd.f32 %v483, %v492
      %v523 = vadd.f32 %v484, %v492
      %v524 = vadd.f32 %v485, %v492
      %v525 = vadd.f32 %v486, %v492
      %v526 = vmax.f32 %v494, 0.0
      %v527 = vmax.f32 %v495, 0.0
      %v528 = vmax.f32 %v496, 0.0
      %v529 = vmax.f32 %v497, 0.0
      %v530 = vmax.f32 %v498, 0.0
      %v531 = vmax.f32 %v499, 0.0
      %v532 = vmax.f32 %v500, 0.0
      %v533 = vmax.f32 %v501, 0.0
      %v534 = vmax.f32 %v502, 0.0
      %v535 = vmax.f32 %v503, 0.0
      %v536 = vmax.f32 %v504, 0.0
      %v537 = vmax.f32 %v505, 0.0
      %v538 = vmax.f32 %v506, 0.0
      %v539 = vmax.f32 %v507, 0.0
      %v540 = vmax.f32 %v508, 0.0
      %v541 = vmax.f32 %v509, 0.0
      %v542 = vmax.f32 %v510, 0.0
      %v543 = vmax.f32 %v511, 0.0
      %v544 = vmax.f32 %v512, 0.0
      %v545 = vmax.f32 %v513, 0.0
      %v546 = vmax.f32 %v514, 0.0
      %v547 = vmax.f32 %v515, 0.0
      %v548 = vmax.f32 %v516, 0.0
      %v549 = vmax.f32 %v517, 0.0
      %v550 = vmax.f32 %v518, 0.0
      %v551 = vmax.f32 %v519, 0.0
      %v552 = vmax.f32 %v520, 0.0
      %v553 = vmax.f32 %v521, 0.0
      %v554 = vmax.f32 %v522, 0.0
      %v555 = vmax.f32 %v523, 0.0
      %v556 = vmax.f32 %v524, 0.0
      %v557 = vmax.f32 %v525, 0.0
      %v558 = vpack.c.bf16 %v527, %v526
      %v559 = vpack.c.bf16 %v529, %v528
      %v560 = vpack.c.bf16 %v531, %v530
      %v561 = vpack.c.bf16 %v533, %v532
      %v562 = vpack.c.bf16 %v535, %v534
      %v563 = vpack.c.bf16 %v537, %v536
      %v564 = vpack.c.bf16 %v539, %v538
      %v565 = vpack.c.bf16 %v541, %v540
      %v566 = vpack.c.bf16 %v543, %v542
      %v567 = vpack.c.bf16 %v545, %v544
      %v568 = vpack.c.bf16 %v547, %v546
      %v569 = vpack.c.bf16 %v549, %v548
      %v570 = vpack.c.bf16 %v551, %v550
      %v571 = vpack.c.bf16 %v553, %v552
      %v572 = vpack.c.bf16 %v555, %v554
      %v573 = vpack.c.bf16 %v557, %v556
      %v590 = vunpack.c.l.b16 %v558
      %v591 = vunpack.c.h.b16 %v558
      %v592 = vunpack.c.l.b16 %v559
      %v593 = vunpack.c.h.b16 %v559
      %v594 = vunpack.c.l.b16 %v560
      %v595 = vunpack.c.h.b16 %v560
      %v596 = vunpack.c.l.b16 %v561
      %v597 = vunpack.c.h.b16 %v561
      %v598 = vunpack.c.l.b16 %v562
      %v599 = vunpack.c.h.b16 %v562
      %v600 = vunpack.c.l.b16 %v563
      %v601 = vunpack.c.h.b16 %v563
      %v602 = vunpack.c.l.b16 %v564
      %v603 = vunpack.c.h.b16 %v564
      %v604 = vunpack.c.l.b16 %v565
      %v605 = vunpack.c.h.b16 %v565
      %v606 = vunpack.c.l.b16 %v566
      %v607 = vunpack.c.h.b16 %v566
      %v608 = vunpack.c.l.b16 %v567
      %v609 = vunpack.c.h.b16 %v567
      %v610 = vunpack.c.l.b16 %v568
      %v611 = vunpack.c.h.b16 %v568
      %v612 = vunpack.c.l.b16 %v569
      %v613 = vunpack.c.h.b16 %v569
      %v614 = vunpack.c.l.b16 %v570
      %v615 = vunpack.c.h.b16 %v570
      %v616 = vunpack.c.l.b16 %v571
      %v617 = vunpack.c.h.b16 %v571
      %v618 = vunpack.c.l.b16 %v572
      %v619 = vunpack.c.h.b16 %v572
      %v620 = vunpack.c.l.b16 %v573
      %v621 = vunpack.c.h.b16 %v573
      %v622 = vpack.c.b16 %v590, %v590
      %v623 = vpack.c.b16 %v591, %v591
      %v624 = vpack.c.b16 %v592, %v592
      %v625 = vpack.c.b16 %v593, %v593
      %v626 = vpack.c.b16 %v594, %v594
      %v627 = vpack.c.b16 %v595, %v595
      %v628 = vpack.c.b16 %v596, %v596
      %v629 = vpack.c.b16 %v597, %v597
      %v630 = vpack.c.b16 %v598, %v598
      %v631 = vpack.c.b16 %v599, %v599
      %v632 = vpack.c.b16 %v600, %v600
      %v633 = vpack.c.b16 %v601, %v601
      %v634 = vpack.c.b16 %v602, %v602
      %v635 = vpack.c.b16 %v603, %v603
      %v636 = vpack.c.b16 %v604, %v604
      %v637 = vpack.c.b16 %v605, %v605
      %v638 = vpack.c.b16 %v606, %v606
      %v639 = vpack.c.b16 %v607, %v607
      %v640 = vpack.c.b16 %v608, %v608
      %v641 = vpack.c.b16 %v609, %v609
      %v642 = vpack.c.b16 %v610, %v610
      %v643 = vpack.c.b16 %v611, %v611
      %v644 = vpack.c.b16 %v612, %v612
      %v645 = vpack.c.b16 %v613, %v613
      %v646 = vpack.c.b16 %v614, %v614
      %v647 = vpack.c.b16 %v615, %v615
      %v648 = vpack.c.b16 %v616, %v616
      %v649 = vpack.c.b16 %v617, %v617
      %v650 = vpack.c.b16 %v618, %v618
      %v651 = vpack.c.b16 %v619, %v619
      %v652 = vpack.c.b16 %v620, %v620
      %v653 = vpack.c.b16 %v621, %v621
      %vm654 = vsmask.f32 4368
      %vm655 = vmor %vm272, %vm654
      %v657 = vshrl.u32 %v622, 16
      %v659 = vrot.slane %v657, 7
      %v660 = vshll.u32 %v622, 16
      %v662 = vor.u32 %v659, %v660
      %v663 = vrot.slane %v659, 4
      %v665 = vshrl.u32 %v623, 16
      %v667 = vrot.slane %v665, 7
      %v668 = vshll.u32 %v623, 16
      %v670 = vor.u32 %v667, %v668
      %v671 = vsel %vm655, %v663, %v670
      %v672 = vrot.slane %v667, 4
      %v674 = vshrl.u32 %v624, 16
      %v676 = vrot.slane %v674, 7
      %v677 = vshll.u32 %v624, 16
      %v679 = vor.u32 %v676, %v677
      %v680 = vrot.slane %v676, 4
      %v682 = vshrl.u32 %v625, 16
      %v684 = vrot.slane %v682, 7
      %v685 = vshll.u32 %v625, 16
      %v687 = vor.u32 %v684, %v685
      %v688 = vsel %vm655, %v680, %v687
      %v689 = vrot.slane %v684, 4
      %v691 = vshrl.u32 %v626, 16
      %v693 = vrot.slane %v691, 7
      %v694 = vshll.u32 %v626, 16
      %v696 = vor.u32 %v693, %v694
      %v697 = vrot.slane %v693, 4
      %v699 = vshrl.u32 %v627, 16
      %v701 = vrot.slane %v699, 7
      %v702 = vshll.u32 %v627, 16
      %v704 = vor.u32 %v701, %v702
      %v705 = vsel %vm655, %v697, %v704
      %v706 = vrot.slane %v701, 4
      %v708 = vshrl.u32 %v628, 16
      %v710 = vrot.slane %v708, 7
      %v711 = vshll.u32 %v628, 16
      %v713 = vor.u32 %v710, %v711
      %v714 = vrot.slane %v710, 4
      %v716 = vshrl.u32 %v629, 16
      %v718 = vrot.slane %v716, 7
      %v719 = vshll.u32 %v629, 16
      %v721 = vor.u32 %v718, %v719
      %v722 = vsel %vm655, %v714, %v721
      %v723 = vrot.slane %v718, 4
      %v725 = vshrl.u32 %v630, 16
      %v727 = vrot.slane %v725, 7
      %v728 = vshll.u32 %v630, 16
      %v730 = vor.u32 %v727, %v728
      %v731 = vrot.slane %v727, 4
      %v733 = vshrl.u32 %v631, 16
      %v735 = vrot.slane %v733, 7
      %v736 = vshll.u32 %v631, 16
      %v738 = vor.u32 %v735, %v736
      %v739 = vsel %vm655, %v731, %v738
      %v740 = vrot.slane %v735, 4
      %v742 = vshrl.u32 %v632, 16
      %v744 = vrot.slane %v742, 7
      %v745 = vshll.u32 %v632, 16
      %v747 = vor.u32 %v744, %v745
      %v748 = vrot.slane %v744, 4
      %v750 = vshrl.u32 %v633, 16
      %v752 = vrot.slane %v750, 7
      %v753 = vshll.u32 %v633, 16
      %v755 = vor.u32 %v752, %v753
      %v756 = vsel %vm655, %v748, %v755
      %v757 = vrot.slane %v752, 4
      %v759 = vshrl.u32 %v634, 16
      %v761 = vrot.slane %v759, 7
      %v762 = vshll.u32 %v634, 16
      %v764 = vor.u32 %v761, %v762
      %v765 = vrot.slane %v761, 4
      %v767 = vshrl.u32 %v635, 16
      %v769 = vrot.slane %v767, 7
      %v770 = vshll.u32 %v635, 16
      %v772 = vor.u32 %v769, %v770
      %v773 = vsel %vm655, %v765, %v772
      %v774 = vrot.slane %v769, 4
      %v776 = vshrl.u32 %v636, 16
      %v778 = vrot.slane %v776, 7
      %v779 = vshll.u32 %v636, 16
      %v781 = vor.u32 %v778, %v779
      %v782 = vrot.slane %v778, 4
      %v784 = vshrl.u32 %v637, 16
      %v786 = vrot.slane %v784, 7
      %v787 = vshll.u32 %v637, 16
      %v789 = vor.u32 %v786, %v787
      %v790 = vsel %vm655, %v782, %v789
      %v791 = vrot.slane %v786, 4
      %v793 = vshrl.u32 %v638, 16
      %v795 = vrot.slane %v793, 7
      %v796 = vshll.u32 %v638, 16
      %v798 = vor.u32 %v795, %v796
      %v799 = vrot.slane %v795, 4
      %v801 = vshrl.u32 %v639, 16
      %v803 = vrot.slane %v801, 7
      %v804 = vshll.u32 %v639, 16
      %v806 = vor.u32 %v803, %v804
      %v807 = vsel %vm655, %v799, %v806
      %v808 = vrot.slane %v803, 4
      %v810 = vshrl.u32 %v640, 16
      %v812 = vrot.slane %v810, 7
      %v813 = vshll.u32 %v640, 16
      %v815 = vor.u32 %v812, %v813
      %v816 = vrot.slane %v812, 4
      %v818 = vshrl.u32 %v641, 16
      %v820 = vrot.slane %v818, 7
      %v821 = vshll.u32 %v641, 16
      %v823 = vor.u32 %v820, %v821
      %v824 = vsel %vm655, %v816, %v823
      %v825 = vrot.slane %v820, 4
      %v827 = vshrl.u32 %v642, 16
      %v829 = vrot.slane %v827, 7
      %v830 = vshll.u32 %v642, 16
      %v832 = vor.u32 %v829, %v830
      %v833 = vrot.slane %v829, 4
      %v835 = vshrl.u32 %v643, 16
      %v837 = vrot.slane %v835, 7
      %v838 = vshll.u32 %v643, 16
      %v840 = vor.u32 %v837, %v838
      %v841 = vsel %vm655, %v833, %v840
      %v842 = vrot.slane %v837, 4
      %v844 = vshrl.u32 %v644, 16
      %v846 = vrot.slane %v844, 7
      %v847 = vshll.u32 %v644, 16
      %v849 = vor.u32 %v846, %v847
      %v850 = vrot.slane %v846, 4
      %v852 = vshrl.u32 %v645, 16
      %v854 = vrot.slane %v852, 7
      %v855 = vshll.u32 %v645, 16
      %v857 = vor.u32 %v854, %v855
      %v858 = vsel %vm655, %v850, %v857
      %v859 = vrot.slane %v854, 4
      %v861 = vshrl.u32 %v646, 16
      %v863 = vrot.slane %v861, 7
      %v864 = vshll.u32 %v646, 16
      %v866 = vor.u32 %v863, %v864
      %v867 = vrot.slane %v863, 4
      %v869 = vshrl.u32 %v647, 16
      %v871 = vrot.slane %v869, 7
      %v872 = vshll.u32 %v647, 16
      %v874 = vor.u32 %v871, %v872
      %v875 = vsel %vm655, %v867, %v874
      %v876 = vrot.slane %v871, 4
      %v878 = vshrl.u32 %v648, 16
      %v880 = vrot.slane %v878, 7
      %v881 = vshll.u32 %v648, 16
      %v883 = vor.u32 %v880, %v881
      %v884 = vrot.slane %v880, 4
      %v886 = vshrl.u32 %v649, 16
      %v888 = vrot.slane %v886, 7
      %v889 = vshll.u32 %v649, 16
      %v891 = vor.u32 %v888, %v889
      %v892 = vsel %vm655, %v884, %v891
      %v893 = vrot.slane %v888, 4
      %v895 = vshrl.u32 %v650, 16
      %v897 = vrot.slane %v895, 7
      %v898 = vshll.u32 %v650, 16
      %v900 = vor.u32 %v897, %v898
      %v901 = vrot.slane %v897, 4
      %v903 = vshrl.u32 %v651, 16
      %v905 = vrot.slane %v903, 7
      %v906 = vshll.u32 %v651, 16
      %v908 = vor.u32 %v905, %v906
      %v909 = vsel %vm655, %v901, %v908
      %v910 = vrot.slane %v905, 4
      %v912 = vshrl.u32 %v652, 16
      %v914 = vrot.slane %v912, 7
      %v915 = vshll.u32 %v652, 16
      %v917 = vor.u32 %v914, %v915
      %v918 = vrot.slane %v914, 4
      %v920 = vshrl.u32 %v653, 16
      %v922 = vrot.slane %v920, 7
      %v923 = vshll.u32 %v653, 16
      %v925 = vor.u32 %v922, %v923
      %v926 = vsel %vm655, %v918, %v925
      %v927 = vrot.slane %v922, 4
      %s976 = scalar_lea.vmem [#allocation2], 12
      %vm977 = vcmask 1043456
      %vm978 = vmand %vm977, %vm328
      %v979 = vld [vmem:[%s976] sm:$0xf]
      %v980 = vsel %vm978, %v662, %v979
      %981 = vst [vmem:[%s976] sm:$0xf] %v980
      %982 = vst [vmem:[%s976 + $0x4] sm:$0xf] %v671
      %v983 = vld [vmem:[%s976 + $0x8] sm:$0x1]
      %v984 = vsel %vm273, %v672, %v983
      %985 = vst [vmem:[%s976 + $0x8] sm:$0x1] %v984
      %v986 = vld [vmem:[%s976 + $0xc] sm:$0xf]
      %v987 = vsel %vm978, %v679, %v986
      %988 = vst [vmem:[%s976 + $0xc] sm:$0xf] %v987
      %989 = vst [vmem:[%s976 + $0x10] sm:$0xf] %v688
      %v990 = vld [vmem:[%s976 + $0x14] sm:$0x1]
      %v991 = vsel %vm273, %v689, %v990
      %992 = vst [vmem:[%s976 + $0x14] sm:$0x1] %v991
      %v993 = vld [vmem:[%s976 + $0x18] sm:$0xf]
      %v994 = vsel %vm978, %v696, %v993
      %995 = vst [vmem:[%s976 + $0x18] sm:$0xf] %v994
      %996 = vst [vmem:[%s976 + $0x1c] sm:$0xf] %v705
      %v997 = vld [vmem:[%s976 + $0x20] sm:$0x1]
      %v998 = vsel %vm273, %v706, %v997
      %999 = vst [vmem:[%s976 + $0x20] sm:$0x1] %v998
      %v1000 = vld [vmem:[%s976 + $0x24] sm:$0xf]
      %v1001 = vsel %vm978, %v713, %v1000
      %1002 = vst [vmem:[%s976 + $0x24] sm:$0xf] %v1001
      %1003 = vst [vmem:[%s976 + $0x28] sm:$0xf] %v722
      %v1004 = vld [vmem:[%s976 + $0x2c] sm:$0x1]
      %v1005 = vsel %vm273, %v723, %v1004
      %1006 = vst [vmem:[%s976 + $0x2c] sm:$0x1] %v1005
      %v1007 = vld [vmem:[%s976 + $0x30] sm:$0xf]
      %v1008 = vsel %vm978, %v730, %v1007
      %1009 = vst [vmem:[%s976 + $0x30] sm:$0xf] %v1008
      %1010 = vst [vmem:[%s976 + $0x34] sm:$0xf] %v739
      %v1011 = vld [vmem:[%s976 + $0x38] sm:$0x1]
      %v1012 = vsel %vm273, %v740, %v1011
      %1013 = vst [vmem:[%s976 + $0x38] sm:$0x1] %v1012
      %v1014 = vld [vmem:[%s976 + $0x3c] sm:$0xf]
      %v1015 = vsel %vm978, %v747, %v1014
      %1016 = vst [vmem:[%s976 + $0x3c] sm:$0xf] %v1015
      %1017 = vst [vmem:[%s976 + $0x40] sm:$0xf] %v756
      %v1018 = vld [vmem:[%s976 + $0x44] sm:$0x1]
      %v1019 = vsel %vm273, %v757, %v1018
      %1020 = vst [vmem:[%s976 + $0x44] sm:$0x1] %v1019
      %v1021 = vld [vmem:[%s976 + $0x48] sm:$0xf]
      %v1022 = vsel %vm978, %v764, %v1021
      %1023 = vst [vmem:[%s976 + $0x48] sm:$0xf] %v1022
      %1024 = vst [vmem:[%s976 + $0x4c] sm:$0xf] %v773
      %v1025 = vld [vmem:[%s976 + $0x50] sm:$0x1]
      %v1026 = vsel %vm273, %v774, %v1025
      %1027 = vst [vmem:[%s976 + $0x50] sm:$0x1] %v1026
      %v1028 = vld [vmem:[%s976 + $0x54] sm:$0xf]
      %v1029 = vsel %vm978, %v781, %v1028
      %1030 = vst [vmem:[%s976 + $0x54] sm:$0xf] %v1029
      %1031 = vst [vmem:[%s976 + $0x58] sm:$0xf] %v790
      %v1032 = vld [vmem:[%s976 + $0x5c] sm:$0x1]
      %v1033 = vsel %vm273, %v791, %v1032
      %1034 = vst [vmem:[%s976 + $0x5c] sm:$0x1] %v1033
      %v1035 = vld [vmem:[%s976 + $0x60] sm:$0xf]
      %v1036 = vsel %vm978, %v798, %v1035
      %1037 = vst [vmem:[%s976 + $0x60] sm:$0xf] %v1036
      %1038 = vst [vmem:[%s976 + $0x64] sm:$0xf] %v807
      %v1039 = vld [vmem:[%s976 + $0x68] sm:$0x1]
      %v1040 = vsel %vm273, %v808, %v1039
      %1041 = vst [vmem:[%s976 + $0x68] sm:$0x1] %v1040
      %v1042 = vld [vmem:[%s976 + $0x6c] sm:$0xf]
      %v1043 = vsel %vm978, %v815, %v1042
      %1044 = vst [vmem:[%s976 + $0x6c] sm:$0xf] %v1043
      %1045 = vst [vmem:[%s976 + $0x70] sm:$0xf] %v824
      %v1046 = vld [vmem:[%s976 + $0x74] sm:$0x1]
      %v1047 = vsel %vm273, %v825, %v1046
      %1048 = vst [vmem:[%s976 + $0x74] sm:$0x1] %v1047
      %v1049 = vld [vmem:[%s976 + $0x78] sm:$0xf]
      %v1050 = vsel %vm978, %v832, %v1049
      %1051 = vst [vmem:[%s976 + $0x78] sm:$0xf] %v1050
      %1052 = vst [vmem:[%s976 + $0x7c] sm:$0xf] %v841
      %v1053 = vld [vmem:[%s976 + $0x80] sm:$0x1]
      %v1054 = vsel %vm273, %v842, %v1053
      %1055 = vst [vmem:[%s976 + $0x80] sm:$0x1] %v1054
      %v1056 = vld [vmem:[%s976 + $0x84] sm:$0xf]
      %v1057 = vsel %vm978, %v849, %v1056
      %1058 = vst [vmem:[%s976 + $0x84] sm:$0xf] %v1057
      %1059 = vst [vmem:[%s976 + $0x88] sm:$0xf] %v858
      %v1060 = vld [vmem:[%s976 + $0x8c] sm:$0x1]
      %v1061 = vsel %vm273, %v859, %v1060
      %1062 = vst [vmem:[%s976 + $0x8c] sm:$0x1] %v1061
      %v1063 = vld [vmem:[%s976 + $0x90] sm:$0xf]
      %v1064 = vsel %vm978, %v866, %v1063
      %1065 = vst [vmem:[%s976 + $0x90] sm:$0xf] %v1064
      %1066 = vst [vmem:[%s976 + $0x94] sm:$0xf] %v875
      %v1067 = vld [vmem:[%s976 + $0x98] sm:$0x1]
      %v1068 = vsel %vm273, %v876, %v1067
      %1069 = vst [vmem:[%s976 + $0x98] sm:$0x1] %v1068
      %v1070 = vld [vmem:[%s976 + $0x9c] sm:$0xf]
      %v1071 = vsel %vm978, %v883, %v1070
      %1072 = vst [vmem:[%s976 + $0x9c] sm:$0xf] %v1071
      %1073 = vst [vmem:[%s976 + $0xa0] sm:$0xf] %v892
      %v1074 = vld [vmem:[%s976 + $0xa4] sm:$0x1]
      %v1075 = vsel %vm273, %v893, %v1074
      %1076 = vst [vmem:[%s976 + $0xa4] sm:$0x1] %v1075
      %v1077 = vld [vmem:[%s976 + $0xa8] sm:$0xf]
      %v1078 = vsel %vm978, %v900, %v1077
      %1079 = vst [vmem:[%s976 + $0xa8] sm:$0xf] %v1078
      %1080 = vst [vmem:[%s976 + $0xac] sm:$0xf] %v909
      %v1081 = vld [vmem:[%s976 + $0xb0] sm:$0x1]
      %v1082 = vsel %vm273, %v910, %v1081
      %1083 = vst [vmem:[%s976 + $0xb0] sm:$0x1] %v1082
      %v1084 = vld [vmem:[%s976 + $0xb4] sm:$0xf]
      %v1085 = vsel %vm978, %v917, %v1084
      %1086 = vst [vmem:[%s976 + $0xb4] sm:$0xf] %v1085
      %1087 = vst [vmem:[%s976 + $0xb8] sm:$0xf] %v926
      %v1088 = vld [vmem:[%s976 + $0xbc] sm:$0x1]
      %v1089 = vsel %vm273, %v927, %v1088
      %1090 = vst [vmem:[%s976 + $0xbc] sm:$0x1] %v1089
      %v1091 = vld [vmem:[#allocation2] sm:$0xf]
      %v1092 = vld [vmem:[#allocation2 + $0x4] sm:$0xf]
      %v1093 = vld [vmem:[#allocation2 + $0xc] sm:$0xf]
      %v1094 = vld [vmem:[#allocation2 + $0x10] sm:$0xf]
      %v1095 = vld [vmem:[#allocation2 + $0x18] sm:$0xf]
      %v1096 = vld [vmem:[#allocation2 + $0x1c] sm:$0xf]
      %v1097 = vld [vmem:[#allocation2 + $0x24] sm:$0xf]
      %v1098 = vld [vmem:[#allocation2 + $0x28] sm:$0xf]
      %v1099 = vld [vmem:[#allocation2 + $0x30] sm:$0xf]
      %v1100 = vld [vmem:[#allocation2 + $0x34] sm:$0xf]
      %v1101 = vld [vmem:[#allocation2 + $0x3c] sm:$0xf]
      %v1102 = vld [vmem:[#allocation2 + $0x40] sm:$0xf]
      %v1103 = vld [vmem:[#allocation2 + $0x48] sm:$0xf]
      %v1104 = vld [vmem:[#allocation2 + $0x4c] sm:$0xf]
      %v1105 = vld [vmem:[#allocation2 + $0x54] sm:$0xf]
      %v1106 = vld [vmem:[#allocation2 + $0x58] sm:$0xf]
      %v1107 = vld [vmem:[#allocation2 + $0x60] sm:$0xf]
      %v1108 = vld [vmem:[#allocation2 + $0x64] sm:$0xf]
      %v1109 = vld [vmem:[#allocation2 + $0x6c] sm:$0xf]
      %v1110 = vld [vmem:[#allocation2 + $0x70] sm:$0xf]
      %v1111 = vld [vmem:[#allocation2 + $0x78] sm:$0xf]
      %v1112 = vld [vmem:[#allocation2 + $0x7c] sm:$0xf]
      %v1113 = vld [vmem:[#allocation2 + $0x84] sm:$0xf]
      %v1114 = vld [vmem:[#allocation2 + $0x88] sm:$0xf]
      %v1115 = vld [vmem:[#allocation2 + $0x90] sm:$0xf]
      %v1116 = vld [vmem:[#allocation2 + $0x94] sm:$0xf]
      %v1117 = vld [vmem:[#allocation2 + $0x9c] sm:$0xf]
      %v1118 = vld [vmem:[#allocation2 + $0xa0] sm:$0xf]
      %v1119 = vld [vmem:[#allocation2 + $0xa8] sm:$0xf]
      %v1120 = vld [vmem:[#allocation2 + $0xac] sm:$0xf]
      %v1121 = vld [vmem:[#allocation2 + $0xb4] sm:$0xf]
      %v1122 = vld [vmem:[#allocation2 + $0xb8] sm:$0xf]
      %v1123 = vld [vmem:[%s3] sm:$0xf]
      %v1124 = vld [vmem:[%s3 + $0x4] sm:$0xf]
      %v1125 = vld [vmem:[%s3 + $0x8] sm:$0xf]
      %v1126 = vld [vmem:[%s3 + $0xc] sm:$0xf]
      %v1127 = vld [vmem:[%s3 + $0x10] sm:$0xf]
      %v1128 = vld [vmem:[%s3 + $0x14] sm:$0xf]
      %v1129 = vld [vmem:[%s3 + $0x18] sm:$0xf]
      %v1130 = vld [vmem:[%s3 + $0x1c] sm:$0xf]
      %v1131 = vld [vmem:[%s3 + $0x20] sm:$0xf]
      %v1132 = vld [vmem:[%s3 + $0x24] sm:$0xf]
      %v1133 = vld [vmem:[%s3 + $0x28] sm:$0xf]
      %v1134 = vld [vmem:[%s3 + $0x2c] sm:$0xf]
      %v1135 = vld [vmem:[%s3 + $0x30] sm:$0xf]
      %v1136 = vld [vmem:[%s3 + $0x34] sm:$0xf]
      %v1137 = vld [vmem:[%s3 + $0x38] sm:$0xf]
      %v1138 = vld [vmem:[%s3 + $0x3c] sm:$0xf]
      %v1139 = vld [vmem:[#allocation2 + $0x8] sm:$0x1]
      %v1140 = vld [vmem:[#allocation2 + $0x14] sm:$0x1]
      %v1141 = vld [vmem:[#allocation2 + $0x20] sm:$0x1]
      %v1142 = vld [vmem:[#allocation2 + $0x2c] sm:$0x1]
      %v1143 = vld [vmem:[#allocation2 + $0x38] sm:$0x1]
      %v1144 = vld [vmem:[#allocation2 + $0x44] sm:$0x1]
      %v1145 = vld [vmem:[#allocation2 + $0x50] sm:$0x1]
      %v1146 = vld [vmem:[#allocation2 + $0x5c] sm:$0x1]
      %v1147 = vld [vmem:[#allocation2 + $0x68] sm:$0x1]
      %v1148 = vld [vmem:[#allocation2 + $0x74] sm:$0x1]
      %v1149 = vld [vmem:[#allocation2 + $0x80] sm:$0x1]
      %v1150 = vld [vmem:[#allocation2 + $0x8c] sm:$0x1]
      %v1151 = vld [vmem:[#allocation2 + $0x98] sm:$0x1]
      %v1152 = vld [vmem:[#allocation2 + $0xa4] sm:$0x1]
      %v1153 = vld [vmem:[#allocation2 + $0xb0] sm:$0x1]
      %v1154 = vld [vmem:[#allocation2 + $0xbc] sm:$0x1]
      %vm1155 = vsmask.f32 3328
      %vm1156 = vsmask.f32 7440
      %vm1157 = vmor %vm1155, %vm1156
      %v1159 = vshrl.u32 %v1091, 16
      %v1161 = vrot.slane %v1159, 4
      %v1162 = vshll.u32 %v1091, 16
      %v1164 = vrot.slane %v1162, 5
      %v1165 = vor.u32 %v1161, %v1164
      %v1166 = vrot.slane %v1165, 4
      %v1168 = vshll.u32 %v1092, 16
      %v1170 = vrot.slane %v1168, 5
      %v1171 = vsel %vm1157, %v1166, %v1170
      %v1172 = vshrl.u32 %v1092, 16
      %v1174 = vrot.slane %v1172, 4
      %v1175 = vor.u32 %v1174, %v1170
      %v1176 = vrot.slane %v1175, 4
      %v1178 = vshll.u32 %v1139, 16
      %v1180 = vrot.slane %v1178, 5
      %v1181 = vsel %vm1157, %v1176, %v1180
      %v1183 = vshrl.u32 %v1093, 16
      %v1185 = vrot.slane %v1183, 4
      %v1186 = vshll.u32 %v1093, 16
      %v1188 = vrot.slane %v1186, 5
      %v1189 = vor.u32 %v1185, %v1188
      %v1190 = vrot.slane %v1189, 4
      %v1192 = vshll.u32 %v1094, 16
      %v1194 = vrot.slane %v1192, 5
      %v1195 = vsel %vm1157, %v1190, %v1194
      %v1196 = vshrl.u32 %v1094, 16
      %v1198 = vrot.slane %v1196, 4
      %v1199 = vor.u32 %v1198, %v1194
      %v1200 = vrot.slane %v1199, 4
      %v1202 = vshll.u32 %v1140, 16
      %v1204 = vrot.slane %v1202, 5
      %v1205 = vsel %vm1157, %v1200, %v1204
      %v1207 = vshrl.u32 %v1095, 16
      %v1209 = vrot.slane %v1207, 4
      %v1210 = vshll.u32 %v1095, 16
      %v1212 = vrot.slane %v1210, 5
      %v1213 = vor.u32 %v1209, %v1212
      %v1214 = vrot.slane %v1213, 4
      %v1216 = vshll.u32 %v1096, 16
      %v1218 = vrot.slane %v1216, 5
      %v1219 = vsel %vm1157, %v1214, %v1218
      %v1220 = vshrl.u32 %v1096, 16
      %v1222 = vrot.slane %v1220, 4
      %v1223 = vor.u32 %v1222, %v1218
      %v1224 = vrot.slane %v1223, 4
      %v1226 = vshll.u32 %v1141, 16
      %v1228 = vrot.slane %v1226, 5
      %v1229 = vsel %vm1157, %v1224, %v1228
      %v1231 = vshrl.u32 %v1097, 16
      %v1233 = vrot.slane %v1231, 4
      %v1234 = vshll.u32 %v1097, 16
      %v1236 = vrot.slane %v1234, 5
      %v1237 = vor.u32 %v1233, %v1236
      %v1238 = vrot.slane %v1237, 4
      %v1240 = vshll.u32 %v1098, 16
      %v1242 = vrot.slane %v1240, 5
      %v1243 = vsel %vm1157, %v1238, %v1242
      %v1244 = vshrl.u32 %v1098, 16
      %v1246 = vrot.slane %v1244, 4
      %v1247 = vor.u32 %v1246, %v1242
      %v1248 = vrot.slane %v1247, 4
      %v1250 = vshll.u32 %v1142, 16
      %v1252 = vrot.slane %v1250, 5
      %v1253 = vsel %vm1157, %v1248, %v1252
      %v1255 = vshrl.u32 %v1099, 16
      %v1257 = vrot.slane %v1255, 4
      %v1258 = vshll.u32 %v1099, 16
      %v1260 = vrot.slane %v1258, 5
      %v1261 = vor.u32 %v1257, %v1260
      %v1262 = vrot.slane %v1261, 4
      %v1264 = vshll.u32 %v1100, 16
      %v1266 = vrot.slane %v1264, 5
      %v1267 = vsel %vm1157, %v1262, %v1266
      %v1268 = vshrl.u32 %v1100, 16
      %v1270 = vrot.slane %v1268, 4
      %v1271 = vor.u32 %v1270, %v1266
      %v1272 = vrot.slane %v1271, 4
      %v1274 = vshll.u32 %v1143, 16
      %v1276 = vrot.slane %v1274, 5
      %v1277 = vsel %vm1157, %v1272, %v1276
      %v1279 = vshrl.u32 %v1101, 16
      %v1281 = vrot.slane %v1279, 4
      %v1282 = vshll.u32 %v1101, 16
      %v1284 = vrot.slane %v1282, 5
      %v1285 = vor.u32 %v1281, %v1284
      %v1286 = vrot.slane %v1285, 4
      %v1288 = vshll.u32 %v1102, 16
      %v1290 = vrot.slane %v1288, 5
      %v1291 = vsel %vm1157, %v1286, %v1290
      %v1292 = vshrl.u32 %v1102, 16
      %v1294 = vrot.slane %v1292, 4
      %v1295 = vor.u32 %v1294, %v1290
      %v1296 = vrot.slane %v1295, 4
      %v1298 = vshll.u32 %v1144, 16
      %v1300 = vrot.slane %v1298, 5
      %v1301 = vsel %vm1157, %v1296, %v1300
      %v1303 = vshrl.u32 %v1103, 16
      %v1305 = vrot.slane %v1303, 4
      %v1306 = vshll.u32 %v1103, 16
      %v1308 = vrot.slane %v1306, 5
      %v1309 = vor.u32 %v1305, %v1308
      %v1310 = vrot.slane %v1309, 4
      %v1312 = vshll.u32 %v1104, 16
      %v1314 = vrot.slane %v1312, 5
      %v1315 = vsel %vm1157, %v1310, %v1314
      %v1316 = vshrl.u32 %v1104, 16
      %v1318 = vrot.slane %v1316, 4
      %v1319 = vor.u32 %v1318, %v1314
      %v1320 = vrot.slane %v1319, 4
      %v1322 = vshll.u32 %v1145, 16
      %v1324 = vrot.slane %v1322, 5
      %v1325 = vsel %vm1157, %v1320, %v1324
      %v1327 = vshrl.u32 %v1105, 16
      %v1329 = vrot.slane %v1327, 4
      %v1330 = vshll.u32 %v1105, 16
      %v1332 = vrot.slane %v1330, 5
      %v1333 = vor.u32 %v1329, %v1332
      %v1334 = vrot.slane %v1333, 4
      %v1336 = vshll.u32 %v1106, 16
      %v1338 = vrot.slane %v1336, 5
      %v1339 = vsel %vm1157, %v1334, %v1338
      %v1340 = vshrl.u32 %v1106, 16
      %v1342 = vrot.slane %v1340, 4
      %v1343 = vor.u32 %v1342, %v1338
      %v1344 = vrot.slane %v1343, 4
      %v1346 = vshll.u32 %v1146, 16
      %v1348 = vrot.slane %v1346, 5
      %v1349 = vsel %vm1157, %v1344, %v1348
      %v1351 = vshrl.u32 %v1107, 16
      %v1353 = vrot.slane %v1351, 4
      %v1354 = vshll.u32 %v1107, 16
      %v1356 = vrot.slane %v1354, 5
      %v1357 = vor.u32 %v1353, %v1356
      %v1358 = vrot.slane %v1357, 4
      %v1360 = vshll.u32 %v1108, 16
      %v1362 = vrot.slane %v1360, 5
      %v1363 = vsel %vm1157, %v1358, %v1362
      %v1364 = vshrl.u32 %v1108, 16
      %v1366 = vrot.slane %v1364, 4
      %v1367 = vor.u32 %v1366, %v1362
      %v1368 = vrot.slane %v1367, 4
      %v1370 = vshll.u32 %v1147, 16
      %v1372 = vrot.slane %v1370, 5
      %v1373 = vsel %vm1157, %v1368, %v1372
      %v1375 = vshrl.u32 %v1109, 16
      %v1377 = vrot.slane %v1375, 4
      %v1378 = vshll.u32 %v1109, 16
      %v1380 = vrot.slane %v1378, 5
      %v1381 = vor.u32 %v1377, %v1380
      %v1382 = vrot.slane %v1381, 4
      %v1384 = vshll.u32 %v1110, 16
      %v1386 = vrot.slane %v1384, 5
      %v1387 = vsel %vm1157, %v1382, %v1386
      %v1388 = vshrl.u32 %v1110, 16
      %v1390 = vrot.slane %v1388, 4
      %v1391 = vor.u32 %v1390, %v1386
      %v1392 = vrot.slane %v1391, 4
      %v1394 = vshll.u32 %v1148, 16
      %v1396 = vrot.slane %v1394, 5
      %v1397 = vsel %vm1157, %v1392, %v1396
      %v1399 = vshrl.u32 %v1111, 16
      %v1401 = vrot.slane %v1399, 4
      %v1402 = vshll.u32 %v1111, 16
      %v1404 = vrot.slane %v1402, 5
      %v1405 = vor.u32 %v1401, %v1404
      %v1406 = vrot.slane %v1405, 4
      %v1408 = vshll.u32 %v1112, 16
      %v1410 = vrot.slane %v1408, 5
      %v1411 = vsel %vm1157, %v1406, %v1410
      %v1412 = vshrl.u32 %v1112, 16
      %v1414 = vrot.slane %v1412, 4
      %v1415 = vor.u32 %v1414, %v1410
      %v1416 = vrot.slane %v1415, 4
      %v1418 = vshll.u32 %v1149, 16
      %v1420 = vrot.slane %v1418, 5
      %v1421 = vsel %vm1157, %v1416, %v1420
      %v1423 = vshrl.u32 %v1113, 16
      %v1425 = vrot.slane %v1423, 4
      %v1426 = vshll.u32 %v1113, 16
      %v1428 = vrot.slane %v1426, 5
      %v1429 = vor.u32 %v1425, %v1428
      %v1430 = vrot.slane %v1429, 4
      %v1432 = vshll.u32 %v1114, 16
      %v1434 = vrot.slane %v1432, 5
      %v1435 = vsel %vm1157, %v1430, %v1434
      %v1436 = vshrl.u32 %v1114, 16
      %v1438 = vrot.slane %v1436, 4
      %v1439 = vor.u32 %v1438, %v1434
      %v1440 = vrot.slane %v1439, 4
      %v1442 = vshll.u32 %v1150, 16
      %v1444 = vrot.slane %v1442, 5
      %v1445 = vsel %vm1157, %v1440, %v1444
      %v1447 = vshrl.u32 %v1115, 16
      %v1449 = vrot.slane %v1447, 4
      %v1450 = vshll.u32 %v1115, 16
      %v1452 = vrot.slane %v1450, 5
      %v1453 = vor.u32 %v1449, %v1452
      %v1454 = vrot.slane %v1453, 4
      %v1456 = vshll.u32 %v1116, 16
      %v1458 = vrot.slane %v1456, 5
      %v1459 = vsel %vm1157, %v1454, %v1458
      %v1460 = vshrl.u32 %v1116, 16
      %v1462 = vrot.slane %v1460, 4
      %v1463 = vor.u32 %v1462, %v1458
      %v1464 = vrot.slane %v1463, 4
      %v1466 = vshll.u32 %v1151, 16
      %v1468 = vrot.slane %v1466, 5
      %v1469 = vsel %vm1157, %v1464, %v1468
      %v1471 = vshrl.u32 %v1117, 16
      %v1473 = vrot.slane %v1471, 4
      %v1474 = vshll.u32 %v1117, 16
      %v1476 = vrot.slane %v1474, 5
      %v1477 = vor.u32 %v1473, %v1476
      %v1478 = vrot.slane %v1477, 4
      %v1480 = vshll.u32 %v1118, 16
      %v1482 = vrot.slane %v1480, 5
      %v1483 = vsel %vm1157, %v1478, %v1482
      %v1484 = vshrl.u32 %v1118, 16
      %v1486 = vrot.slane %v1484, 4
      %v1487 = vor.u32 %v1486, %v1482
      %v1488 = vrot.slane %v1487, 4
      %v1490 = vshll.u32 %v1152, 16
      %v1492 = vrot.slane %v1490, 5
      %v1493 = vsel %vm1157, %v1488, %v1492
      %v1495 = vshrl.u32 %v1119, 16
      %v1497 = vrot.slane %v1495, 4
      %v1498 = vshll.u32 %v1119, 16
      %v1500 = vrot.slane %v1498, 5
      %v1501 = vor.u32 %v1497, %v1500
      %v1502 = vrot.slane %v1501, 4
      %v1504 = vshll.u32 %v1120, 16
      %v1506 = vrot.slane %v1504, 5
      %v1507 = vsel %vm1157, %v1502, %v1506
      %v1508 = vshrl.u32 %v1120, 16
      %v1510 = vrot.slane %v1508, 4
      %v1511 = vor.u32 %v1510, %v1506
      %v1512 = vrot.slane %v1511, 4
      %v1514 = vshll.u32 %v1153, 16
      %v1516 = vrot.slane %v1514, 5
      %v1517 = vsel %vm1157, %v1512, %v1516
      %v1519 = vshrl.u32 %v1121, 16
      %v1521 = vrot.slane %v1519, 4
      %v1522 = vshll.u32 %v1121, 16
      %v1524 = vrot.slane %v1522, 5
      %v1525 = vor.u32 %v1521, %v1524
      %v1526 = vrot.slane %v1525, 4
      %v1528 = vshll.u32 %v1122, 16
      %v1530 = vrot.slane %v1528, 5
      %v1531 = vsel %vm1157, %v1526, %v1530
      %v1532 = vshrl.u32 %v1122, 16
      %v1534 = vrot.slane %v1532, 4
      %v1535 = vor.u32 %v1534, %v1530
      %v1536 = vrot.slane %v1535, 4
      %v1538 = vshll.u32 %v1154, 16
      %v1540 = vrot.slane %v1538, 5
      %v1541 = vsel %vm1157, %v1536, %v1540
      %s1542 = scalar_lea.vmem %s3, 64
      %v1543 = vld [vmem:[%s1542] sm:$0xf]
      %v1544 = vld [vmem:[%s1542 + $0x4] sm:$0xf]
      %v1545 = vld [vmem:[%s1542 + $0x8] sm:$0xf]
      %v1546 = vld [vmem:[%s1542 + $0xc] sm:$0xf]
      %v1547 = vld [vmem:[%s1542 + $0x10] sm:$0xf]
      %v1548 = vld [vmem:[%s1542 + $0x14] sm:$0xf]
      %v1549 = vld [vmem:[%s1542 + $0x18] sm:$0xf]
      %v1550 = vld [vmem:[%s1542 + $0x1c] sm:$0xf]
      %v1551 = vld [vmem:[%s1542 + $0x20] sm:$0xf]
      %v1552 = vld [vmem:[%s1542 + $0x24] sm:$0xf]
      %v1553 = vld [vmem:[%s1542 + $0x28] sm:$0xf]
      %v1554 = vld [vmem:[%s1542 + $0x2c] sm:$0xf]
      %v1555 = vld [vmem:[%s1542 + $0x30] sm:$0xf]
      %v1556 = vld [vmem:[%s1542 + $0x34] sm:$0xf]
      %v1557 = vld [vmem:[%s1542 + $0x38] sm:$0xf]
      %v1558 = vld [vmem:[%s1542 + $0x3c] sm:$0xf]
      %v1559 = vunpack.c.l.b16 %v1171
      %v1560 = vunpack.c.l.b16 %v1181
      %v1561 = vunpack.c.l.b16 %v1195
      %v1562 = vunpack.c.l.b16 %v1205
      %v1563 = vunpack.c.l.b16 %v1219
      %v1564 = vunpack.c.l.b16 %v1229
      %v1565 = vunpack.c.l.b16 %v1243
      %v1566 = vunpack.c.l.b16 %v1253
      %v1567 = vunpack.c.l.b16 %v1267
      %v1568 = vunpack.c.l.b16 %v1277
      %v1569 = vunpack.c.l.b16 %v1291
      %v1570 = vunpack.c.l.b16 %v1301
      %v1571 = vunpack.c.l.b16 %v1315
      %v1572 = vunpack.c.l.b16 %v1325
      %v1573 = vunpack.c.l.b16 %v1339
      %v1574 = vunpack.c.l.b16 %v1349
      %v1575 = vunpack.c.l.b16 %v1363
      %v1576 = vunpack.c.l.b16 %v1373
      %v1577 = vunpack.c.l.b16 %v1387
      %v1578 = vunpack.c.l.b16 %v1397
      %v1579 = vunpack.c.l.b16 %v1411
      %v1580 = vunpack.c.l.b16 %v1421
      %v1581 = vunpack.c.l.b16 %v1435
      %v1582 = vunpack.c.l.b16 %v1445
      %v1583 = vunpack.c.l.b16 %v1459
      %v1584 = vunpack.c.l.b16 %v1469
      %v1585 = vunpack.c.l.b16 %v1483
      %v1586 = vunpack.c.l.b16 %v1493
      %v1587 = vunpack.c.l.b16 %v1507
      %v1588 = vunpack.c.l.b16 %v1517
      %v1589 = vunpack.c.l.b16 %v1531
      %v1590 = vunpack.c.l.b16 %v1541
      %v1591 = vpack.c.b16 %v1560, %v1559
      %v1592 = vpack.c.b16 %v1562, %v1561
      %v1593 = vpack.c.b16 %v1564, %v1563
      %v1594 = vpack.c.b16 %v1566, %v1565
      %v1595 = vpack.c.b16 %v1568, %v1567
      %v1596 = vpack.c.b16 %v1570, %v1569
      %v1597 = vpack.c.b16 %v1572, %v1571
      %v1598 = vpack.c.b16 %v1574, %v1573
      %v1599 = vpack.c.b16 %v1576, %v1575
      %v1600 = vpack.c.b16 %v1578, %v1577
      %v1601 = vpack.c.b16 %v1580, %v1579
      %v1602 = vpack.c.b16 %v1582, %v1581
      %v1603 = vpack.c.b16 %v1584, %v1583
      %v1604 = vpack.c.b16 %v1586, %v1585
      %v1605 = vpack.c.b16 %v1588, %v1587
      %v1606 = vpack.c.b16 %v1590, %v1589
      %v1639 = vunpack.c.l.b16 %v1543
      %v1640 = vunpack.c.l.b16 %v1544
      %v1641 = vunpack.c.l.b16 %v1545
      %v1642 = vunpack.c.l.b16 %v1546
      %v1643 = vunpack.c.l.b16 %v1547
      %v1644 = vunpack.c.l.b16 %v1548
      %v1645 = vunpack.c.l.b16 %v1549
      %v1646 = vunpack.c.l.b16 %v1550
      %v1647 = vunpack.c.l.b16 %v1551
      %v1648 = vunpack.c.l.b16 %v1552
      %v1649 = vunpack.c.l.b16 %v1553
      %v1650 = vunpack.c.l.b16 %v1554
      %v1651 = vunpack.c.l.b16 %v1555
      %v1652 = vunpack.c.l.b16 %v1556
      %v1653 = vunpack.c.l.b16 %v1557
      %v1654 = vunpack.c.l.b16 %v1558
      %v1655 = vpack.c.b16 %v1640, %v1639
      %v1656 = vpack.c.b16 %v1642, %v1641
      %v1657 = vpack.c.b16 %v1644, %v1643
      %v1658 = vpack.c.b16 %v1646, %v1645
      %v1659 = vpack.c.b16 %v1648, %v1647
      %v1660 = vpack.c.b16 %v1650, %v1649
      %v1661 = vpack.c.b16 %v1652, %v1651
      %v1662 = vpack.c.b16 %v1654, %v1653
      %1671 = vmatprep.subr.bf16.mxu0 0
      %1672 = vmatpush1.bf16.msra.mxu0 %v1662
      %1673 = vmatprep.subr.bf16.mxu0 0
      %1674 = vmatpush1.bf16.msra.mxu0 %v1661
      %1675 = vmatprep.subr.bf16.mxu0 0
      %1676 = vmatpush1.bf16.msra.mxu0 %v1660
      %1677 = vmatprep.subr.bf16.mxu0 0
      %1678 = vmatpush1.bf16.msra.mxu0 %v1659
      %1679 = vmatprep.subr.bf16.mxu0 0
      %1680 = vmatpush1.bf16.msra.mxu0 %v1658
      %1681 = vmatprep.subr.bf16.mxu0 0
      %1682 = vmatpush1.bf16.msra.mxu0 %v1657
      %1683 = vmatprep.subr.bf16.mxu0 0
      %1684 = vmatpush1.bf16.msra.mxu0 %v1656
      %1685 = vmatprep.subr.bf16.mxu0 0
      %1686 = vmatpush1.bf16.msra.mxu0 %v1655
      %1687 = vmatprep.subr.bf16.mxu0 0
      %1688 = vmatpush2.bf16.msra.mxu0 0
      %1689 = vmatprep.subr.bf16.mxu0 0
      %1690 = vmatpush2.bf16.msra.mxu0 0
      %1691 = vmatprep.subr.bf16.mxu0 0
      %1692 = vmatpush2.bf16.msra.mxu0 0
      %1693 = vmatprep.subr.bf16.mxu0 0
      %1694 = vmatpush2.bf16.msra.mxu0 0
      %1695 = vmatprep.subr.bf16.mxu0 0
      %1696 = vmatpush2.bf16.msra.mxu0 0
      %1697 = vmatprep.subr.bf16.mxu0 0
      %1698 = vmatpush2.bf16.msra.mxu0 0
      %1699 = vmatprep.subr.bf16.mxu0 0
      %1700 = vmatpush2.bf16.msra.mxu0 0
      %1701 = vmatprep.subr.bf16.mxu0 0
      %1702 = vmatpush2.bf16.msra.mxu0 0
      %1703 = vmatprep.mubr.bf16.mxu0 0
      %1704 = vmatmul.mubr.bf16.gmra.mxu0 %v1591
      %v1705 = vpop.f32.mrf.mxu0
      %v1706 = vadd.f32 0.0, %v1705
      %v1707 = vpop.f32.mrf.mxu0
      %v1708 = vpop.f32.mrf.mxu0
      %v1709 = vadd.f32 0.0, %v1708
      %v1710 = vpop.f32.mrf.mxu0
      %1711 = vmatprep.mubr.bf16.mxu0 0
      %1712 = vmatmul.mubr.bf16.gmra.mxu0 %v1592
      %v1713 = vpop.f32.mrf.mxu0
      %v1714 = vadd.f32 0.0, %v1713
      %v1715 = vpop.f32.mrf.mxu0
      %v1716 = vpop.f32.mrf.mxu0
      %v1717 = vadd.f32 0.0, %v1716
      %v1718 = vpop.f32.mrf.mxu0
      %1719 = vmatprep.mubr.bf16.mxu0 0
      %1720 = vmatmul.mubr.bf16.gmra.mxu0 %v1593
      %v1721 = vpop.f32.mrf.mxu0
      %v1722 = vadd.f32 0.0, %v1721
      %v1723 = vpop.f32.mrf.mxu0
      %v1724 = vpop.f32.mrf.mxu0
      %v1725 = vadd.f32 0.0, %v1724
      %v1726 = vpop.f32.mrf.mxu0
      %1727 = vmatprep.mubr.bf16.mxu0 0
      %1728 = vmatmul.mubr.bf16.gmra.mxu0 %v1594
      %v1729 = vpop.f32.mrf.mxu0
      %v1730 = vadd.f32 0.0, %v1729
      %v1731 = vpop.f32.mrf.mxu0
      %v1732 = vpop.f32.mrf.mxu0
      %v1733 = vadd.f32 0.0, %v1732
      %v1734 = vpop.f32.mrf.mxu0
      %1735 = vmatprep.mubr.bf16.mxu0 0
      %1736 = vmatmul.mubr.bf16.gmra.mxu0 %v1595
      %v1737 = vpop.f32.mrf.mxu0
      %v1738 = vadd.f32 0.0, %v1737
      %v1739 = vpop.f32.mrf.mxu0
      %v1740 = vpop.f32.mrf.mxu0
      %v1741 = vadd.f32 0.0, %v1740
      %v1742 = vpop.f32.mrf.mxu0
      %1743 = vmatprep.mubr.bf16.mxu0 0
      %1744 = vmatmul.mubr.bf16.gmra.mxu0 %v1596
      %v1745 = vpop.f32.mrf.mxu0
      %v1746 = vadd.f32 0.0, %v1745
      %v1747 = vpop.f32.mrf.mxu0
      %v1748 = vpop.f32.mrf.mxu0
      %v1749 = vadd.f32 0.0, %v1748
      %v1750 = vpop.f32.mrf.mxu0
      %1751 = vmatprep.mubr.bf16.mxu0 0
      %1752 = vmatmul.mubr.bf16.gmra.mxu0 %v1597
      %v1753 = vpop.f32.mrf.mxu0
      %v1754 = vadd.f32 0.0, %v1753
      %v1755 = vpop.f32.mrf.mxu0
      %v1756 = vpop.f32.mrf.mxu0
      %v1757 = vadd.f32 0.0, %v1756
      %v1758 = vpop.f32.mrf.mxu0
      %1759 = vmatprep.mubr.bf16.mxu0 0
      %1760 = vmatmul.mubr.bf16.gmra.mxu0 %v1598
      %v1761 = vpop.f32.mrf.mxu0
      %v1762 = vadd.f32 0.0, %v1761
      %v1763 = vpop.f32.mrf.mxu0
      %v1764 = vpop.f32.mrf.mxu0
      %v1765 = vadd.f32 0.0, %v1764
      %v1766 = vpop.f32.mrf.mxu0
      %1767 = vmatprep.mubr.bf16.mxu0 0
      %1768 = vmatmul.mubr.bf16.gmra.mxu0 %v1599
      %v1769 = vpop.f32.mrf.mxu0
      %v1770 = vadd.f32 0.0, %v1769
      %v1771 = vpop.f32.mrf.mxu0
      %v1772 = vpop.f32.mrf.mxu0
      %v1773 = vadd.f32 0.0, %v1772
      %v1774 = vpop.f32.mrf.mxu0
      %1775 = vmatprep.mubr.bf16.mxu0 0
      %1776 = vmatmul.mubr.bf16.gmra.mxu0 %v1600
      %v1777 = vpop.f32.mrf.mxu0
      %v1778 = vadd.f32 0.0, %v1777
      %v1779 = vpop.f32.mrf.mxu0
      %v1780 = vpop.f32.mrf.mxu0
      %v1781 = vadd.f32 0.0, %v1780
      %v1782 = vpop.f32.mrf.mxu0
      %1783 = vmatprep.mubr.bf16.mxu0 0
      %1784 = vmatmul.mubr.bf16.gmra.mxu0 %v1601
      %v1785 = vpop.f32.mrf.mxu0
      %v1786 = vadd.f32 0.0, %v1785
      %v1787 = vpop.f32.mrf.mxu0
      %v1788 = vpop.f32.mrf.mxu0
      %v1789 = vadd.f32 0.0, %v1788
      %v1790 = vpop.f32.mrf.mxu0
      %1791 = vmatprep.mubr.bf16.mxu0 0
      %1792 = vmatmul.mubr.bf16.gmra.mxu0 %v1602
      %v1793 = vpop.f32.mrf.mxu0
      %v1794 = vadd.f32 0.0, %v1793
      %v1795 = vpop.f32.mrf.mxu0
      %v1796 = vpop.f32.mrf.mxu0
      %v1797 = vadd.f32 0.0, %v1796
      %v1798 = vpop.f32.mrf.mxu0
      %1799 = vmatprep.mubr.bf16.mxu0 0
      %1800 = vmatmul.mubr.bf16.gmra.mxu0 %v1603
      %v1801 = vpop.f32.mrf.mxu0
      %v1802 = vadd.f32 0.0, %v1801
      %v1803 = vpop.f32.mrf.mxu0
      %v1804 = vpop.f32.mrf.mxu0
      %v1805 = vadd.f32 0.0, %v1804
      %v1806 = vpop.f32.mrf.mxu0
      %1807 = vmatprep.mubr.bf16.mxu0 0
      %1808 = vmatmul.mubr.bf16.gmra.mxu0 %v1604
      %v1809 = vpop.f32.mrf.mxu0
      %v1810 = vadd.f32 0.0, %v1809
      %v1811 = vpop.f32.mrf.mxu0
      %v1812 = vpop.f32.mrf.mxu0
      %v1813 = vadd.f32 0.0, %v1812
      %v1814 = vpop.f32.mrf.mxu0
      %1815 = vmatprep.mubr.bf16.mxu0 0
      %1816 = vmatmul.mubr.bf16.gmra.mxu0 %v1605
      %v1817 = vpop.f32.mrf.mxu0
      %v1818 = vadd.f32 0.0, %v1817
      %v1819 = vpop.f32.mrf.mxu0
      %v1820 = vpop.f32.mrf.mxu0
      %v1821 = vadd.f32 0.0, %v1820
      %v1822 = vpop.f32.mrf.mxu0
      %1823 = vmatprep.mubr.bf16.mxu0 0
      %1824 = vmatmul.mubr.bf16.gmra.mxu0 %v1606
      %v1825 = vpop.f32.mrf.mxu0
      %v1826 = vadd.f32 0.0, %v1825
      %v1827 = vpop.f32.mrf.mxu0
      %v1828 = vpop.f32.mrf.mxu0
      %v1829 = vadd.f32 0.0, %v1828
      %v1830 = vpop.f32.mrf.mxu0
      %1831 = vdwg.mxu0
      %v1864 = vunpack.c.l.b16 %v1091
      %v1865 = vunpack.c.l.b16 %v1092
      %v1866 = vunpack.c.l.b16 %v1093
      %v1867 = vunpack.c.l.b16 %v1094
      %v1868 = vunpack.c.l.b16 %v1095
      %v1869 = vunpack.c.l.b16 %v1096
      %v1870 = vunpack.c.l.b16 %v1097
      %v1871 = vunpack.c.l.b16 %v1098
      %v1872 = vunpack.c.l.b16 %v1099
      %v1873 = vunpack.c.l.b16 %v1100
      %v1874 = vunpack.c.l.b16 %v1101
      %v1875 = vunpack.c.l.b16 %v1102
      %v1876 = vunpack.c.l.b16 %v1103
      %v1877 = vunpack.c.l.b16 %v1104
      %v1878 = vunpack.c.l.b16 %v1105
      %v1879 = vunpack.c.l.b16 %v1106
      %v1880 = vunpack.c.l.b16 %v1107
      %v1881 = vunpack.c.l.b16 %v1108
      %v1882 = vunpack.c.l.b16 %v1109
      %v1883 = vunpack.c.l.b16 %v1110
      %v1884 = vunpack.c.l.b16 %v1111
      %v1885 = vunpack.c.l.b16 %v1112
      %v1886 = vunpack.c.l.b16 %v1113
      %v1887 = vunpack.c.l.b16 %v1114
      %v1888 = vunpack.c.l.b16 %v1115
      %v1889 = vunpack.c.l.b16 %v1116
      %v1890 = vunpack.c.l.b16 %v1117
      %v1891 = vunpack.c.l.b16 %v1118
      %v1892 = vunpack.c.l.b16 %v1119
      %v1893 = vunpack.c.l.b16 %v1120
      %v1894 = vunpack.c.l.b16 %v1121
      %v1895 = vunpack.c.l.b16 %v1122
      %v1896 = vpack.c.b16 %v1865, %v1864
      %v1897 = vpack.c.b16 %v1867, %v1866
      %v1898 = vpack.c.b16 %v1869, %v1868
      %v1899 = vpack.c.b16 %v1871, %v1870
      %v1900 = vpack.c.b16 %v1873, %v1872
      %v1901 = vpack.c.b16 %v1875, %v1874
      %v1902 = vpack.c.b16 %v1877, %v1876
      %v1903 = vpack.c.b16 %v1879, %v1878
      %v1904 = vpack.c.b16 %v1881, %v1880
      %v1905 = vpack.c.b16 %v1883, %v1882
      %v1906 = vpack.c.b16 %v1885, %v1884
      %v1907 = vpack.c.b16 %v1887, %v1886
      %v1908 = vpack.c.b16 %v1889, %v1888
      %v1909 = vpack.c.b16 %v1891, %v1890
      %v1910 = vpack.c.b16 %v1893, %v1892
      %v1911 = vpack.c.b16 %v1895, %v1894
      %v1944 = vunpack.c.l.b16 %v1123
      %v1945 = vunpack.c.l.b16 %v1124
      %v1946 = vunpack.c.l.b16 %v1125
      %v1947 = vunpack.c.l.b16 %v1126
      %v1948 = vunpack.c.l.b16 %v1127
      %v1949 = vunpack.c.l.b16 %v1128
      %v1950 = vunpack.c.l.b16 %v1129
      %v1951 = vunpack.c.l.b16 %v1130
      %v1952 = vunpack.c.l.b16 %v1131
      %v1953 = vunpack.c.l.b16 %v1132
      %v1954 = vunpack.c.l.b16 %v1133
      %v1955 = vunpack.c.l.b16 %v1134
      %v1956 = vunpack.c.l.b16 %v1135
      %v1957 = vunpack.c.l.b16 %v1136
      %v1958 = vunpack.c.l.b16 %v1137
      %v1959 = vunpack.c.l.b16 %v1138
      %v1960 = vpack.c.b16 %v1945, %v1944
      %v1961 = vpack.c.b16 %v1947, %v1946
      %v1962 = vpack.c.b16 %v1949, %v1948
      %v1963 = vpack.c.b16 %v1951, %v1950
      %v1964 = vpack.c.b16 %v1953, %v1952
      %v1965 = vpack.c.b16 %v1955, %v1954
      %v1966 = vpack.c.b16 %v1957, %v1956
      %v1967 = vpack.c.b16 %v1959, %v1958
      %1976 = vmatprep.subr.bf16.mxu0 0
      %1977 = vmatpush1.bf16.msra.mxu0 %v1967
      %1978 = vmatprep.subr.bf16.mxu0 0
      %1979 = vmatpush1.bf16.msra.mxu0 %v1966
      %1980 = vmatprep.subr.bf16.mxu0 0
      %1981 = vmatpush1.bf16.msra.mxu0 %v1965
      %1982 = vmatprep.subr.bf16.mxu0 0
      %1983 = vmatpush1.bf16.msra.mxu0 %v1964
      %1984 = vmatprep.subr.bf16.mxu0 0
      %1985 = vmatpush1.bf16.msra.mxu0 %v1963
      %1986 = vmatprep.subr.bf16.mxu0 0
      %1987 = vmatpush1.bf16.msra.mxu0 %v1962
      %1988 = vmatprep.subr.bf16.mxu0 0
      %1989 = vmatpush1.bf16.msra.mxu0 %v1961
      %1990 = vmatprep.subr.bf16.mxu0 0
      %1991 = vmatpush1.bf16.msra.mxu0 %v1960
      %1992 = vmatprep.subr.bf16.mxu0 0
      %1993 = vmatpush2.bf16.msra.mxu0 0
      %1994 = vmatprep.subr.bf16.mxu0 0
      %1995 = vmatpush2.bf16.msra.mxu0 0
      %1996 = vmatprep.subr.bf16.mxu0 0
      %1997 = vmatpush2.bf16.msra.mxu0 0
      %1998 = vmatprep.subr.bf16.mxu0 0
      %1999 = vmatpush2.bf16.msra.mxu0 0
      %2000 = vmatprep.subr.bf16.mxu0 0
      %2001 = vmatpush2.bf16.msra.mxu0 0
      %2002 = vmatprep.subr.bf16.mxu0 0
      %2003 = vmatpush2.bf16.msra.mxu0 0
      %2004 = vmatprep.subr.bf16.mxu0 0
      %2005 = vmatpush2.bf16.msra.mxu0 0
      %2006 = vmatprep.subr.bf16.mxu0 0
      %2007 = vmatpush2.bf16.msra.mxu0 0
      %2008 = vmatprep.mubr.bf16.mxu0 0
      %2009 = vmatmul.mubr.bf16.gmra.mxu0 %v1896
      %v2010 = vpop.f32.mrf.mxu0
      %v2011 = vadd.f32 %v1706, %v2010
      %v2012 = vpop.f32.mrf.mxu0
      %v2013 = vpop.f32.mrf.mxu0
      %v2014 = vadd.f32 %v1709, %v2013
      %v2015 = vpop.f32.mrf.mxu0
      %2016 = vmatprep.mubr.bf16.mxu0 0
      %2017 = vmatmul.mubr.bf16.gmra.mxu0 %v1897
      %v2018 = vpop.f32.mrf.mxu0
      %v2019 = vadd.f32 %v1714, %v2018
      %v2020 = vpop.f32.mrf.mxu0
      %v2021 = vpop.f32.mrf.mxu0
      %v2022 = vadd.f32 %v1717, %v2021
      %v2023 = vpop.f32.mrf.mxu0
      %2024 = vmatprep.mubr.bf16.mxu0 0
      %2025 = vmatmul.mubr.bf16.gmra.mxu0 %v1898
      %v2026 = vpop.f32.mrf.mxu0
      %v2027 = vadd.f32 %v1722, %v2026
      %v2028 = vpop.f32.mrf.mxu0
      %v2029 = vpop.f32.mrf.mxu0
      %v2030 = vadd.f32 %v1725, %v2029
      %v2031 = vpop.f32.mrf.mxu0
      %2032 = vmatprep.mubr.bf16.mxu0 0
      %2033 = vmatmul.mubr.bf16.gmra.mxu0 %v1899
      %v2034 = vpop.f32.mrf.mxu0
      %v2035 = vadd.f32 %v1730, %v2034
      %v2036 = vpop.f32.mrf.mxu0
      %v2037 = vpop.f32.mrf.mxu0
      %v2038 = vadd.f32 %v1733, %v2037
      %v2039 = vpop.f32.mrf.mxu0
      %2040 = vmatprep.mubr.bf16.mxu0 0
      %2041 = vmatmul.mubr.bf16.gmra.mxu0 %v1900
      %v2042 = vpop.f32.mrf.mxu0
      %v2043 = vadd.f32 %v1738, %v2042
      %v2044 = vpop.f32.mrf.mxu0
      %v2045 = vpop.f32.mrf.mxu0
      %v2046 = vadd.f32 %v1741, %v2045
      %v2047 = vpop.f32.mrf.mxu0
      %2048 = vmatprep.mubr.bf16.mxu0 0
      %2049 = vmatmul.mubr.bf16.gmra.mxu0 %v1901
      %v2050 = vpop.f32.mrf.mxu0
      %v2051 = vadd.f32 %v1746, %v2050
      %v2052 = vpop.f32.mrf.mxu0
      %v2053 = vpop.f32.mrf.mxu0
      %v2054 = vadd.f32 %v1749, %v2053
      %v2055 = vpop.f32.mrf.mxu0
      %2056 = vmatprep.mubr.bf16.mxu0 0
      %2057 = vmatmul.mubr.bf16.gmra.mxu0 %v1902
      %v2058 = vpop.f32.mrf.mxu0
      %v2059 = vadd.f32 %v1754, %v2058
      %v2060 = vpop.f32.mrf.mxu0
      %v2061 = vpop.f32.mrf.mxu0
      %v2062 = vadd.f32 %v1757, %v2061
      %v2063 = vpop.f32.mrf.mxu0
      %2064 = vmatprep.mubr.bf16.mxu0 0
      %2065 = vmatmul.mubr.bf16.gmra.mxu0 %v1903
      %v2066 = vpop.f32.mrf.mxu0
      %v2067 = vadd.f32 %v1762, %v2066
      %v2068 = vpop.f32.mrf.mxu0
      %v2069 = vpop.f32.mrf.mxu0
      %v2070 = vadd.f32 %v1765, %v2069
      %v2071 = vpop.f32.mrf.mxu0
      %2072 = vmatprep.mubr.bf16.mxu0 0
      %2073 = vmatmul.mubr.bf16.gmra.mxu0 %v1904
      %v2074 = vpop.f32.mrf.mxu0
      %v2075 = vadd.f32 %v1770, %v2074
      %v2076 = vpop.f32.mrf.mxu0
      %v2077 = vpop.f32.mrf.mxu0
      %v2078 = vadd.f32 %v1773, %v2077
      %v2079 = vpop.f32.mrf.mxu0
      %2080 = vmatprep.mubr.bf16.mxu0 0
      %2081 = vmatmul.mubr.bf16.gmra.mxu0 %v1905
      %v2082 = vpop.f32.mrf.mxu0
      %v2083 = vadd.f32 %v1778, %v2082
      %v2084 = vpop.f32.mrf.mxu0
      %v2085 = vpop.f32.mrf.mxu0
      %v2086 = vadd.f32 %v1781, %v2085
      %v2087 = vpop.f32.mrf.mxu0
      %2088 = vmatprep.mubr.bf16.mxu0 0
      %2089 = vmatmul.mubr.bf16.gmra.mxu0 %v1906
      %v2090 = vpop.f32.mrf.mxu0
      %v2091 = vadd.f32 %v1786, %v2090
      %v2092 = vpop.f32.mrf.mxu0
      %v2093 = vpop.f32.mrf.mxu0
      %v2094 = vadd.f32 %v1789, %v2093
      %v2095 = vpop.f32.mrf.mxu0
      %2096 = vmatprep.mubr.bf16.mxu0 0
      %2097 = vmatmul.mubr.bf16.gmra.mxu0 %v1907
      %v2098 = vpop.f32.mrf.mxu0
      %v2099 = vadd.f32 %v1794, %v2098
      %v2100 = vpop.f32.mrf.mxu0
      %v2101 = vpop.f32.mrf.mxu0
      %v2102 = vadd.f32 %v1797, %v2101
      %v2103 = vpop.f32.mrf.mxu0
      %2104 = vmatprep.mubr.bf16.mxu0 0
      %2105 = vmatmul.mubr.bf16.gmra.mxu0 %v1908
      %v2106 = vpop.f32.mrf.mxu0
      %v2107 = vadd.f32 %v1802, %v2106
      %v2108 = vpop.f32.mrf.mxu0
      %v2109 = vpop.f32.mrf.mxu0
      %v2110 = vadd.f32 %v1805, %v2109
      %v2111 = vpop.f32.mrf.mxu0
      %2112 = vmatprep.mubr.bf16.mxu0 0
      %2113 = vmatmul.mubr.bf16.gmra.mxu0 %v1909
      %v2114 = vpop.f32.mrf.mxu0
      %v2115 = vadd.f32 %v1810, %v2114
      %v2116 = vpop.f32.mrf.mxu0
      %v2117 = vpop.f32.mrf.mxu0
      %v2118 = vadd.f32 %v1813, %v2117
      %v2119 = vpop.f32.mrf.mxu0
      %2120 = vmatprep.mubr.bf16.mxu0 0
      %2121 = vmatmul.mubr.bf16.gmra.mxu0 %v1910
      %v2122 = vpop.f32.mrf.mxu0
      %v2123 = vadd.f32 %v1818, %v2122
      %v2124 = vpop.f32.mrf.mxu0
      %v2125 = vpop.f32.mrf.mxu0
      %v2126 = vadd.f32 %v1821, %v2125
      %v2127 = vpop.f32.mrf.mxu0
      %2128 = vmatprep.mubr.bf16.mxu0 0
      %2129 = vmatmul.mubr.bf16.gmra.mxu0 %v1911
      %v2130 = vpop.f32.mrf.mxu0
      %v2131 = vadd.f32 %v1826, %v2130
      %v2132 = vpop.f32.mrf.mxu0
      %v2133 = vpop.f32.mrf.mxu0
      %v2134 = vadd.f32 %v1829, %v2133
      %v2135 = vpop.f32.mrf.mxu0
      %2136 = vdwg.mxu0
      %v2137 = vld [vmem:[#allocation2] sm:$0xe]
      %v2138 = vld [vmem:[#allocation2 + $0xc] sm:$0xe]
      %v2139 = vld [vmem:[#allocation2 + $0x18] sm:$0xe]
      %v2140 = vld [vmem:[#allocation2 + $0x24] sm:$0xe]
      %v2141 = vld [vmem:[#allocation2 + $0x30] sm:$0xe]
      %v2142 = vld [vmem:[#allocation2 + $0x3c] sm:$0xe]
      %v2143 = vld [vmem:[#allocation2 + $0x48] sm:$0xe]
      %v2144 = vld [vmem:[#allocation2 + $0x54] sm:$0xe]
      %v2145 = vld [vmem:[#allocation2 + $0x60] sm:$0xe]
      %v2146 = vld [vmem:[#allocation2 + $0x6c] sm:$0xe]
      %v2147 = vld [vmem:[#allocation2 + $0x78] sm:$0xe]
      %v2148 = vld [vmem:[#allocation2 + $0x84] sm:$0xe]
      %v2149 = vld [vmem:[#allocation2 + $0x90] sm:$0xe]
      %v2150 = vld [vmem:[#allocation2 + $0x9c] sm:$0xe]
      %v2151 = vld [vmem:[#allocation2 + $0xa8] sm:$0xe]
      %v2152 = vld [vmem:[#allocation2 + $0xb4] sm:$0xe]
      %vm2185 = vcmask 1042432
      %vm2186 = vcmask 1046532
      %vm2187 = vmor %vm2185, %vm2186
      %v2188 = vrot.slane %v2137, 5
      %v2189 = vrot.slane %v2188, 4
      %v2190 = vrot.slane %v1092, 5
      %v2191 = vsel %vm2187, %v2189, %v2190
      %v2192 = vrot.slane %v2190, 4
      %v2193 = vrot.slane %v1139, 5
      %v2194 = vsel %vm2187, %v2192, %v2193
      %v2195 = vrot.slane %v2138, 5
      %v2196 = vrot.slane %v2195, 4
      %v2197 = vrot.slane %v1094, 5
      %v2198 = vsel %vm2187, %v2196, %v2197
      %v2199 = vrot.slane %v2197, 4
      %v2200 = vrot.slane %v1140, 5
      %v2201 = vsel %vm2187, %v2199, %v2200
      %v2202 = vrot.slane %v2139, 5
      %v2203 = vrot.slane %v2202, 4
      %v2204 = vrot.slane %v1096, 5
      %v2205 = vsel %vm2187, %v2203, %v2204
      %v2206 = vrot.slane %v2204, 4
      %v2207 = vrot.slane %v1141, 5
      %v2208 = vsel %vm2187, %v2206, %v2207
      %v2209 = vrot.slane %v2140, 5
      %v2210 = vrot.slane %v2209, 4
      %v2211 = vrot.slane %v1098, 5
      %v2212 = vsel %vm2187, %v2210, %v2211
      %v2213 = vrot.slane %v2211, 4
      %v2214 = vrot.slane %v1142, 5
      %v2215 = vsel %vm2187, %v2213, %v2214
      %v2216 = vrot.slane %v2141, 5
      %v2217 = vrot.slane %v2216, 4
      %v2218 = vrot.slane %v1100, 5
      %v2219 = vsel %vm2187, %v2217, %v2218
      %v2220 = vrot.slane %v2218, 4
      %v2221 = vrot.slane %v1143, 5
      %v2222 = vsel %vm2187, %v2220, %v2221
      %v2223 = vrot.slane %v2142, 5
      %v2224 = vrot.slane %v2223, 4
      %v2225 = vrot.slane %v1102, 5
      %v2226 = vsel %vm2187, %v2224, %v2225
      %v2227 = vrot.slane %v2225, 4
      %v2228 = vrot.slane %v1144, 5
      %v2229 = vsel %vm2187, %v2227, %v2228
      %v2230 = vrot.slane %v2143, 5
      %v2231 = vrot.slane %v2230, 4
      %v2232 = vrot.slane %v1104, 5
      %v2233 = vsel %vm2187, %v2231, %v2232
      %v2234 = vrot.slane %v2232, 4
      %v2235 = vrot.slane %v1145, 5
      %v2236 = vsel %vm2187, %v2234, %v2235
      %v2237 = vrot.slane %v2144, 5
      %v2238 = vrot.slane %v2237, 4
      %v2239 = vrot.slane %v1106, 5
      %v2240 = vsel %vm2187, %v2238, %v2239
      %v2241 = vrot.slane %v2239, 4
      %v2242 = vrot.slane %v1146, 5
      %v2243 = vsel %vm2187, %v2241, %v2242
      %v2244 = vrot.slane %v2145, 5
      %v2245 = vrot.slane %v2244, 4
      %v2246 = vrot.slane %v1108, 5
      %v2247 = vsel %vm2187, %v2245, %v2246
      %v2248 = vrot.slane %v2246, 4
      %v2249 = vrot.slane %v1147, 5
      %v2250 = vsel %vm2187, %v2248, %v2249
      %v2251 = vrot.slane %v2146, 5
      %v2252 = vrot.slane %v2251, 4
      %v2253 = vrot.slane %v1110, 5
      %v2254 = vsel %vm2187, %v2252, %v2253
      %v2255 = vrot.slane %v2253, 4
      %v2256 = vrot.slane %v1148, 5
      %v2257 = vsel %vm2187, %v2255, %v2256
      %v2258 = vrot.slane %v2147, 5
      %v2259 = vrot.slane %v2258, 4
      %v2260 = vrot.slane %v1112, 5
      %v2261 = vsel %vm2187, %v2259, %v2260
      %v2262 = vrot.slane %v2260, 4
      %v2263 = vrot.slane %v1149, 5
      %v2264 = vsel %vm2187, %v2262, %v2263
      %v2265 = vrot.slane %v2148, 5
      %v2266 = vrot.slane %v2265, 4
      %v2267 = vrot.slane %v1114, 5
      %v2268 = vsel %vm2187, %v2266, %v2267
      %v2269 = vrot.slane %v2267, 4
      %v2270 = vrot.slane %v1150, 5
      %v2271 = vsel %vm2187, %v2269, %v2270
      %v2272 = vrot.slane %v2149, 5
      %v2273 = vrot.slane %v2272, 4
      %v2274 = vrot.slane %v1116, 5
      %v2275 = vsel %vm2187, %v2273, %v2274
      %v2276 = vrot.slane %v2274, 4
      %v2277 = vrot.slane %v1151, 5
      %v2278 = vsel %vm2187, %v2276, %v2277
      %v2279 = vrot.slane %v2150, 5
      %v2280 = vrot.slane %v2279, 4
      %v2281 = vrot.slane %v1118, 5
      %v2282 = vsel %vm2187, %v2280, %v2281
      %v2283 = vrot.slane %v2281, 4
      %v2284 = vrot.slane %v1152, 5
      %v2285 = vsel %vm2187, %v2283, %v2284
      %v2286 = vrot.slane %v2151, 5
      %v2287 = vrot.slane %v2286, 4
      %v2288 = vrot.slane %v1120, 5
      %v2289 = vsel %vm2187, %v2287, %v2288
      %v2290 = vrot.slane %v2288, 4
      %v2291 = vrot.slane %v1153, 5
      %v2292 = vsel %vm2187, %v2290, %v2291
      %v2293 = vrot.slane %v2152, 5
      %v2294 = vrot.slane %v2293, 4
      %v2295 = vrot.slane %v1122, 5
      %v2296 = vsel %vm2187, %v2294, %v2295
      %v2297 = vrot.slane %v2295, 4
      %v2298 = vrot.slane %v1154, 5
      %v2299 = vsel %vm2187, %v2297, %v2298
      %s2300 = scalar_lea.vmem %s3, 128
      %v2301 = vld [vmem:[%s2300] sm:$0xf]
      %v2302 = vld [vmem:[%s2300 + $0x4] sm:$0xf]
      %v2303 = vld [vmem:[%s2300 + $0x8] sm:$0xf]
      %v2304 = vld [vmem:[%s2300 + $0xc] sm:$0xf]
      %v2305 = vld [vmem:[%s2300 + $0x10] sm:$0xf]
      %v2306 = vld [vmem:[%s2300 + $0x14] sm:$0xf]
      %v2307 = vld [vmem:[%s2300 + $0x18] sm:$0xf]
      %v2308 = vld [vmem:[%s2300 + $0x1c] sm:$0xf]
      %v2309 = vld [vmem:[%s2300 + $0x20] sm:$0xf]
      %v2310 = vld [vmem:[%s2300 + $0x24] sm:$0xf]
      %v2311 = vld [vmem:[%s2300 + $0x28] sm:$0xf]
      %v2312 = vld [vmem:[%s2300 + $0x2c] sm:$0xf]
      %v2313 = vld [vmem:[%s2300 + $0x30] sm:$0xf]
      %v2314 = vld [vmem:[%s2300 + $0x34] sm:$0xf]
      %v2315 = vld [vmem:[%s2300 + $0x38] sm:$0xf]
      %v2316 = vld [vmem:[%s2300 + $0x3c] sm:$0xf]
      %v2317 = vunpack.c.l.b16 %v2191
      %v2318 = vunpack.c.l.b16 %v2194
      %v2319 = vunpack.c.l.b16 %v2198
      %v2320 = vunpack.c.l.b16 %v2201
      %v2321 = vunpack.c.l.b16 %v2205
      %v2322 = vunpack.c.l.b16 %v2208
      %v2323 = vunpack.c.l.b16 %v2212
      %v2324 = vunpack.c.l.b16 %v2215
      %v2325 = vunpack.c.l.b16 %v2219
      %v2326 = vunpack.c.l.b16 %v2222
      %v2327 = vunpack.c.l.b16 %v2226
      %v2328 = vunpack.c.l.b16 %v2229
      %v2329 = vunpack.c.l.b16 %v2233
      %v2330 = vunpack.c.l.b16 %v2236
      %v2331 = vunpack.c.l.b16 %v2240
      %v2332 = vunpack.c.l.b16 %v2243
      %v2333 = vunpack.c.l.b16 %v2247
      %v2334 = vunpack.c.l.b16 %v2250
      %v2335 = vunpack.c.l.b16 %v2254
      %v2336 = vunpack.c.l.b16 %v2257
      %v2337 = vunpack.c.l.b16 %v2261
      %v2338 = vunpack.c.l.b16 %v2264
      %v2339 = vunpack.c.l.b16 %v2268
      %v2340 = vunpack.c.l.b16 %v2271
      %v2341 = vunpack.c.l.b16 %v2275
      %v2342 = vunpack.c.l.b16 %v2278
      %v2343 = vunpack.c.l.b16 %v2282
      %v2344 = vunpack.c.l.b16 %v2285
      %v2345 = vunpack.c.l.b16 %v2289
      %v2346 = vunpack.c.l.b16 %v2292
      %v2347 = vunpack.c.l.b16 %v2296
      %v2348 = vunpack.c.l.b16 %v2299
      %v2349 = vpack.c.b16 %v2318, %v2317
      %v2350 = vpack.c.b16 %v2320, %v2319
      %v2351 = vpack.c.b16 %v2322, %v2321
      %v2352 = vpack.c.b16 %v2324, %v2323
      %v2353 = vpack.c.b16 %v2326, %v2325
      %v2354 = vpack.c.b16 %v2328, %v2327
      %v2355 = vpack.c.b16 %v2330, %v2329
      %v2356 = vpack.c.b16 %v2332, %v2331
      %v2357 = vpack.c.b16 %v2334, %v2333
      %v2358 = vpack.c.b16 %v2336, %v2335
      %v2359 = vpack.c.b16 %v2338, %v2337
      %v2360 = vpack.c.b16 %v2340, %v2339
      %v2361 = vpack.c.b16 %v2342, %v2341
      %v2362 = vpack.c.b16 %v2344, %v2343
      %v2363 = vpack.c.b16 %v2346, %v2345
      %v2364 = vpack.c.b16 %v2348, %v2347
      %v2397 = vunpack.c.l.b16 %v2301
      %v2398 = vunpack.c.l.b16 %v2302
      %v2399 = vunpack.c.l.b16 %v2303
      %v2400 = vunpack.c.l.b16 %v2304
      %v2401 = vunpack.c.l.b16 %v2305
      %v2402 = vunpack.c.l.b16 %v2306
      %v2403 = vunpack.c.l.b16 %v2307
      %v2404 = vunpack.c.l.b16 %v2308
      %v2405 = vunpack.c.l.b16 %v2309
      %v2406 = vunpack.c.l.b16 %v2310
      %v2407 = vunpack.c.l.b16 %v2311
      %v2408 = vunpack.c.l.b16 %v2312
      %v2409 = vunpack.c.l.b16 %v2313
      %v2410 = vunpack.c.l.b16 %v2314
      %v2411 = vunpack.c.l.b16 %v2315
      %v2412 = vunpack.c.l.b16 %v2316
      %v2413 = vpack.c.b16 %v2398, %v2397
      %v2414 = vpack.c.b16 %v2400, %v2399
      %v2415 = vpack.c.b16 %v2402, %v2401
      %v2416 = vpack.c.b16 %v2404, %v2403
      %v2417 = vpack.c.b16 %v2406, %v2405
      %v2418 = vpack.c.b16 %v2408, %v2407
      %v2419 = vpack.c.b16 %v2410, %v2409
      %v2420 = vpack.c.b16 %v2412, %v2411
      %2429 = vmatprep.subr.bf16.mxu0 0
      %2430 = vmatpush1.bf16.msra.mxu0 %v2420
      %2431 = vmatprep.subr.bf16.mxu0 0
      %2432 = vmatpush1.bf16.msra.mxu0 %v2419
      %2433 = vmatprep.subr.bf16.mxu0 0
      %2434 = vmatpush1.bf16.msra.mxu0 %v2418
      %2435 = vmatprep.subr.bf16.mxu0 0
      %2436 = vmatpush1.bf16.msra.mxu0 %v2417
      %2437 = vmatprep.subr.bf16.mxu0 0
      %2438 = vmatpush1.bf16.msra.mxu0 %v2416
      %2439 = vmatprep.subr.bf16.mxu0 0
      %2440 = vmatpush1.bf16.msra.mxu0 %v2415
      %2441 = vmatprep.subr.bf16.mxu0 0
      %2442 = vmatpush1.bf16.msra.mxu0 %v2414
      %2443 = vmatprep.subr.bf16.mxu0 0
      %2444 = vmatpush1.bf16.msra.mxu0 %v2413
      %2445 = vmatprep.subr.bf16.mxu0 0
      %2446 = vmatpush2.bf16.msra.mxu0 0
      %2447 = vmatprep.subr.bf16.mxu0 0
      %2448 = vmatpush2.bf16.msra.mxu0 0
      %2449 = vmatprep.subr.bf16.mxu0 0
      %2450 = vmatpush2.bf16.msra.mxu0 0
      %2451 = vmatprep.subr.bf16.mxu0 0
      %2452 = vmatpush2.bf16.msra.mxu0 0
      %2453 = vmatprep.subr.bf16.mxu0 0
      %2454 = vmatpush2.bf16.msra.mxu0 0
      %2455 = vmatprep.subr.bf16.mxu0 0
      %2456 = vmatpush2.bf16.msra.mxu0 0
      %2457 = vmatprep.subr.bf16.mxu0 0
      %2458 = vmatpush2.bf16.msra.mxu0 0
      %2459 = vmatprep.subr.bf16.mxu0 0
      %2460 = vmatpush2.bf16.msra.mxu0 0
      %2461 = vmatprep.mubr.bf16.mxu0 0
      %2462 = vmatmul.mubr.bf16.gmra.mxu0 %v2349
      %v2463 = vpop.f32.mrf.mxu0
      %v2464 = vadd.f32 0.0, %v2463
      %v2465 = vpop.f32.mrf.mxu0
      %v2466 = vpop.f32.mrf.mxu0
      %v2467 = vadd.f32 0.0, %v2466
      %v2468 = vpop.f32.mrf.mxu0
      %2469 = vmatprep.mubr.bf16.mxu0 0
      %2470 = vmatmul.mubr.bf16.gmra.mxu0 %v2350
      %v2471 = vpop.f32.mrf.mxu0
      %v2472 = vadd.f32 0.0, %v2471
      %v2473 = vpop.f32.mrf.mxu0
      %v2474 = vpop.f32.mrf.mxu0
      %v2475 = vadd.f32 0.0, %v2474
      %v2476 = vpop.f32.mrf.mxu0
      %2477 = vmatprep.mubr.bf16.mxu0 0
      %2478 = vmatmul.mubr.bf16.gmra.mxu0 %v2351
      %v2479 = vpop.f32.mrf.mxu0
      %v2480 = vadd.f32 0.0, %v2479
      %v2481 = vpop.f32.mrf.mxu0
      %v2482 = vpop.f32.mrf.mxu0
      %v2483 = vadd.f32 0.0, %v2482
      %v2484 = vpop.f32.mrf.mxu0
      %2485 = vmatprep.mubr.bf16.mxu0 0
      %2486 = vmatmul.mubr.bf16.gmra.mxu0 %v2352
      %v2487 = vpop.f32.mrf.mxu0
      %v2488 = vadd.f32 0.0, %v2487
      %v2489 = vpop.f32.mrf.mxu0
      %v2490 = vpop.f32.mrf.mxu0
      %v2491 = vadd.f32 0.0, %v2490
      %v2492 = vpop.f32.mrf.mxu0
      %2493 = vmatprep.mubr.bf16.mxu0 0
      %2494 = vmatmul.mubr.bf16.gmra.mxu0 %v2353
      %v2495 = vpop.f32.mrf.mxu0
      %v2496 = vadd.f32 0.0, %v2495
      %v2497 = vpop.f32.mrf.mxu0
      %v2498 = vpop.f32.mrf.mxu0
      %v2499 = vadd.f32 0.0, %v2498
      %v2500 = vpop.f32.mrf.mxu0
      %2501 = vmatprep.mubr.bf16.mxu0 0
      %2502 = vmatmul.mubr.bf16.gmra.mxu0 %v2354
      %v2503 = vpop.f32.mrf.mxu0
      %v2504 = vadd.f32 0.0, %v2503
      %v2505 = vpop.f32.mrf.mxu0
      %v2506 = vpop.f32.mrf.mxu0
      %v2507 = vadd.f32 0.0, %v2506
      %v2508 = vpop.f32.mrf.mxu0
      %2509 = vmatprep.mubr.bf16.mxu0 0
      %2510 = vmatmul.mubr.bf16.gmra.mxu0 %v2355
      %v2511 = vpop.f32.mrf.mxu0
      %v2512 = vadd.f32 0.0, %v2511
      %v2513 = vpop.f32.mrf.mxu0
      %v2514 = vpop.f32.mrf.mxu0
      %v2515 = vadd.f32 0.0, %v2514
      %v2516 = vpop.f32.mrf.mxu0
      %2517 = vmatprep.mubr.bf16.mxu0 0
      %2518 = vmatmul.mubr.bf16.gmra.mxu0 %v2356
      %v2519 = vpop.f32.mrf.mxu0
      %v2520 = vadd.f32 0.0, %v2519
      %v2521 = vpop.f32.mrf.mxu0
      %v2522 = vpop.f32.mrf.mxu0
      %v2523 = vadd.f32 0.0, %v2522
      %v2524 = vpop.f32.mrf.mxu0
      %2525 = vmatprep.mubr.bf16.mxu0 0
      %2526 = vmatmul.mubr.bf16.gmra.mxu0 %v2357
      %v2527 = vpop.f32.mrf.mxu0
      %v2528 = vadd.f32 0.0, %v2527
      %v2529 = vpop.f32.mrf.mxu0
      %v2530 = vpop.f32.mrf.mxu0
      %v2531 = vadd.f32 0.0, %v2530
      %v2532 = vpop.f32.mrf.mxu0
      %2533 = vmatprep.mubr.bf16.mxu0 0
      %2534 = vmatmul.mubr.bf16.gmra.mxu0 %v2358
      %v2535 = vpop.f32.mrf.mxu0
      %v2536 = vadd.f32 0.0, %v2535
      %v2537 = vpop.f32.mrf.mxu0
      %v2538 = vpop.f32.mrf.mxu0
      %v2539 = vadd.f32 0.0, %v2538
      %v2540 = vpop.f32.mrf.mxu0
      %2541 = vmatprep.mubr.bf16.mxu0 0
      %2542 = vmatmul.mubr.bf16.gmra.mxu0 %v2359
      %v2543 = vpop.f32.mrf.mxu0
      %v2544 = vadd.f32 0.0, %v2543
      %v2545 = vpop.f32.mrf.mxu0
      %v2546 = vpop.f32.mrf.mxu0
      %v2547 = vadd.f32 0.0, %v2546
      %v2548 = vpop.f32.mrf.mxu0
      %2549 = vmatprep.mubr.bf16.mxu0 0
      %2550 = vmatmul.mubr.bf16.gmra.mxu0 %v2360
      %v2551 = vpop.f32.mrf.mxu0
      %v2552 = vadd.f32 0.0, %v2551
      %v2553 = vpop.f32.mrf.mxu0
      %v2554 = vpop.f32.mrf.mxu0
      %v2555 = vadd.f32 0.0, %v2554
      %v2556 = vpop.f32.mrf.mxu0
      %2557 = vmatprep.mubr.bf16.mxu0 0
      %2558 = vmatmul.mubr.bf16.gmra.mxu0 %v2361
      %v2559 = vpop.f32.mrf.mxu0
      %v2560 = vadd.f32 0.0, %v2559
      %v2561 = vpop.f32.mrf.mxu0
      %v2562 = vpop.f32.mrf.mxu0
      %v2563 = vadd.f32 0.0, %v2562
      %v2564 = vpop.f32.mrf.mxu0
      %2565 = vmatprep.mubr.bf16.mxu0 0
      %2566 = vmatmul.mubr.bf16.gmra.mxu0 %v2362
      %v2567 = vpop.f32.mrf.mxu0
      %v2568 = vadd.f32 0.0, %v2567
      %v2569 = vpop.f32.mrf.mxu0
      %v2570 = vpop.f32.mrf.mxu0
      %v2571 = vadd.f32 0.0, %v2570
      %v2572 = vpop.f32.mrf.mxu0
      %2573 = vmatprep.mubr.bf16.mxu0 0
      %2574 = vmatmul.mubr.bf16.gmra.mxu0 %v2363
      %v2575 = vpop.f32.mrf.mxu0
      %v2576 = vadd.f32 0.0, %v2575
      %v2577 = vpop.f32.mrf.mxu0
      %v2578 = vpop.f32.mrf.mxu0
      %v2579 = vadd.f32 0.0, %v2578
      %v2580 = vpop.f32.mrf.mxu0
      %2581 = vmatprep.mubr.bf16.mxu0 0
      %2582 = vmatmul.mubr.bf16.gmra.mxu0 %v2364
      %v2583 = vpop.f32.mrf.mxu0
      %v2584 = vadd.f32 0.0, %v2583
      %v2585 = vpop.f32.mrf.mxu0
      %v2586 = vpop.f32.mrf.mxu0
      %v2587 = vadd.f32 0.0, %v2586
      %v2588 = vpop.f32.mrf.mxu0
      %2589 = vdwg.mxu0
      %v2590 = vadd.f32 %v2011, %v2464
      %v2591 = vadd.f32 %v2014, %v2467
      %v2592 = vadd.f32 %v2019, %v2472
      %v2593 = vadd.f32 %v2022, %v2475
      %v2594 = vadd.f32 %v2027, %v2480
      %v2595 = vadd.f32 %v2030, %v2483
      %v2596 = vadd.f32 %v2035, %v2488
      %v2597 = vadd.f32 %v2038, %v2491
      %v2598 = vadd.f32 %v2043, %v2496
      %v2599 = vadd.f32 %v2046, %v2499
      %v2600 = vadd.f32 %v2051, %v2504
      %v2601 = vadd.f32 %v2054, %v2507
      %v2602 = vadd.f32 %v2059, %v2512
      %v2603 = vadd.f32 %v2062, %v2515
      %v2604 = vadd.f32 %v2067, %v2520
      %v2605 = vadd.f32 %v2070, %v2523
      %v2606 = vadd.f32 %v2075, %v2528
      %v2607 = vadd.f32 %v2078, %v2531
      %v2608 = vadd.f32 %v2083, %v2536
      %v2609 = vadd.f32 %v2086, %v2539
      %v2610 = vadd.f32 %v2091, %v2544
      %v2611 = vadd.f32 %v2094, %v2547
      %v2612 = vadd.f32 %v2099, %v2552
      %v2613 = vadd.f32 %v2102, %v2555
      %v2614 = vadd.f32 %v2107, %v2560
      %v2615 = vadd.f32 %v2110, %v2563
      %v2616 = vadd.f32 %v2115, %v2568
      %v2617 = vadd.f32 %v2118, %v2571
      %v2618 = vadd.f32 %v2123, %v2576
      %v2619 = vadd.f32 %v2126, %v2579
      %v2620 = vadd.f32 %v2131, %v2584
      %v2621 = vadd.f32 %v2134, %v2587
      %v2622 = vld [vmem:[%s976] sm:$0xf]
      %v2623 = vld [vmem:[%s976 + $0x4] sm:$0xf]
      %v2624 = vld [vmem:[%s976 + $0xc] sm:$0xf]
      %v2625 = vld [vmem:[%s976 + $0x10] sm:$0xf]
      %v2626 = vld [vmem:[%s976 + $0x18] sm:$0xf]
      %v2627 = vld [vmem:[%s976 + $0x1c] sm:$0xf]
      %v2628 = vld [vmem:[%s976 + $0x24] sm:$0xf]
      %v2629 = vld [vmem:[%s976 + $0x28] sm:$0xf]
      %v2630 = vld [vmem:[%s976 + $0x30] sm:$0xf]
      %v2631 = vld [vmem:[%s976 + $0x34] sm:$0xf]
      %v2632 = vld [vmem:[%s976 + $0x3c] sm:$0xf]
      %v2633 = vld [vmem:[%s976 + $0x40] sm:$0xf]
      %v2634 = vld [vmem:[%s976 + $0x48] sm:$0xf]
      %v2635 = vld [vmem:[%s976 + $0x4c] sm:$0xf]
      %v2636 = vld [vmem:[%s976 + $0x54] sm:$0xf]
      %v2637 = vld [vmem:[%s976 + $0x58] sm:$0xf]
      %v2638 = vld [vmem:[%s976 + $0x60] sm:$0xf]
      %v2639 = vld [vmem:[%s976 + $0x64] sm:$0xf]
      %v2640 = vld [vmem:[%s976 + $0x6c] sm:$0xf]
      %v2641 = vld [vmem:[%s976 + $0x70] sm:$0xf]
      %v2642 = vld [vmem:[%s976 + $0x78] sm:$0xf]
      %v2643 = vld [vmem:[%s976 + $0x7c] sm:$0xf]
      %v2644 = vld [vmem:[%s976 + $0x84] sm:$0xf]
      %v2645 = vld [vmem:[%s976 + $0x88] sm:$0xf]
      %v2646 = vld [vmem:[%s976 + $0x90] sm:$0xf]
      %v2647 = vld [vmem:[%s976 + $0x94] sm:$0xf]
      %v2648 = vld [vmem:[%s976 + $0x9c] sm:$0xf]
      %v2649 = vld [vmem:[%s976 + $0xa0] sm:$0xf]
      %v2650 = vld [vmem:[%s976 + $0xa8] sm:$0xf]
      %v2651 = vld [vmem:[%s976 + $0xac] sm:$0xf]
      %v2652 = vld [vmem:[%s976 + $0xb4] sm:$0xf]
      %v2653 = vld [vmem:[%s976 + $0xb8] sm:$0xf]
      %s2654 = scalar_lea.vmem %s3, 192
      %v2655 = vld [vmem:[%s2654] sm:$0xf]
      %v2656 = vld [vmem:[%s2654 + $0x4] sm:$0xf]
      %v2657 = vld [vmem:[%s2654 + $0x8] sm:$0xf]
      %v2658 = vld [vmem:[%s2654 + $0xc] sm:$0xf]
      %v2659 = vld [vmem:[%s2654 + $0x10] sm:$0xf]
      %v2660 = vld [vmem:[%s2654 + $0x14] sm:$0xf]
      %v2661 = vld [vmem:[%s2654 + $0x18] sm:$0xf]
      %v2662 = vld [vmem:[%s2654 + $0x1c] sm:$0xf]
      %v2663 = vld [vmem:[%s2654 + $0x20] sm:$0xf]
      %v2664 = vld [vmem:[%s2654 + $0x24] sm:$0xf]
      %v2665 = vld [vmem:[%s2654 + $0x28] sm:$0xf]
      %v2666 = vld [vmem:[%s2654 + $0x2c] sm:$0xf]
      %v2667 = vld [vmem:[%s2654 + $0x30] sm:$0xf]
      %v2668 = vld [vmem:[%s2654 + $0x34] sm:$0xf]
      %v2669 = vld [vmem:[%s2654 + $0x38] sm:$0xf]
      %v2670 = vld [vmem:[%s2654 + $0x3c] sm:$0xf]
      %v2703 = vunpack.c.l.b16 %v2622
      %v2704 = vunpack.c.l.b16 %v2623
      %v2705 = vunpack.c.l.b16 %v2624
      %v2706 = vunpack.c.l.b16 %v2625
      %v2707 = vunpack.c.l.b16 %v2626
      %v2708 = vunpack.c.l.b16 %v2627
      %v2709 = vunpack.c.l.b16 %v2628
      %v2710 = vunpack.c.l.b16 %v2629
      %v2711 = vunpack.c.l.b16 %v2630
      %v2712 = vunpack.c.l.b16 %v2631
      %v2713 = vunpack.c.l.b16 %v2632
      %v2714 = vunpack.c.l.b16 %v2633
      %v2715 = vunpack.c.l.b16 %v2634
      %v2716 = vunpack.c.l.b16 %v2635
      %v2717 = vunpack.c.l.b16 %v2636
      %v2718 = vunpack.c.l.b16 %v2637
      %v2719 = vunpack.c.l.b16 %v2638
      %v2720 = vunpack.c.l.b16 %v2639
      %v2721 = vunpack.c.l.b16 %v2640
      %v2722 = vunpack.c.l.b16 %v2641
      %v2723 = vunpack.c.l.b16 %v2642
      %v2724 = vunpack.c.l.b16 %v2643
      %v2725 = vunpack.c.l.b16 %v2644
      %v2726 = vunpack.c.l.b16 %v2645
      %v2727 = vunpack.c.l.b16 %v2646
      %v2728 = vunpack.c.l.b16 %v2647
      %v2729 = vunpack.c.l.b16 %v2648
      %v2730 = vunpack.c.l.b16 %v2649
      %v2731 = vunpack.c.l.b16 %v2650
      %v2732 = vunpack.c.l.b16 %v2651
      %v2733 = vunpack.c.l.b16 %v2652
      %v2734 = vunpack.c.l.b16 %v2653
      %v2735 = vpack.c.b16 %v2704, %v2703
      %v2736 = vpack.c.b16 %v2706, %v2705
      %v2737 = vpack.c.b16 %v2708, %v2707
      %v2738 = vpack.c.b16 %v2710, %v2709
      %v2739 = vpack.c.b16 %v2712, %v2711
      %v2740 = vpack.c.b16 %v2714, %v2713
      %v2741 = vpack.c.b16 %v2716, %v2715
      %v2742 = vpack.c.b16 %v2718, %v2717
      %v2743 = vpack.c.b16 %v2720, %v2719
      %v2744 = vpack.c.b16 %v2722, %v2721
      %v2745 = vpack.c.b16 %v2724, %v2723
      %v2746 = vpack.c.b16 %v2726, %v2725
      %v2747 = vpack.c.b16 %v2728, %v2727
      %v2748 = vpack.c.b16 %v2730, %v2729
      %v2749 = vpack.c.b16 %v2732, %v2731
      %v2750 = vpack.c.b16 %v2734, %v2733
      %v2783 = vunpack.c.l.b16 %v2655
      %v2784 = vunpack.c.l.b16 %v2656
      %v2785 = vunpack.c.l.b16 %v2657
      %v2786 = vunpack.c.l.b16 %v2658
      %v2787 = vunpack.c.l.b16 %v2659
      %v2788 = vunpack.c.l.b16 %v2660
      %v2789 = vunpack.c.l.b16 %v2661
      %v2790 = vunpack.c.l.b16 %v2662
      %v2791 = vunpack.c.l.b16 %v2663
      %v2792 = vunpack.c.l.b16 %v2664
      %v2793 = vunpack.c.l.b16 %v2665
      %v2794 = vunpack.c.l.b16 %v2666
      %v2795 = vunpack.c.l.b16 %v2667
      %v2796 = vunpack.c.l.b16 %v2668
      %v2797 = vunpack.c.l.b16 %v2669
      %v2798 = vunpack.c.l.b16 %v2670
      %v2799 = vpack.c.b16 %v2784, %v2783
      %v2800 = vpack.c.b16 %v2786, %v2785
      %v2801 = vpack.c.b16 %v2788, %v2787
      %v2802 = vpack.c.b16 %v2790, %v2789
      %v2803 = vpack.c.b16 %v2792, %v2791
      %v2804 = vpack.c.b16 %v2794, %v2793
      %v2805 = vpack.c.b16 %v2796, %v2795
      %v2806 = vpack.c.b16 %v2798, %v2797
      %2815 = vmatprep.subr.bf16.mxu0 0
      %2816 = vmatpush1.bf16.msra.mxu0 %v2806
      %2817 = vmatprep.subr.bf16.mxu0 0
      %2818 = vmatpush1.bf16.msra.mxu0 %v2805
      %2819 = vmatprep.subr.bf16.mxu0 0
      %2820 = vmatpush1.bf16.msra.mxu0 %v2804
      %2821 = vmatprep.subr.bf16.mxu0 0
      %2822 = vmatpush1.bf16.msra.mxu0 %v2803
      %2823 = vmatprep.subr.bf16.mxu0 0
      %2824 = vmatpush1.bf16.msra.mxu0 %v2802
      %2825 = vmatprep.subr.bf16.mxu0 0
      %2826 = vmatpush1.bf16.msra.mxu0 %v2801
      %2827 = vmatprep.subr.bf16.mxu0 0
      %2828 = vmatpush1.bf16.msra.mxu0 %v2800
      %2829 = vmatprep.subr.bf16.mxu0 0
      %2830 = vmatpush1.bf16.msra.mxu0 %v2799
      %2831 = vmatprep.subr.bf16.mxu0 0
      %2832 = vmatpush2.bf16.msra.mxu0 0
      %2833 = vmatprep.subr.bf16.mxu0 0
      %2834 = vmatpush2.bf16.msra.mxu0 0
      %2835 = vmatprep.subr.bf16.mxu0 0
      %2836 = vmatpush2.bf16.msra.mxu0 0
      %2837 = vmatprep.subr.bf16.mxu0 0
      %2838 = vmatpush2.bf16.msra.mxu0 0
      %2839 = vmatprep.subr.bf16.mxu0 0
      %2840 = vmatpush2.bf16.msra.mxu0 0
      %2841 = vmatprep.subr.bf16.mxu0 0
      %2842 = vmatpush2.bf16.msra.mxu0 0
      %2843 = vmatprep.subr.bf16.mxu0 0
      %2844 = vmatpush2.bf16.msra.mxu0 0
      %2845 = vmatprep.subr.bf16.mxu0 0
      %2846 = vmatpush2.bf16.msra.mxu0 0
      %2847 = vmatprep.mubr.bf16.mxu0 0
      %2848 = vmatmul.mubr.bf16.gmra.mxu0 %v2735
      %v2849 = vpop.f32.mrf.mxu0
      %v2850 = vadd.f32 0.0, %v2849
      %v2851 = vpop.f32.mrf.mxu0
      %v2852 = vpop.f32.mrf.mxu0
      %v2853 = vadd.f32 0.0, %v2852
      %v2854 = vpop.f32.mrf.mxu0
      %2855 = vmatprep.mubr.bf16.mxu0 0
      %2856 = vmatmul.mubr.bf16.gmra.mxu0 %v2736
      %v2857 = vpop.f32.mrf.mxu0
      %v2858 = vadd.f32 0.0, %v2857
      %v2859 = vpop.f32.mrf.mxu0
      %v2860 = vpop.f32.mrf.mxu0
      %v2861 = vadd.f32 0.0, %v2860
      %v2862 = vpop.f32.mrf.mxu0
      %2863 = vmatprep.mubr.bf16.mxu0 0
      %2864 = vmatmul.mubr.bf16.gmra.mxu0 %v2737
      %v2865 = vpop.f32.mrf.mxu0
      %v2866 = vadd.f32 0.0, %v2865
      %v2867 = vpop.f32.mrf.mxu0
      %v2868 = vpop.f32.mrf.mxu0
      %v2869 = vadd.f32 0.0, %v2868
      %v2870 = vpop.f32.mrf.mxu0
      %2871 = vmatprep.mubr.bf16.mxu0 0
      %2872 = vmatmul.mubr.bf16.gmra.mxu0 %v2738
      %v2873 = vpop.f32.mrf.mxu0
      %v2874 = vadd.f32 0.0, %v2873
      %v2875 = vpop.f32.mrf.mxu0
      %v2876 = vpop.f32.mrf.mxu0
      %v2877 = vadd.f32 0.0, %v2876
      %v2878 = vpop.f32.mrf.mxu0
      %2879 = vmatprep.mubr.bf16.mxu0 0
      %2880 = vmatmul.mubr.bf16.gmra.mxu0 %v2739
      %v2881 = vpop.f32.mrf.mxu0
      %v2882 = vadd.f32 0.0, %v2881
      %v2883 = vpop.f32.mrf.mxu0
      %v2884 = vpop.f32.mrf.mxu0
      %v2885 = vadd.f32 0.0, %v2884
      %v2886 = vpop.f32.mrf.mxu0
      %2887 = vmatprep.mubr.bf16.mxu0 0
      %2888 = vmatmul.mubr.bf16.gmra.mxu0 %v2740
      %v2889 = vpop.f32.mrf.mxu0
      %v2890 = vadd.f32 0.0, %v2889
      %v2891 = vpop.f32.mrf.mxu0
      %v2892 = vpop.f32.mrf.mxu0
      %v2893 = vadd.f32 0.0, %v2892
      %v2894 = vpop.f32.mrf.mxu0
      %2895 = vmatprep.mubr.bf16.mxu0 0
      %2896 = vmatmul.mubr.bf16.gmra.mxu0 %v2741
      %v2897 = vpop.f32.mrf.mxu0
      %v2898 = vadd.f32 0.0, %v2897
      %v2899 = vpop.f32.mrf.mxu0
      %v2900 = vpop.f32.mrf.mxu0
      %v2901 = vadd.f32 0.0, %v2900
      %v2902 = vpop.f32.mrf.mxu0
      %2903 = vmatprep.mubr.bf16.mxu0 0
      %2904 = vmatmul.mubr.bf16.gmra.mxu0 %v2742
      %v2905 = vpop.f32.mrf.mxu0
      %v2906 = vadd.f32 0.0, %v2905
      %v2907 = vpop.f32.mrf.mxu0
      %v2908 = vpop.f32.mrf.mxu0
      %v2909 = vadd.f32 0.0, %v2908
      %v2910 = vpop.f32.mrf.mxu0
      %2911 = vmatprep.mubr.bf16.mxu0 0
      %2912 = vmatmul.mubr.bf16.gmra.mxu0 %v2743
      %v2913 = vpop.f32.mrf.mxu0
      %v2914 = vadd.f32 0.0, %v2913
      %v2915 = vpop.f32.mrf.mxu0
      %v2916 = vpop.f32.mrf.mxu0
      %v2917 = vadd.f32 0.0, %v2916
      %v2918 = vpop.f32.mrf.mxu0
      %2919 = vmatprep.mubr.bf16.mxu0 0
      %2920 = vmatmul.mubr.bf16.gmra.mxu0 %v2744
      %v2921 = vpop.f32.mrf.mxu0
      %v2922 = vadd.f32 0.0, %v2921
      %v2923 = vpop.f32.mrf.mxu0
      %v2924 = vpop.f32.mrf.mxu0
      %v2925 = vadd.f32 0.0, %v2924
      %v2926 = vpop.f32.mrf.mxu0
      %2927 = vmatprep.mubr.bf16.mxu0 0
      %2928 = vmatmul.mubr.bf16.gmra.mxu0 %v2745
      %v2929 = vpop.f32.mrf.mxu0
      %v2930 = vadd.f32 0.0, %v2929
      %v2931 = vpop.f32.mrf.mxu0
      %v2932 = vpop.f32.mrf.mxu0
      %v2933 = vadd.f32 0.0, %v2932
      %v2934 = vpop.f32.mrf.mxu0
      %2935 = vmatprep.mubr.bf16.mxu0 0
      %2936 = vmatmul.mubr.bf16.gmra.mxu0 %v2746
      %v2937 = vpop.f32.mrf.mxu0
      %v2938 = vadd.f32 0.0, %v2937
      %v2939 = vpop.f32.mrf.mxu0
      %v2940 = vpop.f32.mrf.mxu0
      %v2941 = vadd.f32 0.0, %v2940
      %v2942 = vpop.f32.mrf.mxu0
      %2943 = vmatprep.mubr.bf16.mxu0 0
      %2944 = vmatmul.mubr.bf16.gmra.mxu0 %v2747
      %v2945 = vpop.f32.mrf.mxu0
      %v2946 = vadd.f32 0.0, %v2945
      %v2947 = vpop.f32.mrf.mxu0
      %v2948 = vpop.f32.mrf.mxu0
      %v2949 = vadd.f32 0.0, %v2948
      %v2950 = vpop.f32.mrf.mxu0
      %2951 = vmatprep.mubr.bf16.mxu0 0
      %2952 = vmatmul.mubr.bf16.gmra.mxu0 %v2748
      %v2953 = vpop.f32.mrf.mxu0
      %v2954 = vadd.f32 0.0, %v2953
      %v2955 = vpop.f32.mrf.mxu0
      %v2956 = vpop.f32.mrf.mxu0
      %v2957 = vadd.f32 0.0, %v2956
      %v2958 = vpop.f32.mrf.mxu0
      %2959 = vmatprep.mubr.bf16.mxu0 0
      %2960 = vmatmul.mubr.bf16.gmra.mxu0 %v2749
      %v2961 = vpop.f32.mrf.mxu0
      %v2962 = vadd.f32 0.0, %v2961
      %v2963 = vpop.f32.mrf.mxu0
      %v2964 = vpop.f32.mrf.mxu0
      %v2965 = vadd.f32 0.0, %v2964
      %v2966 = vpop.f32.mrf.mxu0
      %2967 = vmatprep.mubr.bf16.mxu0 0
      %2968 = vmatmul.mubr.bf16.gmra.mxu0 %v2750
      %v2969 = vpop.f32.mrf.mxu0
      %v2970 = vadd.f32 0.0, %v2969
      %v2971 = vpop.f32.mrf.mxu0
      %v2972 = vpop.f32.mrf.mxu0
      %v2973 = vadd.f32 0.0, %v2972
      %v2974 = vpop.f32.mrf.mxu0
      %2975 = vdwg.mxu0
      %v2976 = vadd.f32 %v2590, %v2850
      %v2977 = vadd.f32 %v2591, %v2853
      %v2978 = vadd.f32 %v2592, %v2858
      %v2979 = vadd.f32 %v2593, %v2861
      %v2980 = vadd.f32 %v2594, %v2866
      %v2981 = vadd.f32 %v2595, %v2869
      %v2982 = vadd.f32 %v2596, %v2874
      %v2983 = vadd.f32 %v2597, %v2877
      %v2984 = vadd.f32 %v2598, %v2882
      %v2985 = vadd.f32 %v2599, %v2885
      %v2986 = vadd.f32 %v2600, %v2890
      %v2987 = vadd.f32 %v2601, %v2893
      %v2988 = vadd.f32 %v2602, %v2898
      %v2989 = vadd.f32 %v2603, %v2901
      %v2990 = vadd.f32 %v2604, %v2906
      %v2991 = vadd.f32 %v2605, %v2909
      %v2992 = vadd.f32 %v2606, %v2914
      %v2993 = vadd.f32 %v2607, %v2917
      %v2994 = vadd.f32 %v2608, %v2922
      %v2995 = vadd.f32 %v2609, %v2925
      %v2996 = vadd.f32 %v2610, %v2930
      %v2997 = vadd.f32 %v2611, %v2933
      %v2998 = vadd.f32 %v2612, %v2938
      %v2999 = vadd.f32 %v2613, %v2941
      %v3000 = vadd.f32 %v2614, %v2946
      %v3001 = vadd.f32 %v2615, %v2949
      %v3002 = vadd.f32 %v2616, %v2954
      %v3003 = vadd.f32 %v2617, %v2957
      %v3004 = vadd.f32 %v2618, %v2962
      %v3005 = vadd.f32 %v2619, %v2965
      %v3006 = vadd.f32 %v2620, %v2970
      %v3007 = vadd.f32 %v2621, %v2973
      %v3008 = vld [vmem:[%s976] sm:$0xf]
      %v3009 = vld [vmem:[%s976 + $0x4] sm:$0xf]
      %v3010 = vld [vmem:[%s976 + $0x8] sm:$0x1]
      %v3011 = vld [vmem:[%s976 + $0xc] sm:$0xf]
      %v3012 = vld [vmem:[%s976 + $0x10] sm:$0xf]
      %v3013 = vld [vmem:[%s976 + $0x14] sm:$0x1]
      %v3014 = vld [vmem:[%s976 + $0x18] sm:$0xf]
      %v3015 = vld [vmem:[%s976 + $0x1c] sm:$0xf]
      %v3016 = vld [vmem:[%s976 + $0x20] sm:$0x1]
      %v3017 = vld [vmem:[%s976 + $0x24] sm:$0xf]
      %v3018 = vld [vmem:[%s976 + $0x28] sm:$0xf]
      %v3019 = vld [vmem:[%s976 + $0x2c] sm:$0x1]
      %v3020 = vld [vmem:[%s976 + $0x30] sm:$0xf]
      %v3021 = vld [vmem:[%s976 + $0x34] sm:$0xf]
      %v3022 = vld [vmem:[%s976 + $0x38] sm:$0x1]
      %v3023 = vld [vmem:[%s976 + $0x3c] sm:$0xf]
      %v3024 = vld [vmem:[%s976 + $0x40] sm:$0xf]
      %v3025 = vld [vmem:[%s976 + $0x44] sm:$0x1]
      %v3026 = vld [vmem:[%s976 + $0x48] sm:$0xf]
      %v3027 = vld [vmem:[%s976 + $0x4c] sm:$0xf]
      %v3028 = vld [vmem:[%s976 + $0x50] sm:$0x1]
      %v3029 = vld [vmem:[%s976 + $0x54] sm:$0xf]
      %v3030 = vld [vmem:[%s976 + $0x58] sm:$0xf]
      %v3031 = vld [vmem:[%s976 + $0x5c] sm:$0x1]
      %v3032 = vld [vmem:[%s976 + $0x60] sm:$0xf]
      %v3033 = vld [vmem:[%s976 + $0x64] sm:$0xf]
      %v3034 = vld [vmem:[%s976 + $0x68] sm:$0x1]
      %v3035 = vld [vmem:[%s976 + $0x6c] sm:$0xf]
      %v3036 = vld [vmem:[%s976 + $0x70] sm:$0xf]
      %v3037 = vld [vmem:[%s976 + $0x74] sm:$0x1]
      %v3038 = vld [vmem:[%s976 + $0x78] sm:$0xf]
      %v3039 = vld [vmem:[%s976 + $0x7c] sm:$0xf]
      %v3040 = vld [vmem:[%s976 + $0x80] sm:$0x1]
      %v3041 = vld [vmem:[%s976 + $0x84] sm:$0xf]
      %v3042 = vld [vmem:[%s976 + $0x88] sm:$0xf]
      %v3043 = vld [vmem:[%s976 + $0x8c] sm:$0x1]
      %v3044 = vld [vmem:[%s976 + $0x90] sm:$0xf]
      %v3045 = vld [vmem:[%s976 + $0x94] sm:$0xf]
      %v3046 = vld [vmem:[%s976 + $0x98] sm:$0x1]
      %v3047 = vld [vmem:[%s976 + $0x9c] sm:$0xf]
      %v3048 = vld [vmem:[%s976 + $0xa0] sm:$0xf]
      %v3049 = vld [vmem:[%s976 + $0xa4] sm:$0x1]
      %v3050 = vld [vmem:[%s976 + $0xa8] sm:$0xf]
      %v3051 = vld [vmem:[%s976 + $0xac] sm:$0xf]
      %v3052 = vld [vmem:[%s976 + $0xb0] sm:$0x1]
      %v3053 = vld [vmem:[%s976 + $0xb4] sm:$0xf]
      %v3054 = vld [vmem:[%s976 + $0xb8] sm:$0xf]
      %v3055 = vld [vmem:[%s976 + $0xbc] sm:$0x1]
      %v3057 = vshrl.u32 %v3008, 16
      %v3059 = vrot.slane %v3057, 4
      %v3060 = vshll.u32 %v3008, 16
      %v3062 = vrot.slane %v3060, 5
      %v3063 = vor.u32 %v3059, %v3062
      %v3064 = vrot.slane %v3063, 4
      %v3066 = vshll.u32 %v3009, 16
      %v3068 = vrot.slane %v3066, 5
      %v3069 = vsel %vm1157, %v3064, %v3068
      %v3070 = vshrl.u32 %v3009, 16
      %v3072 = vrot.slane %v3070, 4
      %v3073 = vor.u32 %v3072, %v3068
      %v3074 = vrot.slane %v3073, 4
      %v3076 = vshll.u32 %v3010, 16
      %v3078 = vrot.slane %v3076, 5
      %v3079 = vsel %vm1157, %v3074, %v3078
      %v3081 = vshrl.u32 %v3011, 16
      %v3083 = vrot.slane %v3081, 4
      %v3084 = vshll.u32 %v3011, 16
      %v3086 = vrot.slane %v3084, 5
      %v3087 = vor.u32 %v3083, %v3086
      %v3088 = vrot.slane %v3087, 4
      %v3090 = vshll.u32 %v3012, 16
      %v3092 = vrot.slane %v3090, 5
      %v3093 = vsel %vm1157, %v3088, %v3092
      %v3094 = vshrl.u32 %v3012, 16
      %v3096 = vrot.slane %v3094, 4
      %v3097 = vor.u32 %v3096, %v3092
      %v3098 = vrot.slane %v3097, 4
      %v3100 = vshll.u32 %v3013, 16
      %v3102 = vrot.slane %v3100, 5
      %v3103 = vsel %vm1157, %v3098, %v3102
      %v3105 = vshrl.u32 %v3014, 16
      %v3107 = vrot.slane %v3105, 4
      %v3108 = vshll.u32 %v3014, 16
      %v3110 = vrot.slane %v3108, 5
      %v3111 = vor.u32 %v3107, %v3110
      %v3112 = vrot.slane %v3111, 4
      %v3114 = vshll.u32 %v3015, 16
      %v3116 = vrot.slane %v3114, 5
      %v3117 = vsel %vm1157, %v3112, %v3116
      %v3118 = vshrl.u32 %v3015, 16
      %v3120 = vrot.slane %v3118, 4
      %v3121 = vor.u32 %v3120, %v3116
      %v3122 = vrot.slane %v3121, 4
      %v3124 = vshll.u32 %v3016, 16
      %v3126 = vrot.slane %v3124, 5
      %v3127 = vsel %vm1157, %v3122, %v3126
      %v3129 = vshrl.u32 %v3017, 16
      %v3131 = vrot.slane %v3129, 4
      %v3132 = vshll.u32 %v3017, 16
      %v3134 = vrot.slane %v3132, 5
      %v3135 = vor.u32 %v3131, %v3134
      %v3136 = vrot.slane %v3135, 4
      %v3138 = vshll.u32 %v3018, 16
      %v3140 = vrot.slane %v3138, 5
      %v3141 = vsel %vm1157, %v3136, %v3140
      %v3142 = vshrl.u32 %v3018, 16
      %v3144 = vrot.slane %v3142, 4
      %v3145 = vor.u32 %v3144, %v3140
      %v3146 = vrot.slane %v3145, 4
      %v3148 = vshll.u32 %v3019, 16
      %v3150 = vrot.slane %v3148, 5
      %v3151 = vsel %vm1157, %v3146, %v3150
      %v3153 = vshrl.u32 %v3020, 16
      %v3155 = vrot.slane %v3153, 4
      %v3156 = vshll.u32 %v3020, 16
      %v3158 = vrot.slane %v3156, 5
      %v3159 = vor.u32 %v3155, %v3158
      %v3160 = vrot.slane %v3159, 4
      %v3162 = vshll.u32 %v3021, 16
      %v3164 = vrot.slane %v3162, 5
      %v3165 = vsel %vm1157, %v3160, %v3164
      %v3166 = vshrl.u32 %v3021, 16
      %v3168 = vrot.slane %v3166, 4
      %v3169 = vor.u32 %v3168, %v3164
      %v3170 = vrot.slane %v3169, 4
      %v3172 = vshll.u32 %v3022, 16
      %v3174 = vrot.slane %v3172, 5
      %v3175 = vsel %vm1157, %v3170, %v3174
      %v3177 = vshrl.u32 %v3023, 16
      %v3179 = vrot.slane %v3177, 4
      %v3180 = vshll.u32 %v3023, 16
      %v3182 = vrot.slane %v3180, 5
      %v3183 = vor.u32 %v3179, %v3182
      %v3184 = vrot.slane %v3183, 4
      %v3186 = vshll.u32 %v3024, 16
      %v3188 = vrot.slane %v3186, 5
      %v3189 = vsel %vm1157, %v3184, %v3188
      %v3190 = vshrl.u32 %v3024, 16
      %v3192 = vrot.slane %v3190, 4
      %v3193 = vor.u32 %v3192, %v3188
      %v3194 = vrot.slane %v3193, 4
      %v3196 = vshll.u32 %v3025, 16
      %v3198 = vrot.slane %v3196, 5
      %v3199 = vsel %vm1157, %v3194, %v3198
      %v3201 = vshrl.u32 %v3026, 16
      %v3203 = vrot.slane %v3201, 4
      %v3204 = vshll.u32 %v3026, 16
      %v3206 = vrot.slane %v3204, 5
      %v3207 = vor.u32 %v3203, %v3206
      %v3208 = vrot.slane %v3207, 4
      %v3210 = vshll.u32 %v3027, 16
      %v3212 = vrot.slane %v3210, 5
      %v3213 = vsel %vm1157, %v3208, %v3212
      %v3214 = vshrl.u32 %v3027, 16
      %v3216 = vrot.slane %v3214, 4
      %v3217 = vor.u32 %v3216, %v3212
      %v3218 = vrot.slane %v3217, 4
      %v3220 = vshll.u32 %v3028, 16
      %v3222 = vrot.slane %v3220, 5
      %v3223 = vsel %vm1157, %v3218, %v3222
      %v3225 = vshrl.u32 %v3029, 16
      %v3227 = vrot.slane %v3225, 4
      %v3228 = vshll.u32 %v3029, 16
      %v3230 = vrot.slane %v3228, 5
      %v3231 = vor.u32 %v3227, %v3230
      %v3232 = vrot.slane %v3231, 4
      %v3234 = vshll.u32 %v3030, 16
      %v3236 = vrot.slane %v3234, 5
      %v3237 = vsel %vm1157, %v3232, %v3236
      %v3238 = vshrl.u32 %v3030, 16
      %v3240 = vrot.slane %v3238, 4
      %v3241 = vor.u32 %v3240, %v3236
      %v3242 = vrot.slane %v3241, 4
      %v3244 = vshll.u32 %v3031, 16
      %v3246 = vrot.slane %v3244, 5
      %v3247 = vsel %vm1157, %v3242, %v3246
      %v3249 = vshrl.u32 %v3032, 16
      %v3251 = vrot.slane %v3249, 4
      %v3252 = vshll.u32 %v3032, 16
      %v3254 = vrot.slane %v3252, 5
      %v3255 = vor.u32 %v3251, %v3254
      %v3256 = vrot.slane %v3255, 4
      %v3258 = vshll.u32 %v3033, 16
      %v3260 = vrot.slane %v3258, 5
      %v3261 = vsel %vm1157, %v3256, %v3260
      %v3262 = vshrl.u32 %v3033, 16
      %v3264 = vrot.slane %v3262, 4
      %v3265 = vor.u32 %v3264, %v3260
      %v3266 = vrot.slane %v3265, 4
      %v3268 = vshll.u32 %v3034, 16
      %v3270 = vrot.slane %v3268, 5
      %v3271 = vsel %vm1157, %v3266, %v3270
      %v3273 = vshrl.u32 %v3035, 16
      %v3275 = vrot.slane %v3273, 4
      %v3276 = vshll.u32 %v3035, 16
      %v3278 = vrot.slane %v3276, 5
      %v3279 = vor.u32 %v3275, %v3278
      %v3280 = vrot.slane %v3279, 4
      %v3282 = vshll.u32 %v3036, 16
      %v3284 = vrot.slane %v3282, 5
      %v3285 = vsel %vm1157, %v3280, %v3284
      %v3286 = vshrl.u32 %v3036, 16
      %v3288 = vrot.slane %v3286, 4
      %v3289 = vor.u32 %v3288, %v3284
      %v3290 = vrot.slane %v3289, 4
      %v3292 = vshll.u32 %v3037, 16
      %v3294 = vrot.slane %v3292, 5
      %v3295 = vsel %vm1157, %v3290, %v3294
      %v3297 = vshrl.u32 %v3038, 16
      %v3299 = vrot.slane %v3297, 4
      %v3300 = vshll.u32 %v3038, 16
      %v3302 = vrot.slane %v3300, 5
      %v3303 = vor.u32 %v3299, %v3302
      %v3304 = vrot.slane %v3303, 4
      %v3306 = vshll.u32 %v3039, 16
      %v3308 = vrot.slane %v3306, 5
      %v3309 = vsel %vm1157, %v3304, %v3308
      %v3310 = vshrl.u32 %v3039, 16
      %v3312 = vrot.slane %v3310, 4
      %v3313 = vor.u32 %v3312, %v3308
      %v3314 = vrot.slane %v3313, 4
      %v3316 = vshll.u32 %v3040, 16
      %v3318 = vrot.slane %v3316, 5
      %v3319 = vsel %vm1157, %v3314, %v3318
      %v3321 = vshrl.u32 %v3041, 16
      %v3323 = vrot.slane %v3321, 4
      %v3324 = vshll.u32 %v3041, 16
      %v3326 = vrot.slane %v3324, 5
      %v3327 = vor.u32 %v3323, %v3326
      %v3328 = vrot.slane %v3327, 4
      %v3330 = vshll.u32 %v3042, 16
      %v3332 = vrot.slane %v3330, 5
      %v3333 = vsel %vm1157, %v3328, %v3332
      %v3334 = vshrl.u32 %v3042, 16
      %v3336 = vrot.slane %v3334, 4
      %v3337 = vor.u32 %v3336, %v3332
      %v3338 = vrot.slane %v3337, 4
      %v3340 = vshll.u32 %v3043, 16
      %v3342 = vrot.slane %v3340, 5
      %v3343 = vsel %vm1157, %v3338, %v3342
      %v3345 = vshrl.u32 %v3044, 16
      %v3347 = vrot.slane %v3345, 4
      %v3348 = vshll.u32 %v3044, 16
      %v3350 = vrot.slane %v3348, 5
      %v3351 = vor.u32 %v3347, %v3350
      %v3352 = vrot.slane %v3351, 4
      %v3354 = vshll.u32 %v3045, 16
      %v3356 = vrot.slane %v3354, 5
      %v3357 = vsel %vm1157, %v3352, %v3356
      %v3358 = vshrl.u32 %v3045, 16
      %v3360 = vrot.slane %v3358, 4
      %v3361 = vor.u32 %v3360, %v3356
      %v3362 = vrot.slane %v3361, 4
      %v3364 = vshll.u32 %v3046, 16
      %v3366 = vrot.slane %v3364, 5
      %v3367 = vsel %vm1157, %v3362, %v3366
      %v3369 = vshrl.u32 %v3047, 16
      %v3371 = vrot.slane %v3369, 4
      %v3372 = vshll.u32 %v3047, 16
      %v3374 = vrot.slane %v3372, 5
      %v3375 = vor.u32 %v3371, %v3374
      %v3376 = vrot.slane %v3375, 4
      %v3378 = vshll.u32 %v3048, 16
      %v3380 = vrot.slane %v3378, 5
      %v3381 = vsel %vm1157, %v3376, %v3380
      %v3382 = vshrl.u32 %v3048, 16
      %v3384 = vrot.slane %v3382, 4
      %v3385 = vor.u32 %v3384, %v3380
      %v3386 = vrot.slane %v3385, 4
      %v3388 = vshll.u32 %v3049, 16
      %v3390 = vrot.slane %v3388, 5
      %v3391 = vsel %vm1157, %v3386, %v3390
      %v3393 = vshrl.u32 %v3050, 16
      %v3395 = vrot.slane %v3393, 4
      %v3396 = vshll.u32 %v3050, 16
      %v3398 = vrot.slane %v3396, 5
      %v3399 = vor.u32 %v3395, %v3398
      %v3400 = vrot.slane %v3399, 4
      %v3402 = vshll.u32 %v3051, 16
      %v3404 = vrot.slane %v3402, 5
      %v3405 = vsel %vm1157, %v3400, %v3404
      %v3406 = vshrl.u32 %v3051, 16
      %v3408 = vrot.slane %v3406, 4
      %v3409 = vor.u32 %v3408, %v3404
      %v3410 = vrot.slane %v3409, 4
      %v3412 = vshll.u32 %v3052, 16
      %v3414 = vrot.slane %v3412, 5
      %v3415 = vsel %vm1157, %v3410, %v3414
      %v3417 = vshrl.u32 %v3053, 16
      %v3419 = vrot.slane %v3417, 4
      %v3420 = vshll.u32 %v3053, 16
      %v3422 = vrot.slane %v3420, 5
      %v3423 = vor.u32 %v3419, %v3422
      %v3424 = vrot.slane %v3423, 4
      %v3426 = vshll.u32 %v3054, 16
      %v3428 = vrot.slane %v3426, 5
      %v3429 = vsel %vm1157, %v3424, %v3428
      %v3430 = vshrl.u32 %v3054, 16
      %v3432 = vrot.slane %v3430, 4
      %v3433 = vor.u32 %v3432, %v3428
      %v3434 = vrot.slane %v3433, 4
      %v3436 = vshll.u32 %v3055, 16
      %v3438 = vrot.slane %v3436, 5
      %v3439 = vsel %vm1157, %v3434, %v3438
      %s3440 = scalar_lea.vmem %s3, 256
      %v3441 = vld [vmem:[%s3440] sm:$0xf]
      %v3442 = vld [vmem:[%s3440 + $0x4] sm:$0xf]
      %v3443 = vld [vmem:[%s3440 + $0x8] sm:$0xf]
      %v3444 = vld [vmem:[%s3440 + $0xc] sm:$0xf]
      %v3445 = vld [vmem:[%s3440 + $0x10] sm:$0xf]
      %v3446 = vld [vmem:[%s3440 + $0x14] sm:$0xf]
      %v3447 = vld [vmem:[%s3440 + $0x18] sm:$0xf]
      %v3448 = vld [vmem:[%s3440 + $0x1c] sm:$0xf]
      %v3449 = vld [vmem:[%s3440 + $0x20] sm:$0xf]
      %v3450 = vld [vmem:[%s3440 + $0x24] sm:$0xf]
      %v3451 = vld [vmem:[%s3440 + $0x28] sm:$0xf]
      %v3452 = vld [vmem:[%s3440 + $0x2c] sm:$0xf]
      %v3453 = vld [vmem:[%s3440 + $0x30] sm:$0xf]
      %v3454 = vld [vmem:[%s3440 + $0x34] sm:$0xf]
      %v3455 = vld [vmem:[%s3440 + $0x38] sm:$0xf]
      %v3456 = vld [vmem:[%s3440 + $0x3c] sm:$0xf]
      %v3457 = vunpack.c.l.b16 %v3069
      %v3458 = vunpack.c.l.b16 %v3079
      %v3459 = vunpack.c.l.b16 %v3093
      %v3460 = vunpack.c.l.b16 %v3103
      %v3461 = vunpack.c.l.b16 %v3117
      %v3462 = vunpack.c.l.b16 %v3127
      %v3463 = vunpack.c.l.b16 %v3141
      %v3464 = vunpack.c.l.b16 %v3151
      %v3465 = vunpack.c.l.b16 %v3165
      %v3466 = vunpack.c.l.b16 %v3175
      %v3467 = vunpack.c.l.b16 %v3189
      %v3468 = vunpack.c.l.b16 %v3199
      %v3469 = vunpack.c.l.b16 %v3213
      %v3470 = vunpack.c.l.b16 %v3223
      %v3471 = vunpack.c.l.b16 %v3237
      %v3472 = vunpack.c.l.b16 %v3247
      %v3473 = vunpack.c.l.b16 %v3261
      %v3474 = vunpack.c.l.b16 %v3271
      %v3475 = vunpack.c.l.b16 %v3285
      %v3476 = vunpack.c.l.b16 %v3295
      %v3477 = vunpack.c.l.b16 %v3309
      %v3478 = vunpack.c.l.b16 %v3319
      %v3479 = vunpack.c.l.b16 %v3333
      %v3480 = vunpack.c.l.b16 %v3343
      %v3481 = vunpack.c.l.b16 %v3357
      %v3482 = vunpack.c.l.b16 %v3367
      %v3483 = vunpack.c.l.b16 %v3381
      %v3484 = vunpack.c.l.b16 %v3391
      %v3485 = vunpack.c.l.b16 %v3405
      %v3486 = vunpack.c.l.b16 %v3415
      %v3487 = vunpack.c.l.b16 %v3429
      %v3488 = vunpack.c.l.b16 %v3439
      %v3489 = vpack.c.b16 %v3458, %v3457
      %v3490 = vpack.c.b16 %v3460, %v3459
      %v3491 = vpack.c.b16 %v3462, %v3461
      %v3492 = vpack.c.b16 %v3464, %v3463
      %v3493 = vpack.c.b16 %v3466, %v3465
      %v3494 = vpack.c.b16 %v3468, %v3467
      %v3495 = vpack.c.b16 %v3470, %v3469
      %v3496 = vpack.c.b16 %v3472, %v3471
      %v3497 = vpack.c.b16 %v3474, %v3473
      %v3498 = vpack.c.b16 %v3476, %v3475
      %v3499 = vpack.c.b16 %v3478, %v3477
      %v3500 = vpack.c.b16 %v3480, %v3479
      %v3501 = vpack.c.b16 %v3482, %v3481
      %v3502 = vpack.c.b16 %v3484, %v3483
      %v3503 = vpack.c.b16 %v3486, %v3485
      %v3504 = vpack.c.b16 %v3488, %v3487
      %v3537 = vunpack.c.l.b16 %v3441
      %v3538 = vunpack.c.l.b16 %v3442
      %v3539 = vunpack.c.l.b16 %v3443
      %v3540 = vunpack.c.l.b16 %v3444
      %v3541 = vunpack.c.l.b16 %v3445
      %v3542 = vunpack.c.l.b16 %v3446
      %v3543 = vunpack.c.l.b16 %v3447
      %v3544 = vunpack.c.l.b16 %v3448
      %v3545 = vunpack.c.l.b16 %v3449
      %v3546 = vunpack.c.l.b16 %v3450
      %v3547 = vunpack.c.l.b16 %v3451
      %v3548 = vunpack.c.l.b16 %v3452
      %v3549 = vunpack.c.l.b16 %v3453
      %v3550 = vunpack.c.l.b16 %v3454
      %v3551 = vunpack.c.l.b16 %v3455
      %v3552 = vunpack.c.l.b16 %v3456
      %v3553 = vpack.c.b16 %v3538, %v3537
      %v3554 = vpack.c.b16 %v3540, %v3539
      %v3555 = vpack.c.b16 %v3542, %v3541
      %v3556 = vpack.c.b16 %v3544, %v3543
      %v3557 = vpack.c.b16 %v3546, %v3545
      %v3558 = vpack.c.b16 %v3548, %v3547
      %v3559 = vpack.c.b16 %v3550, %v3549
      %v3560 = vpack.c.b16 %v3552, %v3551
      %3569 = vmatprep.subr.bf16.mxu0 0
      %3570 = vmatpush1.bf16.msra.mxu0 %v3560
      %3571 = vmatprep.subr.bf16.mxu0 0
      %3572 = vmatpush1.bf16.msra.mxu0 %v3559
      %3573 = vmatprep.subr.bf16.mxu0 0
      %3574 = vmatpush1.bf16.msra.mxu0 %v3558
      %3575 = vmatprep.subr.bf16.mxu0 0
      %3576 = vmatpush1.bf16.msra.mxu0 %v3557
      %3577 = vmatprep.subr.bf16.mxu0 0
      %3578 = vmatpush1.bf16.msra.mxu0 %v3556
      %3579 = vmatprep.subr.bf16.mxu0 0
      %3580 = vmatpush1.bf16.msra.mxu0 %v3555
      %3581 = vmatprep.subr.bf16.mxu0 0
      %3582 = vmatpush1.bf16.msra.mxu0 %v3554
      %3583 = vmatprep.subr.bf16.mxu0 0
      %3584 = vmatpush1.bf16.msra.mxu0 %v3553
      %3585 = vmatprep.subr.bf16.mxu0 0
      %3586 = vmatpush2.bf16.msra.mxu0 0
      %3587 = vmatprep.subr.bf16.mxu0 0
      %3588 = vmatpush2.bf16.msra.mxu0 0
      %3589 = vmatprep.subr.bf16.mxu0 0
      %3590 = vmatpush2.bf16.msra.mxu0 0
      %3591 = vmatprep.subr.bf16.mxu0 0
      %3592 = vmatpush2.bf16.msra.mxu0 0
      %3593 = vmatprep.subr.bf16.mxu0 0
      %3594 = vmatpush2.bf16.msra.mxu0 0
      %3595 = vmatprep.subr.bf16.mxu0 0
      %3596 = vmatpush2.bf16.msra.mxu0 0
      %3597 = vmatprep.subr.bf16.mxu0 0
      %3598 = vmatpush2.bf16.msra.mxu0 0
      %3599 = vmatprep.subr.bf16.mxu0 0
      %3600 = vmatpush2.bf16.msra.mxu0 0
      %3601 = vmatprep.mubr.bf16.mxu0 0
      %3602 = vmatmul.mubr.bf16.gmra.mxu0 %v3489
      %v3603 = vpop.f32.mrf.mxu0
      %v3604 = vadd.f32 0.0, %v3603
      %v3605 = vpop.f32.mrf.mxu0
      %v3606 = vpop.f32.mrf.mxu0
      %v3607 = vadd.f32 0.0, %v3606
      %v3608 = vpop.f32.mrf.mxu0
      %3609 = vmatprep.mubr.bf16.mxu0 0
      %3610 = vmatmul.mubr.bf16.gmra.mxu0 %v3490
      %v3611 = vpop.f32.mrf.mxu0
      %v3612 = vadd.f32 0.0, %v3611
      %v3613 = vpop.f32.mrf.mxu0
      %v3614 = vpop.f32.mrf.mxu0
      %v3615 = vadd.f32 0.0, %v3614
      %v3616 = vpop.f32.mrf.mxu0
      %3617 = vmatprep.mubr.bf16.mxu0 0
      %3618 = vmatmul.mubr.bf16.gmra.mxu0 %v3491
      %v3619 = vpop.f32.mrf.mxu0
      %v3620 = vadd.f32 0.0, %v3619
      %v3621 = vpop.f32.mrf.mxu0
      %v3622 = vpop.f32.mrf.mxu0
      %v3623 = vadd.f32 0.0, %v3622
      %v3624 = vpop.f32.mrf.mxu0
      %3625 = vmatprep.mubr.bf16.mxu0 0
      %3626 = vmatmul.mubr.bf16.gmra.mxu0 %v3492
      %v3627 = vpop.f32.mrf.mxu0
      %v3628 = vadd.f32 0.0, %v3627
      %v3629 = vpop.f32.mrf.mxu0
      %v3630 = vpop.f32.mrf.mxu0
      %v3631 = vadd.f32 0.0, %v3630
      %v3632 = vpop.f32.mrf.mxu0
      %3633 = vmatprep.mubr.bf16.mxu0 0
      %3634 = vmatmul.mubr.bf16.gmra.mxu0 %v3493
      %v3635 = vpop.f32.mrf.mxu0
      %v3636 = vadd.f32 0.0, %v3635
      %v3637 = vpop.f32.mrf.mxu0
      %v3638 = vpop.f32.mrf.mxu0
      %v3639 = vadd.f32 0.0, %v3638
      %v3640 = vpop.f32.mrf.mxu0
      %3641 = vmatprep.mubr.bf16.mxu0 0
      %3642 = vmatmul.mubr.bf16.gmra.mxu0 %v3494
      %v3643 = vpop.f32.mrf.mxu0
      %v3644 = vadd.f32 0.0, %v3643
      %v3645 = vpop.f32.mrf.mxu0
      %v3646 = vpop.f32.mrf.mxu0
      %v3647 = vadd.f32 0.0, %v3646
      %v3648 = vpop.f32.mrf.mxu0
      %3649 = vmatprep.mubr.bf16.mxu0 0
      %3650 = vmatmul.mubr.bf16.gmra.mxu0 %v3495
      %v3651 = vpop.f32.mrf.mxu0
      %v3652 = vadd.f32 0.0, %v3651
      %v3653 = vpop.f32.mrf.mxu0
      %v3654 = vpop.f32.mrf.mxu0
      %v3655 = vadd.f32 0.0, %v3654
      %v3656 = vpop.f32.mrf.mxu0
      %3657 = vmatprep.mubr.bf16.mxu0 0
      %3658 = vmatmul.mubr.bf16.gmra.mxu0 %v3496
      %v3659 = vpop.f32.mrf.mxu0
      %v3660 = vadd.f32 0.0, %v3659
      %v3661 = vpop.f32.mrf.mxu0
      %v3662 = vpop.f32.mrf.mxu0
      %v3663 = vadd.f32 0.0, %v3662
      %v3664 = vpop.f32.mrf.mxu0
      %3665 = vmatprep.mubr.bf16.mxu0 0
      %3666 = vmatmul.mubr.bf16.gmra.mxu0 %v3497
      %v3667 = vpop.f32.mrf.mxu0
      %v3668 = vadd.f32 0.0, %v3667
      %v3669 = vpop.f32.mrf.mxu0
      %v3670 = vpop.f32.mrf.mxu0
      %v3671 = vadd.f32 0.0, %v3670
      %v3672 = vpop.f32.mrf.mxu0
      %3673 = vmatprep.mubr.bf16.mxu0 0
      %3674 = vmatmul.mubr.bf16.gmra.mxu0 %v3498
      %v3675 = vpop.f32.mrf.mxu0
      %v3676 = vadd.f32 0.0, %v3675
      %v3677 = vpop.f32.mrf.mxu0
      %v3678 = vpop.f32.mrf.mxu0
      %v3679 = vadd.f32 0.0, %v3678
      %v3680 = vpop.f32.mrf.mxu0
      %3681 = vmatprep.mubr.bf16.mxu0 0
      %3682 = vmatmul.mubr.bf16.gmra.mxu0 %v3499
      %v3683 = vpop.f32.mrf.mxu0
      %v3684 = vadd.f32 0.0, %v3683
      %v3685 = vpop.f32.mrf.mxu0
      %v3686 = vpop.f32.mrf.mxu0
      %v3687 = vadd.f32 0.0, %v3686
      %v3688 = vpop.f32.mrf.mxu0
      %3689 = vmatprep.mubr.bf16.mxu0 0
      %3690 = vmatmul.mubr.bf16.gmra.mxu0 %v3500
      %v3691 = vpop.f32.mrf.mxu0
      %v3692 = vadd.f32 0.0, %v3691
      %v3693 = vpop.f32.mrf.mxu0
      %v3694 = vpop.f32.mrf.mxu0
      %v3695 = vadd.f32 0.0, %v3694
      %v3696 = vpop.f32.mrf.mxu0
      %3697 = vmatprep.mubr.bf16.mxu0 0
      %3698 = vmatmul.mubr.bf16.gmra.mxu0 %v3501
      %v3699 = vpop.f32.mrf.mxu0
      %v3700 = vadd.f32 0.0, %v3699
      %v3701 = vpop.f32.mrf.mxu0
      %v3702 = vpop.f32.mrf.mxu0
      %v3703 = vadd.f32 0.0, %v3702
      %v3704 = vpop.f32.mrf.mxu0
      %3705 = vmatprep.mubr.bf16.mxu0 0
      %3706 = vmatmul.mubr.bf16.gmra.mxu0 %v3502
      %v3707 = vpop.f32.mrf.mxu0
      %v3708 = vadd.f32 0.0, %v3707
      %v3709 = vpop.f32.mrf.mxu0
      %v3710 = vpop.f32.mrf.mxu0
      %v3711 = vadd.f32 0.0, %v3710
      %v3712 = vpop.f32.mrf.mxu0
      %3713 = vmatprep.mubr.bf16.mxu0 0
      %3714 = vmatmul.mubr.bf16.gmra.mxu0 %v3503
      %v3715 = vpop.f32.mrf.mxu0
      %v3716 = vadd.f32 0.0, %v3715
      %v3717 = vpop.f32.mrf.mxu0
      %v3718 = vpop.f32.mrf.mxu0
      %v3719 = vadd.f32 0.0, %v3718
      %v3720 = vpop.f32.mrf.mxu0
      %3721 = vmatprep.mubr.bf16.mxu0 0
      %3722 = vmatmul.mubr.bf16.gmra.mxu0 %v3504
      %v3723 = vpop.f32.mrf.mxu0
      %v3724 = vadd.f32 0.0, %v3723
      %v3725 = vpop.f32.mrf.mxu0
      %v3726 = vpop.f32.mrf.mxu0
      %v3727 = vadd.f32 0.0, %v3726
      %v3728 = vpop.f32.mrf.mxu0
      %3729 = vdwg.mxu0
      %v3730 = vadd.f32 %v2976, %v3604
      %v3731 = vadd.f32 %v2977, %v3607
      %v3732 = vadd.f32 %v2978, %v3612
      %v3733 = vadd.f32 %v2979, %v3615
      %v3734 = vadd.f32 %v2980, %v3620
      %v3735 = vadd.f32 %v2981, %v3623
      %v3736 = vadd.f32 %v2982, %v3628
      %v3737 = vadd.f32 %v2983, %v3631
      %v3738 = vadd.f32 %v2984, %v3636
      %v3739 = vadd.f32 %v2985, %v3639
      %v3740 = vadd.f32 %v2986, %v3644
      %v3741 = vadd.f32 %v2987, %v3647
      %v3742 = vadd.f32 %v2988, %v3652
      %v3743 = vadd.f32 %v2989, %v3655
      %v3744 = vadd.f32 %v2990, %v3660
      %v3745 = vadd.f32 %v2991, %v3663
      %v3746 = vadd.f32 %v2992, %v3668
      %v3747 = vadd.f32 %v2993, %v3671
      %v3748 = vadd.f32 %v2994, %v3676
      %v3749 = vadd.f32 %v2995, %v3679
      %v3750 = vadd.f32 %v2996, %v3684
      %v3751 = vadd.f32 %v2997, %v3687
      %v3752 = vadd.f32 %v2998, %v3692
      %v3753 = vadd.f32 %v2999, %v3695
      %v3754 = vadd.f32 %v3000, %v3700
      %v3755 = vadd.f32 %v3001, %v3703
      %v3756 = vadd.f32 %v3002, %v3708
      %v3757 = vadd.f32 %v3003, %v3711
      %v3758 = vadd.f32 %v3004, %v3716
      %v3759 = vadd.f32 %v3005, %v3719
      %v3760 = vadd.f32 %v3006, %v3724
      %v3761 = vadd.f32 %v3007, %v3727
      %v3762 = vld [vmem:[%s976] sm:$0xe]
      %v3763 = vld [vmem:[%s976 + $0xc] sm:$0xe]
      %v3764 = vld [vmem:[%s976 + $0x18] sm:$0xe]
      %v3765 = vld [vmem:[%s976 + $0x24] sm:$0xe]
      %v3766 = vld [vmem:[%s976 + $0x30] sm:$0xe]
      %v3767 = vld [vmem:[%s976 + $0x3c] sm:$0xe]
      %v3768 = vld [vmem:[%s976 + $0x48] sm:$0xe]
      %v3769 = vld [vmem:[%s976 + $0x54] sm:$0xe]
      %v3770 = vld [vmem:[%s976 + $0x60] sm:$0xe]
      %v3771 = vld [vmem:[%s976 + $0x6c] sm:$0xe]
      %v3772 = vld [vmem:[%s976 + $0x78] sm:$0xe]
      %v3773 = vld [vmem:[%s976 + $0x84] sm:$0xe]
      %v3774 = vld [vmem:[%s976 + $0x90] sm:$0xe]
      %v3775 = vld [vmem:[%s976 + $0x9c] sm:$0xe]
      %v3776 = vld [vmem:[%s976 + $0xa8] sm:$0xe]
      %v3777 = vld [vmem:[%s976 + $0xb4] sm:$0xe]
      %v3826 = vrot.slane %v3762, 5
      %v3827 = vrot.slane %v3826, 4
      %v3828 = vrot.slane %v3009, 5
      %v3829 = vsel %vm2187, %v3827, %v3828
      %v3830 = vrot.slane %v3828, 4
      %v3831 = vrot.slane %v3010, 5
      %v3832 = vsel %vm2187, %v3830, %v3831
      %v3833 = vrot.slane %v3763, 5
      %v3834 = vrot.slane %v3833, 4
      %v3835 = vrot.slane %v3012, 5
      %v3836 = vsel %vm2187, %v3834, %v3835
      %v3837 = vrot.slane %v3835, 4
      %v3838 = vrot.slane %v3013, 5
      %v3839 = vsel %vm2187, %v3837, %v3838
      %v3840 = vrot.slane %v3764, 5
      %v3841 = vrot.slane %v3840, 4
      %v3842 = vrot.slane %v3015, 5
      %v3843 = vsel %vm2187, %v3841, %v3842
      %v3844 = vrot.slane %v3842, 4
      %v3845 = vrot.slane %v3016, 5
      %v3846 = vsel %vm2187, %v3844, %v3845
      %v3847 = vrot.slane %v3765, 5
      %v3848 = vrot.slane %v3847, 4
      %v3849 = vrot.slane %v3018, 5
      %v3850 = vsel %vm2187, %v3848, %v3849
      %v3851 = vrot.slane %v3849, 4
      %v3852 = vrot.slane %v3019, 5
      %v3853 = vsel %vm2187, %v3851, %v3852
      %v3854 = vrot.slane %v3766, 5
      %v3855 = vrot.slane %v3854, 4
      %v3856 = vrot.slane %v3021, 5
      %v3857 = vsel %vm2187, %v3855, %v3856
      %v3858 = vrot.slane %v3856, 4
      %v3859 = vrot.slane %v3022, 5
      %v3860 = vsel %vm2187, %v3858, %v3859
      %v3861 = vrot.slane %v3767, 5
      %v3862 = vrot.slane %v3861, 4
      %v3863 = vrot.slane %v3024, 5
      %v3864 = vsel %vm2187, %v3862, %v3863
      %v3865 = vrot.slane %v3863, 4
      %v3866 = vrot.slane %v3025, 5
      %v3867 = vsel %vm2187, %v3865, %v3866
      %v3868 = vrot.slane %v3768, 5
      %v3869 = vrot.slane %v3868, 4
      %v3870 = vrot.slane %v3027, 5
      %v3871 = vsel %vm2187, %v3869, %v3870
      %v3872 = vrot.slane %v3870, 4
      %v3873 = vrot.slane %v3028, 5
      %v3874 = vsel %vm2187, %v3872, %v3873
      %v3875 = vrot.slane %v3769, 5
      %v3876 = vrot.slane %v3875, 4
      %v3877 = vrot.slane %v3030, 5
      %v3878 = vsel %vm2187, %v3876, %v3877
      %v3879 = vrot.slane %v3877, 4
      %v3880 = vrot.slane %v3031, 5
      %v3881 = vsel %vm2187, %v3879, %v3880
      %v3882 = vrot.slane %v3770, 5
      %v3883 = vrot.slane %v3882, 4
      %v3884 = vrot.slane %v3033, 5
      %v3885 = vsel %vm2187, %v3883, %v3884
      %v3886 = vrot.slane %v3884, 4
      %v3887 = vrot.slane %v3034, 5
      %v3888 = vsel %vm2187, %v3886, %v3887
      %v3889 = vrot.slane %v3771, 5
      %v3890 = vrot.slane %v3889, 4
      %v3891 = vrot.slane %v3036, 5
      %v3892 = vsel %vm2187, %v3890, %v3891
      %v3893 = vrot.slane %v3891, 4
      %v3894 = vrot.slane %v3037, 5
      %v3895 = vsel %vm2187, %v3893, %v3894
      %v3896 = vrot.slane %v3772, 5
      %v3897 = vrot.slane %v3896, 4
      %v3898 = vrot.slane %v3039, 5
      %v3899 = vsel %vm2187, %v3897, %v3898
      %v3900 = vrot.slane %v3898, 4
      %v3901 = vrot.slane %v3040, 5
      %v3902 = vsel %vm2187, %v3900, %v3901
      %v3903 = vrot.slane %v3773, 5
      %v3904 = vrot.slane %v3903, 4
      %v3905 = vrot.slane %v3042, 5
      %v3906 = vsel %vm2187, %v3904, %v3905
      %v3907 = vrot.slane %v3905, 4
      %v3908 = vrot.slane %v3043, 5
      %v3909 = vsel %vm2187, %v3907, %v3908
      %v3910 = vrot.slane %v3774, 5
      %v3911 = vrot.slane %v3910, 4
      %v3912 = vrot.slane %v3045, 5
      %v3913 = vsel %vm2187, %v3911, %v3912
      %v3914 = vrot.slane %v3912, 4
      %v3915 = vrot.slane %v3046, 5
      %v3916 = vsel %vm2187, %v3914, %v3915
      %v3917 = vrot.slane %v3775, 5
      %v3918 = vrot.slane %v3917, 4
      %v3919 = vrot.slane %v3048, 5
      %v3920 = vsel %vm2187, %v3918, %v3919
      %v3921 = vrot.slane %v3919, 4
      %v3922 = vrot.slane %v3049, 5
      %v3923 = vsel %vm2187, %v3921, %v3922
      %v3924 = vrot.slane %v3776, 5
      %v3925 = vrot.slane %v3924, 4
      %v3926 = vrot.slane %v3051, 5
      %v3927 = vsel %vm2187, %v3925, %v3926
      %v3928 = vrot.slane %v3926, 4
      %v3929 = vrot.slane %v3052, 5
      %v3930 = vsel %vm2187, %v3928, %v3929
      %v3931 = vrot.slane %v3777, 5
      %v3932 = vrot.slane %v3931, 4
      %v3933 = vrot.slane %v3054, 5
      %v3934 = vsel %vm2187, %v3932, %v3933
      %v3935 = vrot.slane %v3933, 4
      %v3936 = vrot.slane %v3055, 5
      %v3937 = vsel %vm2187, %v3935, %v3936
      %s3938 = scalar_lea.vmem %s3, 320
      %v3939 = vld [vmem:[%s3938] sm:$0xf]
      %v3940 = vld [vmem:[%s3938 + $0x4] sm:$0xf]
      %v3941 = vld [vmem:[%s3938 + $0x8] sm:$0xf]
      %v3942 = vld [vmem:[%s3938 + $0xc] sm:$0xf]
      %v3943 = vld [vmem:[%s3938 + $0x10] sm:$0xf]
      %v3944 = vld [vmem:[%s3938 + $0x14] sm:$0xf]
      %v3945 = vld [vmem:[%s3938 + $0x18] sm:$0xf]
      %v3946 = vld [vmem:[%s3938 + $0x1c] sm:$0xf]
      %v3947 = vld [vmem:[%s3938 + $0x20] sm:$0xf]
      %v3948 = vld [vmem:[%s3938 + $0x24] sm:$0xf]
      %v3949 = vld [vmem:[%s3938 + $0x28] sm:$0xf]
      %v3950 = vld [vmem:[%s3938 + $0x2c] sm:$0xf]
      %v3951 = vld [vmem:[%s3938 + $0x30] sm:$0xf]
      %v3952 = vld [vmem:[%s3938 + $0x34] sm:$0xf]
      %v3953 = vld [vmem:[%s3938 + $0x38] sm:$0xf]
      %v3954 = vld [vmem:[%s3938 + $0x3c] sm:$0xf]
      %v3955 = vunpack.c.l.b16 %v3829
      %v3956 = vunpack.c.l.b16 %v3832
      %v3957 = vunpack.c.l.b16 %v3836
      %v3958 = vunpack.c.l.b16 %v3839
      %v3959 = vunpack.c.l.b16 %v3843
      %v3960 = vunpack.c.l.b16 %v3846
      %v3961 = vunpack.c.l.b16 %v3850
      %v3962 = vunpack.c.l.b16 %v3853
      %v3963 = vunpack.c.l.b16 %v3857
      %v3964 = vunpack.c.l.b16 %v3860
      %v3965 = vunpack.c.l.b16 %v3864
      %v3966 = vunpack.c.l.b16 %v3867
      %v3967 = vunpack.c.l.b16 %v3871
      %v3968 = vunpack.c.l.b16 %v3874
      %v3969 = vunpack.c.l.b16 %v3878
      %v3970 = vunpack.c.l.b16 %v3881
      %v3971 = vunpack.c.l.b16 %v3885
      %v3972 = vunpack.c.l.b16 %v3888
      %v3973 = vunpack.c.l.b16 %v3892
      %v3974 = vunpack.c.l.b16 %v3895
      %v3975 = vunpack.c.l.b16 %v3899
      %v3976 = vunpack.c.l.b16 %v3902
      %v3977 = vunpack.c.l.b16 %v3906
      %v3978 = vunpack.c.l.b16 %v3909
      %v3979 = vunpack.c.l.b16 %v3913
      %v3980 = vunpack.c.l.b16 %v3916
      %v3981 = vunpack.c.l.b16 %v3920
      %v3982 = vunpack.c.l.b16 %v3923
      %v3983 = vunpack.c.l.b16 %v3927
      %v3984 = vunpack.c.l.b16 %v3930
      %v3985 = vunpack.c.l.b16 %v3934
      %v3986 = vunpack.c.l.b16 %v3937
      %v3987 = vpack.c.b16 %v3956, %v3955
      %v3988 = vpack.c.b16 %v3958, %v3957
      %v3989 = vpack.c.b16 %v3960, %v3959
      %v3990 = vpack.c.b16 %v3962, %v3961
      %v3991 = vpack.c.b16 %v3964, %v3963
      %v3992 = vpack.c.b16 %v3966, %v3965
      %v3993 = vpack.c.b16 %v3968, %v3967
      %v3994 = vpack.c.b16 %v3970, %v3969
      %v3995 = vpack.c.b16 %v3972, %v3971
      %v3996 = vpack.c.b16 %v3974, %v3973
      %v3997 = vpack.c.b16 %v3976, %v3975
      %v3998 = vpack.c.b16 %v3978, %v3977
      %v3999 = vpack.c.b16 %v3980, %v3979
      %v4000 = vpack.c.b16 %v3982, %v3981
      %v4001 = vpack.c.b16 %v3984, %v3983
      %v4002 = vpack.c.b16 %v3986, %v3985
      %v4035 = vunpack.c.l.b16 %v3939
      %v4036 = vunpack.c.l.b16 %v3940
      %v4037 = vunpack.c.l.b16 %v3941
      %v4038 = vunpack.c.l.b16 %v3942
      %v4039 = vunpack.c.l.b16 %v3943
      %v4040 = vunpack.c.l.b16 %v3944
      %v4041 = vunpack.c.l.b16 %v3945
      %v4042 = vunpack.c.l.b16 %v3946
      %v4043 = vunpack.c.l.b16 %v3947
      %v4044 = vunpack.c.l.b16 %v3948
      %v4045 = vunpack.c.l.b16 %v3949
      %v4046 = vunpack.c.l.b16 %v3950
      %v4047 = vunpack.c.l.b16 %v3951
      %v4048 = vunpack.c.l.b16 %v3952
      %v4049 = vunpack.c.l.b16 %v3953
      %v4050 = vunpack.c.l.b16 %v3954
      %v4051 = vpack.c.b16 %v4036, %v4035
      %v4052 = vpack.c.b16 %v4038, %v4037
      %v4053 = vpack.c.b16 %v4040, %v4039
      %v4054 = vpack.c.b16 %v4042, %v4041
      %v4055 = vpack.c.b16 %v4044, %v4043
      %v4056 = vpack.c.b16 %v4046, %v4045
      %v4057 = vpack.c.b16 %v4048, %v4047
      %v4058 = vpack.c.b16 %v4050, %v4049
      %4067 = vmatprep.subr.bf16.mxu0 0
      %4068 = vmatpush1.bf16.msra.mxu0 %v4058
      %4069 = vmatprep.subr.bf16.mxu0 0
      %4070 = vmatpush1.bf16.msra.mxu0 %v4057
      %4071 = vmatprep.subr.bf16.mxu0 0
      %4072 = vmatpush1.bf16.msra.mxu0 %v4056
      %4073 = vmatprep.subr.bf16.mxu0 0
      %4074 = vmatpush1.bf16.msra.mxu0 %v4055
      %4075 = vmatprep.subr.bf16.mxu0 0
      %4076 = vmatpush1.bf16.msra.mxu0 %v4054
      %4077 = vmatprep.subr.bf16.mxu0 0
      %4078 = vmatpush1.bf16.msra.mxu0 %v4053
      %4079 = vmatprep.subr.bf16.mxu0 0
      %4080 = vmatpush1.bf16.msra.mxu0 %v4052
      %4081 = vmatprep.subr.bf16.mxu0 0
      %4082 = vmatpush1.bf16.msra.mxu0 %v4051
      %4083 = vmatprep.subr.bf16.mxu0 0
      %4084 = vmatpush2.bf16.msra.mxu0 0
      %4085 = vmatprep.subr.bf16.mxu0 0
      %4086 = vmatpush2.bf16.msra.mxu0 0
      %4087 = vmatprep.subr.bf16.mxu0 0
      %4088 = vmatpush2.bf16.msra.mxu0 0
      %4089 = vmatprep.subr.bf16.mxu0 0
      %4090 = vmatpush2.bf16.msra.mxu0 0
      %4091 = vmatprep.subr.bf16.mxu0 0
      %4092 = vmatpush2.bf16.msra.mxu0 0
      %4093 = vmatprep.subr.bf16.mxu0 0
      %4094 = vmatpush2.bf16.msra.mxu0 0
      %4095 = vmatprep.subr.bf16.mxu0 0
      %4096 = vmatpush2.bf16.msra.mxu0 0
      %4097 = vmatprep.subr.bf16.mxu0 0
      %4098 = vmatpush2.bf16.msra.mxu0 0
      %4099 = vmatprep.mubr.bf16.mxu0 0
      %4100 = vmatmul.mubr.bf16.gmra.mxu0 %v3987
      %v4101 = vpop.f32.mrf.mxu0
      %v4102 = vadd.f32 0.0, %v4101
      %v4103 = vpop.f32.mrf.mxu0
      %v4104 = vpop.f32.mrf.mxu0
      %v4105 = vadd.f32 0.0, %v4104
      %v4106 = vpop.f32.mrf.mxu0
      %4107 = vmatprep.mubr.bf16.mxu0 0
      %4108 = vmatmul.mubr.bf16.gmra.mxu0 %v3988
      %v4109 = vpop.f32.mrf.mxu0
      %v4110 = vadd.f32 0.0, %v4109
      %v4111 = vpop.f32.mrf.mxu0
      %v4112 = vpop.f32.mrf.mxu0
      %v4113 = vadd.f32 0.0, %v4112
      %v4114 = vpop.f32.mrf.mxu0
      %4115 = vmatprep.mubr.bf16.mxu0 0
      %4116 = vmatmul.mubr.bf16.gmra.mxu0 %v3989
      %v4117 = vpop.f32.mrf.mxu0
      %v4118 = vadd.f32 0.0, %v4117
      %v4119 = vpop.f32.mrf.mxu0
      %v4120 = vpop.f32.mrf.mxu0
      %v4121 = vadd.f32 0.0, %v4120
      %v4122 = vpop.f32.mrf.mxu0
      %4123 = vmatprep.mubr.bf16.mxu0 0
      %4124 = vmatmul.mubr.bf16.gmra.mxu0 %v3990
      %v4125 = vpop.f32.mrf.mxu0
      %v4126 = vadd.f32 0.0, %v4125
      %v4127 = vpop.f32.mrf.mxu0
      %v4128 = vpop.f32.mrf.mxu0
      %v4129 = vadd.f32 0.0, %v4128
      %v4130 = vpop.f32.mrf.mxu0
      %4131 = vmatprep.mubr.bf16.mxu0 0
      %4132 = vmatmul.mubr.bf16.gmra.mxu0 %v3991
      %v4133 = vpop.f32.mrf.mxu0
      %v4134 = vadd.f32 0.0, %v4133
      %v4135 = vpop.f32.mrf.mxu0
      %v4136 = vpop.f32.mrf.mxu0
      %v4137 = vadd.f32 0.0, %v4136
      %v4138 = vpop.f32.mrf.mxu0
      %4139 = vmatprep.mubr.bf16.mxu0 0
      %4140 = vmatmul.mubr.bf16.gmra.mxu0 %v3992
      %v4141 = vpop.f32.mrf.mxu0
      %v4142 = vadd.f32 0.0, %v4141
      %v4143 = vpop.f32.mrf.mxu0
      %v4144 = vpop.f32.mrf.mxu0
      %v4145 = vadd.f32 0.0, %v4144
      %v4146 = vpop.f32.mrf.mxu0
      %4147 = vmatprep.mubr.bf16.mxu0 0
      %4148 = vmatmul.mubr.bf16.gmra.mxu0 %v3993
      %v4149 = vpop.f32.mrf.mxu0
      %v4150 = vadd.f32 0.0, %v4149
      %v4151 = vpop.f32.mrf.mxu0
      %v4152 = vpop.f32.mrf.mxu0
      %v4153 = vadd.f32 0.0, %v4152
      %v4154 = vpop.f32.mrf.mxu0
      %4155 = vmatprep.mubr.bf16.mxu0 0
      %4156 = vmatmul.mubr.bf16.gmra.mxu0 %v3994
      %v4157 = vpop.f32.mrf.mxu0
      %v4158 = vadd.f32 0.0, %v4157
      %v4159 = vpop.f32.mrf.mxu0
      %v4160 = vpop.f32.mrf.mxu0
      %v4161 = vadd.f32 0.0, %v4160
      %v4162 = vpop.f32.mrf.mxu0
      %4163 = vmatprep.mubr.bf16.mxu0 0
      %4164 = vmatmul.mubr.bf16.gmra.mxu0 %v3995
      %v4165 = vpop.f32.mrf.mxu0
      %v4166 = vadd.f32 0.0, %v4165
      %v4167 = vpop.f32.mrf.mxu0
      %v4168 = vpop.f32.mrf.mxu0
      %v4169 = vadd.f32 0.0, %v4168
      %v4170 = vpop.f32.mrf.mxu0
      %4171 = vmatprep.mubr.bf16.mxu0 0
      %4172 = vmatmul.mubr.bf16.gmra.mxu0 %v3996
      %v4173 = vpop.f32.mrf.mxu0
      %v4174 = vadd.f32 0.0, %v4173
      %v4175 = vpop.f32.mrf.mxu0
      %v4176 = vpop.f32.mrf.mxu0
      %v4177 = vadd.f32 0.0, %v4176
      %v4178 = vpop.f32.mrf.mxu0
      %4179 = vmatprep.mubr.bf16.mxu0 0
      %4180 = vmatmul.mubr.bf16.gmra.mxu0 %v3997
      %v4181 = vpop.f32.mrf.mxu0
      %v4182 = vadd.f32 0.0, %v4181
      %v4183 = vpop.f32.mrf.mxu0
      %v4184 = vpop.f32.mrf.mxu0
      %v4185 = vadd.f32 0.0, %v4184
      %v4186 = vpop.f32.mrf.mxu0
      %4187 = vmatprep.mubr.bf16.mxu0 0
      %4188 = vmatmul.mubr.bf16.gmra.mxu0 %v3998
      %v4189 = vpop.f32.mrf.mxu0
      %v4190 = vadd.f32 0.0, %v4189
      %v4191 = vpop.f32.mrf.mxu0
      %v4192 = vpop.f32.mrf.mxu0
      %v4193 = vadd.f32 0.0, %v4192
      %v4194 = vpop.f32.mrf.mxu0
      %4195 = vmatprep.mubr.bf16.mxu0 0
      %4196 = vmatmul.mubr.bf16.gmra.mxu0 %v3999
      %v4197 = vpop.f32.mrf.mxu0
      %v4198 = vadd.f32 0.0, %v4197
      %v4199 = vpop.f32.mrf.mxu0
      %v4200 = vpop.f32.mrf.mxu0
      %v4201 = vadd.f32 0.0, %v4200
      %v4202 = vpop.f32.mrf.mxu0
      %4203 = vmatprep.mubr.bf16.mxu0 0
      %4204 = vmatmul.mubr.bf16.gmra.mxu0 %v4000
      %v4205 = vpop.f32.mrf.mxu0
      %v4206 = vadd.f32 0.0, %v4205
      %v4207 = vpop.f32.mrf.mxu0
      %v4208 = vpop.f32.mrf.mxu0
      %v4209 = vadd.f32 0.0, %v4208
      %v4210 = vpop.f32.mrf.mxu0
      %4211 = vmatprep.mubr.bf16.mxu0 0
      %4212 = vmatmul.mubr.bf16.gmra.mxu0 %v4001
      %v4213 = vpop.f32.mrf.mxu0
      %v4214 = vadd.f32 0.0, %v4213
      %v4215 = vpop.f32.mrf.mxu0
      %v4216 = vpop.f32.mrf.mxu0
      %v4217 = vadd.f32 0.0, %v4216
      %v4218 = vpop.f32.mrf.mxu0
      %4219 = vmatprep.mubr.bf16.mxu0 0
      %4220 = vmatmul.mubr.bf16.gmra.mxu0 %v4002
      %v4221 = vpop.f32.mrf.mxu0
      %v4222 = vadd.f32 0.0, %v4221
      %v4223 = vpop.f32.mrf.mxu0
      %v4224 = vpop.f32.mrf.mxu0
      %v4225 = vadd.f32 0.0, %v4224
      %v4226 = vpop.f32.mrf.mxu0
      %4227 = vdwg.mxu0
      %v4228 = vadd.f32 %v3730, %v4102
      %v4229 = vadd.f32 %v3731, %v4105
      %v4230 = vadd.f32 %v3732, %v4110
      %v4231 = vadd.f32 %v3733, %v4113
      %v4232 = vadd.f32 %v3734, %v4118
      %v4233 = vadd.f32 %v3735, %v4121
      %v4234 = vadd.f32 %v3736, %v4126
      %v4235 = vadd.f32 %v3737, %v4129
      %v4236 = vadd.f32 %v3738, %v4134
      %v4237 = vadd.f32 %v3739, %v4137
      %v4238 = vadd.f32 %v3740, %v4142
      %v4239 = vadd.f32 %v3741, %v4145
      %v4240 = vadd.f32 %v3742, %v4150
      %v4241 = vadd.f32 %v3743, %v4153
      %v4242 = vadd.f32 %v3744, %v4158
      %v4243 = vadd.f32 %v3745, %v4161
      %v4244 = vadd.f32 %v3746, %v4166
      %v4245 = vadd.f32 %v3747, %v4169
      %v4246 = vadd.f32 %v3748, %v4174
      %v4247 = vadd.f32 %v3749, %v4177
      %v4248 = vadd.f32 %v3750, %v4182
      %v4249 = vadd.f32 %v3751, %v4185
      %v4250 = vadd.f32 %v3752, %v4190
      %v4251 = vadd.f32 %v3753, %v4193
      %v4252 = vadd.f32 %v3754, %v4198
      %v4253 = vadd.f32 %v3755, %v4201
      %v4254 = vadd.f32 %v3756, %v4206
      %v4255 = vadd.f32 %v3757, %v4209
      %v4256 = vadd.f32 %v3758, %v4214
      %v4257 = vadd.f32 %v3759, %v4217
      %v4258 = vadd.f32 %v3760, %v4222
      %v4259 = vadd.f32 %v3761, %v4225
      %s4260 = scalar_lea.vmem [#allocation2], 24
      %v4261 = vld [vmem:[%s4260] sm:$0xf]
      %v4262 = vld [vmem:[%s4260 + $0x4] sm:$0xf]
      %v4263 = vld [vmem:[%s4260 + $0xc] sm:$0xf]
      %v4264 = vld [vmem:[%s4260 + $0x10] sm:$0xf]
      %v4265 = vld [vmem:[%s4260 + $0x18] sm:$0xf]
      %v4266 = vld [vmem:[%s4260 + $0x1c] sm:$0xf]
      %v4267 = vld [vmem:[%s4260 + $0x24] sm:$0xf]
      %v4268 = vld [vmem:[%s4260 + $0x28] sm:$0xf]
      %v4269 = vld [vmem:[%s4260 + $0x30] sm:$0xf]
      %v4270 = vld [vmem:[%s4260 + $0x34] sm:$0xf]
      %v4271 = vld [vmem:[%s4260 + $0x3c] sm:$0xf]
      %v4272 = vld [vmem:[%s4260 + $0x40] sm:$0xf]
      %v4273 = vld [vmem:[%s4260 + $0x48] sm:$0xf]
      %v4274 = vld [vmem:[%s4260 + $0x4c] sm:$0xf]
      %v4275 = vld [vmem:[%s4260 + $0x54] sm:$0xf]
      %v4276 = vld [vmem:[%s4260 + $0x58] sm:$0xf]
      %v4277 = vld [vmem:[%s4260 + $0x60] sm:$0xf]
      %v4278 = vld [vmem:[%s4260 + $0x64] sm:$0xf]
      %v4279 = vld [vmem:[%s4260 + $0x6c] sm:$0xf]
      %v4280 = vld [vmem:[%s4260 + $0x70] sm:$0xf]
      %v4281 = vld [vmem:[%s4260 + $0x78] sm:$0xf]
      %v4282 = vld [vmem:[%s4260 + $0x7c] sm:$0xf]
      %v4283 = vld [vmem:[%s4260 + $0x84] sm:$0xf]
      %v4284 = vld [vmem:[%s4260 + $0x88] sm:$0xf]
      %v4285 = vld [vmem:[%s4260 + $0x90] sm:$0xf]
      %v4286 = vld [vmem:[%s4260 + $0x94] sm:$0xf]
      %v4287 = vld [vmem:[%s4260 + $0x9c] sm:$0xf]
      %v4288 = vld [vmem:[%s4260 + $0xa0] sm:$0xf]
      %v4289 = vld [vmem:[%s4260 + $0xa8] sm:$0xf]
      %v4290 = vld [vmem:[%s4260 + $0xac] sm:$0xf]
      %v4291 = vld [vmem:[%s4260 + $0xb4] sm:$0xf]
      %v4292 = vld [vmem:[%s4260 + $0xb8] sm:$0xf]
      %s4293 = scalar_lea.vmem %s3, 384
      %v4294 = vld [vmem:[%s4293] sm:$0xf]
      %v4295 = vld [vmem:[%s4293 + $0x4] sm:$0xf]
      %v4296 = vld [vmem:[%s4293 + $0x8] sm:$0xf]
      %v4297 = vld [vmem:[%s4293 + $0xc] sm:$0xf]
      %v4298 = vld [vmem:[%s4293 + $0x10] sm:$0xf]
      %v4299 = vld [vmem:[%s4293 + $0x14] sm:$0xf]
      %v4300 = vld [vmem:[%s4293 + $0x18] sm:$0xf]
      %v4301 = vld [vmem:[%s4293 + $0x1c] sm:$0xf]
      %v4302 = vld [vmem:[%s4293 + $0x20] sm:$0xf]
      %v4303 = vld [vmem:[%s4293 + $0x24] sm:$0xf]
      %v4304 = vld [vmem:[%s4293 + $0x28] sm:$0xf]
      %v4305 = vld [vmem:[%s4293 + $0x2c] sm:$0xf]
      %v4306 = vld [vmem:[%s4293 + $0x30] sm:$0xf]
      %v4307 = vld [vmem:[%s4293 + $0x34] sm:$0xf]
      %v4308 = vld [vmem:[%s4293 + $0x38] sm:$0xf]
      %v4309 = vld [vmem:[%s4293 + $0x3c] sm:$0xf]
      %v4342 = vunpack.c.l.b16 %v4261
      %v4343 = vunpack.c.l.b16 %v4262
      %v4344 = vunpack.c.l.b16 %v4263
      %v4345 = vunpack.c.l.b16 %v4264
      %v4346 = vunpack.c.l.b16 %v4265
      %v4347 = vunpack.c.l.b16 %v4266
      %v4348 = vunpack.c.l.b16 %v4267
      %v4349 = vunpack.c.l.b16 %v4268
      %v4350 = vunpack.c.l.b16 %v4269
      %v4351 = vunpack.c.l.b16 %v4270
      %v4352 = vunpack.c.l.b16 %v4271
      %v4353 = vunpack.c.l.b16 %v4272
      %v4354 = vunpack.c.l.b16 %v4273
      %v4355 = vunpack.c.l.b16 %v4274
      %v4356 = vunpack.c.l.b16 %v4275
      %v4357 = vunpack.c.l.b16 %v4276
      %v4358 = vunpack.c.l.b16 %v4277
      %v4359 = vunpack.c.l.b16 %v4278
      %v4360 = vunpack.c.l.b16 %v4279
      %v4361 = vunpack.c.l.b16 %v4280
      %v4362 = vunpack.c.l.b16 %v4281
      %v4363 = vunpack.c.l.b16 %v4282
      %v4364 = vunpack.c.l.b16 %v4283
      %v4365 = vunpack.c.l.b16 %v4284
      %v4366 = vunpack.c.l.b16 %v4285
      %v4367 = vunpack.c.l.b16 %v4286
      %v4368 = vunpack.c.l.b16 %v4287
      %v4369 = vunpack.c.l.b16 %v4288
      %v4370 = vunpack.c.l.b16 %v4289
      %v4371 = vunpack.c.l.b16 %v4290
      %v4372 = vunpack.c.l.b16 %v4291
      %v4373 = vunpack.c.l.b16 %v4292
      %v4374 = vpack.c.b16 %v4343, %v4342
      %v4375 = vpack.c.b16 %v4345, %v4344
      %v4376 = vpack.c.b16 %v4347, %v4346
      %v4377 = vpack.c.b16 %v4349, %v4348
      %v4378 = vpack.c.b16 %v4351, %v4350
      %v4379 = vpack.c.b16 %v4353, %v4352
      %v4380 = vpack.c.b16 %v4355, %v4354
      %v4381 = vpack.c.b16 %v4357, %v4356
      %v4382 = vpack.c.b16 %v4359, %v4358
      %v4383 = vpack.c.b16 %v4361, %v4360
      %v4384 = vpack.c.b16 %v4363, %v4362
      %v4385 = vpack.c.b16 %v4365, %v4364
      %v4386 = vpack.c.b16 %v4367, %v4366
      %v4387 = vpack.c.b16 %v4369, %v4368
      %v4388 = vpack.c.b16 %v4371, %v4370
      %v4389 = vpack.c.b16 %v4373, %v4372
      %v4422 = vunpack.c.l.b16 %v4294
      %v4423 = vunpack.c.l.b16 %v4295
      %v4424 = vunpack.c.l.b16 %v4296
      %v4425 = vunpack.c.l.b16 %v4297
      %v4426 = vunpack.c.l.b16 %v4298
      %v4427 = vunpack.c.l.b16 %v4299
      %v4428 = vunpack.c.l.b16 %v4300
      %v4429 = vunpack.c.l.b16 %v4301
      %v4430 = vunpack.c.l.b16 %v4302
      %v4431 = vunpack.c.l.b16 %v4303
      %v4432 = vunpack.c.l.b16 %v4304
      %v4433 = vunpack.c.l.b16 %v4305
      %v4434 = vunpack.c.l.b16 %v4306
      %v4435 = vunpack.c.l.b16 %v4307
      %v4436 = vunpack.c.l.b16 %v4308
      %v4437 = vunpack.c.l.b16 %v4309
      %v4438 = vpack.c.b16 %v4423, %v4422
      %v4439 = vpack.c.b16 %v4425, %v4424
      %v4440 = vpack.c.b16 %v4427, %v4426
      %v4441 = vpack.c.b16 %v4429, %v4428
      %v4442 = vpack.c.b16 %v4431, %v4430
      %v4443 = vpack.c.b16 %v4433, %v4432
      %v4444 = vpack.c.b16 %v4435, %v4434
      %v4445 = vpack.c.b16 %v4437, %v4436
      %4454 = vmatprep.subr.bf16.mxu0 0
      %4455 = vmatpush1.bf16.msra.mxu0 %v4445
      %4456 = vmatprep.subr.bf16.mxu0 0
      %4457 = vmatpush1.bf16.msra.mxu0 %v4444
      %4458 = vmatprep.subr.bf16.mxu0 0
      %4459 = vmatpush1.bf16.msra.mxu0 %v4443
      %4460 = vmatprep.subr.bf16.mxu0 0
      %4461 = vmatpush1.bf16.msra.mxu0 %v4442
      %4462 = vmatprep.subr.bf16.mxu0 0
      %4463 = vmatpush1.bf16.msra.mxu0 %v4441
      %4464 = vmatprep.subr.bf16.mxu0 0
      %4465 = vmatpush1.bf16.msra.mxu0 %v4440
      %4466 = vmatprep.subr.bf16.mxu0 0
      %4467 = vmatpush1.bf16.msra.mxu0 %v4439
      %4468 = vmatprep.subr.bf16.mxu0 0
      %4469 = vmatpush1.bf16.msra.mxu0 %v4438
      %4470 = vmatprep.subr.bf16.mxu0 0
      %4471 = vmatpush2.bf16.msra.mxu0 0
      %4472 = vmatprep.subr.bf16.mxu0 0
      %4473 = vmatpush2.bf16.msra.mxu0 0
      %4474 = vmatprep.subr.bf16.mxu0 0
      %4475 = vmatpush2.bf16.msra.mxu0 0
      %4476 = vmatprep.subr.bf16.mxu0 0
      %4477 = vmatpush2.bf16.msra.mxu0 0
      %4478 = vmatprep.subr.bf16.mxu0 0
      %4479 = vmatpush2.bf16.msra.mxu0 0
      %4480 = vmatprep.subr.bf16.mxu0 0
      %4481 = vmatpush2.bf16.msra.mxu0 0
      %4482 = vmatprep.subr.bf16.mxu0 0
      %4483 = vmatpush2.bf16.msra.mxu0 0
      %4484 = vmatprep.subr.bf16.mxu0 0
      %4485 = vmatpush2.bf16.msra.mxu0 0
      %4486 = vmatprep.mubr.bf16.mxu0 0
      %4487 = vmatmul.mubr.bf16.gmra.mxu0 %v4374
      %v4488 = vpop.f32.mrf.mxu0
      %v4489 = vadd.f32 0.0, %v4488
      %v4490 = vpop.f32.mrf.mxu0
      %v4491 = vpop.f32.mrf.mxu0
      %v4492 = vadd.f32 0.0, %v4491
      %v4493 = vpop.f32.mrf.mxu0
      %4494 = vmatprep.mubr.bf16.mxu0 0
      %4495 = vmatmul.mubr.bf16.gmra.mxu0 %v4375
      %v4496 = vpop.f32.mrf.mxu0
      %v4497 = vadd.f32 0.0, %v4496
      %v4498 = vpop.f32.mrf.mxu0
      %v4499 = vpop.f32.mrf.mxu0
      %v4500 = vadd.f32 0.0, %v4499
      %v4501 = vpop.f32.mrf.mxu0
      %4502 = vmatprep.mubr.bf16.mxu0 0
      %4503 = vmatmul.mubr.bf16.gmra.mxu0 %v4376
      %v4504 = vpop.f32.mrf.mxu0
      %v4505 = vadd.f32 0.0, %v4504
      %v4506 = vpop.f32.mrf.mxu0
      %v4507 = vpop.f32.mrf.mxu0
      %v4508 = vadd.f32 0.0, %v4507
      %v4509 = vpop.f32.mrf.mxu0
      %4510 = vmatprep.mubr.bf16.mxu0 0
      %4511 = vmatmul.mubr.bf16.gmra.mxu0 %v4377
      %v4512 = vpop.f32.mrf.mxu0
      %v4513 = vadd.f32 0.0, %v4512
      %v4514 = vpop.f32.mrf.mxu0
      %v4515 = vpop.f32.mrf.mxu0
      %v4516 = vadd.f32 0.0, %v4515
      %v4517 = vpop.f32.mrf.mxu0
      %4518 = vmatprep.mubr.bf16.mxu0 0
      %4519 = vmatmul.mubr.bf16.gmra.mxu0 %v4378
      %v4520 = vpop.f32.mrf.mxu0
      %v4521 = vadd.f32 0.0, %v4520
      %v4522 = vpop.f32.mrf.mxu0
      %v4523 = vpop.f32.mrf.mxu0
      %v4524 = vadd.f32 0.0, %v4523
      %v4525 = vpop.f32.mrf.mxu0
      %4526 = vmatprep.mubr.bf16.mxu0 0
      %4527 = vmatmul.mubr.bf16.gmra.mxu0 %v4379
      %v4528 = vpop.f32.mrf.mxu0
      %v4529 = vadd.f32 0.0, %v4528
      %v4530 = vpop.f32.mrf.mxu0
      %v4531 = vpop.f32.mrf.mxu0
      %v4532 = vadd.f32 0.0, %v4531
      %v4533 = vpop.f32.mrf.mxu0
      %4534 = vmatprep.mubr.bf16.mxu0 0
      %4535 = vmatmul.mubr.bf16.gmra.mxu0 %v4380
      %v4536 = vpop.f32.mrf.mxu0
      %v4537 = vadd.f32 0.0, %v4536
      %v4538 = vpop.f32.mrf.mxu0
      %v4539 = vpop.f32.mrf.mxu0
      %v4540 = vadd.f32 0.0, %v4539
      %v4541 = vpop.f32.mrf.mxu0
      %4542 = vmatprep.mubr.bf16.mxu0 0
      %4543 = vmatmul.mubr.bf16.gmra.mxu0 %v4381
      %v4544 = vpop.f32.mrf.mxu0
      %v4545 = vadd.f32 0.0, %v4544
      %v4546 = vpop.f32.mrf.mxu0
      %v4547 = vpop.f32.mrf.mxu0
      %v4548 = vadd.f32 0.0, %v4547
      %v4549 = vpop.f32.mrf.mxu0
      %4550 = vmatprep.mubr.bf16.mxu0 0
      %4551 = vmatmul.mubr.bf16.gmra.mxu0 %v4382
      %v4552 = vpop.f32.mrf.mxu0
      %v4553 = vadd.f32 0.0, %v4552
      %v4554 = vpop.f32.mrf.mxu0
      %v4555 = vpop.f32.mrf.mxu0
      %v4556 = vadd.f32 0.0, %v4555
      %v4557 = vpop.f32.mrf.mxu0
      %4558 = vmatprep.mubr.bf16.mxu0 0
      %4559 = vmatmul.mubr.bf16.gmra.mxu0 %v4383
      %v4560 = vpop.f32.mrf.mxu0
      %v4561 = vadd.f32 0.0, %v4560
      %v4562 = vpop.f32.mrf.mxu0
      %v4563 = vpop.f32.mrf.mxu0
      %v4564 = vadd.f32 0.0, %v4563
      %v4565 = vpop.f32.mrf.mxu0
      %4566 = vmatprep.mubr.bf16.mxu0 0
      %4567 = vmatmul.mubr.bf16.gmra.mxu0 %v4384
      %v4568 = vpop.f32.mrf.mxu0
      %v4569 = vadd.f32 0.0, %v4568
      %v4570 = vpop.f32.mrf.mxu0
      %v4571 = vpop.f32.mrf.mxu0
      %v4572 = vadd.f32 0.0, %v4571
      %v4573 = vpop.f32.mrf.mxu0
      %4574 = vmatprep.mubr.bf16.mxu0 0
      %4575 = vmatmul.mubr.bf16.gmra.mxu0 %v4385
      %v4576 = vpop.f32.mrf.mxu0
      %v4577 = vadd.f32 0.0, %v4576
      %v4578 = vpop.f32.mrf.mxu0
      %v4579 = vpop.f32.mrf.mxu0
      %v4580 = vadd.f32 0.0, %v4579
      %v4581 = vpop.f32.mrf.mxu0
      %4582 = vmatprep.mubr.bf16.mxu0 0
      %4583 = vmatmul.mubr.bf16.gmra.mxu0 %v4386
      %v4584 = vpop.f32.mrf.mxu0
      %v4585 = vadd.f32 0.0, %v4584
      %v4586 = vpop.f32.mrf.mxu0
      %v4587 = vpop.f32.mrf.mxu0
      %v4588 = vadd.f32 0.0, %v4587
      %v4589 = vpop.f32.mrf.mxu0
      %4590 = vmatprep.mubr.bf16.mxu0 0
      %4591 = vmatmul.mubr.bf16.gmra.mxu0 %v4387
      %v4592 = vpop.f32.mrf.mxu0
      %v4593 = vadd.f32 0.0, %v4592
      %v4594 = vpop.f32.mrf.mxu0
      %v4595 = vpop.f32.mrf.mxu0
      %v4596 = vadd.f32 0.0, %v4595
      %v4597 = vpop.f32.mrf.mxu0
      %4598 = vmatprep.mubr.bf16.mxu0 0
      %4599 = vmatmul.mubr.bf16.gmra.mxu0 %v4388
      %v4600 = vpop.f32.mrf.mxu0
      %v4601 = vadd.f32 0.0, %v4600
      %v4602 = vpop.f32.mrf.mxu0
      %v4603 = vpop.f32.mrf.mxu0
      %v4604 = vadd.f32 0.0, %v4603
      %v4605 = vpop.f32.mrf.mxu0
      %4606 = vmatprep.mubr.bf16.mxu0 0
      %4607 = vmatmul.mubr.bf16.gmra.mxu0 %v4389
      %v4608 = vpop.f32.mrf.mxu0
      %v4609 = vadd.f32 0.0, %v4608
      %v4610 = vpop.f32.mrf.mxu0
      %v4611 = vpop.f32.mrf.mxu0
      %v4612 = vadd.f32 0.0, %v4611
      %v4613 = vpop.f32.mrf.mxu0
      %4614 = vdwg.mxu0
      %v4615 = vadd.f32 %v4228, %v4489
      %v4616 = vadd.f32 %v4229, %v4492
      %v4617 = vadd.f32 %v4230, %v4497
      %v4618 = vadd.f32 %v4231, %v4500
      %v4619 = vadd.f32 %v4232, %v4505
      %v4620 = vadd.f32 %v4233, %v4508
      %v4621 = vadd.f32 %v4234, %v4513
      %v4622 = vadd.f32 %v4235, %v4516
      %v4623 = vadd.f32 %v4236, %v4521
      %v4624 = vadd.f32 %v4237, %v4524
      %v4625 = vadd.f32 %v4238, %v4529
      %v4626 = vadd.f32 %v4239, %v4532
      %v4627 = vadd.f32 %v4240, %v4537
      %v4628 = vadd.f32 %v4241, %v4540
      %v4629 = vadd.f32 %v4242, %v4545
      %v4630 = vadd.f32 %v4243, %v4548
      %v4631 = vadd.f32 %v4244, %v4553
      %v4632 = vadd.f32 %v4245, %v4556
      %v4633 = vadd.f32 %v4246, %v4561
      %v4634 = vadd.f32 %v4247, %v4564
      %v4635 = vadd.f32 %v4248, %v4569
      %v4636 = vadd.f32 %v4249, %v4572
      %v4637 = vadd.f32 %v4250, %v4577
      %v4638 = vadd.f32 %v4251, %v4580
      %v4639 = vadd.f32 %v4252, %v4585
      %v4640 = vadd.f32 %v4253, %v4588
      %v4641 = vadd.f32 %v4254, %v4593
      %v4642 = vadd.f32 %v4255, %v4596
      %v4643 = vadd.f32 %v4256, %v4601
      %v4644 = vadd.f32 %v4257, %v4604
      %v4645 = vadd.f32 %v4258, %v4609
      %v4646 = vadd.f32 %v4259, %v4612
      %v4647 = vld [vmem:[%s4260] sm:$0xf]
      %v4648 = vld [vmem:[%s4260 + $0x4] sm:$0xf]
      %v4649 = vld [vmem:[%s4260 + $0x8] sm:$0x1]
      %v4650 = vld [vmem:[%s4260 + $0xc] sm:$0xf]
      %v4651 = vld [vmem:[%s4260 + $0x10] sm:$0xf]
      %v4652 = vld [vmem:[%s4260 + $0x14] sm:$0x1]
      %v4653 = vld [vmem:[%s4260 + $0x18] sm:$0xf]
      %v4654 = vld [vmem:[%s4260 + $0x1c] sm:$0xf]
      %v4655 = vld [vmem:[%s4260 + $0x20] sm:$0x1]
      %v4656 = vld [vmem:[%s4260 + $0x24] sm:$0xf]
      %v4657 = vld [vmem:[%s4260 + $0x28] sm:$0xf]
      %v4658 = vld [vmem:[%s4260 + $0x2c] sm:$0x1]
      %v4659 = vld [vmem:[%s4260 + $0x30] sm:$0xf]
      %v4660 = vld [vmem:[%s4260 + $0x34] sm:$0xf]
      %v4661 = vld [vmem:[%s4260 + $0x38] sm:$0x1]
      %v4662 = vld [vmem:[%s4260 + $0x3c] sm:$0xf]
      %v4663 = vld [vmem:[%s4260 + $0x40] sm:$0xf]
      %v4664 = vld [vmem:[%s4260 + $0x44] sm:$0x1]
      %v4665 = vld [vmem:[%s4260 + $0x48] sm:$0xf]
      %v4666 = vld [vmem:[%s4260 + $0x4c] sm:$0xf]
      %v4667 = vld [vmem:[%s4260 + $0x50] sm:$0x1]
      %v4668 = vld [vmem:[%s4260 + $0x54] sm:$0xf]
      %v4669 = vld [vmem:[%s4260 + $0x58] sm:$0xf]
      %v4670 = vld [vmem:[%s4260 + $0x5c] sm:$0x1]
      %v4671 = vld [vmem:[%s4260 + $0x60] sm:$0xf]
      %v4672 = vld [vmem:[%s4260 + $0x64] sm:$0xf]
      %v4673 = vld [vmem:[%s4260 + $0x68] sm:$0x1]
      %v4674 = vld [vmem:[%s4260 + $0x6c] sm:$0xf]
      %v4675 = vld [vmem:[%s4260 + $0x70] sm:$0xf]
      %v4676 = vld [vmem:[%s4260 + $0x74] sm:$0x1]
      %v4677 = vld [vmem:[%s4260 + $0x78] sm:$0xf]
      %v4678 = vld [vmem:[%s4260 + $0x7c] sm:$0xf]
      %v4679 = vld [vmem:[%s4260 + $0x80] sm:$0x1]
      %v4680 = vld [vmem:[%s4260 + $0x84] sm:$0xf]
      %v4681 = vld [vmem:[%s4260 + $0x88] sm:$0xf]
      %v4682 = vld [vmem:[%s4260 + $0x8c] sm:$0x1]
      %v4683 = vld [vmem:[%s4260 + $0x90] sm:$0xf]
      %v4684 = vld [vmem:[%s4260 + $0x94] sm:$0xf]
      %v4685 = vld [vmem:[%s4260 + $0x98] sm:$0x1]
      %v4686 = vld [vmem:[%s4260 + $0x9c] sm:$0xf]
      %v4687 = vld [vmem:[%s4260 + $0xa0] sm:$0xf]
      %v4688 = vld [vmem:[%s4260 + $0xa4] sm:$0x1]
      %v4689 = vld [vmem:[%s4260 + $0xa8] sm:$0xf]
      %v4690 = vld [vmem:[%s4260 + $0xac] sm:$0xf]
      %v4691 = vld [vmem:[%s4260 + $0xb0] sm:$0x1]
      %v4692 = vld [vmem:[%s4260 + $0xb4] sm:$0xf]
      %v4693 = vld [vmem:[%s4260 + $0xb8] sm:$0xf]
      %v4694 = vld [vmem:[%s4260 + $0xbc] sm:$0x1]
      %v4696 = vshrl.u32 %v4647, 16
      %v4698 = vrot.slane %v4696, 4
      %v4699 = vshll.u32 %v4647, 16
      %v4701 = vrot.slane %v4699, 5
      %v4702 = vor.u32 %v4698, %v4701
      %v4703 = vrot.slane %v4702, 4
      %v4705 = vshll.u32 %v4648, 16
      %v4707 = vrot.slane %v4705, 5
      %v4708 = vsel %vm1157, %v4703, %v4707
      %v4709 = vshrl.u32 %v4648, 16
      %v4711 = vrot.slane %v4709, 4
      %v4712 = vor.u32 %v4711, %v4707
      %v4713 = vrot.slane %v4712, 4
      %v4715 = vshll.u32 %v4649, 16
      %v4717 = vrot.slane %v4715, 5
      %v4718 = vsel %vm1157, %v4713, %v4717
      %v4720 = vshrl.u32 %v4650, 16
      %v4722 = vrot.slane %v4720, 4
      %v4723 = vshll.u32 %v4650, 16
      %v4725 = vrot.slane %v4723, 5
      %v4726 = vor.u32 %v4722, %v4725
      %v4727 = vrot.slane %v4726, 4
      %v4729 = vshll.u32 %v4651, 16
      %v4731 = vrot.slane %v4729, 5
      %v4732 = vsel %vm1157, %v4727, %v4731
      %v4733 = vshrl.u32 %v4651, 16
      %v4735 = vrot.slane %v4733, 4
      %v4736 = vor.u32 %v4735, %v4731
      %v4737 = vrot.slane %v4736, 4
      %v4739 = vshll.u32 %v4652, 16
      %v4741 = vrot.slane %v4739, 5
      %v4742 = vsel %vm1157, %v4737, %v4741
      %v4744 = vshrl.u32 %v4653, 16
      %v4746 = vrot.slane %v4744, 4
      %v4747 = vshll.u32 %v4653, 16
      %v4749 = vrot.slane %v4747, 5
      %v4750 = vor.u32 %v4746, %v4749
      %v4751 = vrot.slane %v4750, 4
      %v4753 = vshll.u32 %v4654, 16
      %v4755 = vrot.slane %v4753, 5
      %v4756 = vsel %vm1157, %v4751, %v4755
      %v4757 = vshrl.u32 %v4654, 16
      %v4759 = vrot.slane %v4757, 4
      %v4760 = vor.u32 %v4759, %v4755
      %v4761 = vrot.slane %v4760, 4
      %v4763 = vshll.u32 %v4655, 16
      %v4765 = vrot.slane %v4763, 5
      %v4766 = vsel %vm1157, %v4761, %v4765
      %v4768 = vshrl.u32 %v4656, 16
      %v4770 = vrot.slane %v4768, 4
      %v4771 = vshll.u32 %v4656, 16
      %v4773 = vrot.slane %v4771, 5
      %v4774 = vor.u32 %v4770, %v4773
      %v4775 = vrot.slane %v4774, 4
      %v4777 = vshll.u32 %v4657, 16
      %v4779 = vrot.slane %v4777, 5
      %v4780 = vsel %vm1157, %v4775, %v4779
      %v4781 = vshrl.u32 %v4657, 16
      %v4783 = vrot.slane %v4781, 4
      %v4784 = vor.u32 %v4783, %v4779
      %v4785 = vrot.slane %v4784, 4
      %v4787 = vshll.u32 %v4658, 16
      %v4789 = vrot.slane %v4787, 5
      %v4790 = vsel %vm1157, %v4785, %v4789
      %v4792 = vshrl.u32 %v4659, 16
      %v4794 = vrot.slane %v4792, 4
      %v4795 = vshll.u32 %v4659, 16
      %v4797 = vrot.slane %v4795, 5
      %v4798 = vor.u32 %v4794, %v4797
      %v4799 = vrot.slane %v4798, 4
      %v4801 = vshll.u32 %v4660, 16
      %v4803 = vrot.slane %v4801, 5
      %v4804 = vsel %vm1157, %v4799, %v4803
      %v4805 = vshrl.u32 %v4660, 16
      %v4807 = vrot.slane %v4805, 4
      %v4808 = vor.u32 %v4807, %v4803
      %v4809 = vrot.slane %v4808, 4
      %v4811 = vshll.u32 %v4661, 16
      %v4813 = vrot.slane %v4811, 5
      %v4814 = vsel %vm1157, %v4809, %v4813
      %v4816 = vshrl.u32 %v4662, 16
      %v4818 = vrot.slane %v4816, 4
      %v4819 = vshll.u32 %v4662, 16
      %v4821 = vrot.slane %v4819, 5
      %v4822 = vor.u32 %v4818, %v4821
      %v4823 = vrot.slane %v4822, 4
      %v4825 = vshll.u32 %v4663, 16
      %v4827 = vrot.slane %v4825, 5
      %v4828 = vsel %vm1157, %v4823, %v4827
      %v4829 = vshrl.u32 %v4663, 16
      %v4831 = vrot.slane %v4829, 4
      %v4832 = vor.u32 %v4831, %v4827
      %v4833 = vrot.slane %v4832, 4
      %v4835 = vshll.u32 %v4664, 16
      %v4837 = vrot.slane %v4835, 5
      %v4838 = vsel %vm1157, %v4833, %v4837
      %v4840 = vshrl.u32 %v4665, 16
      %v4842 = vrot.slane %v4840, 4
      %v4843 = vshll.u32 %v4665, 16
      %v4845 = vrot.slane %v4843, 5
      %v4846 = vor.u32 %v4842, %v4845
      %v4847 = vrot.slane %v4846, 4
      %v4849 = vshll.u32 %v4666, 16
      %v4851 = vrot.slane %v4849, 5
      %v4852 = vsel %vm1157, %v4847, %v4851
      %v4853 = vshrl.u32 %v4666, 16
      %v4855 = vrot.slane %v4853, 4
      %v4856 = vor.u32 %v4855, %v4851
      %v4857 = vrot.slane %v4856, 4
      %v4859 = vshll.u32 %v4667, 16
      %v4861 = vrot.slane %v4859, 5
      %v4862 = vsel %vm1157, %v4857, %v4861
      %v4864 = vshrl.u32 %v4668, 16
      %v4866 = vrot.slane %v4864, 4
      %v4867 = vshll.u32 %v4668, 16
      %v4869 = vrot.slane %v4867, 5
      %v4870 = vor.u32 %v4866, %v4869
      %v4871 = vrot.slane %v4870, 4
      %v4873 = vshll.u32 %v4669, 16
      %v4875 = vrot.slane %v4873, 5
      %v4876 = vsel %vm1157, %v4871, %v4875
      %v4877 = vshrl.u32 %v4669, 16
      %v4879 = vrot.slane %v4877, 4
      %v4880 = vor.u32 %v4879, %v4875
      %v4881 = vrot.slane %v4880, 4
      %v4883 = vshll.u32 %v4670, 16
      %v4885 = vrot.slane %v4883, 5
      %v4886 = vsel %vm1157, %v4881, %v4885
      %v4888 = vshrl.u32 %v4671, 16
      %v4890 = vrot.slane %v4888, 4
      %v4891 = vshll.u32 %v4671, 16
      %v4893 = vrot.slane %v4891, 5
      %v4894 = vor.u32 %v4890, %v4893
      %v4895 = vrot.slane %v4894, 4
      %v4897 = vshll.u32 %v4672, 16
      %v4899 = vrot.slane %v4897, 5
      %v4900 = vsel %vm1157, %v4895, %v4899
      %v4901 = vshrl.u32 %v4672, 16
      %v4903 = vrot.slane %v4901, 4
      %v4904 = vor.u32 %v4903, %v4899
      %v4905 = vrot.slane %v4904, 4
      %v4907 = vshll.u32 %v4673, 16
      %v4909 = vrot.slane %v4907, 5
      %v4910 = vsel %vm1157, %v4905, %v4909
      %v4912 = vshrl.u32 %v4674, 16
      %v4914 = vrot.slane %v4912, 4
      %v4915 = vshll.u32 %v4674, 16
      %v4917 = vrot.slane %v4915, 5
      %v4918 = vor.u32 %v4914, %v4917
      %v4919 = vrot.slane %v4918, 4
      %v4921 = vshll.u32 %v4675, 16
      %v4923 = vrot.slane %v4921, 5
      %v4924 = vsel %vm1157, %v4919, %v4923
      %v4925 = vshrl.u32 %v4675, 16
      %v4927 = vrot.slane %v4925, 4
      %v4928 = vor.u32 %v4927, %v4923
      %v4929 = vrot.slane %v4928, 4
      %v4931 = vshll.u32 %v4676, 16
      %v4933 = vrot.slane %v4931, 5
      %v4934 = vsel %vm1157, %v4929, %v4933
      %v4936 = vshrl.u32 %v4677, 16
      %v4938 = vrot.slane %v4936, 4
      %v4939 = vshll.u32 %v4677, 16
      %v4941 = vrot.slane %v4939, 5
      %v4942 = vor.u32 %v4938, %v4941
      %v4943 = vrot.slane %v4942, 4
      %v4945 = vshll.u32 %v4678, 16
      %v4947 = vrot.slane %v4945, 5
      %v4948 = vsel %vm1157, %v4943, %v4947
      %v4949 = vshrl.u32 %v4678, 16
      %v4951 = vrot.slane %v4949, 4
      %v4952 = vor.u32 %v4951, %v4947
      %v4953 = vrot.slane %v4952, 4
      %v4955 = vshll.u32 %v4679, 16
      %v4957 = vrot.slane %v4955, 5
      %v4958 = vsel %vm1157, %v4953, %v4957
      %v4960 = vshrl.u32 %v4680, 16
      %v4962 = vrot.slane %v4960, 4
      %v4963 = vshll.u32 %v4680, 16
      %v4965 = vrot.slane %v4963, 5
      %v4966 = vor.u32 %v4962, %v4965
      %v4967 = vrot.slane %v4966, 4
      %v4969 = vshll.u32 %v4681, 16
      %v4971 = vrot.slane %v4969, 5
      %v4972 = vsel %vm1157, %v4967, %v4971
      %v4973 = vshrl.u32 %v4681, 16
      %v4975 = vrot.slane %v4973, 4
      %v4976 = vor.u32 %v4975, %v4971
      %v4977 = vrot.slane %v4976, 4
      %v4979 = vshll.u32 %v4682, 16
      %v4981 = vrot.slane %v4979, 5
      %v4982 = vsel %vm1157, %v4977, %v4981
      %v4984 = vshrl.u32 %v4683, 16
      %v4986 = vrot.slane %v4984, 4
      %v4987 = vshll.u32 %v4683, 16
      %v4989 = vrot.slane %v4987, 5
      %v4990 = vor.u32 %v4986, %v4989
      %v4991 = vrot.slane %v4990, 4
      %v4993 = vshll.u32 %v4684, 16
      %v4995 = vrot.slane %v4993, 5
      %v4996 = vsel %vm1157, %v4991, %v4995
      %v4997 = vshrl.u32 %v4684, 16
      %v4999 = vrot.slane %v4997, 4
      %v5000 = vor.u32 %v4999, %v4995
      %v5001 = vrot.slane %v5000, 4
      %v5003 = vshll.u32 %v4685, 16
      %v5005 = vrot.slane %v5003, 5
      %v5006 = vsel %vm1157, %v5001, %v5005
      %v5008 = vshrl.u32 %v4686, 16
      %v5010 = vrot.slane %v5008, 4
      %v5011 = vshll.u32 %v4686, 16
      %v5013 = vrot.slane %v5011, 5
      %v5014 = vor.u32 %v5010, %v5013
      %v5015 = vrot.slane %v5014, 4
      %v5017 = vshll.u32 %v4687, 16
      %v5019 = vrot.slane %v5017, 5
      %v5020 = vsel %vm1157, %v5015, %v5019
      %v5021 = vshrl.u32 %v4687, 16
      %v5023 = vrot.slane %v5021, 4
      %v5024 = vor.u32 %v5023, %v5019
      %v5025 = vrot.slane %v5024, 4
      %v5027 = vshll.u32 %v4688, 16
      %v5029 = vrot.slane %v5027, 5
      %v5030 = vsel %vm1157, %v5025, %v5029
      %v5032 = vshrl.u32 %v4689, 16
      %v5034 = vrot.slane %v5032, 4
      %v5035 = vshll.u32 %v4689, 16
      %v5037 = vrot.slane %v5035, 5
      %v5038 = vor.u32 %v5034, %v5037
      %v5039 = vrot.slane %v5038, 4
      %v5041 = vshll.u32 %v4690, 16
      %v5043 = vrot.slane %v5041, 5
      %v5044 = vsel %vm1157, %v5039, %v5043
      %v5045 = vshrl.u32 %v4690, 16
      %v5047 = vrot.slane %v5045, 4
      %v5048 = vor.u32 %v5047, %v5043
      %v5049 = vrot.slane %v5048, 4
      %v5051 = vshll.u32 %v4691, 16
      %v5053 = vrot.slane %v5051, 5
      %v5054 = vsel %vm1157, %v5049, %v5053
      %v5056 = vshrl.u32 %v4692, 16
      %v5058 = vrot.slane %v5056, 4
      %v5059 = vshll.u32 %v4692, 16
      %v5061 = vrot.slane %v5059, 5
      %v5062 = vor.u32 %v5058, %v5061
      %v5063 = vrot.slane %v5062, 4
      %v5065 = vshll.u32 %v4693, 16
      %v5067 = vrot.slane %v5065, 5
      %v5068 = vsel %vm1157, %v5063, %v5067
      %v5069 = vshrl.u32 %v4693, 16
      %v5071 = vrot.slane %v5069, 4
      %v5072 = vor.u32 %v5071, %v5067
      %v5073 = vrot.slane %v5072, 4
      %v5075 = vshll.u32 %v4694, 16
      %v5077 = vrot.slane %v5075, 5
      %v5078 = vsel %vm1157, %v5073, %v5077
      %s5079 = scalar_lea.vmem %s3, 448
      %v5080 = vld [vmem:[%s5079] sm:$0xf]
      %v5081 = vld [vmem:[%s5079 + $0x4] sm:$0xf]
      %v5082 = vld [vmem:[%s5079 + $0x8] sm:$0xf]
      %v5083 = vld [vmem:[%s5079 + $0xc] sm:$0xf]
      %v5084 = vld [vmem:[%s5079 + $0x10] sm:$0xf]
      %v5085 = vld [vmem:[%s5079 + $0x14] sm:$0xf]
      %v5086 = vld [vmem:[%s5079 + $0x18] sm:$0xf]
      %v5087 = vld [vmem:[%s5079 + $0x1c] sm:$0xf]
      %v5088 = vld [vmem:[%s5079 + $0x20] sm:$0xf]
      %v5089 = vld [vmem:[%s5079 + $0x24] sm:$0xf]
      %v5090 = vld [vmem:[%s5079 + $0x28] sm:$0xf]
      %v5091 = vld [vmem:[%s5079 + $0x2c] sm:$0xf]
      %v5092 = vld [vmem:[%s5079 + $0x30] sm:$0xf]
      %v5093 = vld [vmem:[%s5079 + $0x34] sm:$0xf]
      %v5094 = vld [vmem:[%s5079 + $0x38] sm:$0xf]
      %v5095 = vld [vmem:[%s5079 + $0x3c] sm:$0xf]
      %v5096 = vunpack.c.l.b16 %v4708
      %v5097 = vunpack.c.l.b16 %v4718
      %v5098 = vunpack.c.l.b16 %v4732
      %v5099 = vunpack.c.l.b16 %v4742
      %v5100 = vunpack.c.l.b16 %v4756
      %v5101 = vunpack.c.l.b16 %v4766
      %v5102 = vunpack.c.l.b16 %v4780
      %v5103 = vunpack.c.l.b16 %v4790
      %v5104 = vunpack.c.l.b16 %v4804
      %v5105 = vunpack.c.l.b16 %v4814
      %v5106 = vunpack.c.l.b16 %v4828
      %v5107 = vunpack.c.l.b16 %v4838
      %v5108 = vunpack.c.l.b16 %v4852
      %v5109 = vunpack.c.l.b16 %v4862
      %v5110 = vunpack.c.l.b16 %v4876
      %v5111 = vunpack.c.l.b16 %v4886
      %v5112 = vunpack.c.l.b16 %v4900
      %v5113 = vunpack.c.l.b16 %v4910
      %v5114 = vunpack.c.l.b16 %v4924
      %v5115 = vunpack.c.l.b16 %v4934
      %v5116 = vunpack.c.l.b16 %v4948
      %v5117 = vunpack.c.l.b16 %v4958
      %v5118 = vunpack.c.l.b16 %v4972
      %v5119 = vunpack.c.l.b16 %v4982
      %v5120 = vunpack.c.l.b16 %v4996
      %v5121 = vunpack.c.l.b16 %v5006
      %v5122 = vunpack.c.l.b16 %v5020
      %v5123 = vunpack.c.l.b16 %v5030
      %v5124 = vunpack.c.l.b16 %v5044
      %v5125 = vunpack.c.l.b16 %v5054
      %v5126 = vunpack.c.l.b16 %v5068
      %v5127 = vunpack.c.l.b16 %v5078
      %v5128 = vpack.c.b16 %v5097, %v5096
      %v5129 = vpack.c.b16 %v5099, %v5098
      %v5130 = vpack.c.b16 %v5101, %v5100
      %v5131 = vpack.c.b16 %v5103, %v5102
      %v5132 = vpack.c.b16 %v5105, %v5104
      %v5133 = vpack.c.b16 %v5107, %v5106
      %v5134 = vpack.c.b16 %v5109, %v5108
      %v5135 = vpack.c.b16 %v5111, %v5110
      %v5136 = vpack.c.b16 %v5113, %v5112
      %v5137 = vpack.c.b16 %v5115, %v5114
      %v5138 = vpack.c.b16 %v5117, %v5116
      %v5139 = vpack.c.b16 %v5119, %v5118
      %v5140 = vpack.c.b16 %v5121, %v5120
      %v5141 = vpack.c.b16 %v5123, %v5122
      %v5142 = vpack.c.b16 %v5125, %v5124
      %v5143 = vpack.c.b16 %v5127, %v5126
      %v5176 = vunpack.c.l.b16 %v5080
      %v5177 = vunpack.c.l.b16 %v5081
      %v5178 = vunpack.c.l.b16 %v5082
      %v5179 = vunpack.c.l.b16 %v5083
      %v5180 = vunpack.c.l.b16 %v5084
      %v5181 = vunpack.c.l.b16 %v5085
      %v5182 = vunpack.c.l.b16 %v5086
      %v5183 = vunpack.c.l.b16 %v5087
      %v5184 = vunpack.c.l.b16 %v5088
      %v5185 = vunpack.c.l.b16 %v5089
      %v5186 = vunpack.c.l.b16 %v5090
      %v5187 = vunpack.c.l.b16 %v5091
      %v5188 = vunpack.c.l.b16 %v5092
      %v5189 = vunpack.c.l.b16 %v5093
      %v5190 = vunpack.c.l.b16 %v5094
      %v5191 = vunpack.c.l.b16 %v5095
      %v5192 = vpack.c.b16 %v5177, %v5176
      %v5193 = vpack.c.b16 %v5179, %v5178
      %v5194 = vpack.c.b16 %v5181, %v5180
      %v5195 = vpack.c.b16 %v5183, %v5182
      %v5196 = vpack.c.b16 %v5185, %v5184
      %v5197 = vpack.c.b16 %v5187, %v5186
      %v5198 = vpack.c.b16 %v5189, %v5188
      %v5199 = vpack.c.b16 %v5191, %v5190
      %5208 = vmatprep.subr.bf16.mxu0 0
      %5209 = vmatpush1.bf16.msra.mxu0 %v5199
      %5210 = vmatprep.subr.bf16.mxu0 0
      %5211 = vmatpush1.bf16.msra.mxu0 %v5198
      %5212 = vmatprep.subr.bf16.mxu0 0
      %5213 = vmatpush1.bf16.msra.mxu0 %v5197
      %5214 = vmatprep.subr.bf16.mxu0 0
      %5215 = vmatpush1.bf16.msra.mxu0 %v5196
      %5216 = vmatprep.subr.bf16.mxu0 0
      %5217 = vmatpush1.bf16.msra.mxu0 %v5195
      %5218 = vmatprep.subr.bf16.mxu0 0
      %5219 = vmatpush1.bf16.msra.mxu0 %v5194
      %5220 = vmatprep.subr.bf16.mxu0 0
      %5221 = vmatpush1.bf16.msra.mxu0 %v5193
      %5222 = vmatprep.subr.bf16.mxu0 0
      %5223 = vmatpush1.bf16.msra.mxu0 %v5192
      %5224 = vmatprep.subr.bf16.mxu0 0
      %5225 = vmatpush2.bf16.msra.mxu0 0
      %5226 = vmatprep.subr.bf16.mxu0 0
      %5227 = vmatpush2.bf16.msra.mxu0 0
      %5228 = vmatprep.subr.bf16.mxu0 0
      %5229 = vmatpush2.bf16.msra.mxu0 0
      %5230 = vmatprep.subr.bf16.mxu0 0
      %5231 = vmatpush2.bf16.msra.mxu0 0
      %5232 = vmatprep.subr.bf16.mxu0 0
      %5233 = vmatpush2.bf16.msra.mxu0 0
      %5234 = vmatprep.subr.bf16.mxu0 0
      %5235 = vmatpush2.bf16.msra.mxu0 0
      %5236 = vmatprep.subr.bf16.mxu0 0
      %5237 = vmatpush2.bf16.msra.mxu0 0
      %5238 = vmatprep.subr.bf16.mxu0 0
      %5239 = vmatpush2.bf16.msra.mxu0 0
      %5240 = vmatprep.mubr.bf16.mxu0 0
      %5241 = vmatmul.mubr.bf16.gmra.mxu0 %v5128
      %v5242 = vpop.f32.mrf.mxu0
      %v5243 = vadd.f32 0.0, %v5242
      %v5244 = vpop.f32.mrf.mxu0
      %v5245 = vpop.f32.mrf.mxu0
      %v5246 = vadd.f32 0.0, %v5245
      %v5247 = vpop.f32.mrf.mxu0
      %5248 = vmatprep.mubr.bf16.mxu0 0
      %5249 = vmatmul.mubr.bf16.gmra.mxu0 %v5129
      %v5250 = vpop.f32.mrf.mxu0
      %v5251 = vadd.f32 0.0, %v5250
      %v5252 = vpop.f32.mrf.mxu0
      %v5253 = vpop.f32.mrf.mxu0
      %v5254 = vadd.f32 0.0, %v5253
      %v5255 = vpop.f32.mrf.mxu0
      %5256 = vmatprep.mubr.bf16.mxu0 0
      %5257 = vmatmul.mubr.bf16.gmra.mxu0 %v5130
      %v5258 = vpop.f32.mrf.mxu0
      %v5259 = vadd.f32 0.0, %v5258
      %v5260 = vpop.f32.mrf.mxu0
      %v5261 = vpop.f32.mrf.mxu0
      %v5262 = vadd.f32 0.0, %v5261
      %v5263 = vpop.f32.mrf.mxu0
      %5264 = vmatprep.mubr.bf16.mxu0 0
      %5265 = vmatmul.mubr.bf16.gmra.mxu0 %v5131
      %v5266 = vpop.f32.mrf.mxu0
      %v5267 = vadd.f32 0.0, %v5266
      %v5268 = vpop.f32.mrf.mxu0
      %v5269 = vpop.f32.mrf.mxu0
      %v5270 = vadd.f32 0.0, %v5269
      %v5271 = vpop.f32.mrf.mxu0
      %5272 = vmatprep.mubr.bf16.mxu0 0
      %5273 = vmatmul.mubr.bf16.gmra.mxu0 %v5132
      %v5274 = vpop.f32.mrf.mxu0
      %v5275 = vadd.f32 0.0, %v5274
      %v5276 = vpop.f32.mrf.mxu0
      %v5277 = vpop.f32.mrf.mxu0
      %v5278 = vadd.f32 0.0, %v5277
      %v5279 = vpop.f32.mrf.mxu0
      %5280 = vmatprep.mubr.bf16.mxu0 0
      %5281 = vmatmul.mubr.bf16.gmra.mxu0 %v5133
      %v5282 = vpop.f32.mrf.mxu0
      %v5283 = vadd.f32 0.0, %v5282
      %v5284 = vpop.f32.mrf.mxu0
      %v5285 = vpop.f32.mrf.mxu0
      %v5286 = vadd.f32 0.0, %v5285
      %v5287 = vpop.f32.mrf.mxu0
      %5288 = vmatprep.mubr.bf16.mxu0 0
      %5289 = vmatmul.mubr.bf16.gmra.mxu0 %v5134
      %v5290 = vpop.f32.mrf.mxu0
      %v5291 = vadd.f32 0.0, %v5290
      %v5292 = vpop.f32.mrf.mxu0
      %v5293 = vpop.f32.mrf.mxu0
      %v5294 = vadd.f32 0.0, %v5293
      %v5295 = vpop.f32.mrf.mxu0
      %5296 = vmatprep.mubr.bf16.mxu0 0
      %5297 = vmatmul.mubr.bf16.gmra.mxu0 %v5135
      %v5298 = vpop.f32.mrf.mxu0
      %v5299 = vadd.f32 0.0, %v5298
      %v5300 = vpop.f32.mrf.mxu0
      %v5301 = vpop.f32.mrf.mxu0
      %v5302 = vadd.f32 0.0, %v5301
      %v5303 = vpop.f32.mrf.mxu0
      %5304 = vmatprep.mubr.bf16.mxu0 0
      %5305 = vmatmul.mubr.bf16.gmra.mxu0 %v5136
      %v5306 = vpop.f32.mrf.mxu0
      %v5307 = vadd.f32 0.0, %v5306
      %v5308 = vpop.f32.mrf.mxu0
      %v5309 = vpop.f32.mrf.mxu0
      %v5310 = vadd.f32 0.0, %v5309
      %v5311 = vpop.f32.mrf.mxu0
      %5312 = vmatprep.mubr.bf16.mxu0 0
      %5313 = vmatmul.mubr.bf16.gmra.mxu0 %v5137
      %v5314 = vpop.f32.mrf.mxu0
      %v5315 = vadd.f32 0.0, %v5314
      %v5316 = vpop.f32.mrf.mxu0
      %v5317 = vpop.f32.mrf.mxu0
      %v5318 = vadd.f32 0.0, %v5317
      %v5319 = vpop.f32.mrf.mxu0
      %5320 = vmatprep.mubr.bf16.mxu0 0
      %5321 = vmatmul.mubr.bf16.gmra.mxu0 %v5138
      %v5322 = vpop.f32.mrf.mxu0
      %v5323 = vadd.f32 0.0, %v5322
      %v5324 = vpop.f32.mrf.mxu0
      %v5325 = vpop.f32.mrf.mxu0
      %v5326 = vadd.f32 0.0, %v5325
      %v5327 = vpop.f32.mrf.mxu0
      %5328 = vmatprep.mubr.bf16.mxu0 0
      %5329 = vmatmul.mubr.bf16.gmra.mxu0 %v5139
      %v5330 = vpop.f32.mrf.mxu0
      %v5331 = vadd.f32 0.0, %v5330
      %v5332 = vpop.f32.mrf.mxu0
      %v5333 = vpop.f32.mrf.mxu0
      %v5334 = vadd.f32 0.0, %v5333
      %v5335 = vpop.f32.mrf.mxu0
      %5336 = vmatprep.mubr.bf16.mxu0 0
      %5337 = vmatmul.mubr.bf16.gmra.mxu0 %v5140
      %v5338 = vpop.f32.mrf.mxu0
      %v5339 = vadd.f32 0.0, %v5338
      %v5340 = vpop.f32.mrf.mxu0
      %v5341 = vpop.f32.mrf.mxu0
      %v5342 = vadd.f32 0.0, %v5341
      %v5343 = vpop.f32.mrf.mxu0
      %5344 = vmatprep.mubr.bf16.mxu0 0
      %5345 = vmatmul.mubr.bf16.gmra.mxu0 %v5141
      %v5346 = vpop.f32.mrf.mxu0
      %v5347 = vadd.f32 0.0, %v5346
      %v5348 = vpop.f32.mrf.mxu0
      %v5349 = vpop.f32.mrf.mxu0
      %v5350 = vadd.f32 0.0, %v5349
      %v5351 = vpop.f32.mrf.mxu0
      %5352 = vmatprep.mubr.bf16.mxu0 0
      %5353 = vmatmul.mubr.bf16.gmra.mxu0 %v5142
      %v5354 = vpop.f32.mrf.mxu0
      %v5355 = vadd.f32 0.0, %v5354
      %v5356 = vpop.f32.mrf.mxu0
      %v5357 = vpop.f32.mrf.mxu0
      %v5358 = vadd.f32 0.0, %v5357
      %v5359 = vpop.f32.mrf.mxu0
      %5360 = vmatprep.mubr.bf16.mxu0 0
      %5361 = vmatmul.mubr.bf16.gmra.mxu0 %v5143
      %v5362 = vpop.f32.mrf.mxu0
      %v5363 = vadd.f32 0.0, %v5362
      %v5364 = vpop.f32.mrf.mxu0
      %v5365 = vpop.f32.mrf.mxu0
      %v5366 = vadd.f32 0.0, %v5365
      %v5367 = vpop.f32.mrf.mxu0
      %5368 = vdwg.mxu0
      %v5369 = vadd.f32 %v4615, %v5243
      %v5370 = vadd.f32 %v4616, %v5246
      %v5371 = vadd.f32 %v4617, %v5251
      %v5372 = vadd.f32 %v4618, %v5254
      %v5373 = vadd.f32 %v4619, %v5259
      %v5374 = vadd.f32 %v4620, %v5262
      %v5375 = vadd.f32 %v4621, %v5267
      %v5376 = vadd.f32 %v4622, %v5270
      %v5377 = vadd.f32 %v4623, %v5275
      %v5378 = vadd.f32 %v4624, %v5278
      %v5379 = vadd.f32 %v4625, %v5283
      %v5380 = vadd.f32 %v4626, %v5286
      %v5381 = vadd.f32 %v4627, %v5291
      %v5382 = vadd.f32 %v4628, %v5294
      %v5383 = vadd.f32 %v4629, %v5299
      %v5384 = vadd.f32 %v4630, %v5302
      %v5385 = vadd.f32 %v4631, %v5307
      %v5386 = vadd.f32 %v4632, %v5310
      %v5387 = vadd.f32 %v4633, %v5315
      %v5388 = vadd.f32 %v4634, %v5318
      %v5389 = vadd.f32 %v4635, %v5323
      %v5390 = vadd.f32 %v4636, %v5326
      %v5391 = vadd.f32 %v4637, %v5331
      %v5392 = vadd.f32 %v4638, %v5334
      %v5393 = vadd.f32 %v4639, %v5339
      %v5394 = vadd.f32 %v4640, %v5342
      %v5395 = vadd.f32 %v4641, %v5347
      %v5396 = vadd.f32 %v4642, %v5350
      %v5397 = vadd.f32 %v4643, %v5355
      %v5398 = vadd.f32 %v4644, %v5358
      %v5399 = vadd.f32 %v4645, %v5363
      %v5400 = vadd.f32 %v4646, %v5366
      %v5401 = vld [vmem:[%s4260] sm:$0xe]
      %v5402 = vld [vmem:[%s4260 + $0xc] sm:$0xe]
      %v5403 = vld [vmem:[%s4260 + $0x18] sm:$0xe]
      %v5404 = vld [vmem:[%s4260 + $0x24] sm:$0xe]
      %v5405 = vld [vmem:[%s4260 + $0x30] sm:$0xe]
      %v5406 = vld [vmem:[%s4260 + $0x3c] sm:$0xe]
      %v5407 = vld [vmem:[%s4260 + $0x48] sm:$0xe]
      %v5408 = vld [vmem:[%s4260 + $0x54] sm:$0xe]
      %v5409 = vld [vmem:[%s4260 + $0x60] sm:$0xe]
      %v5410 = vld [vmem:[%s4260 + $0x6c] sm:$0xe]
      %v5411 = vld [vmem:[%s4260 + $0x78] sm:$0xe]
      %v5412 = vld [vmem:[%s4260 + $0x84] sm:$0xe]
      %v5413 = vld [vmem:[%s4260 + $0x90] sm:$0xe]
      %v5414 = vld [vmem:[%s4260 + $0x9c] sm:$0xe]
      %v5415 = vld [vmem:[%s4260 + $0xa8] sm:$0xe]
      %v5416 = vld [vmem:[%s4260 + $0xb4] sm:$0xe]
      %v5465 = vrot.slane %v5401, 5
      %v5466 = vrot.slane %v5465, 4
      %v5467 = vrot.slane %v4648, 5
      %v5468 = vsel %vm2187, %v5466, %v5467
      %v5469 = vrot.slane %v5467, 4
      %v5470 = vrot.slane %v4649, 5
      %v5471 = vsel %vm2187, %v5469, %v5470
      %v5472 = vrot.slane %v5402, 5
      %v5473 = vrot.slane %v5472, 4
      %v5474 = vrot.slane %v4651, 5
      %v5475 = vsel %vm2187, %v5473, %v5474
      %v5476 = vrot.slane %v5474, 4
      %v5477 = vrot.slane %v4652, 5
      %v5478 = vsel %vm2187, %v5476, %v5477
      %v5479 = vrot.slane %v5403, 5
      %v5480 = vrot.slane %v5479, 4
      %v5481 = vrot.slane %v4654, 5
      %v5482 = vsel %vm2187, %v5480, %v5481
      %v5483 = vrot.slane %v5481, 4
      %v5484 = vrot.slane %v4655, 5
      %v5485 = vsel %vm2187, %v5483, %v5484
      %v5486 = vrot.slane %v5404, 5
      %v5487 = vrot.slane %v5486, 4
      %v5488 = vrot.slane %v4657, 5
      %v5489 = vsel %vm2187, %v5487, %v5488
      %v5490 = vrot.slane %v5488, 4
      %v5491 = vrot.slane %v4658, 5
      %v5492 = vsel %vm2187, %v5490, %v5491
      %v5493 = vrot.slane %v5405, 5
      %v5494 = vrot.slane %v5493, 4
      %v5495 = vrot.slane %v4660, 5
      %v5496 = vsel %vm2187, %v5494, %v5495
      %v5497 = vrot.slane %v5495, 4
      %v5498 = vrot.slane %v4661, 5
      %v5499 = vsel %vm2187, %v5497, %v5498
      %v5500 = vrot.slane %v5406, 5
      %v5501 = vrot.slane %v5500, 4
      %v5502 = vrot.slane %v4663, 5
      %v5503 = vsel %vm2187, %v5501, %v5502
      %v5504 = vrot.slane %v5502, 4
      %v5505 = vrot.slane %v4664, 5
      %v5506 = vsel %vm2187, %v5504, %v5505
      %v5507 = vrot.slane %v5407, 5
      %v5508 = vrot.slane %v5507, 4
      %v5509 = vrot.slane %v4666, 5
      %v5510 = vsel %vm2187, %v5508, %v5509
      %v5511 = vrot.slane %v5509, 4
      %v5512 = vrot.slane %v4667, 5
      %v5513 = vsel %vm2187, %v5511, %v5512
      %v5514 = vrot.slane %v5408, 5
      %v5515 = vrot.slane %v5514, 4
      %v5516 = vrot.slane %v4669, 5
      %v5517 = vsel %vm2187, %v5515, %v5516
      %v5518 = vrot.slane %v5516, 4
      %v5519 = vrot.slane %v4670, 5
      %v5520 = vsel %vm2187, %v5518, %v5519
      %v5521 = vrot.slane %v5409, 5
      %v5522 = vrot.slane %v5521, 4
      %v5523 = vrot.slane %v4672, 5
      %v5524 = vsel %vm2187, %v5522, %v5523
      %v5525 = vrot.slane %v5523, 4
      %v5526 = vrot.slane %v4673, 5
      %v5527 = vsel %vm2187, %v5525, %v5526
      %v5528 = vrot.slane %v5410, 5
      %v5529 = vrot.slane %v5528, 4
      %v5530 = vrot.slane %v4675, 5
      %v5531 = vsel %vm2187, %v5529, %v5530
      %v5532 = vrot.slane %v5530, 4
      %v5533 = vrot.slane %v4676, 5
      %v5534 = vsel %vm2187, %v5532, %v5533
      %v5535 = vrot.slane %v5411, 5
      %v5536 = vrot.slane %v5535, 4
      %v5537 = vrot.slane %v4678, 5
      %v5538 = vsel %vm2187, %v5536, %v5537
      %v5539 = vrot.slane %v5537, 4
      %v5540 = vrot.slane %v4679, 5
      %v5541 = vsel %vm2187, %v5539, %v5540
      %v5542 = vrot.slane %v5412, 5
      %v5543 = vrot.slane %v5542, 4
      %v5544 = vrot.slane %v4681, 5
      %v5545 = vsel %vm2187, %v5543, %v5544
      %v5546 = vrot.slane %v5544, 4
      %v5547 = vrot.slane %v4682, 5
      %v5548 = vsel %vm2187, %v5546, %v5547
      %v5549 = vrot.slane %v5413, 5
      %v5550 = vrot.slane %v5549, 4
      %v5551 = vrot.slane %v4684, 5
      %v5552 = vsel %vm2187, %v5550, %v5551
      %v5553 = vrot.slane %v5551, 4
      %v5554 = vrot.slane %v4685, 5
      %v5555 = vsel %vm2187, %v5553, %v5554
      %v5556 = vrot.slane %v5414, 5
      %v5557 = vrot.slane %v5556, 4
      %v5558 = vrot.slane %v4687, 5
      %v5559 = vsel %vm2187, %v5557, %v5558
      %v5560 = vrot.slane %v5558, 4
      %v5561 = vrot.slane %v4688, 5
      %v5562 = vsel %vm2187, %v5560, %v5561
      %v5563 = vrot.slane %v5415, 5
      %v5564 = vrot.slane %v5563, 4
      %v5565 = vrot.slane %v4690, 5
      %v5566 = vsel %vm2187, %v5564, %v5565
      %v5567 = vrot.slane %v5565, 4
      %v5568 = vrot.slane %v4691, 5
      %v5569 = vsel %vm2187, %v5567, %v5568
      %v5570 = vrot.slane %v5416, 5
      %v5571 = vrot.slane %v5570, 4
      %v5572 = vrot.slane %v4693, 5
      %v5573 = vsel %vm2187, %v5571, %v5572
      %v5574 = vrot.slane %v5572, 4
      %v5575 = vrot.slane %v4694, 5
      %v5576 = vsel %vm2187, %v5574, %v5575
      %s5577 = scalar_lea.vmem %s3, 512
      %v5578 = vld [vmem:[%s5577] sm:$0xf]
      %v5579 = vld [vmem:[%s5577 + $0x4] sm:$0xf]
      %v5580 = vld [vmem:[%s5577 + $0x8] sm:$0xf]
      %v5581 = vld [vmem:[%s5577 + $0xc] sm:$0xf]
      %v5582 = vld [vmem:[%s5577 + $0x10] sm:$0xf]
      %v5583 = vld [vmem:[%s5577 + $0x14] sm:$0xf]
      %v5584 = vld [vmem:[%s5577 + $0x18] sm:$0xf]
      %v5585 = vld [vmem:[%s5577 + $0x1c] sm:$0xf]
      %v5586 = vld [vmem:[%s5577 + $0x20] sm:$0xf]
      %v5587 = vld [vmem:[%s5577 + $0x24] sm:$0xf]
      %v5588 = vld [vmem:[%s5577 + $0x28] sm:$0xf]
      %v5589 = vld [vmem:[%s5577 + $0x2c] sm:$0xf]
      %v5590 = vld [vmem:[%s5577 + $0x30] sm:$0xf]
      %v5591 = vld [vmem:[%s5577 + $0x34] sm:$0xf]
      %v5592 = vld [vmem:[%s5577 + $0x38] sm:$0xf]
      %v5593 = vld [vmem:[%s5577 + $0x3c] sm:$0xf]
      %v5594 = vunpack.c.l.b16 %v5468
      %v5595 = vunpack.c.l.b16 %v5471
      %v5596 = vunpack.c.l.b16 %v5475
      %v5597 = vunpack.c.l.b16 %v5478
      %v5598 = vunpack.c.l.b16 %v5482
      %v5599 = vunpack.c.l.b16 %v5485
      %v5600 = vunpack.c.l.b16 %v5489
      %v5601 = vunpack.c.l.b16 %v5492
      %v5602 = vunpack.c.l.b16 %v5496
      %v5603 = vunpack.c.l.b16 %v5499
      %v5604 = vunpack.c.l.b16 %v5503
      %v5605 = vunpack.c.l.b16 %v5506
      %v5606 = vunpack.c.l.b16 %v5510
      %v5607 = vunpack.c.l.b16 %v5513
      %v5608 = vunpack.c.l.b16 %v5517
      %v5609 = vunpack.c.l.b16 %v5520
      %v5610 = vunpack.c.l.b16 %v5524
      %v5611 = vunpack.c.l.b16 %v5527
      %v5612 = vunpack.c.l.b16 %v5531
      %v5613 = vunpack.c.l.b16 %v5534
      %v5614 = vunpack.c.l.b16 %v5538
      %v5615 = vunpack.c.l.b16 %v5541
      %v5616 = vunpack.c.l.b16 %v5545
      %v5617 = vunpack.c.l.b16 %v5548
      %v5618 = vunpack.c.l.b16 %v5552
      %v5619 = vunpack.c.l.b16 %v5555
      %v5620 = vunpack.c.l.b16 %v5559
      %v5621 = vunpack.c.l.b16 %v5562
      %v5622 = vunpack.c.l.b16 %v5566
      %v5623 = vunpack.c.l.b16 %v5569
      %v5624 = vunpack.c.l.b16 %v5573
      %v5625 = vunpack.c.l.b16 %v5576
      %v5626 = vpack.c.b16 %v5595, %v5594
      %v5627 = vpack.c.b16 %v5597, %v5596
      %v5628 = vpack.c.b16 %v5599, %v5598
      %v5629 = vpack.c.b16 %v5601, %v5600
      %v5630 = vpack.c.b16 %v5603, %v5602
      %v5631 = vpack.c.b16 %v5605, %v5604
      %v5632 = vpack.c.b16 %v5607, %v5606
      %v5633 = vpack.c.b16 %v5609, %v5608
      %v5634 = vpack.c.b16 %v5611, %v5610
      %v5635 = vpack.c.b16 %v5613, %v5612
      %v5636 = vpack.c.b16 %v5615, %v5614
      %v5637 = vpack.c.b16 %v5617, %v5616
      %v5638 = vpack.c.b16 %v5619, %v5618
      %v5639 = vpack.c.b16 %v5621, %v5620
      %v5640 = vpack.c.b16 %v5623, %v5622
      %v5641 = vpack.c.b16 %v5625, %v5624
      %v5674 = vunpack.c.l.b16 %v5578
      %v5675 = vunpack.c.l.b16 %v5579
      %v5676 = vunpack.c.l.b16 %v5580
      %v5677 = vunpack.c.l.b16 %v5581
      %v5678 = vunpack.c.l.b16 %v5582
      %v5679 = vunpack.c.l.b16 %v5583
      %v5680 = vunpack.c.l.b16 %v5584
      %v5681 = vunpack.c.l.b16 %v5585
      %v5682 = vunpack.c.l.b16 %v5586
      %v5683 = vunpack.c.l.b16 %v5587
      %v5684 = vunpack.c.l.b16 %v5588
      %v5685 = vunpack.c.l.b16 %v5589
      %v5686 = vunpack.c.l.b16 %v5590
      %v5687 = vunpack.c.l.b16 %v5591
      %v5688 = vunpack.c.l.b16 %v5592
      %v5689 = vunpack.c.l.b16 %v5593
      %v5690 = vpack.c.b16 %v5675, %v5674
      %v5691 = vpack.c.b16 %v5677, %v5676
      %v5692 = vpack.c.b16 %v5679, %v5678
      %v5693 = vpack.c.b16 %v5681, %v5680
      %v5694 = vpack.c.b16 %v5683, %v5682
      %v5695 = vpack.c.b16 %v5685, %v5684
      %v5696 = vpack.c.b16 %v5687, %v5686
      %v5697 = vpack.c.b16 %v5689, %v5688
      %5706 = vmatprep.subr.bf16.mxu0 0
      %5707 = vmatpush1.bf16.msra.mxu0 %v5697
      %5708 = vmatprep.subr.bf16.mxu0 0
      %5709 = vmatpush1.bf16.msra.mxu0 %v5696
      %5710 = vmatprep.subr.bf16.mxu0 0
      %5711 = vmatpush1.bf16.msra.mxu0 %v5695
      %5712 = vmatprep.subr.bf16.mxu0 0
      %5713 = vmatpush1.bf16.msra.mxu0 %v5694
      %5714 = vmatprep.subr.bf16.mxu0 0
      %5715 = vmatpush1.bf16.msra.mxu0 %v5693
      %5716 = vmatprep.subr.bf16.mxu0 0
      %5717 = vmatpush1.bf16.msra.mxu0 %v5692
      %5718 = vmatprep.subr.bf16.mxu0 0
      %5719 = vmatpush1.bf16.msra.mxu0 %v5691
      %5720 = vmatprep.subr.bf16.mxu0 0
      %5721 = vmatpush1.bf16.msra.mxu0 %v5690
      %5722 = vmatprep.subr.bf16.mxu0 0
      %5723 = vmatpush2.bf16.msra.mxu0 0
      %5724 = vmatprep.subr.bf16.mxu0 0
      %5725 = vmatpush2.bf16.msra.mxu0 0
      %5726 = vmatprep.subr.bf16.mxu0 0
      %5727 = vmatpush2.bf16.msra.mxu0 0
      %5728 = vmatprep.subr.bf16.mxu0 0
      %5729 = vmatpush2.bf16.msra.mxu0 0
      %5730 = vmatprep.subr.bf16.mxu0 0
      %5731 = vmatpush2.bf16.msra.mxu0 0
      %5732 = vmatprep.subr.bf16.mxu0 0
      %5733 = vmatpush2.bf16.msra.mxu0 0
      %5734 = vmatprep.subr.bf16.mxu0 0
      %5735 = vmatpush2.bf16.msra.mxu0 0
      %5736 = vmatprep.subr.bf16.mxu0 0
      %5737 = vmatpush2.bf16.msra.mxu0 0
      %5738 = vmatprep.mubr.bf16.mxu0 0
      %5739 = vmatmul.mubr.bf16.gmra.mxu0 %v5626
      %v5740 = vpop.f32.mrf.mxu0
      %v5741 = vadd.f32 0.0, %v5740
      %v5742 = vpop.f32.mrf.mxu0
      %v5743 = vpop.f32.mrf.mxu0
      %v5744 = vadd.f32 0.0, %v5743
      %v5745 = vpop.f32.mrf.mxu0
      %5746 = vmatprep.mubr.bf16.mxu0 0
      %5747 = vmatmul.mubr.bf16.gmra.mxu0 %v5627
      %v5748 = vpop.f32.mrf.mxu0
      %v5749 = vadd.f32 0.0, %v5748
      %v5750 = vpop.f32.mrf.mxu0
      %v5751 = vpop.f32.mrf.mxu0
      %v5752 = vadd.f32 0.0, %v5751
      %v5753 = vpop.f32.mrf.mxu0
      %5754 = vmatprep.mubr.bf16.mxu0 0
      %5755 = vmatmul.mubr.bf16.gmra.mxu0 %v5628
      %v5756 = vpop.f32.mrf.mxu0
      %v5757 = vadd.f32 0.0, %v5756
      %v5758 = vpop.f32.mrf.mxu0
      %v5759 = vpop.f32.mrf.mxu0
      %v5760 = vadd.f32 0.0, %v5759
      %v5761 = vpop.f32.mrf.mxu0
      %5762 = vmatprep.mubr.bf16.mxu0 0
      %5763 = vmatmul.mubr.bf16.gmra.mxu0 %v5629
      %v5764 = vpop.f32.mrf.mxu0
      %v5765 = vadd.f32 0.0, %v5764
      %v5766 = vpop.f32.mrf.mxu0
      %v5767 = vpop.f32.mrf.mxu0
      %v5768 = vadd.f32 0.0, %v5767
      %v5769 = vpop.f32.mrf.mxu0
      %5770 = vmatprep.mubr.bf16.mxu0 0
      %5771 = vmatmul.mubr.bf16.gmra.mxu0 %v5630
      %v5772 = vpop.f32.mrf.mxu0
      %v5773 = vadd.f32 0.0, %v5772
      %v5774 = vpop.f32.mrf.mxu0
      %v5775 = vpop.f32.mrf.mxu0
      %v5776 = vadd.f32 0.0, %v5775
      %v5777 = vpop.f32.mrf.mxu0
      %5778 = vmatprep.mubr.bf16.mxu0 0
      %5779 = vmatmul.mubr.bf16.gmra.mxu0 %v5631
      %v5780 = vpop.f32.mrf.mxu0
      %v5781 = vadd.f32 0.0, %v5780
      %v5782 = vpop.f32.mrf.mxu0
      %v5783 = vpop.f32.mrf.mxu0
      %v5784 = vadd.f32 0.0, %v5783
      %v5785 = vpop.f32.mrf.mxu0
      %5786 = vmatprep.mubr.bf16.mxu0 0
      %5787 = vmatmul.mubr.bf16.gmra.mxu0 %v5632
      %v5788 = vpop.f32.mrf.mxu0
      %v5789 = vadd.f32 0.0, %v5788
      %v5790 = vpop.f32.mrf.mxu0
      %v5791 = vpop.f32.mrf.mxu0
      %v5792 = vadd.f32 0.0, %v5791
      %v5793 = vpop.f32.mrf.mxu0
      %5794 = vmatprep.mubr.bf16.mxu0 0
      %5795 = vmatmul.mubr.bf16.gmra.mxu0 %v5633
      %v5796 = vpop.f32.mrf.mxu0
      %v5797 = vadd.f32 0.0, %v5796
      %v5798 = vpop.f32.mrf.mxu0
      %v5799 = vpop.f32.mrf.mxu0
      %v5800 = vadd.f32 0.0, %v5799
      %v5801 = vpop.f32.mrf.mxu0
      %5802 = vmatprep.mubr.bf16.mxu0 0
      %5803 = vmatmul.mubr.bf16.gmra.mxu0 %v5634
      %v5804 = vpop.f32.mrf.mxu0
      %v5805 = vadd.f32 0.0, %v5804
      %v5806 = vpop.f32.mrf.mxu0
      %v5807 = vpop.f32.mrf.mxu0
      %v5808 = vadd.f32 0.0, %v5807
      %v5809 = vpop.f32.mrf.mxu0
      %5810 = vmatprep.mubr.bf16.mxu0 0
      %5811 = vmatmul.mubr.bf16.gmra.mxu0 %v5635
      %v5812 = vpop.f32.mrf.mxu0
      %v5813 = vadd.f32 0.0, %v5812
      %v5814 = vpop.f32.mrf.mxu0
      %v5815 = vpop.f32.mrf.mxu0
      %v5816 = vadd.f32 0.0, %v5815
      %v5817 = vpop.f32.mrf.mxu0
      %5818 = vmatprep.mubr.bf16.mxu0 0
      %5819 = vmatmul.mubr.bf16.gmra.mxu0 %v5636
      %v5820 = vpop.f32.mrf.mxu0
      %v5821 = vadd.f32 0.0, %v5820
      %v5822 = vpop.f32.mrf.mxu0
      %v5823 = vpop.f32.mrf.mxu0
      %v5824 = vadd.f32 0.0, %v5823
      %v5825 = vpop.f32.mrf.mxu0
      %5826 = vmatprep.mubr.bf16.mxu0 0
      %5827 = vmatmul.mubr.bf16.gmra.mxu0 %v5637
      %v5828 = vpop.f32.mrf.mxu0
      %v5829 = vadd.f32 0.0, %v5828
      %v5830 = vpop.f32.mrf.mxu0
      %v5831 = vpop.f32.mrf.mxu0
      %v5832 = vadd.f32 0.0, %v5831
      %v5833 = vpop.f32.mrf.mxu0
      %5834 = vmatprep.mubr.bf16.mxu0 0
      %5835 = vmatmul.mubr.bf16.gmra.mxu0 %v5638
      %v5836 = vpop.f32.mrf.mxu0
      %v5837 = vadd.f32 0.0, %v5836
      %v5838 = vpop.f32.mrf.mxu0
      %v5839 = vpop.f32.mrf.mxu0
      %v5840 = vadd.f32 0.0, %v5839
      %v5841 = vpop.f32.mrf.mxu0
      %5842 = vmatprep.mubr.bf16.mxu0 0
      %5843 = vmatmul.mubr.bf16.gmra.mxu0 %v5639
      %v5844 = vpop.f32.mrf.mxu0
      %v5845 = vadd.f32 0.0, %v5844
      %v5846 = vpop.f32.mrf.mxu0
      %v5847 = vpop.f32.mrf.mxu0
      %v5848 = vadd.f32 0.0, %v5847
      %v5849 = vpop.f32.mrf.mxu0
      %5850 = vmatprep.mubr.bf16.mxu0 0
      %5851 = vmatmul.mubr.bf16.gmra.mxu0 %v5640
      %v5852 = vpop.f32.mrf.mxu0
      %v5853 = vadd.f32 0.0, %v5852
      %v5854 = vpop.f32.mrf.mxu0
      %v5855 = vpop.f32.mrf.mxu0
      %v5856 = vadd.f32 0.0, %v5855
      %v5857 = vpop.f32.mrf.mxu0
      %5858 = vmatprep.mubr.bf16.mxu0 0
      %5859 = vmatmul.mubr.bf16.gmra.mxu0 %v5641
      %v5860 = vpop.f32.mrf.mxu0
      %v5861 = vadd.f32 0.0, %v5860
      %v5862 = vpop.f32.mrf.mxu0
      %v5863 = vpop.f32.mrf.mxu0
      %v5864 = vadd.f32 0.0, %v5863
      %v5865 = vpop.f32.mrf.mxu0
      %5866 = vdwg.mxu0
      %v5867 = vadd.f32 %v5369, %v5741
      %v5868 = vadd.f32 %v5370, %v5744
      %v5869 = vadd.f32 %v5371, %v5749
      %v5870 = vadd.f32 %v5372, %v5752
      %v5871 = vadd.f32 %v5373, %v5757
      %v5872 = vadd.f32 %v5374, %v5760
      %v5873 = vadd.f32 %v5375, %v5765
      %v5874 = vadd.f32 %v5376, %v5768
      %v5875 = vadd.f32 %v5377, %v5773
      %v5876 = vadd.f32 %v5378, %v5776
      %v5877 = vadd.f32 %v5379, %v5781
      %v5878 = vadd.f32 %v5380, %v5784
      %v5879 = vadd.f32 %v5381, %v5789
      %v5880 = vadd.f32 %v5382, %v5792
      %v5881 = vadd.f32 %v5383, %v5797
      %v5882 = vadd.f32 %v5384, %v5800
      %v5883 = vadd.f32 %v5385, %v5805
      %v5884 = vadd.f32 %v5386, %v5808
      %v5885 = vadd.f32 %v5387, %v5813
      %v5886 = vadd.f32 %v5388, %v5816
      %v5887 = vadd.f32 %v5389, %v5821
      %v5888 = vadd.f32 %v5390, %v5824
      %v5889 = vadd.f32 %v5391, %v5829
      %v5890 = vadd.f32 %v5392, %v5832
      %v5891 = vadd.f32 %v5393, %v5837
      %v5892 = vadd.f32 %v5394, %v5840
      %v5893 = vadd.f32 %v5395, %v5845
      %v5894 = vadd.f32 %v5396, %v5848
      %v5895 = vadd.f32 %v5397, %v5853
      %v5896 = vadd.f32 %v5398, %v5856
      %v5897 = vadd.f32 %v5399, %v5861
      %v5898 = vadd.f32 %v5400, %v5864
      %v5899 = vld [vmem:[%s4] sm:$0x1]
      %v5901 = vlaneseq
      %v5902 = vshrl.u32 %v5901, 7
      %v5903 = vsub.s32 0, %v5902
      %v5904 = vrot.slane %v5899, %v5903
      %v5906 = vadd.f32 %v5867, %v5904
      %v5907 = vadd.f32 %v5868, %v5904
      %v5908 = vadd.f32 %v5869, %v5904
      %v5909 = vadd.f32 %v5870, %v5904
      %v5910 = vadd.f32 %v5871, %v5904
      %v5911 = vadd.f32 %v5872, %v5904
      %v5912 = vadd.f32 %v5873, %v5904
      %v5913 = vadd.f32 %v5874, %v5904
      %v5914 = vadd.f32 %v5875, %v5904
      %v5915 = vadd.f32 %v5876, %v5904
      %v5916 = vadd.f32 %v5877, %v5904
      %v5917 = vadd.f32 %v5878, %v5904
      %v5918 = vadd.f32 %v5879, %v5904
      %v5919 = vadd.f32 %v5880, %v5904
      %v5920 = vadd.f32 %v5881, %v5904
      %v5921 = vadd.f32 %v5882, %v5904
      %v5922 = vadd.f32 %v5883, %v5904
      %v5923 = vadd.f32 %v5884, %v5904
      %v5924 = vadd.f32 %v5885, %v5904
      %v5925 = vadd.f32 %v5886, %v5904
      %v5926 = vadd.f32 %v5887, %v5904
      %v5927 = vadd.f32 %v5888, %v5904
      %v5928 = vadd.f32 %v5889, %v5904
      %v5929 = vadd.f32 %v5890, %v5904
      %v5930 = vadd.f32 %v5891, %v5904
      %v5931 = vadd.f32 %v5892, %v5904
      %v5932 = vadd.f32 %v5893, %v5904
      %v5933 = vadd.f32 %v5894, %v5904
      %v5934 = vadd.f32 %v5895, %v5904
      %v5935 = vadd.f32 %v5896, %v5904
      %v5936 = vadd.f32 %v5897, %v5904
      %v5937 = vadd.f32 %v5898, %v5904
      %v5938 = vpack.c.bf16 %v5907, %v5906
      %v5939 = vpack.c.bf16 %v5909, %v5908
      %v5940 = vpack.c.bf16 %v5911, %v5910
      %v5941 = vpack.c.bf16 %v5913, %v5912
      %v5942 = vpack.c.bf16 %v5915, %v5914
      %v5943 = vpack.c.bf16 %v5917, %v5916
      %v5944 = vpack.c.bf16 %v5919, %v5918
      %v5945 = vpack.c.bf16 %v5921, %v5920
      %v5946 = vpack.c.bf16 %v5923, %v5922
      %v5947 = vpack.c.bf16 %v5925, %v5924
      %v5948 = vpack.c.bf16 %v5927, %v5926
      %v5949 = vpack.c.bf16 %v5929, %v5928
      %v5950 = vpack.c.bf16 %v5931, %v5930
      %v5951 = vpack.c.bf16 %v5933, %v5932
      %v5952 = vpack.c.bf16 %v5935, %v5934
      %v5953 = vpack.c.bf16 %v5937, %v5936
      %v5970 = vunpack.c.l.b16 %v5938
      %v5971 = vunpack.c.h.b16 %v5938
      %v5972 = vunpack.c.l.b16 %v5939
      %v5973 = vunpack.c.h.b16 %v5939
      %v5974 = vunpack.c.l.b16 %v5940
      %v5975 = vunpack.c.h.b16 %v5940
      %v5976 = vunpack.c.l.b16 %v5941
      %v5977 = vunpack.c.h.b16 %v5941
      %v5978 = vunpack.c.l.b16 %v5942
      %v5979 = vunpack.c.h.b16 %v5942
      %v5980 = vunpack.c.l.b16 %v5943
      %v5981 = vunpack.c.h.b16 %v5943
      %v5982 = vunpack.c.l.b16 %v5944
      %v5983 = vunpack.c.h.b16 %v5944
      %v5984 = vunpack.c.l.b16 %v5945
      %v5985 = vunpack.c.h.b16 %v5945
      %v5986 = vunpack.c.l.b16 %v5946
      %v5987 = vunpack.c.h.b16 %v5946
      %v5988 = vunpack.c.l.b16 %v5947
      %v5989 = vunpack.c.h.b16 %v5947
      %v5990 = vunpack.c.l.b16 %v5948
      %v5991 = vunpack.c.h.b16 %v5948
      %v5992 = vunpack.c.l.b16 %v5949
      %v5993 = vunpack.c.h.b16 %v5949
      %v5994 = vunpack.c.l.b16 %v5950
      %v5995 = vunpack.c.h.b16 %v5950
      %v5996 = vunpack.c.l.b16 %v5951
      %v5997 = vunpack.c.h.b16 %v5951
      %v5998 = vunpack.c.l.b16 %v5952
      %v5999 = vunpack.c.h.b16 %v5952
      %v6000 = vunpack.c.l.b16 %v5953
      %v6001 = vunpack.c.h.b16 %v5953
      %v6002 = vpack.c.b16 %v5970, %v5970
      %v6003 = vpack.c.b16 %v5971, %v5971
      %v6004 = vpack.c.b16 %v5972, %v5972
      %v6005 = vpack.c.b16 %v5973, %v5973
      %v6006 = vpack.c.b16 %v5974, %v5974
      %v6007 = vpack.c.b16 %v5975, %v5975
      %v6008 = vpack.c.b16 %v5976, %v5976
      %v6009 = vpack.c.b16 %v5977, %v5977
      %v6010 = vpack.c.b16 %v5978, %v5978
      %v6011 = vpack.c.b16 %v5979, %v5979
      %v6012 = vpack.c.b16 %v5980, %v5980
      %v6013 = vpack.c.b16 %v5981, %v5981
      %v6014 = vpack.c.b16 %v5982, %v5982
      %v6015 = vpack.c.b16 %v5983, %v5983
      %v6016 = vpack.c.b16 %v5984, %v5984
      %v6017 = vpack.c.b16 %v5985, %v5985
      %v6018 = vpack.c.b16 %v5986, %v5986
      %v6019 = vpack.c.b16 %v5987, %v5987
      %v6020 = vpack.c.b16 %v5988, %v5988
      %v6021 = vpack.c.b16 %v5989, %v5989
      %v6022 = vpack.c.b16 %v5990, %v5990
      %v6023 = vpack.c.b16 %v5991, %v5991
      %v6024 = vpack.c.b16 %v5992, %v5992
      %v6025 = vpack.c.b16 %v5993, %v5993
      %v6026 = vpack.c.b16 %v5994, %v5994
      %v6027 = vpack.c.b16 %v5995, %v5995
      %v6028 = vpack.c.b16 %v5996, %v5996
      %v6029 = vpack.c.b16 %v5997, %v5997
      %v6030 = vpack.c.b16 %v5998, %v5998
      %v6031 = vpack.c.b16 %v5999, %v5999
      %v6032 = vpack.c.b16 %v6000, %v6000
      %v6033 = vpack.c.b16 %v6001, %v6001
      %6066 = vst [vmem:[%s258] sm:$0xf] %v6002
      %6067 = vst [vmem:[%s258 + $0x4] sm:$0xf] %v6003
      %6068 = vst [vmem:[%s258 + $0x8] sm:$0xf] %v6004
      %6069 = vst [vmem:[%s258 + $0xc] sm:$0xf] %v6005
      %6070 = vst [vmem:[%s258 + $0x10] sm:$0xf] %v6006
      %6071 = vst [vmem:[%s258 + $0x14] sm:$0xf] %v6007
      %6072 = vst [vmem:[%s258 + $0x18] sm:$0xf] %v6008
      %6073 = vst [vmem:[%s258 + $0x1c] sm:$0xf] %v6009
      %6074 = vst [vmem:[%s258 + $0x20] sm:$0xf] %v6010
      %6075 = vst [vmem:[%s258 + $0x24] sm:$0xf] %v6011
      %6076 = vst [vmem:[%s258 + $0x28] sm:$0xf] %v6012
      %6077 = vst [vmem:[%s258 + $0x2c] sm:$0xf] %v6013
      %6078 = vst [vmem:[%s258 + $0x30] sm:$0xf] %v6014
      %6079 = vst [vmem:[%s258 + $0x34] sm:$0xf] %v6015
      %6080 = vst [vmem:[%s258 + $0x38] sm:$0xf] %v6016
      %6081 = vst [vmem:[%s258 + $0x3c] sm:$0xf] %v6017
      %6082 = vst [vmem:[%s258 + $0x40] sm:$0xf] %v6018
      %6083 = vst [vmem:[%s258 + $0x44] sm:$0xf] %v6019
      %6084 = vst [vmem:[%s258 + $0x48] sm:$0xf] %v6020
      %6085 = vst [vmem:[%s258 + $0x4c] sm:$0xf] %v6021
      %6086 = vst [vmem:[%s258 + $0x50] sm:$0xf] %v6022
      %6087 = vst [vmem:[%s258 + $0x54] sm:$0xf] %v6023
      %6088 = vst [vmem:[%s258 + $0x58] sm:$0xf] %v6024
      %6089 = vst [vmem:[%s258 + $0x5c] sm:$0xf] %v6025
      %6090 = vst [vmem:[%s258 + $0x60] sm:$0xf] %v6026
      %6091 = vst [vmem:[%s258 + $0x64] sm:$0xf] %v6027
      %6092 = vst [vmem:[%s258 + $0x68] sm:$0xf] %v6028
      %6093 = vst [vmem:[%s258 + $0x6c] sm:$0xf] %v6029
      %6094 = vst [vmem:[%s258 + $0x70] sm:$0xf] %v6030
      %6095 = vst [vmem:[%s258 + $0x74] sm:$0xf] %v6031
      %6096 = vst [vmem:[%s258 + $0x78] sm:$0xf] %v6032
      %6097 = vst [vmem:[%s258 + $0x7c] sm:$0xf] %v6033
      %v6098 = vadd.f32 %v5906, %v5907
      %v6099 = vadd.f32 %v6098, %v5908
      %v6100 = vadd.f32 %v6099, %v5909
      %v6101 = vadd.f32 %v6100, %v5910
      %v6102 = vadd.f32 %v6101, %v5911
      %v6103 = vadd.f32 %v6102, %v5912
      %v6104 = vadd.f32 %v6103, %v5913
      %v6105 = vadd.f32 %v6104, %v5914
      %v6106 = vadd.f32 %v6105, %v5915
      %v6107 = vadd.f32 %v6106, %v5916
      %v6108 = vadd.f32 %v6107, %v5917
      %v6109 = vadd.f32 %v6108, %v5918
      %v6110 = vadd.f32 %v6109, %v5919
      %v6111 = vadd.f32 %v6110, %v5920
      %v6112 = vadd.f32 %v6111, %v5921
      %v6113 = vadd.f32 %v6112, %v5922
      %v6114 = vadd.f32 %v6113, %v5923
      %v6115 = vadd.f32 %v6114, %v5924
      %v6116 = vadd.f32 %v6115, %v5925
      %v6117 = vadd.f32 %v6116, %v5926
      %v6118 = vadd.f32 %v6117, %v5927
      %v6119 = vadd.f32 %v6118, %v5928
      %v6120 = vadd.f32 %v6119, %v5929
      %v6121 = vadd.f32 %v6120, %v5930
      %v6122 = vadd.f32 %v6121, %v5931
      %v6123 = vadd.f32 %v6122, %v5932
      %v6124 = vadd.f32 %v6123, %v5933
      %v6125 = vadd.f32 %v6124, %v5934
      %v6126 = vadd.f32 %v6125, %v5935
      %v6127 = vadd.f32 %v6126, %v5936
      %v6128 = vadd.f32 %v6127, %v5937
      %v6129 = vrot.slane %v6128, 4
      %v6130 = vadd.f32 %v6128, %v6129
      %v6131 = vrot.slane %v6130, 2
      %v6132 = vadd.f32 %v6130, %v6131
      %v6133 = vrot.slane %v6132, 1
      %v6134 = vadd.f32 %v6132, %v6133
      %v6135 = vmul.f32 %v5906, %v5906
      %v6136 = vmul.f32 %v5907, %v5907
      %v6137 = vmul.f32 %v5908, %v5908
      %v6138 = vmul.f32 %v5909, %v5909
      %v6139 = vmul.f32 %v5910, %v5910
      %v6140 = vmul.f32 %v5911, %v5911
      %v6141 = vmul.f32 %v5912, %v5912
      %v6142 = vmul.f32 %v5913, %v5913
      %v6143 = vmul.f32 %v5914, %v5914
      %v6144 = vmul.f32 %v5915, %v5915
      %v6145 = vmul.f32 %v5916, %v5916
      %v6146 = vmul.f32 %v5917, %v5917
      %v6147 = vmul.f32 %v5918, %v5918
      %v6148 = vmul.f32 %v5919, %v5919
      %v6149 = vmul.f32 %v5920, %v5920
      %v6150 = vmul.f32 %v5921, %v5921
      %v6151 = vmul.f32 %v5922, %v5922
      %v6152 = vmul.f32 %v5923, %v5923
      %v6153 = vmul.f32 %v5924, %v5924
      %v6154 = vmul.f32 %v5925, %v5925
      %v6155 = vmul.f32 %v5926, %v5926
      %v6156 = vmul.f32 %v5927, %v5927
      %v6157 = vmul.f32 %v5928, %v5928
      %v6158 = vmul.f32 %v5929, %v5929
      %v6159 = vmul.f32 %v5930, %v5930
      %v6160 = vmul.f32 %v5931, %v5931
      %v6161 = vmul.f32 %v5932, %v5932
      %v6162 = vmul.f32 %v5933, %v5933
      %v6163 = vmul.f32 %v5934, %v5934
      %v6164 = vmul.f32 %v5935, %v5935
      %v6165 = vmul.f32 %v5936, %v5936
      %v6166 = vmul.f32 %v5937, %v5937
      %v6167 = vadd.f32 %v6135, %v6136
      %v6168 = vadd.f32 %v6167, %v6137
      %v6169 = vadd.f32 %v6168, %v6138
      %v6170 = vadd.f32 %v6169, %v6139
      %v6171 = vadd.f32 %v6170, %v6140
      %v6172 = vadd.f32 %v6171, %v6141
      %v6173 = vadd.f32 %v6172, %v6142
      %v6174 = vadd.f32 %v6173, %v6143
      %v6175 = vadd.f32 %v6174, %v6144
      %v6176 = vadd.f32 %v6175, %v6145
      %v6177 = vadd.f32 %v6176, %v6146
      %v6178 = vadd.f32 %v6177, %v6147
      %v6179 = vadd.f32 %v6178, %v6148
      %v6180 = vadd.f32 %v6179, %v6149
      %v6181 = vadd.f32 %v6180, %v6150
      %v6182 = vadd.f32 %v6181, %v6151
      %v6183 = vadd.f32 %v6182, %v6152
      %v6184 = vadd.f32 %v6183, %v6153
      %v6185 = vadd.f32 %v6184, %v6154
      %v6186 = vadd.f32 %v6185, %v6155
      %v6187 = vadd.f32 %v6186, %v6156
      %v6188 = vadd.f32 %v6187, %v6157
      %v6189 = vadd.f32 %v6188, %v6158
      %v6190 = vadd.f32 %v6189, %v6159
      %v6191 = vadd.f32 %v6190, %v6160
      %v6192 = vadd.f32 %v6191, %v6161
      %v6193 = vadd.f32 %v6192, %v6162
      %v6194 = vadd.f32 %v6193, %v6163
      %v6195 = vadd.f32 %v6194, %v6164
      %v6196 = vadd.f32 %v6195, %v6165
      %v6197 = vadd.f32 %v6196, %v6166
      %v6198 = vrot.slane %v6197, 4
      %v6199 = vadd.f32 %v6197, %v6198
      %v6200 = vrot.slane %v6199, 2
      %v6201 = vadd.f32 %v6199, %v6200
      %v6202 = vrot.slane %v6201, 1
      %v6203 = vadd.f32 %v6201, %v6202
      %vm6204 = vcmask 1040384
      %v6205 = vsel %vm6204, %v6134, %v6203
      %vm6206 = vcmask 1041408
      %v6207 = vsel %vm6206, %v6205, 0.0
      %6208 = vst [vmem:[%s262] sm:$0xff] %v6207
      %p6209 = scmp.lt.s32.totalorder %s18, 1
      %s6210 = scalar_select %p6209, %s18, 1
      %s6211 = smul.addr %s6210, 32
      %s6212 = smul.addr %s6211, 4
      %s6213 = scalar_lea.vmem %s5, %s6212
      %p6214 = scmp.lt.s32.totalorder %s18, 1
      %s6215 = scalar_select %p6214, %s18, 1
      %s6216 = smul.addr %s6215, 8
      %s6217 = scalar_lea.vmem %s6, %s6216
      // Predicated region
      $region41: #{grouped_conv_block_forward.6} parent=39 // pred_check
        %p6218 = pneg %p146
      $region42: #{grouped_conv_block_forward.6} parent=39 // pred_check_branch
        %6220 = sbr.rel (%p6218) target = $region44
      $region43: #{grouped_conv_block_forward.6} parent=39 // pred_region
        _
      $region44: #{grouped_conv_block_forward.6} parent=39 // pred_fallthru
        _
      // Predicated region
      $region45: #{grouped_conv_block_forward.6} parent=39 // pred_check
        %p6221 = pneg %p172
      $region46: #{grouped_conv_block_forward.6} parent=39 // pred_check_branch
        %6223 = sbr.rel (%p6221) target = $region48
      $region47: #{grouped_conv_block_forward.6} parent=39 // pred_region
        _
      $region48: #{grouped_conv_block_forward.6} parent=39 // pred_fallthru
        _
    $region40: #{grouped_conv_block_forward.6} parent=5 // pred_fallthru
      _
    %p6224 = scmp.le.s32.totalorder 2, %s13
    // Predicated region
    $region49: #{grouped_conv_block_forward.6} parent=5 // pred_check
      %p6225 = pneg %p6224
    $region50: #{grouped_conv_block_forward.6} parent=5 // pred_check_branch
      %6227 = sbr.rel (%p6225) target = $region52
    $region51: #{grouped_conv_block_forward.6} parent=5 // pred_region
      %s6228 = ssub.s32 %s13, 2
      // Predicated region
      $region53: #{grouped_conv_block_forward.6} parent=51 // pred_check
        %p6229 = pneg %p152
      $region54: #{grouped_conv_block_forward.6} parent=51 // pred_check_branch
        %6231 = sbr.rel (%p6229) target = $region56
      $region55: #{grouped_conv_block_forward.6} parent=51 // pred_region
        %p6232 = scmp.lt.s32.totalorder %s19, 1
        %s6233 = scalar_select %p6232, %s19, 1
        %s6234 = smul.addr %s6233, 32
        %s6235 = smul.addr %s6234, 4
        %s6236 = scalar_lea.vmem %s5, %s6235
      $region56: #{grouped_conv_block_forward.6} parent=51 // pred_fallthru
        _
      // Predicated region
      $region57: #{grouped_conv_block_forward.6} parent=51 // pred_check
        %p6237 = pneg %p178
      $region58: #{grouped_conv_block_forward.6} parent=51 // pred_check_branch
        %6239 = sbr.rel (%p6237) target = $region60
      $region59: #{grouped_conv_block_forward.6} parent=51 // pred_region
        %p6240 = scmp.lt.s32.totalorder %s19, 1
        %s6241 = scalar_select %p6240, %s19, 1
        %s6242 = smul.addr %s6241, 8
        %s6243 = scalar_lea.vmem %s6, %s6242
      $region60: #{grouped_conv_block_forward.6} parent=51 // pred_fallthru
        _
    $region52: #{grouped_conv_block_forward.6} parent=5 // pred_fallthru
      _
  $region6: #{grouped_conv_block_forward.6} parent=0 // loop_footer
    %s17 = sadd.s32 1, %s13
  $region7: #{grouped_conv_block_forward.6} parent=0 // loop_footer_branch
    %12 = sbr.rel target = $region3
  $region8: #{grouped_conv_block_forward.6} parent=0 // loop_exit
    _

</llo_original>
